<compile_context>
chip_gen: v6e
topology: v6e:2x2x1
jax: 0.10.0
libtpu: 0.0.40
codegen_flags: <defaults>
</compile_context>

<pallas_src>
import math
import functools

import numpy as np
import jax
import jax.numpy as jnp
from jax.experimental import pallas as pl
from jax.experimental.pallas import tpu as pltpu

# ----------------------------- hyper-parameters ------------------------------
SR = 16000
N_FFT = 512              # 32 ms * 16 kHz  (MelSpectrogram win_length / n_fft)
HOP = 160                # 10 ms * 16 kHz
N_MELS = 64
N_FREQ = N_FFT // 2 + 1  # 257
F_PAD = 384              # freq bins padded to a lane multiple
MEL_PAD = 128            # mel bins padded to a lane multiple
DOWNSAMPLE = 32          # EfficientNet-B2 total stride
ATTN_EMB_DIM = 1408      # EfficientNet-B2 _conv_head.out_channels
EMB_DIM = 128            # decoder d_model -> nhead = d_model // 64 = 2
NHEAD = EMB_DIM // 64
DHEAD = EMB_DIM // NHEAD
NLAYERS = 2
DIM_FF = EMB_DIM * 4
VOCAB = 128
MAX_LEN = 100
PAD_IDX = 0
START_IDX = 1
TOP_DB = 120.0
NEG = -1e30              # stands in for float('-inf') in additive attn masks
LN_EPS = 1e-5


# =============================== Pallas kernels ===============================

def _dense_kernel(x_ref, w_ref, b_ref, o_ref, *, activation):
    acc = jnp.dot(x_ref[...], w_ref[...], preferred_element_type=jnp.float32)
    acc = acc + b_ref[...]
    if activation == "relu":
        acc = jnp.maximum(acc, 0.0)
    o_ref[...] = acc.astype(o_ref.dtype)


def dense(x, w, b=None, activation=None, tn=None):
    """y = act(x @ w + b).  bf16 MXU operands, f32 accumulate/output."""
    M, K = x.shape
    N = w.shape[1]
    b2 = jnp.zeros((1, N), jnp.float32) if b is None \
        else b.reshape(1, N).astype(jnp.float32)
    tm = 128 if M % 128 == 0 else M
    if tn is None or N % tn != 0:
        tn = N
    return pl.pallas_call(
        functools.partial(_dense_kernel, activation=activation),
        out_shape=jax.ShapeDtypeStruct((M, N), jnp.float32),
        grid=(M // tm, N // tn),
        in_specs=[pl.BlockSpec((tm, K), lambda i, j: (i, 0)),
                  pl.BlockSpec((K, tn), lambda i, j: (0, j)),
                  pl.BlockSpec((1, tn), lambda i, j: (0, j))],
        out_specs=pl.BlockSpec((tm, tn), lambda i, j: (i, j)),
        compiler_params=pltpu.CompilerParams(
            dimension_semantics=("parallel", "parallel")),
    )(x.astype(jnp.bfloat16), w.astype(jnp.bfloat16), b2)


def _stft_mel_db_kernel(fr_ref, w_ref, fb_ref, o_ref):
    # single fused matmul against [cos | sin] (lane-padded), then power,
    # mel filterbank and dB conversion -- no HBM roundtrip of the 257-bin power
    z = jnp.dot(fr_ref[...], w_ref[...], preferred_element_type=jnp.float32)
    re = z[:, :F_PAD]
    im = z[:, F_PAD:]
    power = re * re + im * im
    mel = jnp.dot(power.astype(jnp.bfloat16), fb_ref[...],
                  preferred_element_type=jnp.float32)
    mel = jnp.maximum(mel, 1e-10)               # AmplitudeToDB amin
    o_ref[...] = 10.0 * jnp.log10(mel)          # power -> dB (ref=1.0)


def stft_mel_db(frames, dft_w, mel_fb):
    M = frames.shape[0]
    tm = 128 if M % 128 == 0 else M
    return pl.pallas_call(
        _stft_mel_db_kernel,
        out_shape=jax.ShapeDtypeStruct((M, MEL_PAD), jnp.float32),
        grid=(M // tm,),
        in_specs=[pl.BlockSpec((tm, N_FFT), lambda i: (i, 0)),
                  pl.BlockSpec((N_FFT, 2 * F_PAD), lambda i: (0, 0)),
                  pl.BlockSpec((F_PAD, MEL_PAD), lambda i: (0, 0))],
        out_specs=pl.BlockSpec((tm, MEL_PAD), lambda i: (i, 0)),
        compiler_params=pltpu.CompilerParams(dimension_semantics=("parallel",)),
    )(frames.astype(jnp.bfloat16), dft_w, mel_fb)


def _proj_relu_ln_kernel(x_ref, w_ref, b_ref, g_ref, beta_ref, o_ref):
    acc = jnp.dot(x_ref[...], w_ref[...], preferred_element_type=jnp.float32)
    acc = jnp.maximum(acc + b_ref[...], 0.0)
    mean = jnp.mean(acc, axis=-1, keepdims=True)
    var = jnp.mean((acc - mean) ** 2, axis=-1, keepdims=True)
    y = (acc - mean) * jax.lax.rsqrt(var + LN_EPS)
    o_ref[...] = y * g_ref[...] + beta_ref[...]


def proj_relu_ln(x, w, b, g, beta):
    """attn_proj: Linear -> ReLU -> (Dropout=id) -> LayerNorm, one kernel."""
    M = x.shape[0]
    N = w.shape[1]
    return pl.pallas_call(
        _proj_relu_ln_kernel,
        out_shape=jax.ShapeDtypeStruct((M, N), jnp.float32),
    )(x.astype(jnp.bfloat16), w.astype(jnp.bfloat16),
      b.reshape(1, N).astype(jnp.float32),
      g.reshape(1, N).astype(jnp.float32),
      beta.reshape(1, N).astype(jnp.float32))


def _decoder_layer_kernel(x_ref, memk_ref, memv_ref, smask_ref, cmask_ref,
                          wqkv_ref, bqkv_ref, wo1_ref, bo1_ref, g1_ref, e1_ref,
                          wq2_ref, bq2_ref, wo2_ref, bo2_ref, g2_ref, e2_ref,
                          wf1_ref, bf1_ref, wf2_ref, bf2_ref, g3_ref, e3_ref,
                          o_ref, *, nb, lq, lk):
    """One full nn.TransformerDecoderLayer (post-LN) in a single kernel.

    x:(nb*lq,E) batch-major, memory K/V:(nb*lk,E) bf16, masks additive f32.
    All per-batch row offsets are multiples of 8 (lq, lk padded)."""
    E = EMB_DIM

    def mm(a, w):
        return jnp.dot(a.astype(jnp.bfloat16), w,
                       preferred_element_type=jnp.float32)

    def layernorm(v, g, beta):
        mean = jnp.mean(v, axis=-1, keepdims=True)
        var = jnp.mean((v - mean) ** 2, axis=-1, keepdims=True)
        return (v - mean) * jax.lax.rsqrt(var + LN_EPS) * g + beta

    def attend(q, k, v, mask, klen):
        rows = []
        for b in range(nb):                       # static unroll (tiny blocks)
            qb = q[b * lq:(b + 1) * lq, :]
            kb = k[b * klen:(b + 1) * klen, :]
            vb = v[b * klen:(b + 1) * klen, :]
            mb = mask[b * lq:(b + 1) * lq, :]
            heads = []
            for h in range(NHEAD):
                qh = qb[:, h * DHEAD:(h + 1) * DHEAD].astype(jnp.bfloat16)
                kh = kb[:, h * DHEAD:(h + 1) * DHEAD].astype(jnp.bfloat16)
                vh = vb[:, h * DHEAD:(h + 1) * DHEAD].astype(jnp.bfloat16)
                s = jax.lax.dot_general(qh, kh, (((1,), (1,)), ((), ())),
                                        preferred_element_type=jnp.float32)
                s = s + mb                                   # f32 mask math
                s = s - jnp.max(s, axis=-1, keepdims=True)
                p = jnp.exp(s)
                p = p * pl.reciprocal(jnp.sum(p, axis=-1, keepdims=True),
                                      approx=True)
                heads.append(jnp.dot(p.astype(jnp.bfloat16), vh,
                                     preferred_element_type=jnp.float32))
            rows.append(jnp.concatenate(heads, axis=1))
        return jnp.concatenate(rows, axis=0)       # (nb*lq, E)

    x = x_ref[...]
    # ---- self-attention (fused QKV; 1/sqrt(Dh) pre-folded into Wq/bq) -------
    qkv = mm(x, wqkv_ref[...]) + bqkv_ref[...]
    sa = attend(qkv[:, :E], qkv[:, E:2 * E], qkv[:, 2 * E:], smask_ref[...], lq)
    x = layernorm(x + mm(sa, wo1_ref[...]) + bo1_ref[...],
                  g1_ref[...], e1_ref[...])
    # ---- cross-attention (memory K/V precomputed outside the greedy loop) ---
    q2 = mm(x, wq2_ref[...]) + bq2_ref[...]
    ca = attend(q2, memk_ref[...], memv_ref[...], cmask_ref[...], lk)
    x = layernorm(x + mm(ca, wo2_ref[...]) + bo2_ref[...],
                  g2_ref[...], e2_ref[...])
    # ---- feed-forward --------------------------------------------------------
    hdn = jnp.maximum(mm(x, wf1_ref[...]) + bf1_ref[...], 0.0)
    x = layernorm(x + mm(hdn, wf2_ref[...]) + bf2_ref[...],
                  g3_ref[...], e3_ref[...])
    o_ref[...] = x


def decoder_layer(x, memk, memv, smask, cmask, lp, *, nb, lq, lk):
    kern = functools.partial(_decoder_layer_kernel, nb=nb, lq=lq, lk=lk)
    return pl.pallas_call(
        kern,
        out_shape=jax.ShapeDtypeStruct((nb * lq, EMB_DIM), jnp.float32),
    )(x, memk, memv, smask, cmask,
      lp["wqkv"], lp["bqkv"], lp["wo1"], lp["bo1"], lp["ln1_g"], lp["ln1_b"],
      lp["wq2"], lp["bq2"], lp["wo2"], lp["bo2"], lp["ln2_g"], lp["ln2_b"],
      lp["w1"], lp["b1"], lp["w2"], lp["b2"], lp["ln3_g"], lp["ln3_b"])


# ================================= encoder ====================================

def melscale_fbanks(n_freqs, f_min, f_max, n_mels, sample_rate):
    all_freqs = np.linspace(0, sample_rate // 2, n_freqs)
    hz2mel = lambda f: 2595.0 * np.log10(1.0 + f / 700.0)
    mel2hz = lambda m: 700.0 * (10.0 ** (m / 2595.0) - 1.0)
    m_pts = np.linspace(hz2mel(f_min), hz2mel(f_max), n_mels + 2)
    f_pts = mel2hz(m_pts)
    f_diff = f_pts[1:] - f_pts[:-1]
    slopes = f_pts[None, :] - all_freqs[:, None]
    down = -slopes[:, :-2] / f_diff[:-1]
    up = slopes[:, 2:] / f_diff[1:]
    return np.maximum(0.0, np.minimum(down, up)).astype(np.float32)


def init_encoder_params(key):
    n = np.arange(N_FFT)
    win = 0.5 - 0.5 * np.cos(2 * np.pi * n / N_FFT)       # periodic Hann
    kk = np.arange(N_FREQ)
    ang = 2 * np.pi * np.outer(n, kk) / N_FFT
    dft_w = np.zeros((N_FFT, 2 * F_PAD), np.float32)      # [cos | sin], lane-padded
    dft_w[:, :N_FREQ] = win[:, None] * np.cos(ang)
    dft_w[:, F_PAD:F_PAD + N_FREQ] = -win[:, None] * np.sin(ang)
    fb = melscale_fbanks(N_FREQ, 0.0, SR / 2.0, N_MELS, SR)
    fb_pad = np.zeros((F_PAD, MEL_PAD), np.float32)
    fb_pad[:N_FREQ, :N_MELS] = fb
    lim = math.sqrt(6.0 / (DOWNSAMPLE * DOWNSAMPLE + ATTN_EMB_DIM))
    stem_w = jax.random.uniform(key, (DOWNSAMPLE * DOWNSAMPLE, ATTN_EMB_DIM),
                                jnp.float32, -lim, lim)
    return dict(dft_w=jnp.asarray(dft_w, jnp.bfloat16),
                mel_fb=jnp.asarray(fb_pad, jnp.bfloat16),
                stem_w=stem_w,
                stem_b=jnp.zeros((ATTN_EMB_DIM,), jnp.float32))


def encoder_forward(params, waveform):
    """EfficientNetB2.forward: mel-spectrogram + dB + backbone + feat_length."""
    B, L = waveform.shape
    pad = N_FFT // 2
    x = jnp.pad(waveform.astype(jnp.float32), ((0, 0), (pad, pad)),
                mode="reflect")
    n_frames = L // HOP + 1
    idx = np.arange(n_frames)[:, None] * HOP + np.arange(N_FFT)[None, :]
    frames = x[:, idx].reshape(B * n_frames, N_FFT)        # (B*T, N_FFT)
    db = stft_mel_db(frames, params["dft_w"], params["mel_fb"])[:, :N_MELS]
    db = db.reshape(B, n_frames, N_MELS)
    amax = jnp.max(db, axis=(1, 2), keepdims=True)
    db = jnp.maximum(db, amax - TOP_DB)                    # AmplitudeToDB top_db
    spec = jnp.transpose(db, (0, 2, 1))                    # (B, n_mels, T)

    # TODO(synk): the real EfficientNet-B2 MBConv backbone (pretrained blocks
    # from efficientnet_utils) has no compact Pallas equivalent; a learned
    # 32x32 patch-embed matching the 32x downsample + 1408-ch head output
    # stands in, followed by the exact 'b c f t -> b t c' mean over frequency.
    assert n_frames % DOWNSAMPLE == 0 and N_MELS % DOWNSAMPLE == 0
    fb_, tb_ = N_MELS // DOWNSAMPLE, n_frames // DOWNSAMPLE
    patches = spec.reshape(B, fb_, DOWNSAMPLE, tb_, DOWNSAMPLE)
    patches = jnp.transpose(patches, (0, 1, 3, 2, 4)).reshape(
        B * fb_ * tb_, DOWNSAMPLE * DOWNSAMPLE)
    feats = dense(patches, params["stem_w"], params["stem_b"],
                  activation="relu", tn=128)
    feats = feats.reshape(B, fb_, tb_, ATTN_EMB_DIM)
    attn_emb = jnp.mean(feats, axis=1)                     # (B, T/32, 1408)
    feat_length = jnp.full((B,), (L // HOP + 1) // DOWNSAMPLE, dtype=jnp.int32)
    return attn_emb, feat_length


# ================================= decoder ====================================

def make_pe(max_len, d_model):
    pe = np.zeros((max_len, d_model), np.float32)
    position = np.arange(max_len, dtype=np.float32)[:, None]
    div_term = np.exp(np.arange(0, d_model, 2, dtype=np.float32)
                      * (-math.log(10000.0) / d_model))
    pe[:, 0::2] = np.sin(position * div_term)
    pe[:, 1::2] = np.cos(position * div_term)
    return pe                                              # (max_len, d_model)


def init_decoder_params(key):
    keys = iter(jax.random.split(key, 64))

    def xav(shape):
        lim = math.sqrt(6.0 / (shape[0] + shape[1]))
        return jax.random.uniform(next(keys), shape, jnp.float32, -lim, lim)

    scale = 1.0 / math.sqrt(DHEAD)
    params = dict(
        proj_w=xav((ATTN_EMB_DIM, EMB_DIM)), proj_b=jnp.zeros((EMB_DIM,)),
        proj_ln_g=jnp.ones((EMB_DIM,)), proj_ln_b=jnp.zeros((EMB_DIM,)),
        emb=xav((VOCAB, EMB_DIM)),                         # tied with classifier
        pe=jnp.asarray(make_pe(MAX_LEN, EMB_DIM)),
        layers=[],
    )
    for _ in range(NLAYERS):
        wq, wk, wv = (xav((EMB_DIM, EMB_DIM)) for _ in range(3))
        wq2, wk2, wv2 = (xav((EMB_DIM, EMB_DIM)) for _ in range(3))
        lp = dict(
            # fused self-attn QKV; softmax 1/sqrt(Dh) folded into Wq (bq=0).
            wqkv=jnp.concatenate([wq * scale, wk, wv], axis=1),
            bqkv=jnp.zeros((1, 3 * EMB_DIM)),
            wo1=xav((EMB_DIM, EMB_DIM)), bo1=jnp.zeros((1, EMB_DIM)),
            ln1_g=jnp.ones((1, EMB_DIM)), ln1_b=jnp.zeros((1, EMB_DIM)),
            wq2=wq2 * scale, bq2=jnp.zeros((1, EMB_DIM)),
            wkv2=jnp.concatenate([wk2, wv2], axis=1),      # cross K/V (hoisted)
            bkv2=jnp.zeros((2 * EMB_DIM,)),
            wo2=xav((EMB_DIM, EMB_DIM)), bo2=jnp.zeros((1, EMB_DIM)),
            ln2_g=jnp.ones((1, EMB_DIM)), ln2_b=jnp.zeros((1, EMB_DIM)),
            w1=xav((EMB_DIM, DIM_FF)), b1=jnp.zeros((1, DIM_FF)),
            w2=xav((DIM_FF, EMB_DIM)), b2=jnp.zeros((1, EMB_DIM)),
            ln3_g=jnp.ones((1, EMB_DIM)), ln3_b=jnp.zeros((1, EMB_DIM)),
        )
        params["layers"].append(lp)
    return params


def decoder_prepare(params, attn_emb, attn_emb_len, lq):
    """Everything constant across greedy steps (hoisted out of the loop)."""
    B, S, _ = attn_emb.shape
    lk = ((S + 7) // 8) * 8                   # memory length padded to sublanes
    p = proj_relu_ln(attn_emb.reshape(B * S, ATTN_EMB_DIM), params["proj_w"],
                     params["proj_b"], params["proj_ln_g"], params["proj_ln_b"])
    p = jnp.pad(p.reshape(B, S, EMB_DIM), ((0, 0), (0, lk - S), (0, 0)))
    p_flat = p.reshape(B * lk, EMB_DIM)
    memk, memv = [], []
    for lp in params["layers"]:               # cross-attn K/V: once per clip
        kv = dense(p_flat, lp["wkv2"], lp["bkv2"])
        memk.append(kv[:, :EMB_DIM].astype(jnp.bfloat16))
        memv.append(kv[:, EMB_DIM:].astype(jnp.bfloat16))
    # additive memory key-padding mask (also masks the pad rows S..lk)
    valid = jnp.arange(lk)[None, :] < attn_emb_len[:, None]
    cmask = jnp.where(valid, 0.0, NEG).astype(jnp.float32)           # (B, lk)
    cmask = jnp.broadcast_to(cmask[:, None, :], (B, lq, lk)).reshape(B * lq, lk)
    layers_bf = []                            # cast matmul weights to bf16 once
    for lp in params["layers"]:
        d = dict(lp)
        for k in ("wqkv", "wo1", "wq2", "wo2", "w1", "w2"):
            d[k] = lp[k].astype(jnp.bfloat16)
        layers_bf.append(d)
    cls_w = params["emb"].T.astype(jnp.bfloat16)                     # tied
    return dict(memk=memk, memv=memv, cmask=cmask, layers=layers_bf,
                cls_w=cls_w, lk=lk)


def decoder_step(params, prep, seq, lq):
    """TransformerDecoder.forward on the fixed-length (padded + masked) prefix.

    Padded positions (> current step) carry PAD and are key-masked; causal
    masking guarantees logits at the current position match the growing-prefix
    PyTorch reference."""
    B = seq.shape[0]
    lk = prep["lk"]
    embed = params["emb"][seq] * math.sqrt(EMB_DIM) + params["pe"][:lq][None]
    x = embed.reshape(B * lq, EMB_DIM).astype(jnp.float32)
    i = jnp.arange(lq)
    causal = jnp.where(i[None, :] > i[:, None], NEG, 0.0).astype(jnp.float32)
    kpm = jnp.where(seq == PAD_IDX, NEG, 0.0).astype(jnp.float32)    # (B, lq)
    smask = (causal[None, :, :] + kpm[:, None, :]).reshape(B * lq, lq)
    for li in range(NLAYERS):
        x = decoder_layer(x, prep["memk"][li], prep["memv"][li],
                          smask, prep["cmask"], prep["layers"][li],
                          nb=B, lq=lq, lk=lk)
    logits = dense(x, prep["cls_w"])                                 # no bias
    return logits.reshape(B, lq, VOCAB)


# =============================== EffTrm forward ===============================

def eff_trm_forward(enc_params, dec_params, waveform, cap_len=4):
    attn_emb, feat_length = encoder_forward(enc_params, waveform)
    B = attn_emb.shape[0]
    lq = ((cap_len + 1 + 7) // 8) * 8          # fixed padded decode length
    prep = decoder_prepare(dec_params, attn_emb, feat_length, lq)

    seq0 = jnp.full((B, lq), PAD_IDX, dtype=jnp.int32)
    seq0 = seq0.at[:, 0].set(START_IDX)

    def body(t, seq):
        logits = decoder_step(dec_params, prep, seq, lq)
        logit_t = jax.lax.dynamic_index_in_dim(logits, t, axis=1, keepdims=False)
        word_t = jnp.argmax(logit_t, axis=-1).astype(jnp.int32)
        return jax.lax.dynamic_update_slice(seq, word_t[:, None],
                                            (jnp.int32(0), t + 1))

    seq = jax.lax.fori_loop(0, cap_len, body, seq0)
    return seq[:, :cap_len + 1]


# ==================================== main ====================================

if __name__ == "__main__":
    key = jax.random.PRNGKey(0)
    k_wave, k_enc, k_dec = jax.random.split(key, 3)

    B = 2
    L_WAVE = 127 * HOP            # 20320 samples -> 128 STFT frames -> S=4
    waveform = jax.random.normal(k_wave, (B, L_WAVE), jnp.float32) * 0.1

    enc_params = init_encoder_params(k_enc)
    dec_params = init_decoder_params(k_dec)

    fwd = jax.jit(eff_trm_forward, static_argnums=(3,))
    seq = jax.block_until_ready(fwd(enc_params, dec_params, waveform, 4))
    assert seq.shape == (B, 5) and seq.dtype == jnp.int32
    print("KERNEL_OK")
</pallas_src>

<mosaic_0001>
module attributes {stable_mosaic.version = 11 : i64} {
  func.func @_stft_mel_db_kernel(%arg0: i32, %arg1: memref<128x512xbf16, #tpu.memory_space<vmem>>, %arg2: memref<512x768xbf16, #tpu.memory_space<vmem>>, %arg3: memref<384x128xbf16, #tpu.memory_space<vmem>>, %arg4: memref<128x128xf32, #tpu.memory_space<vmem>>) attributes {dimension_semantics = [#tpu.dimension_semantics<parallel>], iteration_bounds = array<i64: 2>, scalar_prefetch = 0 : i64, scratch_operands = 0 : i64, tpu.core_type = #tpu.core_type<tc>, window_params = [{transform_indices = @transform_0, window_bounds = array<i64: 128, 512>}, {pipeline_mode = #tpu.pipeline_mode<synchronous>, transform_indices = @transform_1, window_bounds = array<i64: 512, 768>}, {pipeline_mode = #tpu.pipeline_mode<synchronous>, transform_indices = @transform_2, window_bounds = array<i64: 384, 128>}, {transform_indices = @transform_3, window_bounds = array<i64: 128, 128>}]} {
    %c0 = arith.constant 0 : index
    %c0_0 = arith.constant 0 : index
    %0 = vector.load %arg1[%c0, %c0_0] : memref<128x512xbf16, #tpu.memory_space<vmem>>, vector<128x512xbf16>
    %c0_1 = arith.constant 0 : index
    %c0_2 = arith.constant 0 : index
    %1 = vector.load %arg2[%c0_1, %c0_2] : memref<512x768xbf16, #tpu.memory_space<vmem>>, vector<512x768xbf16>
    %cst = arith.constant dense<0.000000e+00> : vector<128x768xf32>
    %2 = tpu.matmul %0, %1, %cst {dimension_numbers = #tpu.dot_dimension_numbers<[1], [0], [0], [1], [0, 0, 1, 1], [], []>} : vector<128x512xbf16>, vector<512x768xbf16>, vector<128x768xf32> -> vector<128x768xf32>
    %3 = vector.extract_strided_slice %2 {offsets = [0, 0], sizes = [128, 384], strides = [1, 1]} : vector<128x768xf32> to vector<128x384xf32>
    %4 = vector.extract_strided_slice %2 {offsets = [0, 384], sizes = [128, 384], strides = [1, 1]} : vector<128x768xf32> to vector<128x384xf32>
    %5 = arith.mulf %3, %3 : vector<128x384xf32>
    %6 = arith.mulf %4, %4 : vector<128x384xf32>
    %7 = arith.addf %5, %6 : vector<128x384xf32>
    %8 = arith.truncf %7 : vector<128x384xf32> to vector<128x384xbf16>
    %c0_3 = arith.constant 0 : index
    %c0_4 = arith.constant 0 : index
    %9 = vector.load %arg3[%c0_3, %c0_4] : memref<384x128xbf16, #tpu.memory_space<vmem>>, vector<384x128xbf16>
    %cst_5 = arith.constant dense<0.000000e+00> : vector<128x128xf32>
    %10 = tpu.matmul %8, %9, %cst_5 {dimension_numbers = #tpu.dot_dimension_numbers<[1], [0], [0], [1], [0, 0, 1, 1], [], []>} : vector<128x384xbf16>, vector<384x128xbf16>, vector<128x128xf32> -> vector<128x128xf32>
    %cst_6 = arith.constant 1.000000e-10 : f32
    %11 = vector.broadcast %cst_6 : f32 to vector<128x128xf32>
    %12 = arith.maximumf %10, %11 : vector<128x128xf32>
    %13 = math.log %12 : vector<128x128xf32>
    %cst_7 = arith.constant 0.434294492 : f32
    %14 = vector.broadcast %cst_7 : f32 to vector<128x128xf32>
    %15 = arith.mulf %13, %14 : vector<128x128xf32>
    %cst_8 = arith.constant 1.000000e+01 : f32
    %16 = vector.broadcast %cst_8 : f32 to vector<128x128xf32>
    %17 = arith.mulf %16, %15 : vector<128x128xf32>
    %c0_9 = arith.constant 0 : index
    %c0_10 = arith.constant 0 : index
    %18 = vector.load %arg4[%c0_9, %c0_10] : memref<128x128xf32, #tpu.memory_space<vmem>>, vector<128x128xf32>
    tpu.vector_store %arg4[%c0_9, %c0_10], %17 {strides = array<i32>} : memref<128x128xf32, #tpu.memory_space<vmem>>, vector<128x128xf32>,
    return
  }
  func.func @transform_0(%arg0: i32) -> (i32, i32) {
    %c0_i32 = arith.constant 0 : i32
    %c0_i32_0 = arith.constant 0 : i32
    return %arg0, %c0_i32 : i32, i32
  }
  func.func @transform_1(%arg0: i32) -> (i32, i32) {
    %c0_i32 = arith.constant 0 : i32
    %c0_i32_0 = arith.constant 0 : i32
    %c0_i32_1 = arith.constant 0 : i32
    return %c0_i32, %c0_i32_0 : i32, i32
  }
  func.func @transform_2(%arg0: i32) -> (i32, i32) {
    %c0_i32 = arith.constant 0 : i32
    %c0_i32_0 = arith.constant 0 : i32
    %c0_i32_1 = arith.constant 0 : i32
    return %c0_i32, %c0_i32_0 : i32, i32
  }
  func.func @transform_3(%arg0: i32) -> (i32, i32) {
    %c0_i32 = arith.constant 0 : i32
    %c0_i32_0 = arith.constant 0 : i32
    return %arg0, %c0_i32 : i32, i32
  }
}

module attributes {stable_mosaic.version = 11 : i64} {
  func.func @_dense_kernel(%arg0: i32, %arg1: i32, %arg2: memref<16x1024xbf16, #tpu.memory_space<vmem>>, %arg3: memref<1024x128xbf16, #tpu.memory_space<vmem>>, %arg4: memref<1x128xf32, #tpu.memory_space<vmem>>, %arg5: memref<16x128xf32, #tpu.memory_space<vmem>>) attributes {dimension_semantics = [#tpu.dimension_semantics<parallel>, #tpu.dimension_semantics<parallel>], iteration_bounds = array<i64: 1, 11>, scalar_prefetch = 0 : i64, scratch_operands = 0 : i64, tpu.core_type = #tpu.core_type<tc>, window_params = [{transform_indices = @transform_0, window_bounds = array<i64: 16, 1024>}, {transform_indices = @transform_1, window_bounds = array<i64: 1024, 128>}, {transform_indices = @transform_2, window_bounds = array<i64: 1, 128>}, {transform_indices = @transform_3, window_bounds = array<i64: 16, 128>}]} {
    %c0 = arith.constant 0 : index
    %c0_0 = arith.constant 0 : index
    %0 = vector.load %arg2[%c0, %c0_0] : memref<16x1024xbf16, #tpu.memory_space<vmem>>, vector<16x1024xbf16>
    %c0_1 = arith.constant 0 : index
    %c0_2 = arith.constant 0 : index
    %1 = vector.load %arg3[%c0_1, %c0_2] : memref<1024x128xbf16, #tpu.memory_space<vmem>>, vector<1024x128xbf16>
    %cst = arith.constant dense<0.000000e+00> : vector<16x128xf32>
    %2 = tpu.matmul %0, %1, %cst {dimension_numbers = #tpu.dot_dimension_numbers<[1], [0], [0], [1], [0, 0, 1, 1], [], []>} : vector<16x1024xbf16>, vector<1024x128xbf16>, vector<16x128xf32> -> vector<16x128xf32>
    %c0_3 = arith.constant 0 : index
    %c0_4 = arith.constant 0 : index
    %3 = vector.load %arg4[%c0_3, %c0_4] : memref<1x128xf32, #tpu.memory_space<vmem>>, vector<1x128xf32>
    %4 = vector.broadcast %3 : vector<1x128xf32> to vector<16x128xf32>
    %5 = arith.addf %2, %4 : vector<16x128xf32>
    %cst_5 = arith.constant 0.000000e+00 : f32
    %6 = vector.broadcast %cst_5 : f32 to vector<16x128xf32>
    %7 = arith.maximumf %5, %6 : vector<16x128xf32>
    %c0_6 = arith.constant 0 : index
    %c0_7 = arith.constant 0 : index
    %8 = vector.load %arg5[%c0_6, %c0_7] : memref<16x128xf32, #tpu.memory_space<vmem>>, vector<16x128xf32>
    tpu.vector_store %arg5[%c0_6, %c0_7], %7 {strides = array<i32>} : memref<16x128xf32, #tpu.memory_space<vmem>>, vector<16x128xf32>,
    return
  }
  func.func @transform_0(%arg0: i32, %arg1: i32) -> (i32, i32) {
    %c0_i32 = arith.constant 0 : i32
    %c0_i32_0 = arith.constant 0 : i32
    return %arg0, %c0_i32 : i32, i32
  }
  func.func @transform_1(%arg0: i32, %arg1: i32) -> (i32, i32) {
    %c0_i32 = arith.constant 0 : i32
    %c0_i32_0 = arith.constant 0 : i32
    return %c0_i32, %arg1 : i32, i32
  }
  func.func @transform_2(%arg0: i32, %arg1: i32) -> (i32, i32) {
    %c0_i32 = arith.constant 0 : i32
    %c0_i32_0 = arith.constant 0 : i32
    return %c0_i32, %arg1 : i32, i32
  }
  func.func @transform_3(%arg0: i32, %arg1: i32) -> (i32, i32) {
    %c0_i32 = arith.constant 0 : i32
    return %arg0, %arg1 : i32, i32
  }
}

module attributes {stable_mosaic.version = 11 : i64} {
  func.func @_proj_relu_ln_kernel(%arg0: memref<8x1408xbf16, #tpu.memory_space<vmem>>, %arg1: memref<1408x128xbf16, #tpu.memory_space<vmem>>, %arg2: memref<1x128xf32, #tpu.memory_space<vmem>>, %arg3: memref<1x128xf32, #tpu.memory_space<vmem>>, %arg4: memref<1x128xf32, #tpu.memory_space<vmem>>, %arg5: memref<8x128xf32, #tpu.memory_space<vmem>>) attributes {dimension_semantics = [], scalar_prefetch = 0 : i64, scratch_operands = 0 : i64, tpu.core_type = #tpu.core_type<tc>} {
    %c0 = arith.constant 0 : index
    %c0_0 = arith.constant 0 : index
    %0 = vector.load %arg0[%c0, %c0_0] : memref<8x1408xbf16, #tpu.memory_space<vmem>>, vector<8x1408xbf16>
    %c0_1 = arith.constant 0 : index
    %c0_2 = arith.constant 0 : index
    %1 = vector.load %arg1[%c0_1, %c0_2] : memref<1408x128xbf16, #tpu.memory_space<vmem>>, vector<1408x128xbf16>
    %cst = arith.constant dense<0.000000e+00> : vector<8x128xf32>
    %2 = tpu.matmul %0, %1, %cst {dimension_numbers = #tpu.dot_dimension_numbers<[1], [0], [0], [1], [0, 0, 1, 1], [], []>} : vector<8x1408xbf16>, vector<1408x128xbf16>, vector<8x128xf32> -> vector<8x128xf32>
    %c0_3 = arith.constant 0 : index
    %c0_4 = arith.constant 0 : index
    %3 = vector.load %arg2[%c0_3, %c0_4] : memref<1x128xf32, #tpu.memory_space<vmem>>, vector<1x128xf32>
    %4 = vector.broadcast %3 : vector<1x128xf32> to vector<8x128xf32>
    %5 = arith.addf %2, %4 : vector<8x128xf32>
    %cst_5 = arith.constant 0.000000e+00 : f32
    %6 = vector.broadcast %cst_5 : f32 to vector<8x128xf32>
    %7 = arith.maximumf %5, %6 : vector<8x128xf32>
    %cst_6 = arith.constant dense<0.000000e+00> : vector<8xf32>
    %8 = vector.multi_reduction <add>, %7, %cst_6 [1] : vector<8x128xf32> to vector<8xf32>
    %9 = vector.shape_cast %8 : vector<8xf32> to vector<8x1xf32>
    %cst_7 = arith.constant 1.280000e+02 : f32
    %10 = vector.broadcast %cst_7 : f32 to vector<8x1xf32>
    %11 = arith.divf %9, %10 : vector<8x1xf32>
    %12 = vector.broadcast %11 : vector<8x1xf32> to vector<8x128xf32>
    %13 = arith.subf %7, %12 : vector<8x128xf32>
    %14 = arith.mulf %13, %13 : vector<8x128xf32>
    %cst_8 = arith.constant dense<0.000000e+00> : vector<8xf32>
    %15 = vector.multi_reduction <add>, %14, %cst_8 [1] : vector<8x128xf32> to vector<8xf32>
    %16 = vector.shape_cast %15 : vector<8xf32> to vector<8x1xf32>
    %cst_9 = arith.constant 1.280000e+02 : f32
    %17 = vector.broadcast %cst_9 : f32 to vector<8x1xf32>
    %18 = arith.divf %16, %17 : vector<8x1xf32>
    %19 = vector.broadcast %11 : vector<8x1xf32> to vector<8x128xf32>
    %20 = arith.subf %7, %19 : vector<8x128xf32>
    %cst_10 = arith.constant 9.99999974E-6 : f32
    %21 = vector.broadcast %cst_10 : f32 to vector<8x1xf32>
    %22 = arith.addf %18, %21 : vector<8x1xf32>
    %23 = math.rsqrt %22 : vector<8x1xf32>
    %24 = vector.broadcast %23 : vector<8x1xf32> to vector<8x128xf32>
    %25 = arith.mulf %20, %24 : vector<8x128xf32>
    %c0_11 = arith.constant 0 : index
    %c0_12 = arith.constant 0 : index
    %26 = vector.load %arg3[%c0_11, %c0_12] : memref<1x128xf32, #tpu.memory_space<vmem>>, vector<1x128xf32>
    %27 = vector.broadcast %26 : vector<1x128xf32> to vector<8x128xf32>
    %28 = arith.mulf %25, %27 : vector<8x128xf32>
    %c0_13 = arith.constant 0 : index
    %c0_14 = arith.constant 0 : index
    %29 = vector.load %arg4[%c0_13, %c0_14] : memref<1x128xf32, #tpu.memory_space<vmem>>, vector<1x128xf32>
    %30 = vector.broadcast %29 : vector<1x128xf32> to vector<8x128xf32>
    %31 = arith.addf %28, %30 : vector<8x128xf32>
    %c0_15 = arith.constant 0 : index
    %c0_16 = arith.constant 0 : index
    %32 = vector.load %arg5[%c0_15, %c0_16] : memref<8x128xf32, #tpu.memory_space<vmem>>, vector<8x128xf32>
    tpu.vector_store %arg5[%c0_15, %c0_16], %31 {strides = array<i32>} : memref<8x128xf32, #tpu.memory_space<vmem>>, vector<8x128xf32>,
    return
  }
}

module attributes {stable_mosaic.version = 11 : i64} {
  func.func @_dense_kernel(%arg0: i32, %arg1: i32, %arg2: memref<16x128xbf16, #tpu.memory_space<vmem>>, %arg3: memref<128x256xbf16, #tpu.memory_space<vmem>>, %arg4: memref<1x256xf32, #tpu.memory_space<vmem>>, %arg5: memref<16x256xf32, #tpu.memory_space<vmem>>) attributes {dimension_semantics = [#tpu.dimension_semantics<parallel>, #tpu.dimension_semantics<parallel>], iteration_bounds = array<i64: 1, 1>, scalar_prefetch = 0 : i64, scratch_operands = 0 : i64, tpu.core_type = #tpu.core_type<tc>, window_params = [{transform_indices = @transform_0, window_bounds = array<i64: 16, 128>}, {transform_indices = @transform_1, window_bounds = array<i64: 128, 256>}, {transform_indices = @transform_2, window_bounds = array<i64: 1, 256>}, {transform_indices = @transform_3, window_bounds = array<i64: 16, 256>}]} {
    %c0 = arith.constant 0 : index
    %c0_0 = arith.constant 0 : index
    %0 = vector.load %arg2[%c0, %c0_0] : memref<16x128xbf16, #tpu.memory_space<vmem>>, vector<16x128xbf16>
    %c0_1 = arith.constant 0 : index
    %c0_2 = arith.constant 0 : index
    %1 = vector.load %arg3[%c0_1, %c0_2] : memref<128x256xbf16, #tpu.memory_space<vmem>>, vector<128x256xbf16>
    %cst = arith.constant dense<0.000000e+00> : vector<16x256xf32>
    %2 = tpu.matmul %0, %1, %cst {dimension_numbers = #tpu.dot_dimension_numbers<[1], [0], [0], [1], [0, 0, 1, 1], [], []>} : vector<16x128xbf16>, vector<128x256xbf16>, vector<16x256xf32> -> vector<16x256xf32>
    %c0_3 = arith.constant 0 : index
    %c0_4 = arith.constant 0 : index
    %3 = vector.load %arg4[%c0_3, %c0_4] : memref<1x256xf32, #tpu.memory_space<vmem>>, vector<1x256xf32>
    %4 = vector.broadcast %3 : vector<1x256xf32> to vector<16x256xf32>
    %5 = arith.addf %2, %4 : vector<16x256xf32>
    %c0_5 = arith.constant 0 : index
    %c0_6 = arith.constant 0 : index
    %6 = vector.load %arg5[%c0_5, %c0_6] : memref<16x256xf32, #tpu.memory_space<vmem>>, vector<16x256xf32>
    tpu.vector_store %arg5[%c0_5, %c0_6], %5 {strides = array<i32>} : memref<16x256xf32, #tpu.memory_space<vmem>>, vector<16x256xf32>,
    return
  }
  func.func @transform_0(%arg0: i32, %arg1: i32) -> (i32, i32) {
    %c0_i32 = arith.constant 0 : i32
    %c0_i32_0 = arith.constant 0 : i32
    return %arg0, %c0_i32 : i32, i32
  }
  func.func @transform_1(%arg0: i32, %arg1: i32) -> (i32, i32) {
    %c0_i32 = arith.constant 0 : i32
    %c0_i32_0 = arith.constant 0 : i32
    return %c0_i32, %arg1 : i32, i32
  }
  func.func @transform_2(%arg0: i32, %arg1: i32) -> (i32, i32) {
    %c0_i32 = arith.constant 0 : i32
    %c0_i32_0 = arith.constant 0 : i32
    return %c0_i32, %arg1 : i32, i32
  }
  func.func @transform_3(%arg0: i32, %arg1: i32) -> (i32, i32) {
    %c0_i32 = arith.constant 0 : i32
    return %arg0, %arg1 : i32, i32
  }
}

module attributes {stable_mosaic.version = 11 : i64} {
  func.func @_decoder_layer_kernel(%arg0: memref<16x128xf32, #tpu.memory_space<vmem>>, %arg1: memref<16x128xbf16, #tpu.memory_space<vmem>>, %arg2: memref<16x128xbf16, #tpu.memory_space<vmem>>, %arg3: memref<16x8xf32, #tpu.memory_space<vmem>>, %arg4: memref<16x8xf32, #tpu.memory_space<vmem>>, %arg5: memref<128x384xbf16, #tpu.memory_space<vmem>>, %arg6: memref<1x384xf32, #tpu.memory_space<vmem>>, %arg7: memref<128x128xbf16, #tpu.memory_space<vmem>>, %arg8: memref<1x128xf32, #tpu.memory_space<vmem>>, %arg9: memref<1x128xf32, #tpu.memory_space<vmem>>, %arg10: memref<1x128xf32, #tpu.memory_space<vmem>>, %arg11: memref<128x128xbf16, #tpu.memory_space<vmem>>, %arg12: memref<1x128xf32, #tpu.memory_space<vmem>>, %arg13: memref<128x128xbf16, #tpu.memory_space<vmem>>, %arg14: memref<1x128xf32, #tpu.memory_space<vmem>>, %arg15: memref<1x128xf32, #tpu.memory_space<vmem>>, %arg16: memref<1x128xf32, #tpu.memory_space<vmem>>, %arg17: memref<128x512xbf16, #tpu.memory_space<vmem>>, %arg18: memref<1x512xf32, #tpu.memory_space<vmem>>, %arg19: memref<512x128xbf16, #tpu.memory_space<vmem>>, %arg20: memref<1x128xf32, #tpu.memory_space<vmem>>, %arg21: memref<1x128xf32, #tpu.memory_space<vmem>>, %arg22: memref<1x128xf32, #tpu.memory_space<vmem>>, %arg23: memref<16x128xf32, #tpu.memory_space<vmem>>) attributes {dimension_semantics = [], scalar_prefetch = 0 : i64, scratch_operands = 0 : i64, tpu.core_type = #tpu.core_type<tc>} {
    %c0 = arith.constant 0 : index
    %c0_0 = arith.constant 0 : index
    %0 = vector.load %arg0[%c0, %c0_0] : memref<16x128xf32, #tpu.memory_space<vmem>>, vector<16x128xf32>
    %c0_1 = arith.constant 0 : index
    %c0_2 = arith.constant 0 : index
    %1 = vector.load %arg5[%c0_1, %c0_2] : memref<128x384xbf16, #tpu.memory_space<vmem>>, vector<128x384xbf16>
    %2 = arith.truncf %0 : vector<16x128xf32> to vector<16x128xbf16>
    %cst = arith.constant dense<0.000000e+00> : vector<16x384xf32>
    %3 = tpu.matmul %2, %1, %cst {dimension_numbers = #tpu.dot_dimension_numbers<[1], [0], [0], [1], [0, 0, 1, 1], [], []>} : vector<16x128xbf16>, vector<128x384xbf16>, vector<16x384xf32> -> vector<16x384xf32>
    %c0_3 = arith.constant 0 : index
    %c0_4 = arith.constant 0 : index
    %4 = vector.load %arg6[%c0_3, %c0_4] : memref<1x384xf32, #tpu.memory_space<vmem>>, vector<1x384xf32>
    %5 = vector.broadcast %4 : vector<1x384xf32> to vector<16x384xf32>
    %6 = arith.addf %3, %5 : vector<16x384xf32>
    %7 = vector.extract_strided_slice %6 {offsets = [0, 0], sizes = [16, 128], strides = [1, 1]} : vector<16x384xf32> to vector<16x128xf32>
    %8 = vector.extract_strided_slice %6 {offsets = [0, 128], sizes = [16, 128], strides = [1, 1]} : vector<16x384xf32> to vector<16x128xf32>
    %9 = vector.extract_strided_slice %6 {offsets = [0, 256], sizes = [16, 128], strides = [1, 1]} : vector<16x384xf32> to vector<16x128xf32>
    %c0_5 = arith.constant 0 : index
    %c0_6 = arith.constant 0 : index
    %10 = vector.load %arg3[%c0_5, %c0_6] : memref<16x8xf32, #tpu.memory_space<vmem>>, vector<16x8xf32>
    %11 = vector.extract_strided_slice %7 {offsets = [0, 0], sizes = [8, 128], strides = [1, 1]} : vector<16x128xf32> to vector<8x128xf32>
    %12 = vector.extract_strided_slice %8 {offsets = [0, 0], sizes = [8, 128], strides = [1, 1]} : vector<16x128xf32> to vector<8x128xf32>
    %13 = vector.extract_strided_slice %9 {offsets = [0, 0], sizes = [8, 128], strides = [1, 1]} : vector<16x128xf32> to vector<8x128xf32>
    %14 = vector.extract_strided_slice %10 {offsets = [0, 0], sizes = [8, 8], strides = [1, 1]} : vector<16x8xf32> to vector<8x8xf32>
    %15 = vector.extract_strided_slice %11 {offsets = [0, 0], sizes = [8, 64], strides = [1, 1]} : vector<8x128xf32> to vector<8x64xf32>
    %16 = arith.truncf %15 : vector<8x64xf32> to vector<8x64xbf16>
    %17 = vector.extract_strided_slice %12 {offsets = [0, 0], sizes = [8, 64], strides = [1, 1]} : vector<8x128xf32> to vector<8x64xf32>
    %18 = arith.truncf %17 : vector<8x64xf32> to vector<8x64xbf16>
    %19 = vector.extract_strided_slice %13 {offsets = [0, 0], sizes = [8, 64], strides = [1, 1]} : vector<8x128xf32> to vector<8x64xf32>
    %20 = arith.truncf %19 : vector<8x64xf32> to vector<8x64xbf16>
    %cst_7 = arith.constant dense<0.000000e+00> : vector<8x8xf32>
    %21 = tpu.matmul %16, %18, %cst_7 {dimension_numbers = #tpu.dot_dimension_numbers<[1], [1], [0], [0], [0, 0, 1, 0], [], []>} : vector<8x64xbf16>, vector<8x64xbf16>, vector<8x8xf32> -> vector<8x8xf32>
    %22 = arith.addf %21, %14 : vector<8x8xf32>
    %cst_8 = arith.constant dense<0xFF800000> : vector<8xf32>
    %23 = vector.multi_reduction <maximumf>, %22, %cst_8 [1] : vector<8x8xf32> to vector<8xf32>
    %24 = vector.shape_cast %23 : vector<8xf32> to vector<8x1xf32>
    %25 = vector.broadcast %24 : vector<8x1xf32> to vector<8x8xf32>
    %26 = arith.subf %22, %25 : vector<8x8xf32>
    %27 = math.exp %26 : vector<8x8xf32>
    %cst_9 = arith.constant dense<0.000000e+00> : vector<8xf32>
    %28 = vector.multi_reduction <add>, %27, %cst_9 [1] : vector<8x8xf32> to vector<8xf32>
    %29 = vector.shape_cast %28 : vector<8xf32> to vector<8x1xf32>
    %30 = tpu.reciprocal %29 {approx = true} : vector<8x1xf32> -> vector<8x1xf32>
    %31 = vector.broadcast %30 : vector<8x1xf32> to vector<8x8xf32>
    %32 = arith.mulf %27, %31 : vector<8x8xf32>
    %33 = arith.truncf %32 : vector<8x8xf32> to vector<8x8xbf16>
    %cst_10 = arith.constant dense<0.000000e+00> : vector<8x64xf32>
    %34 = tpu.matmul %33, %20, %cst_10 {dimension_numbers = #tpu.dot_dimension_numbers<[1], [0], [0], [1], [0, 0, 1, 1], [], []>} : vector<8x8xbf16>, vector<8x64xbf16>, vector<8x64xf32> -> vector<8x64xf32>
    %35 = vector.extract_strided_slice %11 {offsets = [0, 64], sizes = [8, 64], strides = [1, 1]} : vector<8x128xf32> to vector<8x64xf32>
    %36 = arith.truncf %35 : vector<8x64xf32> to vector<8x64xbf16>
    %37 = vector.extract_strided_slice %12 {offsets = [0, 64], sizes = [8, 64], strides = [1, 1]} : vector<8x128xf32> to vector<8x64xf32>
    %38 = arith.truncf %37 : vector<8x64xf32> to vector<8x64xbf16>
    %39 = vector.extract_strided_slice %13 {offsets = [0, 64], sizes = [8, 64], strides = [1, 1]} : vector<8x128xf32> to vector<8x64xf32>
    %40 = arith.truncf %39 : vector<8x64xf32> to vector<8x64xbf16>
    %cst_11 = arith.constant dense<0.000000e+00> : vector<8x8xf32>
    %41 = tpu.matmul %36, %38, %cst_11 {dimension_numbers = #tpu.dot_dimension_numbers<[1], [1], [0], [0], [0, 0, 1, 0], [], []>} : vector<8x64xbf16>, vector<8x64xbf16>, vector<8x8xf32> -> vector<8x8xf32>
    %42 = arith.addf %41, %14 : vector<8x8xf32>
    %cst_12 = arith.constant dense<0xFF800000> : vector<8xf32>
    %43 = vector.multi_reduction <maximumf>, %42, %cst_12 [1] : vector<8x8xf32> to vector<8xf32>
    %44 = vector.shape_cast %43 : vector<8xf32> to vector<8x1xf32>
    %45 = vector.broadcast %44 : vector<8x1xf32> to vector<8x8xf32>
    %46 = arith.subf %42, %45 : vector<8x8xf32>
    %47 = math.exp %46 : vector<8x8xf32>
    %cst_13 = arith.constant dense<0.000000e+00> : vector<8xf32>
    %48 = vector.multi_reduction <add>, %47, %cst_13 [1] : vector<8x8xf32> to vector<8xf32>
    %49 = vector.shape_cast %48 : vector<8xf32> to vector<8x1xf32>
    %50 = tpu.reciprocal %49 {approx = true} : vector<8x1xf32> -> vector<8x1xf32>
    %51 = vector.broadcast %50 : vector<8x1xf32> to vector<8x8xf32>
    %52 = arith.mulf %47, %51 : vector<8x8xf32>
    %53 = arith.truncf %52 : vector<8x8xf32> to vector<8x8xbf16>
    %cst_14 = arith.constant dense<0.000000e+00> : vector<8x64xf32>
    %54 = tpu.matmul %53, %40, %cst_14 {dimension_numbers = #tpu.dot_dimension_numbers<[1], [0], [0], [1], [0, 0, 1, 1], [], []>} : vector<8x8xbf16>, vector<8x64xbf16>, vector<8x64xf32> -> vector<8x64xf32>
    %55 = tpu.concatenate %34, %54 in 1 : vector<8x64xf32>, vector<8x64xf32> -> vector<8x128xf32>
    %56 = vector.extract_strided_slice %7 {offsets = [8, 0], sizes = [8, 128], strides = [1, 1]} : vector<16x128xf32> to vector<8x128xf32>
    %57 = vector.extract_strided_slice %8 {offsets = [8, 0], sizes = [8, 128], strides = [1, 1]} : vector<16x128xf32> to vector<8x128xf32>
    %58 = vector.extract_strided_slice %9 {offsets = [8, 0], sizes = [8, 128], strides = [1, 1]} : vector<16x128xf32> to vector<8x128xf32>
    %59 = vector.extract_strided_slice %10 {offsets = [8, 0], sizes = [8, 8], strides = [1, 1]} : vector<16x8xf32> to vector<8x8xf32>
    %60 = vector.extract_strided_slice %56 {offsets = [0, 0], sizes = [8, 64], strides = [1, 1]} : vector<8x128xf32> to vector<8x64xf32>
    %61 = arith.truncf %60 : vector<8x64xf32> to vector<8x64xbf16>
    %62 = vector.extract_strided_slice %57 {offsets = [0, 0], sizes = [8, 64], strides = [1, 1]} : vector<8x128xf32> to vector<8x64xf32>
    %63 = arith.truncf %62 : vector<8x64xf32> to vector<8x64xbf16>
    %64 = vector.extract_strided_slice %58 {offsets = [0, 0], sizes = [8, 64], strides = [1, 1]} : vector<8x128xf32> to vector<8x64xf32>
    %65 = arith.truncf %64 : vector<8x64xf32> to vector<8x64xbf16>
    %cst_15 = arith.constant dense<0.000000e+00> : vector<8x8xf32>
    %66 = tpu.matmul %61, %63, %cst_15 {dimension_numbers = #tpu.dot_dimension_numbers<[1], [1], [0], [0], [0, 0, 1, 0], [], []>} : vector<8x64xbf16>, vector<8x64xbf16>, vector<8x8xf32> -> vector<8x8xf32>
    %67 = arith.addf %66, %59 : vector<8x8xf32>
    %cst_16 = arith.constant dense<0xFF800000> : vector<8xf32>
    %68 = vector.multi_reduction <maximumf>, %67, %cst_16 [1] : vector<8x8xf32> to vector<8xf32>
    %69 = vector.shape_cast %68 : vector<8xf32> to vector<8x1xf32>
    %70 = vector.broadcast %69 : vector<8x1xf32> to vector<8x8xf32>
    %71 = arith.subf %67, %70 : vector<8x8xf32>
    %72 = math.exp %71 : vector<8x8xf32>
    %cst_17 = arith.constant dense<0.000000e+00> : vector<8xf32>
    %73 = vector.multi_reduction <add>, %72, %cst_17 [1] : vector<8x8xf32> to vector<8xf32>
    %74 = vector.shape_cast %73 : vector<8xf32> to vector<8x1xf32>
    %75 = tpu.reciprocal %74 {approx = true} : vector<8x1xf32> -> vector<8x1xf32>
    %76 = vector.broadcast %75 : vector<8x1xf32> to vector<8x8xf32>
    %77 = arith.mulf %72, %76 : vector<8x8xf32>
    %78 = arith.truncf %77 : vector<8x8xf32> to vector<8x8xbf16>
    %cst_18 = arith.constant dense<0.000000e+00> : vector<8x64xf32>
    %79 = tpu.matmul %78, %65, %cst_18 {dimension_numbers = #tpu.dot_dimension_numbers<[1], [0], [0], [1], [0, 0, 1, 1], [], []>} : vector<8x8xbf16>, vector<8x64xbf16>, vector<8x64xf32> -> vector<8x64xf32>
    %80 = vector.extract_strided_slice %56 {offsets = [0, 64], sizes = [8, 64], strides = [1, 1]} : vector<8x128xf32> to vector<8x64xf32>
    %81 = arith.truncf %80 : vector<8x64xf32> to vector<8x64xbf16>
    %82 = vector.extract_strided_slice %57 {offsets = [0, 64], sizes = [8, 64], strides = [1, 1]} : vector<8x128xf32> to vector<8x64xf32>
    %83 = arith.truncf %82 : vector<8x64xf32> to vector<8x64xbf16>
    %84 = vector.extract_strided_slice %58 {offsets = [0, 64], sizes = [8, 64], strides = [1, 1]} : vector<8x128xf32> to vector<8x64xf32>
    %85 = arith.truncf %84 : vector<8x64xf32> to vector<8x64xbf16>
    %cst_19 = arith.constant dense<0.000000e+00> : vector<8x8xf32>
    %86 = tpu.matmul %81, %83, %cst_19 {dimension_numbers = #tpu.dot_dimension_numbers<[1], [1], [0], [0], [0, 0, 1, 0], [], []>} : vector<8x64xbf16>, vector<8x64xbf16>, vector<8x8xf32> -> vector<8x8xf32>
    %87 = arith.addf %86, %59 : vector<8x8xf32>
    %cst_20 = arith.constant dense<0xFF800000> : vector<8xf32>
    %88 = vector.multi_reduction <maximumf>, %87, %cst_20 [1] : vector<8x8xf32> to vector<8xf32>
    %89 = vector.shape_cast %88 : vector<8xf32> to vector<8x1xf32>
    %90 = vector.broadcast %89 : vector<8x1xf32> to vector<8x8xf32>
    %91 = arith.subf %87, %90 : vector<8x8xf32>
    %92 = math.exp %91 : vector<8x8xf32>
    %cst_21 = arith.constant dense<0.000000e+00> : vector<8xf32>
    %93 = vector.multi_reduction <add>, %92, %cst_21 [1] : vector<8x8xf32> to vector<8xf32>
    %94 = vector.shape_cast %93 : vector<8xf32> to vector<8x1xf32>
    %95 = tpu.reciprocal %94 {approx = true} : vector<8x1xf32> -> vector<8x1xf32>
    %96 = vector.broadcast %95 : vector<8x1xf32> to vector<8x8xf32>
    %97 = arith.mulf %92, %96 : vector<8x8xf32>
    %98 = arith.truncf %97 : vector<8x8xf32> to vector<8x8xbf16>
    %cst_22 = arith.constant dense<0.000000e+00> : vector<8x64xf32>
    %99 = tpu.matmul %98, %85, %cst_22 {dimension_numbers = #tpu.dot_dimension_numbers<[1], [0], [0], [1], [0, 0, 1, 1], [], []>} : vector<8x8xbf16>, vector<8x64xbf16>, vector<8x64xf32> -> vector<8x64xf32>
    %100 = tpu.concatenate %79, %99 in 1 : vector<8x64xf32>, vector<8x64xf32> -> vector<8x128xf32>
    %101 = tpu.concatenate %55, %100 in 0 : vector<8x128xf32>, vector<8x128xf32> -> vector<16x128xf32>
    %c0_23 = arith.constant 0 : index
    %c0_24 = arith.constant 0 : index
    %102 = vector.load %arg7[%c0_23, %c0_24] : memref<128x128xbf16, #tpu.memory_space<vmem>>, vector<128x128xbf16>
    %103 = arith.truncf %101 : vector<16x128xf32> to vector<16x128xbf16>
    %cst_25 = arith.constant dense<0.000000e+00> : vector<16x128xf32>
    %104 = tpu.matmul %103, %102, %cst_25 {dimension_numbers = #tpu.dot_dimension_numbers<[1], [0], [0], [1], [0, 0, 1, 1], [], []>} : vector<16x128xbf16>, vector<128x128xbf16>, vector<16x128xf32> -> vector<16x128xf32>
    %105 = arith.addf %0, %104 : vector<16x128xf32>
    %c0_26 = arith.constant 0 : index
    %c0_27 = arith.constant 0 : index
    %106 = vector.load %arg8[%c0_26, %c0_27] : memref<1x128xf32, #tpu.memory_space<vmem>>, vector<1x128xf32>
    %107 = vector.broadcast %106 : vector<1x128xf32> to vector<16x128xf32>
    %108 = arith.addf %105, %107 : vector<16x128xf32>
    %c0_28 = arith.constant 0 : index
    %c0_29 = arith.constant 0 : index
    %109 = vector.load %arg9[%c0_28, %c0_29] : memref<1x128xf32, #tpu.memory_space<vmem>>, vector<1x128xf32>
    %c0_30 = arith.constant 0 : index
    %c0_31 = arith.constant 0 : index
    %110 = vector.load %arg10[%c0_30, %c0_31] : memref<1x128xf32, #tpu.memory_space<vmem>>, vector<1x128xf32>
    %cst_32 = arith.constant dense<0.000000e+00> : vector<16xf32>
    %111 = vector.multi_reduction <add>, %108, %cst_32 [1] : vector<16x128xf32> to vector<16xf32>
    %112 = vector.shape_cast %111 : vector<16xf32> to vector<16x1xf32>
    %cst_33 = arith.constant 1.280000e+02 : f32
    %113 = vector.broadcast %cst_33 : f32 to vector<16x1xf32>
    %114 = arith.divf %112, %113 : vector<16x1xf32>
    %115 = vector.broadcast %114 : vector<16x1xf32> to vector<16x128xf32>
    %116 = arith.subf %108, %115 : vector<16x128xf32>
    %117 = arith.mulf %116, %116 : vector<16x128xf32>
    %cst_34 = arith.constant dense<0.000000e+00> : vector<16xf32>
    %118 = vector.multi_reduction <add>, %117, %cst_34 [1] : vector<16x128xf32> to vector<16xf32>
    %119 = vector.shape_cast %118 : vector<16xf32> to vector<16x1xf32>
    %cst_35 = arith.constant 1.280000e+02 : f32
    %120 = vector.broadcast %cst_35 : f32 to vector<16x1xf32>
    %121 = arith.divf %119, %120 : vector<16x1xf32>
    %122 = vector.broadcast %114 : vector<16x1xf32> to vector<16x128xf32>
    %123 = arith.subf %108, %122 : vector<16x128xf32>
    %cst_36 = arith.constant 9.99999974E-6 : f32
    %124 = vector.broadcast %cst_36 : f32 to vector<16x1xf32>
    %125 = arith.addf %121, %124 : vector<16x1xf32>
    %126 = math.rsqrt %125 : vector<16x1xf32>
    %127 = vector.broadcast %126 : vector<16x1xf32> to vector<16x128xf32>
    %128 = arith.mulf %123, %127 : vector<16x128xf32>
    %129 = vector.broadcast %109 : vector<1x128xf32> to vector<16x128xf32>
    %130 = arith.mulf %128, %129 : vector<16x128xf32>
    %131 = vector.broadcast %110 : vector<1x128xf32> to vector<16x128xf32>
    %132 = arith.addf %130, %131 : vector<16x128xf32>
    %c0_37 = arith.constant 0 : index
    %c0_38 = arith.constant 0 : index
    %133 = vector.load %arg11[%c0_37, %c0_38] : memref<128x128xbf16, #tpu.memory_space<vmem>>, vector<128x128xbf16>
    %134 = arith.truncf %132 : vector<16x128xf32> to vector<16x128xbf16>
    %cst_39 = arith.constant dense<0.000000e+00> : vector<16x128xf32>
    %135 = tpu.matmul %134, %133, %cst_39 {dimension_numbers = #tpu.dot_dimension_numbers<[1], [0], [0], [1], [0, 0, 1, 1], [], []>} : vector<16x128xbf16>, vector<128x128xbf16>, vector<16x128xf32> -> vector<16x128xf32>
    %c0_40 = arith.constant 0 : index
    %c0_41 = arith.constant 0 : index
    %136 = vector.load %arg12[%c0_40, %c0_41] : memref<1x128xf32, #tpu.memory_space<vmem>>, vector<1x128xf32>
    %137 = vector.broadcast %136 : vector<1x128xf32> to vector<16x128xf32>
    %138 = arith.addf %135, %137 : vector<16x128xf32>
    %c0_42 = arith.constant 0 : index
    %c0_43 = arith.constant 0 : index
    %139 = vector.load %arg1[%c0_42, %c0_43] : memref<16x128xbf16, #tpu.memory_space<vmem>>, vector<16x128xbf16>
    %c0_44 = arith.constant 0 : index
    %c0_45 = arith.constant 0 : index
    %140 = vector.load %arg2[%c0_44, %c0_45] : memref<16x128xbf16, #tpu.memory_space<vmem>>, vector<16x128xbf16>
    %c0_46 = arith.constant 0 : index
    %c0_47 = arith.constant 0 : index
    %141 = vector.load %arg4[%c0_46, %c0_47] : memref<16x8xf32, #tpu.memory_space<vmem>>, vector<16x8xf32>
    %142 = vector.extract_strided_slice %138 {offsets = [0, 0], sizes = [8, 128], strides = [1, 1]} : vector<16x128xf32> to vector<8x128xf32>
    %143 = vector.extract_strided_slice %139 {offsets = [0, 0], sizes = [8, 128], strides = [1, 1]} : vector<16x128xbf16> to vector<8x128xbf16>
    %144 = vector.extract_strided_slice %140 {offsets = [0, 0], sizes = [8, 128], strides = [1, 1]} : vector<16x128xbf16> to vector<8x128xbf16>
    %145 = vector.extract_strided_slice %141 {offsets = [0, 0], sizes = [8, 8], strides = [1, 1]} : vector<16x8xf32> to vector<8x8xf32>
    %146 = vector.extract_strided_slice %142 {offsets = [0, 0], sizes = [8, 64], strides = [1, 1]} : vector<8x128xf32> to vector<8x64xf32>
    %147 = arith.truncf %146 : vector<8x64xf32> to vector<8x64xbf16>
    %148 = vector.extract_strided_slice %143 {offsets = [0, 0], sizes = [8, 64], strides = [1, 1]} : vector<8x128xbf16> to vector<8x64xbf16>
    %149 = vector.extract_strided_slice %144 {offsets = [0, 0], sizes = [8, 64], strides = [1, 1]} : vector<8x128xbf16> to vector<8x64xbf16>
    %cst_48 = arith.constant dense<0.000000e+00> : vector<8x8xf32>
    %150 = tpu.matmul %147, %148, %cst_48 {dimension_numbers = #tpu.dot_dimension_numbers<[1], [1], [0], [0], [0, 0, 1, 0], [], []>} : vector<8x64xbf16>, vector<8x64xbf16>, vector<8x8xf32> -> vector<8x8xf32>
    %151 = arith.addf %150, %145 : vector<8x8xf32>
    %cst_49 = arith.constant dense<0xFF800000> : vector<8xf32>
    %152 = vector.multi_reduction <maximumf>, %151, %cst_49 [1] : vector<8x8xf32> to vector<8xf32>
    %153 = vector.shape_cast %152 : vector<8xf32> to vector<8x1xf32>
    %154 = vector.broadcast %153 : vector<8x1xf32> to vector<8x8xf32>
    %155 = arith.subf %151, %154 : vector<8x8xf32>
    %156 = math.exp %155 : vector<8x8xf32>
    %cst_50 = arith.constant dense<0.000000e+00> : vector<8xf32>
    %157 = vector.multi_reduction <add>, %156, %cst_50 [1] : vector<8x8xf32> to vector<8xf32>
    %158 = vector.shape_cast %157 : vector<8xf32> to vector<8x1xf32>
    %159 = tpu.reciprocal %158 {approx = true} : vector<8x1xf32> -> vector<8x1xf32>
    %160 = vector.broadcast %159 : vector<8x1xf32> to vector<8x8xf32>
    %161 = arith.mulf %156, %160 : vector<8x8xf32>
    %162 = arith.truncf %161 : vector<8x8xf32> to vector<8x8xbf16>
    %cst_51 = arith.constant dense<0.000000e+00> : vector<8x64xf32>
    %163 = tpu.matmul %162, %149, %cst_51 {dimension_numbers = #tpu.dot_dimension_numbers<[1], [0], [0], [1], [0, 0, 1, 1], [], []>} : vector<8x8xbf16>, vector<8x64xbf16>, vector<8x64xf32> -> vector<8x64xf32>
    %164 = vector.extract_strided_slice %142 {offsets = [0, 64], sizes = [8, 64], strides = [1, 1]} : vector<8x128xf32> to vector<8x64xf32>
    %165 = arith.truncf %164 : vector<8x64xf32> to vector<8x64xbf16>
    %166 = vector.extract_strided_slice %143 {offsets = [0, 64], sizes = [8, 64], strides = [1, 1]} : vector<8x128xbf16> to vector<8x64xbf16>
    %167 = vector.extract_strided_slice %144 {offsets = [0, 64], sizes = [8, 64], strides = [1, 1]} : vector<8x128xbf16> to vector<8x64xbf16>
    %cst_52 = arith.constant dense<0.000000e+00> : vector<8x8xf32>
    %168 = tpu.matmul %165, %166, %cst_52 {dimension_numbers = #tpu.dot_dimension_numbers<[1], [1], [0], [0], [0, 0, 1, 0], [], []>} : vector<8x64xbf16>, vector<8x64xbf16>, vector<8x8xf32> -> vector<8x8xf32>
    %169 = arith.addf %168, %145 : vector<8x8xf32>
    %cst_53 = arith.constant dense<0xFF800000> : vector<8xf32>
    %170 = vector.multi_reduction <maximumf>, %169, %cst_53 [1] : vector<8x8xf32> to vector<8xf32>
    %171 = vector.shape_cast %170 : vector<8xf32> to vector<8x1xf32>
    %172 = vector.broadcast %171 : vector<8x1xf32> to vector<8x8xf32>
    %173 = arith.subf %169, %172 : vector<8x8xf32>
    %174 = math.exp %173 : vector<8x8xf32>
    %cst_54 = arith.constant dense<0.000000e+00> : vector<8xf32>
    %175 = vector.multi_reduction <add>, %174, %cst_54 [1] : vector<8x8xf32> to vector<8xf32>
    %176 = vector.shape_cast %175 : vector<8xf32> to vector<8x1xf32>
    %177 = tpu.reciprocal %176 {approx = true} : vector<8x1xf32> -> vector<8x1xf32>
    %178 = vector.broadcast %177 : vector<8x1xf32> to vector<8x8xf32>
    %179 = arith.mulf %174, %178 : vector<8x8xf32>
    %180 = arith.truncf %179 : vector<8x8xf32> to vector<8x8xbf16>
    %cst_55 = arith.constant dense<0.000000e+00> : vector<8x64xf32>
    %181 = tpu.matmul %180, %167, %cst_55 {dimension_numbers = #tpu.dot_dimension_numbers<[1], [0], [0], [1], [0, 0, 1, 1], [], []>} : vector<8x8xbf16>, vector<8x64xbf16>, vector<8x64xf32> -> vector<8x64xf32>
    %182 = tpu.concatenate %163, %181 in 1 : vector<8x64xf32>, vector<8x64xf32> -> vector<8x128xf32>
    %183 = vector.extract_strided_slice %138 {offsets = [8, 0], sizes = [8, 128], strides = [1, 1]} : vector<16x128xf32> to vector<8x128xf32>
    %184 = vector.extract_strided_slice %139 {offsets = [8, 0], sizes = [8, 128], strides = [1, 1]} : vector<16x128xbf16> to vector<8x128xbf16>
    %185 = vector.extract_strided_slice %140 {offsets = [8, 0], sizes = [8, 128], strides = [1, 1]} : vector<16x128xbf16> to vector<8x128xbf16>
    %186 = vector.extract_strided_slice %141 {offsets = [8, 0], sizes = [8, 8], strides = [1, 1]} : vector<16x8xf32> to vector<8x8xf32>
    %187 = vector.extract_strided_slice %183 {offsets = [0, 0], sizes = [8, 64], strides = [1, 1]} : vector<8x128xf32> to vector<8x64xf32>
    %188 = arith.truncf %187 : vector<8x64xf32> to vector<8x64xbf16>
    %189 = vector.extract_strided_slice %184 {offsets = [0, 0], sizes = [8, 64], strides = [1, 1]} : vector<8x128xbf16> to vector<8x64xbf16>
    %190 = vector.extract_strided_slice %185 {offsets = [0, 0], sizes = [8, 64], strides = [1, 1]} : vector<8x128xbf16> to vector<8x64xbf16>
    %cst_56 = arith.constant dense<0.000000e+00> : vector<8x8xf32>
    %191 = tpu.matmul %188, %189, %cst_56 {dimension_numbers = #tpu.dot_dimension_numbers<[1], [1], [0], [0], [0, 0, 1, 0], [], []>} : vector<8x64xbf16>, vector<8x64xbf16>, vector<8x8xf32> -> vector<8x8xf32>
    %192 = arith.addf %191, %186 : vector<8x8xf32>
    %cst_57 = arith.constant dense<0xFF800000> : vector<8xf32>
    %193 = vector.multi_reduction <maximumf>, %192, %cst_57 [1] : vector<8x8xf32> to vector<8xf32>
    %194 = vector.shape_cast %193 : vector<8xf32> to vector<8x1xf32>
    %195 = vector.broadcast %194 : vector<8x1xf32> to vector<8x8xf32>
    %196 = arith.subf %192, %195 : vector<8x8xf32>
    %197 = math.exp %196 : vector<8x8xf32>
    %cst_58 = arith.constant dense<0.000000e+00> : vector<8xf32>
    %198 = vector.multi_reduction <add>, %197, %cst_58 [1] : vector<8x8xf32> to vector<8xf32>
    %199 = vector.shape_cast %198 : vector<8xf32> to vector<8x1xf32>
    %200 = tpu.reciprocal %199 {approx = true} : vector<8x1xf32> -> vector<8x1xf32>
    %201 = vector.broadcast %200 : vector<8x1xf32> to vector<8x8xf32>
    %202 = arith.mulf %197, %201 : vector<8x8xf32>
    %203 = arith.truncf %202 : vector<8x8xf32> to vector<8x8xbf16>
    %cst_59 = arith.constant dense<0.000000e+00> : vector<8x64xf32>
    %204 = tpu.matmul %203, %190, %cst_59 {dimension_numbers = #tpu.dot_dimension_numbers<[1], [0], [0], [1], [0, 0, 1, 1], [], []>} : vector<8x8xbf16>, vector<8x64xbf16>, vector<8x64xf32> -> vector<8x64xf32>
    %205 = vector.extract_strided_slice %183 {offsets = [0, 64], sizes = [8, 64], strides = [1, 1]} : vector<8x128xf32> to vector<8x64xf32>
    %206 = arith.truncf %205 : vector<8x64xf32> to vector<8x64xbf16>
    %207 = vector.extract_strided_slice %184 {offsets = [0, 64], sizes = [8, 64], strides = [1, 1]} : vector<8x128xbf16> to vector<8x64xbf16>
    %208 = vector.extract_strided_slice %185 {offsets = [0, 64], sizes = [8, 64], strides = [1, 1]} : vector<8x128xbf16> to vector<8x64xbf16>
    %cst_60 = arith.constant dense<0.000000e+00> : vector<8x8xf32>
    %209 = tpu.matmul %206, %207, %cst_60 {dimension_numbers = #tpu.dot_dimension_numbers<[1], [1], [0], [0], [0, 0, 1, 0], [], []>} : vector<8x64xbf16>, vector<8x64xbf16>, vector<8x8xf32> -> vector<8x8xf32>
    %210 = arith.addf %209, %186 : vector<8x8xf32>
    %cst_61 = arith.constant dense<0xFF800000> : vector<8xf32>
    %211 = vector.multi_reduction <maximumf>, %210, %cst_61 [1] : vector<8x8xf32> to vector<8xf32>
    %212 = vector.shape_cast %211 : vector<8xf32> to vector<8x1xf32>
    %213 = vector.broadcast %212 : vector<8x1xf32> to vector<8x8xf32>
    %214 = arith.subf %210, %213 : vector<8x8xf32>
    %215 = math.exp %214 : vector<8x8xf32>
    %cst_62 = arith.constant dense<0.000000e+00> : vector<8xf32>
    %216 = vector.multi_reduction <add>, %215, %cst_62 [1] : vector<8x8xf32> to vector<8xf32>
    %217 = vector.shape_cast %216 : vector<8xf32> to vector<8x1xf32>
    %218 = tpu.reciprocal %217 {approx = true} : vector<8x1xf32> -> vector<8x1xf32>
    %219 = vector.broadcast %218 : vector<8x1xf32> to vector<8x8xf32>
    %220 = arith.mulf %215, %219 : vector<8x8xf32>
    %221 = arith.truncf %220 : vector<8x8xf32> to vector<8x8xbf16>
    %cst_63 = arith.constant dense<0.000000e+00> : vector<8x64xf32>
    %222 = tpu.matmul %221, %208, %cst_63 {dimension_numbers = #tpu.dot_dimension_numbers<[1], [0], [0], [1], [0, 0, 1, 1], [], []>} : vector<8x8xbf16>, vector<8x64xbf16>, vector<8x64xf32> -> vector<8x64xf32>
    %223 = tpu.concatenate %204, %222 in 1 : vector<8x64xf32>, vector<8x64xf32> -> vector<8x128xf32>
    %224 = tpu.concatenate %182, %223 in 0 : vector<8x128xf32>, vector<8x128xf32> -> vector<16x128xf32>
    %c0_64 = arith.constant 0 : index
    %c0_65 = arith.constant 0 : index
    %225 = vector.load %arg13[%c0_64, %c0_65] : memref<128x128xbf16, #tpu.memory_space<vmem>>, vector<128x128xbf16>
    %226 = arith.truncf %224 : vector<16x128xf32> to vector<16x128xbf16>
    %cst_66 = arith.constant dense<0.000000e+00> : vector<16x128xf32>
    %227 = tpu.matmul %226, %225, %cst_66 {dimension_numbers = #tpu.dot_dimension_numbers<[1], [0], [0], [1], [0, 0, 1, 1], [], []>} : vector<16x128xbf16>, vector<128x128xbf16>, vector<16x128xf32> -> vector<16x128xf32>
    %228 = arith.addf %132, %227 : vector<16x128xf32>
    %c0_67 = arith.constant 0 : index
    %c0_68 = arith.constant 0 : index
    %229 = vector.load %arg14[%c0_67, %c0_68] : memref<1x128xf32, #tpu.memory_space<vmem>>, vector<1x128xf32>
    %230 = vector.broadcast %229 : vector<1x128xf32> to vector<16x128xf32>
    %231 = arith.addf %228, %230 : vector<16x128xf32>
    %c0_69 = arith.constant 0 : index
    %c0_70 = arith.constant 0 : index
    %232 = vector.load %arg15[%c0_69, %c0_70] : memref<1x128xf32, #tpu.memory_space<vmem>>, vector<1x128xf32>
    %c0_71 = arith.constant 0 : index
    %c0_72 = arith.constant 0 : index
    %233 = vector.load %arg16[%c0_71, %c0_72] : memref<1x128xf32, #tpu.memory_space<vmem>>, vector<1x128xf32>
    %cst_73 = arith.constant dense<0.000000e+00> : vector<16xf32>
    %234 = vector.multi_reduction <add>, %231, %cst_73 [1] : vector<16x128xf32> to vector<16xf32>
    %235 = vector.shape_cast %234 : vector<16xf32> to vector<16x1xf32>
    %cst_74 = arith.constant 1.280000e+02 : f32
    %236 = vector.broadcast %cst_74 : f32 to vector<16x1xf32>
    %237 = arith.divf %235, %236 : vector<16x1xf32>
    %238 = vector.broadcast %237 : vector<16x1xf32> to vector<16x128xf32>
    %239 = arith.subf %231, %238 : vector<16x128xf32>
    %240 = arith.mulf %239, %239 : vector<16x128xf32>
    %cst_75 = arith.constant dense<0.000000e+00> : vector<16xf32>
    %241 = vector.multi_reduction <add>, %240, %cst_75 [1] : vector<16x128xf32> to vector<16xf32>
    %242 = vector.shape_cast %241 : vector<16xf32> to vector<16x1xf32>
    %cst_76 = arith.constant 1.280000e+02 : f32
    %243 = vector.broadcast %cst_76 : f32 to vector<16x1xf32>
    %244 = arith.divf %242, %243 : vector<16x1xf32>
    %245 = vector.broadcast %237 : vector<16x1xf32> to vector<16x128xf32>
    %246 = arith.subf %231, %245 : vector<16x128xf32>
    %cst_77 = arith.constant 9.99999974E-6 : f32
    %247 = vector.broadcast %cst_77 : f32 to vector<16x1xf32>
    %248 = arith.addf %244, %247 : vector<16x1xf32>
    %249 = math.rsqrt %248 : vector<16x1xf32>
    %250 = vector.broadcast %249 : vector<16x1xf32> to vector<16x128xf32>
    %251 = arith.mulf %246, %250 : vector<16x128xf32>
    %252 = vector.broadcast %232 : vector<1x128xf32> to vector<16x128xf32>
    %253 = arith.mulf %251, %252 : vector<16x128xf32>
    %254 = vector.broadcast %233 : vector<1x128xf32> to vector<16x128xf32>
    %255 = arith.addf %253, %254 : vector<16x128xf32>
    %c0_78 = arith.constant 0 : index
    %c0_79 = arith.constant 0 : index
    %256 = vector.load %arg17[%c0_78, %c0_79] : memref<128x512xbf16, #tpu.memory_space<vmem>>, vector<128x512xbf16>
    %257 = arith.truncf %255 : vector<16x128xf32> to vector<16x128xbf16>
    %cst_80 = arith.constant dense<0.000000e+00> : vector<16x512xf32>
    %258 = tpu.matmul %257, %256, %cst_80 {dimension_numbers = #tpu.dot_dimension_numbers<[1], [0], [0], [1], [0, 0, 1, 1], [], []>} : vector<16x128xbf16>, vector<128x512xbf16>, vector<16x512xf32> -> vector<16x512xf32>
    %c0_81 = arith.constant 0 : index
    %c0_82 = arith.constant 0 : index
    %259 = vector.load %arg18[%c0_81, %c0_82] : memref<1x512xf32, #tpu.memory_space<vmem>>, vector<1x512xf32>
    %260 = vector.broadcast %259 : vector<1x512xf32> to vector<16x512xf32>
    %261 = arith.addf %258, %260 : vector<16x512xf32>
    %cst_83 = arith.constant 0.000000e+00 : f32
    %262 = vector.broadcast %cst_83 : f32 to vector<16x512xf32>
    %263 = arith.maximumf %261, %262 : vector<16x512xf32>
    %c0_84 = arith.constant 0 : index
    %c0_85 = arith.constant 0 : index
    %264 = vector.load %arg19[%c0_84, %c0_85] : memref<512x128xbf16, #tpu.memory_space<vmem>>, vector<512x128xbf16>
    %265 = arith.truncf %263 : vector<16x512xf32> to vector<16x512xbf16>
    %cst_86 = arith.constant dense<0.000000e+00> : vector<16x128xf32>
    %266 = tpu.matmul %265, %264, %cst_86 {dimension_numbers = #tpu.dot_dimension_numbers<[1], [0], [0], [1], [0, 0, 1, 1], [], []>} : vector<16x512xbf16>, vector<512x128xbf16>, vector<16x128xf32> -> vector<16x128xf32>
    %267 = arith.addf %255, %266 : vector<16x128xf32>
    %c0_87 = arith.constant 0 : index
    %c0_88 = arith.constant 0 : index
    %268 = vector.load %arg20[%c0_87, %c0_88] : memref<1x128xf32, #tpu.memory_space<vmem>>, vector<1x128xf32>
    %269 = vector.broadcast %268 : vector<1x128xf32> to vector<16x128xf32>
    %270 = arith.addf %267, %269 : vector<16x128xf32>
    %c0_89 = arith.constant 0 : index
    %c0_90 = arith.constant 0 : index
    %271 = vector.load %arg21[%c0_89, %c0_90] : memref<1x128xf32, #tpu.memory_space<vmem>>, vector<1x128xf32>
    %c0_91 = arith.constant 0 : index
    %c0_92 = arith.constant 0 : index
    %272 = vector.load %arg22[%c0_91, %c0_92] : memref<1x128xf32, #tpu.memory_space<vmem>>, vector<1x128xf32>
    %cst_93 = arith.constant dense<0.000000e+00> : vector<16xf32>
    %273 = vector.multi_reduction <add>, %270, %cst_93 [1] : vector<16x128xf32> to vector<16xf32>
    %274 = vector.shape_cast %273 : vector<16xf32> to vector<16x1xf32>
    %cst_94 = arith.constant 1.280000e+02 : f32
    %275 = vector.broadcast %cst_94 : f32 to vector<16x1xf32>
    %276 = arith.divf %274, %275 : vector<16x1xf32>
    %277 = vector.broadcast %276 : vector<16x1xf32> to vector<16x128xf32>
    %278 = arith.subf %270, %277 : vector<16x128xf32>
    %279 = arith.mulf %278, %278 : vector<16x128xf32>
    %cst_95 = arith.constant dense<0.000000e+00> : vector<16xf32>
    %280 = vector.multi_reduction <add>, %279, %cst_95 [1] : vector<16x128xf32> to vector<16xf32>
    %281 = vector.shape_cast %280 : vector<16xf32> to vector<16x1xf32>
    %cst_96 = arith.constant 1.280000e+02 : f32
    %282 = vector.broadcast %cst_96 : f32 to vector<16x1xf32>
    %283 = arith.divf %281, %282 : vector<16x1xf32>
    %284 = vector.broadcast %276 : vector<16x1xf32> to vector<16x128xf32>
    %285 = arith.subf %270, %284 : vector<16x128xf32>
    %cst_97 = arith.constant 9.99999974E-6 : f32
    %286 = vector.broadcast %cst_97 : f32 to vector<16x1xf32>
    %287 = arith.addf %283, %286 : vector<16x1xf32>
    %288 = math.rsqrt %287 : vector<16x1xf32>
    %289 = vector.broadcast %288 : vector<16x1xf32> to vector<16x128xf32>
    %290 = arith.mulf %285, %289 : vector<16x128xf32>
    %291 = vector.broadcast %271 : vector<1x128xf32> to vector<16x128xf32>
    %292 = arith.mulf %290, %291 : vector<16x128xf32>
    %293 = vector.broadcast %272 : vector<1x128xf32> to vector<16x128xf32>
    %294 = arith.addf %292, %293 : vector<16x128xf32>
    %c0_98 = arith.constant 0 : index
    %c0_99 = arith.constant 0 : index
    %295 = vector.load %arg23[%c0_98, %c0_99] : memref<16x128xf32, #tpu.memory_space<vmem>>, vector<16x128xf32>
    tpu.vector_store %arg23[%c0_98, %c0_99], %294 {strides = array<i32>} : memref<16x128xf32, #tpu.memory_space<vmem>>, vector<16x128xf32>,
    return
  }
}

module attributes {stable_mosaic.version = 11 : i64} {
  func.func @_dense_kernel(%arg0: i32, %arg1: i32, %arg2: memref<16x128xbf16, #tpu.memory_space<vmem>>, %arg3: memref<128x128xbf16, #tpu.memory_space<vmem>>, %arg4: memref<1x128xf32, #tpu.memory_space<vmem>>, %arg5: memref<16x128xf32, #tpu.memory_space<vmem>>) attributes {dimension_semantics = [#tpu.dimension_semantics<parallel>, #tpu.dimension_semantics<parallel>], iteration_bounds = array<i64: 1, 1>, scalar_prefetch = 0 : i64, scratch_operands = 0 : i64, tpu.core_type = #tpu.core_type<tc>, window_params = [{transform_indices = @transform_0, window_bounds = array<i64: 16, 128>}, {transform_indices = @transform_1, window_bounds = array<i64: 128, 128>}, {transform_indices = @transform_2, window_bounds = array<i64: 1, 128>}, {transform_indices = @transform_3, window_bounds = array<i64: 16, 128>}]} {
    %c0 = arith.constant 0 : index
    %c0_0 = arith.constant 0 : index
    %0 = vector.load %arg2[%c0, %c0_0] : memref<16x128xbf16, #tpu.memory_space<vmem>>, vector<16x128xbf16>
    %c0_1 = arith.constant 0 : index
    %c0_2 = arith.constant 0 : index
    %1 = vector.load %arg3[%c0_1, %c0_2] : memref<128x128xbf16, #tpu.memory_space<vmem>>, vector<128x128xbf16>
    %cst = arith.constant dense<0.000000e+00> : vector<16x128xf32>
    %2 = tpu.matmul %0, %1, %cst {dimension_numbers = #tpu.dot_dimension_numbers<[1], [0], [0], [1], [0, 0, 1, 1], [], []>} : vector<16x128xbf16>, vector<128x128xbf16>, vector<16x128xf32> -> vector<16x128xf32>
    %c0_3 = arith.constant 0 : index
    %c0_4 = arith.constant 0 : index
    %3 = vector.load %arg4[%c0_3, %c0_4] : memref<1x128xf32, #tpu.memory_space<vmem>>, vector<1x128xf32>
    %4 = vector.broadcast %3 : vector<1x128xf32> to vector<16x128xf32>
    %5 = arith.addf %2, %4 : vector<16x128xf32>
    %c0_5 = arith.constant 0 : index
    %c0_6 = arith.constant 0 : index
    %6 = vector.load %arg5[%c0_5, %c0_6] : memref<16x128xf32, #tpu.memory_space<vmem>>, vector<16x128xf32>
    tpu.vector_store %arg5[%c0_5, %c0_6], %5 {strides = array<i32>} : memref<16x128xf32, #tpu.memory_space<vmem>>, vector<16x128xf32>,
    return
  }
  func.func @transform_0(%arg0: i32, %arg1: i32) -> (i32, i32) {
    %c0_i32 = arith.constant 0 : i32
    %c0_i32_0 = arith.constant 0 : i32
    return %arg0, %c0_i32 : i32, i32
  }
  func.func @transform_1(%arg0: i32, %arg1: i32) -> (i32, i32) {
    %c0_i32 = arith.constant 0 : i32
    %c0_i32_0 = arith.constant 0 : i32
    return %c0_i32, %arg1 : i32, i32
  }
  func.func @transform_2(%arg0: i32, %arg1: i32) -> (i32, i32) {
    %c0_i32 = arith.constant 0 : i32
    %c0_i32_0 = arith.constant 0 : i32
    return %c0_i32, %arg1 : i32, i32
  }
  func.func @transform_3(%arg0: i32, %arg1: i32) -> (i32, i32) {
    %c0_i32 = arith.constant 0 : i32
    return %arg0, %arg1 : i32, i32
  }
}

</mosaic_0001>

<llo_original>
// kernel: eff_trm_forward.5
$region0: #{eff_trm_forward.5}
  #allocation0 [shape = 'u32[]', space=smem, size = 0x4, offset = 0x4, fixed_abs, tag = 'smem constant byte address 0x4 - core index']
  #allocation1 [shape = 'u32[144,128]{1,0:T(1,128)}', space=vmem, size = 0x12000, scoped, tag = 'internal scratch']
  %s0 = inlined_call_operand.vmem [shape: bf16[256,512], index: 0, kind: input, shape index: {}]
  %s1 = inlined_call_operand.vmem [shape: bf16[512,768], index: 1, kind: input, shape index: {}]
  %s2 = inlined_call_operand.vmem [shape: bf16[384,128], index: 2, kind: input, shape index: {}]
  %s3 = inlined_call_operand.vmem [shape: f32[256,128], index: 3, kind: output, shape index: {}]
  %s4 = sld [smem:[#allocation0]]
  $region45: #{eff_trm_forward.5} parent=0
    _
  %s6 = ssub.s32 1, %s4
  %s7 = scalar_select 0, %s6, %s4
  loop: start=0, step=1, limit=4
  $region2: #{eff_trm_forward.5} parent=0 // loop_pre_header
    _
  $region3: #{eff_trm_forward.5} parent=0 // loop_header
    %s9 = sphi 0, %s13
    %p10 = scmp.ge.s32.totalorder %s9, 4
    %s19 = sphi 0, %s21
    %s22 = sphi 0, %s19
    %s23 = sphi 0, %s22
    %s39 = sphi 0, %s23
    %s43 = sphi 0, %s43
    %s45 = sphi 0, %s43
    %s46 = sphi 0, %s45
    %s60 = sphi 0, %s46
    %s64 = sphi 0, %s64
    %s66 = sphi 0, %s64
    %s67 = sphi 0, %s66
    %s81 = sphi 0, %s67
    %s87 = sphi 0, %s89
    %s90 = sphi 0, %s87
    %s91 = sphi 0, %s90
    %s107 = sphi 0, %s91
  $region4: #{eff_trm_forward.5} parent=0 // loop_header_branch
    %12 = sbr.rel (%p10) target = $region8
  $region5: #{eff_trm_forward.5} parent=0 // loop_body
    %s14 = ssub.s32 %s9, 1
    %s15 = ssub.s32 %s9, 2
    %s16 = sadd.s32 %s9, 1
    %s17 = ssub.s32 %s9, %s16
    %p18 = scmp.eq.s32.totalorder %s17, 0
    %s20 = sadd.s32 %s19, 1
    %s21 = scalar_select %p18, %s19, %s20
    %p24 = pneg %p18
    %p25 = scmp.eq.s32.totalorder %s9, 1
    %p26 = por %p24, %p25
    %p27 = scmp.ne.s32.totalorder %s19, %s22
    %p28 = scmp.eq.s32.totalorder %s9, 0
    %p29 = por %p27, %p28
    %p30 = scmp.ne.s32.totalorder %s19, %s22
    %p31 = scmp.eq.s32.totalorder %s14, 1
    %p32 = por %p30, %p31
    %p33 = scmp.ne.s32.totalorder %s22, %s23
    %p34 = scmp.eq.s32.totalorder %s14, 0
    %p35 = por %p33, %p34
    %p36 = scmp.ne.s32.totalorder %s22, %s23
    %p37 = scmp.eq.s32.totalorder %s15, 1
    %p38 = por %p36, %p37
    %p40 = scmp.ne.s32.totalorder %s23, %s39
    %p41 = scmp.eq.s32.totalorder %s15, 0
    %p42 = por %p40, %p41
    %s44 = sadd.s32 %s43, 1
    %p47 = scmp.eq.s32.totalorder %s9, 1
    %p48 = scmp.ne.s32.totalorder %s43, %s45
    %p49 = scmp.eq.s32.totalorder %s9, 0
    %p50 = por %p48, %p49
    %p51 = scmp.ne.s32.totalorder %s43, %s45
    %p52 = scmp.eq.s32.totalorder %s14, 1
    %p53 = por %p51, %p52
    %p54 = scmp.ne.s32.totalorder %s45, %s46
    %p55 = scmp.eq.s32.totalorder %s14, 0
    %p56 = por %p54, %p55
    %p57 = scmp.ne.s32.totalorder %s45, %s46
    %p58 = scmp.eq.s32.totalorder %s15, 1
    %p59 = por %p57, %p58
    %p61 = scmp.ne.s32.totalorder %s46, %s60
    %p62 = scmp.eq.s32.totalorder %s15, 0
    %p63 = por %p61, %p62
    %s65 = sadd.s32 %s64, 1
    %p68 = scmp.eq.s32.totalorder %s9, 1
    %p69 = scmp.ne.s32.totalorder %s64, %s66
    %p70 = scmp.eq.s32.totalorder %s9, 0
    %p71 = por %p69, %p70
    %p72 = scmp.ne.s32.totalorder %s64, %s66
    %p73 = scmp.eq.s32.totalorder %s14, 1
    %p74 = por %p72, %p73
    %p75 = scmp.ne.s32.totalorder %s66, %s67
    %p76 = scmp.eq.s32.totalorder %s14, 0
    %p77 = por %p75, %p76
    %p78 = scmp.ne.s32.totalorder %s66, %s67
    %p79 = scmp.eq.s32.totalorder %s15, 1
    %p80 = por %p78, %p79
    %p82 = scmp.ne.s32.totalorder %s67, %s81
    %p83 = scmp.eq.s32.totalorder %s15, 0
    %p84 = por %p82, %p83
    %s85 = ssub.s32 %s9, %s16
    %p86 = scmp.eq.s32.totalorder %s85, 0
    %s88 = sadd.s32 %s87, 1
    %s89 = scalar_select %p86, %s87, %s88
    %p92 = pneg %p86
    %p93 = scmp.eq.s32.totalorder %s9, 1
    %p94 = por %p92, %p93
    %p95 = scmp.ne.s32.totalorder %s87, %s90
    %p96 = scmp.eq.s32.totalorder %s9, 0
    %p97 = por %p95, %p96
    %p98 = scmp.ne.s32.totalorder %s87, %s90
    %p99 = scmp.eq.s32.totalorder %s14, 1
    %p100 = por %p98, %p99
    %p101 = scmp.ne.s32.totalorder %s90, %s91
    %p102 = scmp.eq.s32.totalorder %s14, 0
    %p103 = por %p101, %p102
    %p104 = scmp.ne.s32.totalorder %s90, %s91
    %p105 = scmp.eq.s32.totalorder %s15, 1
    %p106 = por %p104, %p105
    %p108 = scmp.ne.s32.totalorder %s91, %s107
    %p109 = scmp.eq.s32.totalorder %s15, 0
    %p110 = por %p108, %p109
    %p111 = scmp.le.s32.totalorder 1, %s9
    %p112 = scmp.lt.s32.totalorder %s9, 3
    %p113 = pnand %p111, %p112
    %p114 = pneg %p113
    // Predicated region
    $region9: #{eff_trm_forward.5} parent=5 // pred_check
      _
    $region10: #{eff_trm_forward.5} parent=5 // pred_check_branch
      %116 = sbr.rel (%p113) target = $region12
    $region11: #{eff_trm_forward.5} parent=5 // pred_region
      %s117 = ssub.s32 %s9, 1
      // Predicated region
      $region13: #{eff_trm_forward.5} parent=11 // pred_check
        %p118 = pneg %p56
      $region14: #{eff_trm_forward.5} parent=11 // pred_check_branch
        %120 = sbr.rel (%p118) target = $region16
      $region15: #{eff_trm_forward.5} parent=11 // pred_region
        _
      $region16: #{eff_trm_forward.5} parent=11 // pred_fallthru
        _
      // Predicated region
      $region17: #{eff_trm_forward.5} parent=11 // pred_check
        %p121 = pneg %p77
      $region18: #{eff_trm_forward.5} parent=11 // pred_check_branch
        %123 = sbr.rel (%p121) target = $region20
      $region19: #{eff_trm_forward.5} parent=11 // pred_region
        _
      $region20: #{eff_trm_forward.5} parent=11 // pred_fallthru
        _
    $region12: #{eff_trm_forward.5} parent=5 // pred_fallthru
      _
    %p124 = scmp.lt.s32.totalorder %s9, 2
    // Predicated region
    $region21: #{eff_trm_forward.5} parent=5 // pred_check
      %p125 = pneg %p124
    $region22: #{eff_trm_forward.5} parent=5 // pred_check_branch
      %127 = sbr.rel (%p125) target = $region24
    $region23: #{eff_trm_forward.5} parent=5 // pred_region
      // Predicated region
      $region25: #{eff_trm_forward.5} parent=23 // pred_check
        %p128 = pneg %p29
      $region26: #{eff_trm_forward.5} parent=23 // pred_check_branch
        %130 = sbr.rel (%p128) target = $region28
      $region27: #{eff_trm_forward.5} parent=23 // pred_region
        %s131 = smul.u32 16, %s9
        %p132 = scmp.lt.s32.totalorder %s131, 31
        %s133 = scalar_select %p132, %s131, 31
        %s134 = smul.addr %s133, 4
        %s135 = smul.addr %s134, 4
        %s136 = scalar_lea.vmem %s0, %s135
        %s137 = smul.u32 16, %s9
      $region28: #{eff_trm_forward.5} parent=23 // pred_fallthru
        _
    $region24: #{eff_trm_forward.5} parent=5 // pred_fallthru
      _
    %p138 = scmp.le.s32.totalorder 1, %s9
    %p139 = scmp.lt.s32.totalorder %s9, 3
    %p140 = pnand %p138, %p139
    %p141 = pneg %p140
    // Predicated region
    $region29: #{eff_trm_forward.5} parent=5 // pred_check
      _
    $region30: #{eff_trm_forward.5} parent=5 // pred_check_branch
      %143 = sbr.rel (%p140) target = $region32
    $region31: #{eff_trm_forward.5} parent=5 // pred_region
      %s144 = ssub.s32 %s9, 1
      %s145 = smul.u32 16, %s14
      %p146 = scmp.lt.s32.totalorder %s145, 31
      %s147 = scalar_select %p146, %s145, 31
      %s148 = smul.addr %s147, 4
      %s149 = smul.addr %s148, 4
      %s150 = scalar_lea.vmem %s0, %s149
      %p151 = pneg %p35
      %p152 = pneg %p32
      %p153 = pneg %p56
      %p154 = pneg %p53
      %p155 = pneg %p77
      %p156 = pneg %p74
      %p157 = pneg %p103
      %p158 = pneg %p100
      %s159 = smul.u32 16, %s14
      %p160 = scmp.lt.s32.totalorder %s159, 31
      %s161 = scalar_select %p160, %s159, 31
      %s162 = smul.addr %s161, 8
      %s163 = scalar_lea.vmem %s3, %s162
      %s164 = smul.u32 16, %s14
      %p165 = scmp.lt.s32.totalorder %s164, 31
      %s166 = scalar_select %p165, %s164, 31
      %s167 = smul.addr %s166, 4
      %s168 = smul.addr %s167, 4
      %s169 = scalar_lea.vmem %s0, %s168
      %s170 = smul.u32 16, %s14
      %s171 = smul.u32 16, %s14
      %p172 = scmp.lt.s32.totalorder %s171, 31
      %s173 = scalar_select %p172, %s171, 31
      %s174 = smul.addr %s173, 8
      %s175 = scalar_lea.vmem %s3, %s174
      %s176 = smul.u32 16, %s14
      %v178 = vld [vmem:[%s169] sm:$0xff]
      %v179 = vld [vmem:[%s169 + $0x8] sm:$0xff]
      %v180 = vld [vmem:[%s169 + $0x10] sm:$0xff]
      %v181 = vld [vmem:[%s169 + $0x18] sm:$0xff]
      %v182 = vld [vmem:[%s169 + $0x20] sm:$0xff]
      %v183 = vld [vmem:[%s169 + $0x28] sm:$0xff]
      %v184 = vld [vmem:[%s169 + $0x30] sm:$0xff]
      %v185 = vld [vmem:[%s169 + $0x38] sm:$0xff]
      %v186 = vld [vmem:[%s169 + $0x40] sm:$0xff]
      %v187 = vld [vmem:[%s169 + $0x48] sm:$0xff]
      %v188 = vld [vmem:[%s169 + $0x50] sm:$0xff]
      %v189 = vld [vmem:[%s169 + $0x58] sm:$0xff]
      %v190 = vld [vmem:[%s169 + $0x60] sm:$0xff]
      %v191 = vld [vmem:[%s169 + $0x68] sm:$0xff]
      %v192 = vld [vmem:[%s169 + $0x70] sm:$0xff]
      %v193 = vld [vmem:[%s169 + $0x78] sm:$0xff]
      %v194 = vld [vmem:[%s169 + $0x80] sm:$0xff]
      %v195 = vld [vmem:[%s169 + $0x88] sm:$0xff]
      %v196 = vld [vmem:[%s169 + $0x90] sm:$0xff]
      %v197 = vld [vmem:[%s169 + $0x98] sm:$0xff]
      %v198 = vld [vmem:[%s169 + $0xa0] sm:$0xff]
      %v199 = vld [vmem:[%s169 + $0xa8] sm:$0xff]
      %v200 = vld [vmem:[%s169 + $0xb0] sm:$0xff]
      %v201 = vld [vmem:[%s169 + $0xb8] sm:$0xff]
      %v202 = vld [vmem:[%s169 + $0xc0] sm:$0xff]
      %v203 = vld [vmem:[%s169 + $0xc8] sm:$0xff]
      %v204 = vld [vmem:[%s169 + $0xd0] sm:$0xff]
      %v205 = vld [vmem:[%s169 + $0xd8] sm:$0xff]
      %v206 = vld [vmem:[%s169 + $0xe0] sm:$0xff]
      %v207 = vld [vmem:[%s169 + $0xe8] sm:$0xff]
      %v208 = vld [vmem:[%s169 + $0xf0] sm:$0xff]
      %v209 = vld [vmem:[%s169 + $0xf8] sm:$0xff]
      %v210 = vld [vmem:[%s1] sm:$0xff]
      %v211 = vld [vmem:[%s1 + $0x8] sm:$0xff]
      %v212 = vld [vmem:[%s1 + $0x10] sm:$0xff]
      %v213 = vld [vmem:[%s1 + $0x18] sm:$0xff]
      %v214 = vld [vmem:[%s1 + $0x20] sm:$0xff]
      %v215 = vld [vmem:[%s1 + $0x28] sm:$0xff]
      %v216 = vld [vmem:[%s1 + $0x30] sm:$0xff]
      %v217 = vld [vmem:[%s1 + $0x38] sm:$0xff]
      %v218 = vld [vmem:[%s1 + $0x40] sm:$0xff]
      %v219 = vld [vmem:[%s1 + $0x48] sm:$0xff]
      %v220 = vld [vmem:[%s1 + $0x50] sm:$0xff]
      %v221 = vld [vmem:[%s1 + $0x58] sm:$0xff]
      %v222 = vld [vmem:[%s1 + $0x60] sm:$0xff]
      %v223 = vld [vmem:[%s1 + $0x68] sm:$0xff]
      %v224 = vld [vmem:[%s1 + $0x70] sm:$0xff]
      %v225 = vld [vmem:[%s1 + $0x78] sm:$0xff]
      %v226 = vld [vmem:[%s1 + $0x80] sm:$0xff]
      %v227 = vld [vmem:[%s1 + $0x88] sm:$0xff]
      %v228 = vld [vmem:[%s1 + $0x90] sm:$0xff]
      %v229 = vld [vmem:[%s1 + $0x98] sm:$0xff]
      %v230 = vld [vmem:[%s1 + $0xa0] sm:$0xff]
      %v231 = vld [vmem:[%s1 + $0xa8] sm:$0xff]
      %v232 = vld [vmem:[%s1 + $0xb0] sm:$0xff]
      %v233 = vld [vmem:[%s1 + $0xb8] sm:$0xff]
      %v234 = vld [vmem:[%s1 + $0xc0] sm:$0xff]
      %v235 = vld [vmem:[%s1 + $0xc8] sm:$0xff]
      %v236 = vld [vmem:[%s1 + $0xd0] sm:$0xff]
      %v237 = vld [vmem:[%s1 + $0xd8] sm:$0xff]
      %v238 = vld [vmem:[%s1 + $0xe0] sm:$0xff]
      %v239 = vld [vmem:[%s1 + $0xe8] sm:$0xff]
      %v240 = vld [vmem:[%s1 + $0xf0] sm:$0xff]
      %v241 = vld [vmem:[%s1 + $0xf8] sm:$0xff]
      %v242 = vld [vmem:[%s1 + $0x100] sm:$0xff]
      %v243 = vld [vmem:[%s1 + $0x108] sm:$0xff]
      %v244 = vld [vmem:[%s1 + $0x110] sm:$0xff]
      %v245 = vld [vmem:[%s1 + $0x118] sm:$0xff]
      %v246 = vld [vmem:[%s1 + $0x120] sm:$0xff]
      %v247 = vld [vmem:[%s1 + $0x128] sm:$0xff]
      %v248 = vld [vmem:[%s1 + $0x130] sm:$0xff]
      %v249 = vld [vmem:[%s1 + $0x138] sm:$0xff]
      %v250 = vld [vmem:[%s1 + $0x140] sm:$0xff]
      %v251 = vld [vmem:[%s1 + $0x148] sm:$0xff]
      %v252 = vld [vmem:[%s1 + $0x150] sm:$0xff]
      %v253 = vld [vmem:[%s1 + $0x158] sm:$0xff]
      %v254 = vld [vmem:[%s1 + $0x160] sm:$0xff]
      %v255 = vld [vmem:[%s1 + $0x168] sm:$0xff]
      %v256 = vld [vmem:[%s1 + $0x170] sm:$0xff]
      %v257 = vld [vmem:[%s1 + $0x178] sm:$0xff]
      %v258 = vld [vmem:[%s1 + $0x180] sm:$0xff]
      %v259 = vld [vmem:[%s1 + $0x188] sm:$0xff]
      %v260 = vld [vmem:[%s1 + $0x190] sm:$0xff]
      %v261 = vld [vmem:[%s1 + $0x198] sm:$0xff]
      %v262 = vld [vmem:[%s1 + $0x1a0] sm:$0xff]
      %v263 = vld [vmem:[%s1 + $0x1a8] sm:$0xff]
      %v264 = vld [vmem:[%s1 + $0x1b0] sm:$0xff]
      %v265 = vld [vmem:[%s1 + $0x1b8] sm:$0xff]
      %v266 = vld [vmem:[%s1 + $0x1c0] sm:$0xff]
      %v267 = vld [vmem:[%s1 + $0x1c8] sm:$0xff]
      %v268 = vld [vmem:[%s1 + $0x1d0] sm:$0xff]
      %v269 = vld [vmem:[%s1 + $0x1d8] sm:$0xff]
      %v270 = vld [vmem:[%s1 + $0x1e0] sm:$0xff]
      %v271 = vld [vmem:[%s1 + $0x1e8] sm:$0xff]
      %v272 = vld [vmem:[%s1 + $0x1f0] sm:$0xff]
      %v273 = vld [vmem:[%s1 + $0x1f8] sm:$0xff]
      %v274 = vld [vmem:[%s1 + $0x200] sm:$0xff]
      %v275 = vld [vmem:[%s1 + $0x208] sm:$0xff]
      %v276 = vld [vmem:[%s1 + $0x210] sm:$0xff]
      %v277 = vld [vmem:[%s1 + $0x218] sm:$0xff]
      %v278 = vld [vmem:[%s1 + $0x220] sm:$0xff]
      %v279 = vld [vmem:[%s1 + $0x228] sm:$0xff]
      %v280 = vld [vmem:[%s1 + $0x230] sm:$0xff]
      %v281 = vld [vmem:[%s1 + $0x238] sm:$0xff]
      %v282 = vld [vmem:[%s1 + $0x240] sm:$0xff]
      %v283 = vld [vmem:[%s1 + $0x248] sm:$0xff]
      %v284 = vld [vmem:[%s1 + $0x250] sm:$0xff]
      %v285 = vld [vmem:[%s1 + $0x258] sm:$0xff]
      %v286 = vld [vmem:[%s1 + $0x260] sm:$0xff]
      %v287 = vld [vmem:[%s1 + $0x268] sm:$0xff]
      %v288 = vld [vmem:[%s1 + $0x270] sm:$0xff]
      %v289 = vld [vmem:[%s1 + $0x278] sm:$0xff]
      %v290 = vld [vmem:[%s1 + $0x280] sm:$0xff]
      %v291 = vld [vmem:[%s1 + $0x288] sm:$0xff]
      %v292 = vld [vmem:[%s1 + $0x290] sm:$0xff]
      %v293 = vld [vmem:[%s1 + $0x298] sm:$0xff]
      %v294 = vld [vmem:[%s1 + $0x2a0] sm:$0xff]
      %v295 = vld [vmem:[%s1 + $0x2a8] sm:$0xff]
      %v296 = vld [vmem:[%s1 + $0x2b0] sm:$0xff]
      %v297 = vld [vmem:[%s1 + $0x2b8] sm:$0xff]
      %v298 = vld [vmem:[%s1 + $0x2c0] sm:$0xff]
      %v299 = vld [vmem:[%s1 + $0x2c8] sm:$0xff]
      %v300 = vld [vmem:[%s1 + $0x2d0] sm:$0xff]
      %v301 = vld [vmem:[%s1 + $0x2d8] sm:$0xff]
      %v302 = vld [vmem:[%s1 + $0x2e0] sm:$0xff]
      %v303 = vld [vmem:[%s1 + $0x2e8] sm:$0xff]
      %v304 = vld [vmem:[%s1 + $0x2f0] sm:$0xff]
      %v305 = vld [vmem:[%s1 + $0x2f8] sm:$0xff]
      %v306 = vld [vmem:[%s1 + $0x300] sm:$0xff]
      %v307 = vld [vmem:[%s1 + $0x308] sm:$0xff]
      %v308 = vld [vmem:[%s1 + $0x310] sm:$0xff]
      %v309 = vld [vmem:[%s1 + $0x318] sm:$0xff]
      %v310 = vld [vmem:[%s1 + $0x320] sm:$0xff]
      %v311 = vld [vmem:[%s1 + $0x328] sm:$0xff]
      %v312 = vld [vmem:[%s1 + $0x330] sm:$0xff]
      %v313 = vld [vmem:[%s1 + $0x338] sm:$0xff]
      %v314 = vld [vmem:[%s1 + $0x340] sm:$0xff]
      %v315 = vld [vmem:[%s1 + $0x348] sm:$0xff]
      %v316 = vld [vmem:[%s1 + $0x350] sm:$0xff]
      %v317 = vld [vmem:[%s1 + $0x358] sm:$0xff]
      %v318 = vld [vmem:[%s1 + $0x360] sm:$0xff]
      %v319 = vld [vmem:[%s1 + $0x368] sm:$0xff]
      %v320 = vld [vmem:[%s1 + $0x370] sm:$0xff]
      %v321 = vld [vmem:[%s1 + $0x378] sm:$0xff]
      %v322 = vld [vmem:[%s1 + $0x380] sm:$0xff]
      %v323 = vld [vmem:[%s1 + $0x388] sm:$0xff]
      %v324 = vld [vmem:[%s1 + $0x390] sm:$0xff]
      %v325 = vld [vmem:[%s1 + $0x398] sm:$0xff]
      %v326 = vld [vmem:[%s1 + $0x3a0] sm:$0xff]
      %v327 = vld [vmem:[%s1 + $0x3a8] sm:$0xff]
      %v328 = vld [vmem:[%s1 + $0x3b0] sm:$0xff]
      %v329 = vld [vmem:[%s1 + $0x3b8] sm:$0xff]
      %v330 = vld [vmem:[%s1 + $0x3c0] sm:$0xff]
      %v331 = vld [vmem:[%s1 + $0x3c8] sm:$0xff]
      %v332 = vld [vmem:[%s1 + $0x3d0] sm:$0xff]
      %v333 = vld [vmem:[%s1 + $0x3d8] sm:$0xff]
      %v334 = vld [vmem:[%s1 + $0x3e0] sm:$0xff]
      %v335 = vld [vmem:[%s1 + $0x3e8] sm:$0xff]
      %v336 = vld [vmem:[%s1 + $0x3f0] sm:$0xff]
      %v337 = vld [vmem:[%s1 + $0x3f8] sm:$0xff]
      %v338 = vld [vmem:[%s1 + $0x400] sm:$0xff]
      %v339 = vld [vmem:[%s1 + $0x408] sm:$0xff]
      %v340 = vld [vmem:[%s1 + $0x410] sm:$0xff]
      %v341 = vld [vmem:[%s1 + $0x418] sm:$0xff]
      %v342 = vld [vmem:[%s1 + $0x420] sm:$0xff]
      %v343 = vld [vmem:[%s1 + $0x428] sm:$0xff]
      %v344 = vld [vmem:[%s1 + $0x430] sm:$0xff]
      %v345 = vld [vmem:[%s1 + $0x438] sm:$0xff]
      %v346 = vld [vmem:[%s1 + $0x440] sm:$0xff]
      %v347 = vld [vmem:[%s1 + $0x448] sm:$0xff]
      %v348 = vld [vmem:[%s1 + $0x450] sm:$0xff]
      %v349 = vld [vmem:[%s1 + $0x458] sm:$0xff]
      %v350 = vld [vmem:[%s1 + $0x460] sm:$0xff]
      %v351 = vld [vmem:[%s1 + $0x468] sm:$0xff]
      %v352 = vld [vmem:[%s1 + $0x470] sm:$0xff]
      %v353 = vld [vmem:[%s1 + $0x478] sm:$0xff]
      %v354 = vld [vmem:[%s1 + $0x480] sm:$0xff]
      %v355 = vld [vmem:[%s1 + $0x488] sm:$0xff]
      %v356 = vld [vmem:[%s1 + $0x490] sm:$0xff]
      %v357 = vld [vmem:[%s1 + $0x498] sm:$0xff]
      %v358 = vld [vmem:[%s1 + $0x4a0] sm:$0xff]
      %v359 = vld [vmem:[%s1 + $0x4a8] sm:$0xff]
      %v360 = vld [vmem:[%s1 + $0x4b0] sm:$0xff]
      %v361 = vld [vmem:[%s1 + $0x4b8] sm:$0xff]
      %v362 = vld [vmem:[%s1 + $0x4c0] sm:$0xff]
      %v363 = vld [vmem:[%s1 + $0x4c8] sm:$0xff]
      %v364 = vld [vmem:[%s1 + $0x4d0] sm:$0xff]
      %v365 = vld [vmem:[%s1 + $0x4d8] sm:$0xff]
      %v366 = vld [vmem:[%s1 + $0x4e0] sm:$0xff]
      %v367 = vld [vmem:[%s1 + $0x4e8] sm:$0xff]
      %v368 = vld [vmem:[%s1 + $0x4f0] sm:$0xff]
      %v369 = vld [vmem:[%s1 + $0x4f8] sm:$0xff]
      %v370 = vld [vmem:[%s1 + $0x500] sm:$0xff]
      %v371 = vld [vmem:[%s1 + $0x508] sm:$0xff]
      %v372 = vld [vmem:[%s1 + $0x510] sm:$0xff]
      %v373 = vld [vmem:[%s1 + $0x518] sm:$0xff]
      %v374 = vld [vmem:[%s1 + $0x520] sm:$0xff]
      %v375 = vld [vmem:[%s1 + $0x528] sm:$0xff]
      %v376 = vld [vmem:[%s1 + $0x530] sm:$0xff]
      %v377 = vld [vmem:[%s1 + $0x538] sm:$0xff]
      %v378 = vld [vmem:[%s1 + $0x540] sm:$0xff]
      %v379 = vld [vmem:[%s1 + $0x548] sm:$0xff]
      %v380 = vld [vmem:[%s1 + $0x550] sm:$0xff]
      %v381 = vld [vmem:[%s1 + $0x558] sm:$0xff]
      %v382 = vld [vmem:[%s1 + $0x560] sm:$0xff]
      %v383 = vld [vmem:[%s1 + $0x568] sm:$0xff]
      %v384 = vld [vmem:[%s1 + $0x570] sm:$0xff]
      %v385 = vld [vmem:[%s1 + $0x578] sm:$0xff]
      %v386 = vld [vmem:[%s1 + $0x580] sm:$0xff]
      %v387 = vld [vmem:[%s1 + $0x588] sm:$0xff]
      %v388 = vld [vmem:[%s1 + $0x590] sm:$0xff]
      %v389 = vld [vmem:[%s1 + $0x598] sm:$0xff]
      %v390 = vld [vmem:[%s1 + $0x5a0] sm:$0xff]
      %v391 = vld [vmem:[%s1 + $0x5a8] sm:$0xff]
      %v392 = vld [vmem:[%s1 + $0x5b0] sm:$0xff]
      %v393 = vld [vmem:[%s1 + $0x5b8] sm:$0xff]
      %v394 = vld [vmem:[%s1 + $0x5c0] sm:$0xff]
      %v395 = vld [vmem:[%s1 + $0x5c8] sm:$0xff]
      %v396 = vld [vmem:[%s1 + $0x5d0] sm:$0xff]
      %v397 = vld [vmem:[%s1 + $0x5d8] sm:$0xff]
      %v398 = vld [vmem:[%s1 + $0x5e0] sm:$0xff]
      %v399 = vld [vmem:[%s1 + $0x5e8] sm:$0xff]
      %v400 = vld [vmem:[%s1 + $0x5f0] sm:$0xff]
      %v401 = vld [vmem:[%s1 + $0x5f8] sm:$0xff]
      %v434 = vunpack.c.l.b16 %v178
      %v435 = vunpack.c.h.b16 %v178
      %v436 = vunpack.c.l.b16 %v179
      %v437 = vunpack.c.h.b16 %v179
      %v438 = vunpack.c.l.b16 %v180
      %v439 = vunpack.c.h.b16 %v180
      %v440 = vunpack.c.l.b16 %v181
      %v441 = vunpack.c.h.b16 %v181
      %v442 = vunpack.c.l.b16 %v182
      %v443 = vunpack.c.h.b16 %v182
      %v444 = vunpack.c.l.b16 %v183
      %v445 = vunpack.c.h.b16 %v183
      %v446 = vunpack.c.l.b16 %v184
      %v447 = vunpack.c.h.b16 %v184
      %v448 = vunpack.c.l.b16 %v185
      %v449 = vunpack.c.h.b16 %v185
      %v450 = vunpack.c.l.b16 %v186
      %v451 = vunpack.c.h.b16 %v186
      %v452 = vunpack.c.l.b16 %v187
      %v453 = vunpack.c.h.b16 %v187
      %v454 = vunpack.c.l.b16 %v188
      %v455 = vunpack.c.h.b16 %v188
      %v456 = vunpack.c.l.b16 %v189
      %v457 = vunpack.c.h.b16 %v189
      %v458 = vunpack.c.l.b16 %v190
      %v459 = vunpack.c.h.b16 %v190
      %v460 = vunpack.c.l.b16 %v191
      %v461 = vunpack.c.h.b16 %v191
      %v462 = vunpack.c.l.b16 %v192
      %v463 = vunpack.c.h.b16 %v192
      %v464 = vunpack.c.l.b16 %v193
      %v465 = vunpack.c.h.b16 %v193
      %v466 = vunpack.c.l.b16 %v194
      %v467 = vunpack.c.h.b16 %v194
      %v468 = vunpack.c.l.b16 %v195
      %v469 = vunpack.c.h.b16 %v195
      %v470 = vunpack.c.l.b16 %v196
      %v471 = vunpack.c.h.b16 %v196
      %v472 = vunpack.c.l.b16 %v197
      %v473 = vunpack.c.h.b16 %v197
      %v474 = vunpack.c.l.b16 %v198
      %v475 = vunpack.c.h.b16 %v198
      %v476 = vunpack.c.l.b16 %v199
      %v477 = vunpack.c.h.b16 %v199
      %v478 = vunpack.c.l.b16 %v200
      %v479 = vunpack.c.h.b16 %v200
      %v480 = vunpack.c.l.b16 %v201
      %v481 = vunpack.c.h.b16 %v201
      %v482 = vunpack.c.l.b16 %v202
      %v483 = vunpack.c.h.b16 %v202
      %v484 = vunpack.c.l.b16 %v203
      %v485 = vunpack.c.h.b16 %v203
      %v486 = vunpack.c.l.b16 %v204
      %v487 = vunpack.c.h.b16 %v204
      %v488 = vunpack.c.l.b16 %v205
      %v489 = vunpack.c.h.b16 %v205
      %v490 = vunpack.c.l.b16 %v206
      %v491 = vunpack.c.h.b16 %v206
      %v492 = vunpack.c.l.b16 %v207
      %v493 = vunpack.c.h.b16 %v207
      %v494 = vunpack.c.l.b16 %v208
      %v495 = vunpack.c.h.b16 %v208
      %v496 = vunpack.c.l.b16 %v209
      %v497 = vunpack.c.h.b16 %v209
      %v498 = vpack.c.b16 %v438, %v434
      %v499 = vpack.c.b16 %v439, %v435
      %v500 = vpack.c.b16 %v440, %v436
      %v501 = vpack.c.b16 %v441, %v437
      %v502 = vpack.c.b16 %v446, %v442
      %v503 = vpack.c.b16 %v447, %v443
      %v504 = vpack.c.b16 %v448, %v444
      %v505 = vpack.c.b16 %v449, %v445
      %v506 = vpack.c.b16 %v454, %v450
      %v507 = vpack.c.b16 %v455, %v451
      %v508 = vpack.c.b16 %v456, %v452
      %v509 = vpack.c.b16 %v457, %v453
      %v510 = vpack.c.b16 %v462, %v458
      %v511 = vpack.c.b16 %v463, %v459
      %v512 = vpack.c.b16 %v464, %v460
      %v513 = vpack.c.b16 %v465, %v461
      %v514 = vpack.c.b16 %v470, %v466
      %v515 = vpack.c.b16 %v471, %v467
      %v516 = vpack.c.b16 %v472, %v468
      %v517 = vpack.c.b16 %v473, %v469
      %v518 = vpack.c.b16 %v478, %v474
      %v519 = vpack.c.b16 %v479, %v475
      %v520 = vpack.c.b16 %v480, %v476
      %v521 = vpack.c.b16 %v481, %v477
      %v522 = vpack.c.b16 %v486, %v482
      %v523 = vpack.c.b16 %v487, %v483
      %v524 = vpack.c.b16 %v488, %v484
      %v525 = vpack.c.b16 %v489, %v485
      %v526 = vpack.c.b16 %v494, %v490
      %v527 = vpack.c.b16 %v495, %v491
      %v528 = vpack.c.b16 %v496, %v492
      %v529 = vpack.c.b16 %v497, %v493
      %v754 = vunpack.c.l.b16 %v210
      %v755 = vunpack.c.h.b16 %v210
      %v756 = vunpack.c.l.b16 %v211
      %v757 = vunpack.c.h.b16 %v211
      %v758 = vunpack.c.l.b16 %v212
      %v759 = vunpack.c.h.b16 %v212
      %v760 = vunpack.c.l.b16 %v213
      %v761 = vunpack.c.h.b16 %v213
      %v762 = vunpack.c.l.b16 %v214
      %v763 = vunpack.c.h.b16 %v214
      %v764 = vunpack.c.l.b16 %v215
      %v765 = vunpack.c.h.b16 %v215
      %v766 = vunpack.c.l.b16 %v216
      %v767 = vunpack.c.h.b16 %v216
      %v768 = vunpack.c.l.b16 %v217
      %v769 = vunpack.c.h.b16 %v217
      %v770 = vunpack.c.l.b16 %v218
      %v771 = vunpack.c.h.b16 %v218
      %v772 = vunpack.c.l.b16 %v219
      %v773 = vunpack.c.h.b16 %v219
      %v774 = vunpack.c.l.b16 %v220
      %v775 = vunpack.c.h.b16 %v220
      %v776 = vunpack.c.l.b16 %v221
      %v777 = vunpack.c.h.b16 %v221
      %v778 = vunpack.c.l.b16 %v222
      %v779 = vunpack.c.h.b16 %v222
      %v780 = vunpack.c.l.b16 %v223
      %v781 = vunpack.c.h.b16 %v223
      %v782 = vunpack.c.l.b16 %v224
      %v783 = vunpack.c.h.b16 %v224
      %v784 = vunpack.c.l.b16 %v225
      %v785 = vunpack.c.h.b16 %v225
      %v786 = vunpack.c.l.b16 %v226
      %v787 = vunpack.c.h.b16 %v226
      %v788 = vunpack.c.l.b16 %v227
      %v789 = vunpack.c.h.b16 %v227
      %v790 = vunpack.c.l.b16 %v228
      %v791 = vunpack.c.h.b16 %v228
      %v792 = vunpack.c.l.b16 %v229
      %v793 = vunpack.c.h.b16 %v229
      %v794 = vunpack.c.l.b16 %v230
      %v795 = vunpack.c.h.b16 %v230
      %v796 = vunpack.c.l.b16 %v231
      %v797 = vunpack.c.h.b16 %v231
      %v798 = vunpack.c.l.b16 %v232
      %v799 = vunpack.c.h.b16 %v232
      %v800 = vunpack.c.l.b16 %v233
      %v801 = vunpack.c.h.b16 %v233
      %v802 = vunpack.c.l.b16 %v234
      %v803 = vunpack.c.h.b16 %v234
      %v804 = vunpack.c.l.b16 %v235
      %v805 = vunpack.c.h.b16 %v235
      %v806 = vunpack.c.l.b16 %v236
      %v807 = vunpack.c.h.b16 %v236
      %v808 = vunpack.c.l.b16 %v237
      %v809 = vunpack.c.h.b16 %v237
      %v810 = vunpack.c.l.b16 %v238
      %v811 = vunpack.c.h.b16 %v238
      %v812 = vunpack.c.l.b16 %v239
      %v813 = vunpack.c.h.b16 %v239
      %v814 = vunpack.c.l.b16 %v240
      %v815 = vunpack.c.h.b16 %v240
      %v816 = vunpack.c.l.b16 %v241
      %v817 = vunpack.c.h.b16 %v241
      %v818 = vunpack.c.l.b16 %v242
      %v819 = vunpack.c.h.b16 %v242
      %v820 = vunpack.c.l.b16 %v243
      %v821 = vunpack.c.h.b16 %v243
      %v822 = vunpack.c.l.b16 %v244
      %v823 = vunpack.c.h.b16 %v244
      %v824 = vunpack.c.l.b16 %v245
      %v825 = vunpack.c.h.b16 %v245
      %v826 = vunpack.c.l.b16 %v246
      %v827 = vunpack.c.h.b16 %v246
      %v828 = vunpack.c.l.b16 %v247
      %v829 = vunpack.c.h.b16 %v247
      %v830 = vunpack.c.l.b16 %v248
      %v831 = vunpack.c.h.b16 %v248
      %v832 = vunpack.c.l.b16 %v249
      %v833 = vunpack.c.h.b16 %v249
      %v834 = vunpack.c.l.b16 %v250
      %v835 = vunpack.c.h.b16 %v250
      %v836 = vunpack.c.l.b16 %v251
      %v837 = vunpack.c.h.b16 %v251
      %v838 = vunpack.c.l.b16 %v252
      %v839 = vunpack.c.h.b16 %v252
      %v840 = vunpack.c.l.b16 %v253
      %v841 = vunpack.c.h.b16 %v253
      %v842 = vunpack.c.l.b16 %v254
      %v843 = vunpack.c.h.b16 %v254
      %v844 = vunpack.c.l.b16 %v255
      %v845 = vunpack.c.h.b16 %v255
      %v846 = vunpack.c.l.b16 %v256
      %v847 = vunpack.c.h.b16 %v256
      %v848 = vunpack.c.l.b16 %v257
      %v849 = vunpack.c.h.b16 %v257
      %v850 = vunpack.c.l.b16 %v258
      %v851 = vunpack.c.h.b16 %v258
      %v852 = vunpack.c.l.b16 %v259
      %v853 = vunpack.c.h.b16 %v259
      %v854 = vunpack.c.l.b16 %v260
      %v855 = vunpack.c.h.b16 %v260
      %v856 = vunpack.c.l.b16 %v261
      %v857 = vunpack.c.h.b16 %v261
      %v858 = vunpack.c.l.b16 %v262
      %v859 = vunpack.c.h.b16 %v262
      %v860 = vunpack.c.l.b16 %v263
      %v861 = vunpack.c.h.b16 %v263
      %v862 = vunpack.c.l.b16 %v264
      %v863 = vunpack.c.h.b16 %v264
      %v864 = vunpack.c.l.b16 %v265
      %v865 = vunpack.c.h.b16 %v265
      %v866 = vunpack.c.l.b16 %v266
      %v867 = vunpack.c.h.b16 %v266
      %v868 = vunpack.c.l.b16 %v267
      %v869 = vunpack.c.h.b16 %v267
      %v870 = vunpack.c.l.b16 %v268
      %v871 = vunpack.c.h.b16 %v268
      %v872 = vunpack.c.l.b16 %v269
      %v873 = vunpack.c.h.b16 %v269
      %v874 = vunpack.c.l.b16 %v270
      %v875 = vunpack.c.h.b16 %v270
      %v876 = vunpack.c.l.b16 %v271
      %v877 = vunpack.c.h.b16 %v271
      %v878 = vunpack.c.l.b16 %v272
      %v879 = vunpack.c.h.b16 %v272
      %v880 = vunpack.c.l.b16 %v273
      %v881 = vunpack.c.h.b16 %v273
      %v882 = vunpack.c.l.b16 %v274
      %v883 = vunpack.c.h.b16 %v274
      %v884 = vunpack.c.l.b16 %v275
      %v885 = vunpack.c.h.b16 %v275
      %v886 = vunpack.c.l.b16 %v276
      %v887 = vunpack.c.h.b16 %v276
      %v888 = vunpack.c.l.b16 %v277
      %v889 = vunpack.c.h.b16 %v277
      %v890 = vunpack.c.l.b16 %v278
      %v891 = vunpack.c.h.b16 %v278
      %v892 = vunpack.c.l.b16 %v279
      %v893 = vunpack.c.h.b16 %v279
      %v894 = vunpack.c.l.b16 %v280
      %v895 = vunpack.c.h.b16 %v280
      %v896 = vunpack.c.l.b16 %v281
      %v897 = vunpack.c.h.b16 %v281
      %v898 = vunpack.c.l.b16 %v282
      %v899 = vunpack.c.h.b16 %v282
      %v900 = vunpack.c.l.b16 %v283
      %v901 = vunpack.c.h.b16 %v283
      %v902 = vunpack.c.l.b16 %v284
      %v903 = vunpack.c.h.b16 %v284
      %v904 = vunpack.c.l.b16 %v285
      %v905 = vunpack.c.h.b16 %v285
      %v906 = vunpack.c.l.b16 %v286
      %v907 = vunpack.c.h.b16 %v286
      %v908 = vunpack.c.l.b16 %v287
      %v909 = vunpack.c.h.b16 %v287
      %v910 = vunpack.c.l.b16 %v288
      %v911 = vunpack.c.h.b16 %v288
      %v912 = vunpack.c.l.b16 %v289
      %v913 = vunpack.c.h.b16 %v289
      %v914 = vunpack.c.l.b16 %v290
      %v915 = vunpack.c.h.b16 %v290
      %v916 = vunpack.c.l.b16 %v291
      %v917 = vunpack.c.h.b16 %v291
      %v918 = vunpack.c.l.b16 %v292
      %v919 = vunpack.c.h.b16 %v292
      %v920 = vunpack.c.l.b16 %v293
      %v921 = vunpack.c.h.b16 %v293
      %v922 = vunpack.c.l.b16 %v294
      %v923 = vunpack.c.h.b16 %v294
      %v924 = vunpack.c.l.b16 %v295
      %v925 = vunpack.c.h.b16 %v295
      %v926 = vunpack.c.l.b16 %v296
      %v927 = vunpack.c.h.b16 %v296
      %v928 = vunpack.c.l.b16 %v297
      %v929 = vunpack.c.h.b16 %v297
      %v930 = vunpack.c.l.b16 %v298
      %v931 = vunpack.c.h.b16 %v298
      %v932 = vunpack.c.l.b16 %v299
      %v933 = vunpack.c.h.b16 %v299
      %v934 = vunpack.c.l.b16 %v300
      %v935 = vunpack.c.h.b16 %v300
      %v936 = vunpack.c.l.b16 %v301
      %v937 = vunpack.c.h.b16 %v301
      %v938 = vunpack.c.l.b16 %v302
      %v939 = vunpack.c.h.b16 %v302
      %v940 = vunpack.c.l.b16 %v303
      %v941 = vunpack.c.h.b16 %v303
      %v942 = vunpack.c.l.b16 %v304
      %v943 = vunpack.c.h.b16 %v304
      %v944 = vunpack.c.l.b16 %v305
      %v945 = vunpack.c.h.b16 %v305
      %v946 = vunpack.c.l.b16 %v306
      %v947 = vunpack.c.h.b16 %v306
      %v948 = vunpack.c.l.b16 %v307
      %v949 = vunpack.c.h.b16 %v307
      %v950 = vunpack.c.l.b16 %v308
      %v951 = vunpack.c.h.b16 %v308
      %v952 = vunpack.c.l.b16 %v309
      %v953 = vunpack.c.h.b16 %v309
      %v954 = vunpack.c.l.b16 %v310
      %v955 = vunpack.c.h.b16 %v310
      %v956 = vunpack.c.l.b16 %v311
      %v957 = vunpack.c.h.b16 %v311
      %v958 = vunpack.c.l.b16 %v312
      %v959 = vunpack.c.h.b16 %v312
      %v960 = vunpack.c.l.b16 %v313
      %v961 = vunpack.c.h.b16 %v313
      %v962 = vunpack.c.l.b16 %v314
      %v963 = vunpack.c.h.b16 %v314
      %v964 = vunpack.c.l.b16 %v315
      %v965 = vunpack.c.h.b16 %v315
      %v966 = vunpack.c.l.b16 %v316
      %v967 = vunpack.c.h.b16 %v316
      %v968 = vunpack.c.l.b16 %v317
      %v969 = vunpack.c.h.b16 %v317
      %v970 = vunpack.c.l.b16 %v318
      %v971 = vunpack.c.h.b16 %v318
      %v972 = vunpack.c.l.b16 %v319
      %v973 = vunpack.c.h.b16 %v319
      %v974 = vunpack.c.l.b16 %v320
      %v975 = vunpack.c.h.b16 %v320
      %v976 = vunpack.c.l.b16 %v321
      %v977 = vunpack.c.h.b16 %v321
      %v978 = vunpack.c.l.b16 %v322
      %v979 = vunpack.c.h.b16 %v322
      %v980 = vunpack.c.l.b16 %v323
      %v981 = vunpack.c.h.b16 %v323
      %v982 = vunpack.c.l.b16 %v324
      %v983 = vunpack.c.h.b16 %v324
      %v984 = vunpack.c.l.b16 %v325
      %v985 = vunpack.c.h.b16 %v325
      %v986 = vunpack.c.l.b16 %v326
      %v987 = vunpack.c.h.b16 %v326
      %v988 = vunpack.c.l.b16 %v327
      %v989 = vunpack.c.h.b16 %v327
      %v990 = vunpack.c.l.b16 %v328
      %v991 = vunpack.c.h.b16 %v328
      %v992 = vunpack.c.l.b16 %v329
      %v993 = vunpack.c.h.b16 %v329
      %v994 = vunpack.c.l.b16 %v330
      %v995 = vunpack.c.h.b16 %v330
      %v996 = vunpack.c.l.b16 %v331
      %v997 = vunpack.c.h.b16 %v331
      %v998 = vunpack.c.l.b16 %v332
      %v999 = vunpack.c.h.b16 %v332
      %v1000 = vunpack.c.l.b16 %v333
      %v1001 = vunpack.c.h.b16 %v333
      %v1002 = vunpack.c.l.b16 %v334
      %v1003 = vunpack.c.h.b16 %v334
      %v1004 = vunpack.c.l.b16 %v335
      %v1005 = vunpack.c.h.b16 %v335
      %v1006 = vunpack.c.l.b16 %v336
      %v1007 = vunpack.c.h.b16 %v336
      %v1008 = vunpack.c.l.b16 %v337
      %v1009 = vunpack.c.h.b16 %v337
      %v1010 = vunpack.c.l.b16 %v338
      %v1011 = vunpack.c.h.b16 %v338
      %v1012 = vunpack.c.l.b16 %v339
      %v1013 = vunpack.c.h.b16 %v339
      %v1014 = vunpack.c.l.b16 %v340
      %v1015 = vunpack.c.h.b16 %v340
      %v1016 = vunpack.c.l.b16 %v341
      %v1017 = vunpack.c.h.b16 %v341
      %v1018 = vunpack.c.l.b16 %v342
      %v1019 = vunpack.c.h.b16 %v342
      %v1020 = vunpack.c.l.b16 %v343
      %v1021 = vunpack.c.h.b16 %v343
      %v1022 = vunpack.c.l.b16 %v344
      %v1023 = vunpack.c.h.b16 %v344
      %v1024 = vunpack.c.l.b16 %v345
      %v1025 = vunpack.c.h.b16 %v345
      %v1026 = vunpack.c.l.b16 %v346
      %v1027 = vunpack.c.h.b16 %v346
      %v1028 = vunpack.c.l.b16 %v347
      %v1029 = vunpack.c.h.b16 %v347
      %v1030 = vunpack.c.l.b16 %v348
      %v1031 = vunpack.c.h.b16 %v348
      %v1032 = vunpack.c.l.b16 %v349
      %v1033 = vunpack.c.h.b16 %v349
      %v1034 = vunpack.c.l.b16 %v350
      %v1035 = vunpack.c.h.b16 %v350
      %v1036 = vunpack.c.l.b16 %v351
      %v1037 = vunpack.c.h.b16 %v351
      %v1038 = vunpack.c.l.b16 %v352
      %v1039 = vunpack.c.h.b16 %v352
      %v1040 = vunpack.c.l.b16 %v353
      %v1041 = vunpack.c.h.b16 %v353
      %v1042 = vunpack.c.l.b16 %v354
      %v1043 = vunpack.c.h.b16 %v354
      %v1044 = vunpack.c.l.b16 %v355
      %v1045 = vunpack.c.h.b16 %v355
      %v1046 = vunpack.c.l.b16 %v356
      %v1047 = vunpack.c.h.b16 %v356
      %v1048 = vunpack.c.l.b16 %v357
      %v1049 = vunpack.c.h.b16 %v357
      %v1050 = vunpack.c.l.b16 %v358
      %v1051 = vunpack.c.h.b16 %v358
      %v1052 = vunpack.c.l.b16 %v359
      %v1053 = vunpack.c.h.b16 %v359
      %v1054 = vunpack.c.l.b16 %v360
      %v1055 = vunpack.c.h.b16 %v360
      %v1056 = vunpack.c.l.b16 %v361
      %v1057 = vunpack.c.h.b16 %v361
      %v1058 = vunpack.c.l.b16 %v362
      %v1059 = vunpack.c.h.b16 %v362
      %v1060 = vunpack.c.l.b16 %v363
      %v1061 = vunpack.c.h.b16 %v363
      %v1062 = vunpack.c.l.b16 %v364
      %v1063 = vunpack.c.h.b16 %v364
      %v1064 = vunpack.c.l.b16 %v365
      %v1065 = vunpack.c.h.b16 %v365
      %v1066 = vunpack.c.l.b16 %v366
      %v1067 = vunpack.c.h.b16 %v366
      %v1068 = vunpack.c.l.b16 %v367
      %v1069 = vunpack.c.h.b16 %v367
      %v1070 = vunpack.c.l.b16 %v368
      %v1071 = vunpack.c.h.b16 %v368
      %v1072 = vunpack.c.l.b16 %v369
      %v1073 = vunpack.c.h.b16 %v369
      %v1074 = vunpack.c.l.b16 %v370
      %v1075 = vunpack.c.h.b16 %v370
      %v1076 = vunpack.c.l.b16 %v371
      %v1077 = vunpack.c.h.b16 %v371
      %v1078 = vunpack.c.l.b16 %v372
      %v1079 = vunpack.c.h.b16 %v372
      %v1080 = vunpack.c.l.b16 %v373
      %v1081 = vunpack.c.h.b16 %v373
      %v1082 = vunpack.c.l.b16 %v374
      %v1083 = vunpack.c.h.b16 %v374
      %v1084 = vunpack.c.l.b16 %v375
      %v1085 = vunpack.c.h.b16 %v375
      %v1086 = vunpack.c.l.b16 %v376
      %v1087 = vunpack.c.h.b16 %v376
      %v1088 = vunpack.c.l.b16 %v377
      %v1089 = vunpack.c.h.b16 %v377
      %v1090 = vunpack.c.l.b16 %v378
      %v1091 = vunpack.c.h.b16 %v378
      %v1092 = vunpack.c.l.b16 %v379
      %v1093 = vunpack.c.h.b16 %v379
      %v1094 = vunpack.c.l.b16 %v380
      %v1095 = vunpack.c.h.b16 %v380
      %v1096 = vunpack.c.l.b16 %v381
      %v1097 = vunpack.c.h.b16 %v381
      %v1098 = vunpack.c.l.b16 %v382
      %v1099 = vunpack.c.h.b16 %v382
      %v1100 = vunpack.c.l.b16 %v383
      %v1101 = vunpack.c.h.b16 %v383
      %v1102 = vunpack.c.l.b16 %v384
      %v1103 = vunpack.c.h.b16 %v384
      %v1104 = vunpack.c.l.b16 %v385
      %v1105 = vunpack.c.h.b16 %v385
      %v1106 = vunpack.c.l.b16 %v386
      %v1107 = vunpack.c.h.b16 %v386
      %v1108 = vunpack.c.l.b16 %v387
      %v1109 = vunpack.c.h.b16 %v387
      %v1110 = vunpack.c.l.b16 %v388
      %v1111 = vunpack.c.h.b16 %v388
      %v1112 = vunpack.c.l.b16 %v389
      %v1113 = vunpack.c.h.b16 %v389
      %v1114 = vunpack.c.l.b16 %v390
      %v1115 = vunpack.c.h.b16 %v390
      %v1116 = vunpack.c.l.b16 %v391
      %v1117 = vunpack.c.h.b16 %v391
      %v1118 = vunpack.c.l.b16 %v392
      %v1119 = vunpack.c.h.b16 %v392
      %v1120 = vunpack.c.l.b16 %v393
      %v1121 = vunpack.c.h.b16 %v393
      %v1122 = vunpack.c.l.b16 %v394
      %v1123 = vunpack.c.h.b16 %v394
      %v1124 = vunpack.c.l.b16 %v395
      %v1125 = vunpack.c.h.b16 %v395
      %v1126 = vunpack.c.l.b16 %v396
      %v1127 = vunpack.c.h.b16 %v396
      %v1128 = vunpack.c.l.b16 %v397
      %v1129 = vunpack.c.h.b16 %v397
      %v1130 = vunpack.c.l.b16 %v398
      %v1131 = vunpack.c.h.b16 %v398
      %v1132 = vunpack.c.l.b16 %v399
      %v1133 = vunpack.c.h.b16 %v399
      %v1134 = vunpack.c.l.b16 %v400
      %v1135 = vunpack.c.h.b16 %v400
      %v1136 = vunpack.c.l.b16 %v401
      %v1137 = vunpack.c.h.b16 %v401
      %v1138 = vpack.c.b16 %v760, %v754
      %v1139 = vpack.c.b16 %v761, %v755
      %v1140 = vpack.c.b16 %v762, %v756
      %v1141 = vpack.c.b16 %v763, %v757
      %v1142 = vpack.c.b16 %v764, %v758
      %v1143 = vpack.c.b16 %v765, %v759
      %v1144 = vpack.c.b16 %v772, %v766
      %v1145 = vpack.c.b16 %v773, %v767
      %v1146 = vpack.c.b16 %v774, %v768
      %v1147 = vpack.c.b16 %v775, %v769
      %v1148 = vpack.c.b16 %v776, %v770
      %v1149 = vpack.c.b16 %v777, %v771
      %v1150 = vpack.c.b16 %v784, %v778
      %v1151 = vpack.c.b16 %v785, %v779
      %v1152 = vpack.c.b16 %v786, %v780
      %v1153 = vpack.c.b16 %v787, %v781
      %v1154 = vpack.c.b16 %v788, %v782
      %v1155 = vpack.c.b16 %v789, %v783
      %v1156 = vpack.c.b16 %v796, %v790
      %v1157 = vpack.c.b16 %v797, %v791
      %v1158 = vpack.c.b16 %v798, %v792
      %v1159 = vpack.c.b16 %v799, %v793
      %v1160 = vpack.c.b16 %v800, %v794
      %v1161 = vpack.c.b16 %v801, %v795
      %v1162 = vpack.c.b16 %v808, %v802
      %v1163 = vpack.c.b16 %v809, %v803
      %v1164 = vpack.c.b16 %v810, %v804
      %v1165 = vpack.c.b16 %v811, %v805
      %v1166 = vpack.c.b16 %v812, %v806
      %v1167 = vpack.c.b16 %v813, %v807
      %v1168 = vpack.c.b16 %v820, %v814
      %v1169 = vpack.c.b16 %v821, %v815
      %v1170 = vpack.c.b16 %v822, %v816
      %v1171 = vpack.c.b16 %v823, %v817
      %v1172 = vpack.c.b16 %v824, %v818
      %v1173 = vpack.c.b16 %v825, %v819
      %v1174 = vpack.c.b16 %v832, %v826
      %v1175 = vpack.c.b16 %v833, %v827
      %v1176 = vpack.c.b16 %v834, %v828
      %v1177 = vpack.c.b16 %v835, %v829
      %v1178 = vpack.c.b16 %v836, %v830
      %v1179 = vpack.c.b16 %v837, %v831
      %v1180 = vpack.c.b16 %v844, %v838
      %v1181 = vpack.c.b16 %v845, %v839
      %v1182 = vpack.c.b16 %v846, %v840
      %v1183 = vpack.c.b16 %v847, %v841
      %v1184 = vpack.c.b16 %v848, %v842
      %v1185 = vpack.c.b16 %v849, %v843
      %v1186 = vpack.c.b16 %v856, %v850
      %v1187 = vpack.c.b16 %v857, %v851
      %v1188 = vpack.c.b16 %v858, %v852
      %v1189 = vpack.c.b16 %v859, %v853
      %v1190 = vpack.c.b16 %v860, %v854
      %v1191 = vpack.c.b16 %v861, %v855
      %v1192 = vpack.c.b16 %v868, %v862
      %v1193 = vpack.c.b16 %v869, %v863
      %v1194 = vpack.c.b16 %v870, %v864
      %v1195 = vpack.c.b16 %v871, %v865
      %v1196 = vpack.c.b16 %v872, %v866
      %v1197 = vpack.c.b16 %v873, %v867
      %v1198 = vpack.c.b16 %v880, %v874
      %v1199 = vpack.c.b16 %v881, %v875
      %v1200 = vpack.c.b16 %v882, %v876
      %v1201 = vpack.c.b16 %v883, %v877
      %v1202 = vpack.c.b16 %v884, %v878
      %v1203 = vpack.c.b16 %v885, %v879
      %v1204 = vpack.c.b16 %v892, %v886
      %v1205 = vpack.c.b16 %v893, %v887
      %v1206 = vpack.c.b16 %v894, %v888
      %v1207 = vpack.c.b16 %v895, %v889
      %v1208 = vpack.c.b16 %v896, %v890
      %v1209 = vpack.c.b16 %v897, %v891
      %v1210 = vpack.c.b16 %v904, %v898
      %v1211 = vpack.c.b16 %v905, %v899
      %v1212 = vpack.c.b16 %v906, %v900
      %v1213 = vpack.c.b16 %v907, %v901
      %v1214 = vpack.c.b16 %v908, %v902
      %v1215 = vpack.c.b16 %v909, %v903
      %v1216 = vpack.c.b16 %v916, %v910
      %v1217 = vpack.c.b16 %v917, %v911
      %v1218 = vpack.c.b16 %v918, %v912
      %v1219 = vpack.c.b16 %v919, %v913
      %v1220 = vpack.c.b16 %v920, %v914
      %v1221 = vpack.c.b16 %v921, %v915
      %v1222 = vpack.c.b16 %v928, %v922
      %v1223 = vpack.c.b16 %v929, %v923
      %v1224 = vpack.c.b16 %v930, %v924
      %v1225 = vpack.c.b16 %v931, %v925
      %v1226 = vpack.c.b16 %v932, %v926
      %v1227 = vpack.c.b16 %v933, %v927
      %v1228 = vpack.c.b16 %v940, %v934
      %v1229 = vpack.c.b16 %v941, %v935
      %v1230 = vpack.c.b16 %v942, %v936
      %v1231 = vpack.c.b16 %v943, %v937
      %v1232 = vpack.c.b16 %v944, %v938
      %v1233 = vpack.c.b16 %v945, %v939
      %v1234 = vpack.c.b16 %v952, %v946
      %v1235 = vpack.c.b16 %v953, %v947
      %v1236 = vpack.c.b16 %v954, %v948
      %v1237 = vpack.c.b16 %v955, %v949
      %v1238 = vpack.c.b16 %v956, %v950
      %v1239 = vpack.c.b16 %v957, %v951
      %v1240 = vpack.c.b16 %v964, %v958
      %v1241 = vpack.c.b16 %v965, %v959
      %v1242 = vpack.c.b16 %v966, %v960
      %v1243 = vpack.c.b16 %v967, %v961
      %v1244 = vpack.c.b16 %v968, %v962
      %v1245 = vpack.c.b16 %v969, %v963
      %v1246 = vpack.c.b16 %v976, %v970
      %v1247 = vpack.c.b16 %v977, %v971
      %v1248 = vpack.c.b16 %v978, %v972
      %v1249 = vpack.c.b16 %v979, %v973
      %v1250 = vpack.c.b16 %v980, %v974
      %v1251 = vpack.c.b16 %v981, %v975
      %v1252 = vpack.c.b16 %v988, %v982
      %v1253 = vpack.c.b16 %v989, %v983
      %v1254 = vpack.c.b16 %v990, %v984
      %v1255 = vpack.c.b16 %v991, %v985
      %v1256 = vpack.c.b16 %v992, %v986
      %v1257 = vpack.c.b16 %v993, %v987
      %v1258 = vpack.c.b16 %v1000, %v994
      %v1259 = vpack.c.b16 %v1001, %v995
      %v1260 = vpack.c.b16 %v1002, %v996
      %v1261 = vpack.c.b16 %v1003, %v997
      %v1262 = vpack.c.b16 %v1004, %v998
      %v1263 = vpack.c.b16 %v1005, %v999
      %v1264 = vpack.c.b16 %v1012, %v1006
      %v1265 = vpack.c.b16 %v1013, %v1007
      %v1266 = vpack.c.b16 %v1014, %v1008
      %v1267 = vpack.c.b16 %v1015, %v1009
      %v1268 = vpack.c.b16 %v1016, %v1010
      %v1269 = vpack.c.b16 %v1017, %v1011
      %v1270 = vpack.c.b16 %v1024, %v1018
      %v1271 = vpack.c.b16 %v1025, %v1019
      %v1272 = vpack.c.b16 %v1026, %v1020
      %v1273 = vpack.c.b16 %v1027, %v1021
      %v1274 = vpack.c.b16 %v1028, %v1022
      %v1275 = vpack.c.b16 %v1029, %v1023
      %v1276 = vpack.c.b16 %v1036, %v1030
      %v1277 = vpack.c.b16 %v1037, %v1031
      %v1278 = vpack.c.b16 %v1038, %v1032
      %v1279 = vpack.c.b16 %v1039, %v1033
      %v1280 = vpack.c.b16 %v1040, %v1034
      %v1281 = vpack.c.b16 %v1041, %v1035
      %v1282 = vpack.c.b16 %v1048, %v1042
      %v1283 = vpack.c.b16 %v1049, %v1043
      %v1284 = vpack.c.b16 %v1050, %v1044
      %v1285 = vpack.c.b16 %v1051, %v1045
      %v1286 = vpack.c.b16 %v1052, %v1046
      %v1287 = vpack.c.b16 %v1053, %v1047
      %v1288 = vpack.c.b16 %v1060, %v1054
      %v1289 = vpack.c.b16 %v1061, %v1055
      %v1290 = vpack.c.b16 %v1062, %v1056
      %v1291 = vpack.c.b16 %v1063, %v1057
      %v1292 = vpack.c.b16 %v1064, %v1058
      %v1293 = vpack.c.b16 %v1065, %v1059
      %v1294 = vpack.c.b16 %v1072, %v1066
      %v1295 = vpack.c.b16 %v1073, %v1067
      %v1296 = vpack.c.b16 %v1074, %v1068
      %v1297 = vpack.c.b16 %v1075, %v1069
      %v1298 = vpack.c.b16 %v1076, %v1070
      %v1299 = vpack.c.b16 %v1077, %v1071
      %v1300 = vpack.c.b16 %v1084, %v1078
      %v1301 = vpack.c.b16 %v1085, %v1079
      %v1302 = vpack.c.b16 %v1086, %v1080
      %v1303 = vpack.c.b16 %v1087, %v1081
      %v1304 = vpack.c.b16 %v1088, %v1082
      %v1305 = vpack.c.b16 %v1089, %v1083
      %v1306 = vpack.c.b16 %v1096, %v1090
      %v1307 = vpack.c.b16 %v1097, %v1091
      %v1308 = vpack.c.b16 %v1098, %v1092
      %v1309 = vpack.c.b16 %v1099, %v1093
      %v1310 = vpack.c.b16 %v1100, %v1094
      %v1311 = vpack.c.b16 %v1101, %v1095
      %v1312 = vpack.c.b16 %v1108, %v1102
      %v1313 = vpack.c.b16 %v1109, %v1103
      %v1314 = vpack.c.b16 %v1110, %v1104
      %v1315 = vpack.c.b16 %v1111, %v1105
      %v1316 = vpack.c.b16 %v1112, %v1106
      %v1317 = vpack.c.b16 %v1113, %v1107
      %v1318 = vpack.c.b16 %v1120, %v1114
      %v1319 = vpack.c.b16 %v1121, %v1115
      %v1320 = vpack.c.b16 %v1122, %v1116
      %v1321 = vpack.c.b16 %v1123, %v1117
      %v1322 = vpack.c.b16 %v1124, %v1118
      %v1323 = vpack.c.b16 %v1125, %v1119
      %v1324 = vpack.c.b16 %v1132, %v1126
      %v1325 = vpack.c.b16 %v1133, %v1127
      %v1326 = vpack.c.b16 %v1134, %v1128
      %v1327 = vpack.c.b16 %v1135, %v1129
      %v1328 = vpack.c.b16 %v1136, %v1130
      %v1329 = vpack.c.b16 %v1137, %v1131
      %1522 = vmatprep.subr.bf16.mxu0 %v1181
      %1523 = vmatpush1.bf16.msra.mxu0 %v1180
      %1524 = vmatprep.subr.bf16.mxu0 %v1175
      %1525 = vmatpush1.bf16.msra.mxu0 %v1174
      %1526 = vmatprep.subr.bf16.mxu0 %v1169
      %1527 = vmatpush1.bf16.msra.mxu0 %v1168
      %1528 = vmatprep.subr.bf16.mxu0 %v1163
      %1529 = vmatpush1.bf16.msra.mxu0 %v1162
      %1530 = vmatprep.subr.bf16.mxu0 %v1157
      %1531 = vmatpush1.bf16.msra.mxu0 %v1156
      %1532 = vmatprep.subr.bf16.mxu0 %v1151
      %1533 = vmatpush1.bf16.msra.mxu0 %v1150
      %1534 = vmatprep.subr.bf16.mxu0 %v1145
      %1535 = vmatpush1.bf16.msra.mxu0 %v1144
      %1536 = vmatprep.subr.bf16.mxu0 %v1139
      %1537 = vmatpush1.bf16.msra.mxu0 %v1138
      %1538 = vmatprep.subr.bf16.mxu0 %v1229
      %1539 = vmatpush2.bf16.msra.mxu0 %v1228
      %1540 = vmatprep.subr.bf16.mxu0 %v1223
      %1541 = vmatpush2.bf16.msra.mxu0 %v1222
      %1542 = vmatprep.subr.bf16.mxu0 %v1217
      %1543 = vmatpush2.bf16.msra.mxu0 %v1216
      %1544 = vmatprep.subr.bf16.mxu0 %v1211
      %1545 = vmatpush2.bf16.msra.mxu0 %v1210
      %1546 = vmatprep.subr.bf16.mxu0 %v1205
      %1547 = vmatpush2.bf16.msra.mxu0 %v1204
      %1548 = vmatprep.subr.bf16.mxu0 %v1199
      %1549 = vmatpush2.bf16.msra.mxu0 %v1198
      %1550 = vmatprep.subr.bf16.mxu0 %v1193
      %1551 = vmatpush2.bf16.msra.mxu0 %v1192
      %1552 = vmatprep.subr.bf16.mxu0 %v1187
      %1553 = vmatpush2.bf16.msra.mxu0 %v1186
      %1554 = vmatprep.mubr.bf16.mxu0 %v499
      %1555 = vmatmul.mubr.bf16.gmra.mxu0 %v498
      %v1556 = vpop.f32.mrf.mxu0
      %v1557 = vadd.f32 0.0, %v1556
      %v1558 = vpop.f32.mrf.mxu0
      %v1559 = vadd.f32 0.0, %v1558
      %v1560 = vpop.f32.mrf.mxu0
      %v1561 = vadd.f32 0.0, %v1560
      %v1562 = vpop.f32.mrf.mxu0
      %v1563 = vadd.f32 0.0, %v1562
      %1564 = vmatprep.mubr.bf16.mxu0 %v503
      %1565 = vmatmul.mubr.bf16.gmra.mxu0 %v502
      %v1566 = vpop.f32.mrf.mxu0
      %v1567 = vadd.f32 0.0, %v1566
      %v1568 = vpop.f32.mrf.mxu0
      %v1569 = vadd.f32 0.0, %v1568
      %v1570 = vpop.f32.mrf.mxu0
      %v1571 = vadd.f32 0.0, %v1570
      %v1572 = vpop.f32.mrf.mxu0
      %v1573 = vadd.f32 0.0, %v1572
      %1574 = vmatprep.mubr.bf16.mxu0 %v507
      %1575 = vmatmul.mubr.bf16.gmra.mxu0 %v506
      %v1576 = vpop.f32.mrf.mxu0
      %v1577 = vadd.f32 0.0, %v1576
      %v1578 = vpop.f32.mrf.mxu0
      %v1579 = vadd.f32 0.0, %v1578
      %v1580 = vpop.f32.mrf.mxu0
      %v1581 = vadd.f32 0.0, %v1580
      %v1582 = vpop.f32.mrf.mxu0
      %v1583 = vadd.f32 0.0, %v1582
      %1584 = vmatprep.mubr.bf16.mxu0 %v511
      %1585 = vmatmul.mubr.bf16.gmra.mxu0 %v510
      %v1586 = vpop.f32.mrf.mxu0
      %v1587 = vadd.f32 0.0, %v1586
      %v1588 = vpop.f32.mrf.mxu0
      %v1589 = vadd.f32 0.0, %v1588
      %v1590 = vpop.f32.mrf.mxu0
      %v1591 = vadd.f32 0.0, %v1590
      %v1592 = vpop.f32.mrf.mxu0
      %v1593 = vadd.f32 0.0, %v1592
      %1594 = vmatprep.mubr.bf16.mxu0 %v515
      %1595 = vmatmul.mubr.bf16.gmra.mxu0 %v514
      %v1596 = vpop.f32.mrf.mxu0
      %v1597 = vadd.f32 0.0, %v1596
      %v1598 = vpop.f32.mrf.mxu0
      %v1599 = vadd.f32 0.0, %v1598
      %v1600 = vpop.f32.mrf.mxu0
      %v1601 = vadd.f32 0.0, %v1600
      %v1602 = vpop.f32.mrf.mxu0
      %v1603 = vadd.f32 0.0, %v1602
      %1604 = vmatprep.mubr.bf16.mxu0 %v519
      %1605 = vmatmul.mubr.bf16.gmra.mxu0 %v518
      %v1606 = vpop.f32.mrf.mxu0
      %v1607 = vadd.f32 0.0, %v1606
      %v1608 = vpop.f32.mrf.mxu0
      %v1609 = vadd.f32 0.0, %v1608
      %v1610 = vpop.f32.mrf.mxu0
      %v1611 = vadd.f32 0.0, %v1610
      %v1612 = vpop.f32.mrf.mxu0
      %v1613 = vadd.f32 0.0, %v1612
      %1614 = vmatprep.mubr.bf16.mxu0 %v523
      %1615 = vmatmul.mubr.bf16.gmra.mxu0 %v522
      %v1616 = vpop.f32.mrf.mxu0
      %v1617 = vadd.f32 0.0, %v1616
      %v1618 = vpop.f32.mrf.mxu0
      %v1619 = vadd.f32 0.0, %v1618
      %v1620 = vpop.f32.mrf.mxu0
      %v1621 = vadd.f32 0.0, %v1620
      %v1622 = vpop.f32.mrf.mxu0
      %v1623 = vadd.f32 0.0, %v1622
      %1624 = vmatprep.mubr.bf16.mxu0 %v527
      %1625 = vmatmul.mubr.bf16.gmra.mxu0 %v526
      %v1626 = vpop.f32.mrf.mxu0
      %v1627 = vadd.f32 0.0, %v1626
      %v1628 = vpop.f32.mrf.mxu0
      %v1629 = vadd.f32 0.0, %v1628
      %v1630 = vpop.f32.mrf.mxu0
      %v1631 = vadd.f32 0.0, %v1630
      %v1632 = vpop.f32.mrf.mxu0
      %v1633 = vadd.f32 0.0, %v1632
      %1634 = vdwg.mxu0
      %1635 = vmatprep.subr.bf16.mxu0 %v1277
      %1636 = vmatpush1.bf16.msra.mxu0 %v1276
      %1637 = vmatprep.subr.bf16.mxu0 %v1271
      %1638 = vmatpush1.bf16.msra.mxu0 %v1270
      %1639 = vmatprep.subr.bf16.mxu0 %v1265
      %1640 = vmatpush1.bf16.msra.mxu0 %v1264
      %1641 = vmatprep.subr.bf16.mxu0 %v1259
      %1642 = vmatpush1.bf16.msra.mxu0 %v1258
      %1643 = vmatprep.subr.bf16.mxu0 %v1253
      %1644 = vmatpush1.bf16.msra.mxu0 %v1252
      %1645 = vmatprep.subr.bf16.mxu0 %v1247
      %1646 = vmatpush1.bf16.msra.mxu0 %v1246
      %1647 = vmatprep.subr.bf16.mxu0 %v1241
      %1648 = vmatpush1.bf16.msra.mxu0 %v1240
      %1649 = vmatprep.subr.bf16.mxu0 %v1235
      %1650 = vmatpush1.bf16.msra.mxu0 %v1234
      %1651 = vmatprep.subr.bf16.mxu0 %v1325
      %1652 = vmatpush2.bf16.msra.mxu0 %v1324
      %1653 = vmatprep.subr.bf16.mxu0 %v1319
      %1654 = vmatpush2.bf16.msra.mxu0 %v1318
      %1655 = vmatprep.subr.bf16.mxu0 %v1313
      %1656 = vmatpush2.bf16.msra.mxu0 %v1312
      %1657 = vmatprep.subr.bf16.mxu0 %v1307
      %1658 = vmatpush2.bf16.msra.mxu0 %v1306
      %1659 = vmatprep.subr.bf16.mxu0 %v1301
      %1660 = vmatpush2.bf16.msra.mxu0 %v1300
      %1661 = vmatprep.subr.bf16.mxu0 %v1295
      %1662 = vmatpush2.bf16.msra.mxu0 %v1294
      %1663 = vmatprep.subr.bf16.mxu0 %v1289
      %1664 = vmatpush2.bf16.msra.mxu0 %v1288
      %1665 = vmatprep.subr.bf16.mxu0 %v1283
      %1666 = vmatpush2.bf16.msra.mxu0 %v1282
      %1667 = vmatprep.mubr.bf16.mxu0 %v501
      %1668 = vmatmul.mubr.bf16.gmra.mxu0 %v500
      %v1669 = vpop.f32.mrf.mxu0
      %v1670 = vadd.f32 %v1557, %v1669
      %v1671 = vpop.f32.mrf.mxu0
      %v1672 = vadd.f32 %v1559, %v1671
      %v1673 = vpop.f32.mrf.mxu0
      %v1674 = vadd.f32 %v1561, %v1673
      %v1675 = vpop.f32.mrf.mxu0
      %v1676 = vadd.f32 %v1563, %v1675
      %1677 = vmatprep.mubr.bf16.mxu0 %v505
      %1678 = vmatmul.mubr.bf16.gmra.mxu0 %v504
      %v1679 = vpop.f32.mrf.mxu0
      %v1680 = vadd.f32 %v1567, %v1679
      %v1681 = vpop.f32.mrf.mxu0
      %v1682 = vadd.f32 %v1569, %v1681
      %v1683 = vpop.f32.mrf.mxu0
      %v1684 = vadd.f32 %v1571, %v1683
      %v1685 = vpop.f32.mrf.mxu0
      %v1686 = vadd.f32 %v1573, %v1685
      %1687 = vmatprep.mubr.bf16.mxu0 %v509
      %1688 = vmatmul.mubr.bf16.gmra.mxu0 %v508
      %v1689 = vpop.f32.mrf.mxu0
      %v1690 = vadd.f32 %v1577, %v1689
      %v1691 = vpop.f32.mrf.mxu0
      %v1692 = vadd.f32 %v1579, %v1691
      %v1693 = vpop.f32.mrf.mxu0
      %v1694 = vadd.f32 %v1581, %v1693
      %v1695 = vpop.f32.mrf.mxu0
      %v1696 = vadd.f32 %v1583, %v1695
      %1697 = vmatprep.mubr.bf16.mxu0 %v513
      %1698 = vmatmul.mubr.bf16.gmra.mxu0 %v512
      %v1699 = vpop.f32.mrf.mxu0
      %v1700 = vadd.f32 %v1587, %v1699
      %v1701 = vpop.f32.mrf.mxu0
      %v1702 = vadd.f32 %v1589, %v1701
      %v1703 = vpop.f32.mrf.mxu0
      %v1704 = vadd.f32 %v1591, %v1703
      %v1705 = vpop.f32.mrf.mxu0
      %v1706 = vadd.f32 %v1593, %v1705
      %1707 = vmatprep.mubr.bf16.mxu0 %v517
      %1708 = vmatmul.mubr.bf16.gmra.mxu0 %v516
      %v1709 = vpop.f32.mrf.mxu0
      %v1710 = vadd.f32 %v1597, %v1709
      %v1711 = vpop.f32.mrf.mxu0
      %v1712 = vadd.f32 %v1599, %v1711
      %v1713 = vpop.f32.mrf.mxu0
      %v1714 = vadd.f32 %v1601, %v1713
      %v1715 = vpop.f32.mrf.mxu0
      %v1716 = vadd.f32 %v1603, %v1715
      %1717 = vmatprep.mubr.bf16.mxu0 %v521
      %1718 = vmatmul.mubr.bf16.gmra.mxu0 %v520
      %v1719 = vpop.f32.mrf.mxu0
      %v1720 = vadd.f32 %v1607, %v1719
      %v1721 = vpop.f32.mrf.mxu0
      %v1722 = vadd.f32 %v1609, %v1721
      %v1723 = vpop.f32.mrf.mxu0
      %v1724 = vadd.f32 %v1611, %v1723
      %v1725 = vpop.f32.mrf.mxu0
      %v1726 = vadd.f32 %v1613, %v1725
      %1727 = vmatprep.mubr.bf16.mxu0 %v525
      %1728 = vmatmul.mubr.bf16.gmra.mxu0 %v524
      %v1729 = vpop.f32.mrf.mxu0
      %v1730 = vadd.f32 %v1617, %v1729
      %v1731 = vpop.f32.mrf.mxu0
      %v1732 = vadd.f32 %v1619, %v1731
      %v1733 = vpop.f32.mrf.mxu0
      %v1734 = vadd.f32 %v1621, %v1733
      %v1735 = vpop.f32.mrf.mxu0
      %v1736 = vadd.f32 %v1623, %v1735
      %1737 = vmatprep.mubr.bf16.mxu0 %v529
      %1738 = vmatmul.mubr.bf16.gmra.mxu0 %v528
      %v1739 = vpop.f32.mrf.mxu0
      %v1740 = vadd.f32 %v1627, %v1739
      %v1741 = vpop.f32.mrf.mxu0
      %v1742 = vadd.f32 %v1629, %v1741
      %v1743 = vpop.f32.mrf.mxu0
      %v1744 = vadd.f32 %v1631, %v1743
      %v1745 = vpop.f32.mrf.mxu0
      %v1746 = vadd.f32 %v1633, %v1745
      %1747 = vdwg.mxu0
      %1748 = vmatprep.subr.bf16.mxu0 %v1183
      %1749 = vmatpush1.bf16.msra.mxu0 %v1182
      %1750 = vmatprep.subr.bf16.mxu0 %v1177
      %1751 = vmatpush1.bf16.msra.mxu0 %v1176
      %1752 = vmatprep.subr.bf16.mxu0 %v1171
      %1753 = vmatpush1.bf16.msra.mxu0 %v1170
      %1754 = vmatprep.subr.bf16.mxu0 %v1165
      %1755 = vmatpush1.bf16.msra.mxu0 %v1164
      %1756 = vmatprep.subr.bf16.mxu0 %v1159
      %1757 = vmatpush1.bf16.msra.mxu0 %v1158
      %1758 = vmatprep.subr.bf16.mxu0 %v1153
      %1759 = vmatpush1.bf16.msra.mxu0 %v1152
      %1760 = vmatprep.subr.bf16.mxu0 %v1147
      %1761 = vmatpush1.bf16.msra.mxu0 %v1146
      %1762 = vmatprep.subr.bf16.mxu0 %v1141
      %1763 = vmatpush1.bf16.msra.mxu0 %v1140
      %1764 = vmatprep.subr.bf16.mxu0 %v1231
      %1765 = vmatpush2.bf16.msra.mxu0 %v1230
      %1766 = vmatprep.subr.bf16.mxu0 %v1225
      %1767 = vmatpush2.bf16.msra.mxu0 %v1224
      %1768 = vmatprep.subr.bf16.mxu0 %v1219
      %1769 = vmatpush2.bf16.msra.mxu0 %v1218
      %1770 = vmatprep.subr.bf16.mxu0 %v1213
      %1771 = vmatpush2.bf16.msra.mxu0 %v1212
      %1772 = vmatprep.subr.bf16.mxu0 %v1207
      %1773 = vmatpush2.bf16.msra.mxu0 %v1206
      %1774 = vmatprep.subr.bf16.mxu0 %v1201
      %1775 = vmatpush2.bf16.msra.mxu0 %v1200
      %1776 = vmatprep.subr.bf16.mxu0 %v1195
      %1777 = vmatpush2.bf16.msra.mxu0 %v1194
      %1778 = vmatprep.subr.bf16.mxu0 %v1189
      %1779 = vmatpush2.bf16.msra.mxu0 %v1188
      %1780 = vmatprep.mubr.bf16.mxu0 %v499
      %1781 = vmatmul.mubr.bf16.gmra.mxu0 %v498
      %v1782 = vpop.f32.mrf.mxu0
      %v1783 = vadd.f32 0.0, %v1782
      %v1784 = vpop.f32.mrf.mxu0
      %v1785 = vadd.f32 0.0, %v1784
      %v1786 = vpop.f32.mrf.mxu0
      %v1787 = vadd.f32 0.0, %v1786
      %v1788 = vpop.f32.mrf.mxu0
      %v1789 = vadd.f32 0.0, %v1788
      %1790 = vmatprep.mubr.bf16.mxu0 %v503
      %1791 = vmatmul.mubr.bf16.gmra.mxu0 %v502
      %v1792 = vpop.f32.mrf.mxu0
      %v1793 = vadd.f32 0.0, %v1792
      %v1794 = vpop.f32.mrf.mxu0
      %v1795 = vadd.f32 0.0, %v1794
      %v1796 = vpop.f32.mrf.mxu0
      %v1797 = vadd.f32 0.0, %v1796
      %v1798 = vpop.f32.mrf.mxu0
      %v1799 = vadd.f32 0.0, %v1798
      %1800 = vmatprep.mubr.bf16.mxu0 %v507
      %1801 = vmatmul.mubr.bf16.gmra.mxu0 %v506
      %v1802 = vpop.f32.mrf.mxu0
      %v1803 = vadd.f32 0.0, %v1802
      %v1804 = vpop.f32.mrf.mxu0
      %v1805 = vadd.f32 0.0, %v1804
      %v1806 = vpop.f32.mrf.mxu0
      %v1807 = vadd.f32 0.0, %v1806
      %v1808 = vpop.f32.mrf.mxu0
      %v1809 = vadd.f32 0.0, %v1808
      %1810 = vmatprep.mubr.bf16.mxu0 %v511
      %1811 = vmatmul.mubr.bf16.gmra.mxu0 %v510
      %v1812 = vpop.f32.mrf.mxu0
      %v1813 = vadd.f32 0.0, %v1812
      %v1814 = vpop.f32.mrf.mxu0
      %v1815 = vadd.f32 0.0, %v1814
      %v1816 = vpop.f32.mrf.mxu0
      %v1817 = vadd.f32 0.0, %v1816
      %v1818 = vpop.f32.mrf.mxu0
      %v1819 = vadd.f32 0.0, %v1818
      %1820 = vmatprep.mubr.bf16.mxu0 %v515
      %1821 = vmatmul.mubr.bf16.gmra.mxu0 %v514
      %v1822 = vpop.f32.mrf.mxu0
      %v1823 = vadd.f32 0.0, %v1822
      %v1824 = vpop.f32.mrf.mxu0
      %v1825 = vadd.f32 0.0, %v1824
      %v1826 = vpop.f32.mrf.mxu0
      %v1827 = vadd.f32 0.0, %v1826
      %v1828 = vpop.f32.mrf.mxu0
      %v1829 = vadd.f32 0.0, %v1828
      %1830 = vmatprep.mubr.bf16.mxu0 %v519
      %1831 = vmatmul.mubr.bf16.gmra.mxu0 %v518
      %v1832 = vpop.f32.mrf.mxu0
      %v1833 = vadd.f32 0.0, %v1832
      %v1834 = vpop.f32.mrf.mxu0
      %v1835 = vadd.f32 0.0, %v1834
      %v1836 = vpop.f32.mrf.mxu0
      %v1837 = vadd.f32 0.0, %v1836
      %v1838 = vpop.f32.mrf.mxu0
      %v1839 = vadd.f32 0.0, %v1838
      %1840 = vmatprep.mubr.bf16.mxu0 %v523
      %1841 = vmatmul.mubr.bf16.gmra.mxu0 %v522
      %v1842 = vpop.f32.mrf.mxu0
      %v1843 = vadd.f32 0.0, %v1842
      %v1844 = vpop.f32.mrf.mxu0
      %v1845 = vadd.f32 0.0, %v1844
      %v1846 = vpop.f32.mrf.mxu0
      %v1847 = vadd.f32 0.0, %v1846
      %v1848 = vpop.f32.mrf.mxu0
      %v1849 = vadd.f32 0.0, %v1848
      %1850 = vmatprep.mubr.bf16.mxu0 %v527
      %1851 = vmatmul.mubr.bf16.gmra.mxu0 %v526
      %v1852 = vpop.f32.mrf.mxu0
      %v1853 = vadd.f32 0.0, %v1852
      %v1854 = vpop.f32.mrf.mxu0
      %v1855 = vadd.f32 0.0, %v1854
      %v1856 = vpop.f32.mrf.mxu0
      %v1857 = vadd.f32 0.0, %v1856
      %v1858 = vpop.f32.mrf.mxu0
      %v1859 = vadd.f32 0.0, %v1858
      %1860 = vdwg.mxu0
      %1861 = vmatprep.subr.bf16.mxu0 %v1279
      %1862 = vmatpush1.bf16.msra.mxu0 %v1278
      %1863 = vmatprep.subr.bf16.mxu0 %v1273
      %1864 = vmatpush1.bf16.msra.mxu0 %v1272
      %1865 = vmatprep.subr.bf16.mxu0 %v1267
      %1866 = vmatpush1.bf16.msra.mxu0 %v1266
      %1867 = vmatprep.subr.bf16.mxu0 %v1261
      %1868 = vmatpush1.bf16.msra.mxu0 %v1260
      %1869 = vmatprep.subr.bf16.mxu0 %v1255
      %1870 = vmatpush1.bf16.msra.mxu0 %v1254
      %1871 = vmatprep.subr.bf16.mxu0 %v1249
      %1872 = vmatpush1.bf16.msra.mxu0 %v1248
      %1873 = vmatprep.subr.bf16.mxu0 %v1243
      %1874 = vmatpush1.bf16.msra.mxu0 %v1242
      %1875 = vmatprep.subr.bf16.mxu0 %v1237
      %1876 = vmatpush1.bf16.msra.mxu0 %v1236
      %1877 = vmatprep.subr.bf16.mxu0 %v1327
      %1878 = vmatpush2.bf16.msra.mxu0 %v1326
      %1879 = vmatprep.subr.bf16.mxu0 %v1321
      %1880 = vmatpush2.bf16.msra.mxu0 %v1320
      %1881 = vmatprep.subr.bf16.mxu0 %v1315
      %1882 = vmatpush2.bf16.msra.mxu0 %v1314
      %1883 = vmatprep.subr.bf16.mxu0 %v1309
      %1884 = vmatpush2.bf16.msra.mxu0 %v1308
      %1885 = vmatprep.subr.bf16.mxu0 %v1303
      %1886 = vmatpush2.bf16.msra.mxu0 %v1302
      %1887 = vmatprep.subr.bf16.mxu0 %v1297
      %1888 = vmatpush2.bf16.msra.mxu0 %v1296
      %1889 = vmatprep.subr.bf16.mxu0 %v1291
      %1890 = vmatpush2.bf16.msra.mxu0 %v1290
      %1891 = vmatprep.subr.bf16.mxu0 %v1285
      %1892 = vmatpush2.bf16.msra.mxu0 %v1284
      %1893 = vmatprep.mubr.bf16.mxu0 %v501
      %1894 = vmatmul.mubr.bf16.gmra.mxu0 %v500
      %v1895 = vpop.f32.mrf.mxu0
      %v1896 = vadd.f32 %v1783, %v1895
      %v1897 = vpop.f32.mrf.mxu0
      %v1898 = vadd.f32 %v1785, %v1897
      %v1899 = vpop.f32.mrf.mxu0
      %v1900 = vadd.f32 %v1787, %v1899
      %v1901 = vpop.f32.mrf.mxu0
      %v1902 = vadd.f32 %v1789, %v1901
      %1903 = vmatprep.mubr.bf16.mxu0 %v505
      %1904 = vmatmul.mubr.bf16.gmra.mxu0 %v504
      %v1905 = vpop.f32.mrf.mxu0
      %v1906 = vadd.f32 %v1793, %v1905
      %v1907 = vpop.f32.mrf.mxu0
      %v1908 = vadd.f32 %v1795, %v1907
      %v1909 = vpop.f32.mrf.mxu0
      %v1910 = vadd.f32 %v1797, %v1909
      %v1911 = vpop.f32.mrf.mxu0
      %v1912 = vadd.f32 %v1799, %v1911
      %1913 = vmatprep.mubr.bf16.mxu0 %v509
      %1914 = vmatmul.mubr.bf16.gmra.mxu0 %v508
      %v1915 = vpop.f32.mrf.mxu0
      %v1916 = vadd.f32 %v1803, %v1915
      %v1917 = vpop.f32.mrf.mxu0
      %v1918 = vadd.f32 %v1805, %v1917
      %v1919 = vpop.f32.mrf.mxu0
      %v1920 = vadd.f32 %v1807, %v1919
      %v1921 = vpop.f32.mrf.mxu0
      %v1922 = vadd.f32 %v1809, %v1921
      %1923 = vmatprep.mubr.bf16.mxu0 %v513
      %1924 = vmatmul.mubr.bf16.gmra.mxu0 %v512
      %v1925 = vpop.f32.mrf.mxu0
      %v1926 = vadd.f32 %v1813, %v1925
      %v1927 = vpop.f32.mrf.mxu0
      %v1928 = vadd.f32 %v1815, %v1927
      %v1929 = vpop.f32.mrf.mxu0
      %v1930 = vadd.f32 %v1817, %v1929
      %v1931 = vpop.f32.mrf.mxu0
      %v1932 = vadd.f32 %v1819, %v1931
      %1933 = vmatprep.mubr.bf16.mxu0 %v517
      %1934 = vmatmul.mubr.bf16.gmra.mxu0 %v516
      %v1935 = vpop.f32.mrf.mxu0
      %v1936 = vadd.f32 %v1823, %v1935
      %v1937 = vpop.f32.mrf.mxu0
      %v1938 = vadd.f32 %v1825, %v1937
      %v1939 = vpop.f32.mrf.mxu0
      %v1940 = vadd.f32 %v1827, %v1939
      %v1941 = vpop.f32.mrf.mxu0
      %v1942 = vadd.f32 %v1829, %v1941
      %1943 = vmatprep.mubr.bf16.mxu0 %v521
      %1944 = vmatmul.mubr.bf16.gmra.mxu0 %v520
      %v1945 = vpop.f32.mrf.mxu0
      %v1946 = vadd.f32 %v1833, %v1945
      %v1947 = vpop.f32.mrf.mxu0
      %v1948 = vadd.f32 %v1835, %v1947
      %v1949 = vpop.f32.mrf.mxu0
      %v1950 = vadd.f32 %v1837, %v1949
      %v1951 = vpop.f32.mrf.mxu0
      %v1952 = vadd.f32 %v1839, %v1951
      %1953 = vmatprep.mubr.bf16.mxu0 %v525
      %1954 = vmatmul.mubr.bf16.gmra.mxu0 %v524
      %v1955 = vpop.f32.mrf.mxu0
      %v1956 = vadd.f32 %v1843, %v1955
      %v1957 = vpop.f32.mrf.mxu0
      %v1958 = vadd.f32 %v1845, %v1957
      %v1959 = vpop.f32.mrf.mxu0
      %v1960 = vadd.f32 %v1847, %v1959
      %v1961 = vpop.f32.mrf.mxu0
      %v1962 = vadd.f32 %v1849, %v1961
      %1963 = vmatprep.mubr.bf16.mxu0 %v529
      %1964 = vmatmul.mubr.bf16.gmra.mxu0 %v528
      %v1965 = vpop.f32.mrf.mxu0
      %v1966 = vadd.f32 %v1853, %v1965
      %v1967 = vpop.f32.mrf.mxu0
      %v1968 = vadd.f32 %v1855, %v1967
      %v1969 = vpop.f32.mrf.mxu0
      %v1970 = vadd.f32 %v1857, %v1969
      %v1971 = vpop.f32.mrf.mxu0
      %v1972 = vadd.f32 %v1859, %v1971
      %1973 = vdwg.mxu0
      %1974 = vmatprep.subr.bf16.mxu0 %v1185
      %1975 = vmatpush1.bf16.msra.mxu0 %v1184
      %1976 = vmatprep.subr.bf16.mxu0 %v1179
      %1977 = vmatpush1.bf16.msra.mxu0 %v1178
      %1978 = vmatprep.subr.bf16.mxu0 %v1173
      %1979 = vmatpush1.bf16.msra.mxu0 %v1172
      %1980 = vmatprep.subr.bf16.mxu0 %v1167
      %1981 = vmatpush1.bf16.msra.mxu0 %v1166
      %1982 = vmatprep.subr.bf16.mxu0 %v1161
      %1983 = vmatpush1.bf16.msra.mxu0 %v1160
      %1984 = vmatprep.subr.bf16.mxu0 %v1155
      %1985 = vmatpush1.bf16.msra.mxu0 %v1154
      %1986 = vmatprep.subr.bf16.mxu0 %v1149
      %1987 = vmatpush1.bf16.msra.mxu0 %v1148
      %1988 = vmatprep.subr.bf16.mxu0 %v1143
      %1989 = vmatpush1.bf16.msra.mxu0 %v1142
      %1990 = vmatprep.subr.bf16.mxu0 %v1233
      %1991 = vmatpush2.bf16.msra.mxu0 %v1232
      %1992 = vmatprep.subr.bf16.mxu0 %v1227
      %1993 = vmatpush2.bf16.msra.mxu0 %v1226
      %1994 = vmatprep.subr.bf16.mxu0 %v1221
      %1995 = vmatpush2.bf16.msra.mxu0 %v1220
      %1996 = vmatprep.subr.bf16.mxu0 %v1215
      %1997 = vmatpush2.bf16.msra.mxu0 %v1214
      %1998 = vmatprep.subr.bf16.mxu0 %v1209
      %1999 = vmatpush2.bf16.msra.mxu0 %v1208
      %2000 = vmatprep.subr.bf16.mxu0 %v1203
      %2001 = vmatpush2.bf16.msra.mxu0 %v1202
      %2002 = vmatprep.subr.bf16.mxu0 %v1197
      %2003 = vmatpush2.bf16.msra.mxu0 %v1196
      %2004 = vmatprep.subr.bf16.mxu0 %v1191
      %2005 = vmatpush2.bf16.msra.mxu0 %v1190
      %2006 = vmatprep.mubr.bf16.mxu0 %v499
      %2007 = vmatmul.mubr.bf16.gmra.mxu0 %v498
      %v2008 = vpop.f32.mrf.mxu0
      %v2009 = vadd.f32 0.0, %v2008
      %v2010 = vpop.f32.mrf.mxu0
      %v2011 = vadd.f32 0.0, %v2010
      %v2012 = vpop.f32.mrf.mxu0
      %v2013 = vadd.f32 0.0, %v2012
      %v2014 = vpop.f32.mrf.mxu0
      %v2015 = vadd.f32 0.0, %v2014
      %2016 = vmatprep.mubr.bf16.mxu0 %v503
      %2017 = vmatmul.mubr.bf16.gmra.mxu0 %v502
      %v2018 = vpop.f32.mrf.mxu0
      %v2019 = vadd.f32 0.0, %v2018
      %v2020 = vpop.f32.mrf.mxu0
      %v2021 = vadd.f32 0.0, %v2020
      %v2022 = vpop.f32.mrf.mxu0
      %v2023 = vadd.f32 0.0, %v2022
      %v2024 = vpop.f32.mrf.mxu0
      %v2025 = vadd.f32 0.0, %v2024
      %2026 = vmatprep.mubr.bf16.mxu0 %v507
      %2027 = vmatmul.mubr.bf16.gmra.mxu0 %v506
      %v2028 = vpop.f32.mrf.mxu0
      %v2029 = vadd.f32 0.0, %v2028
      %v2030 = vpop.f32.mrf.mxu0
      %v2031 = vadd.f32 0.0, %v2030
      %v2032 = vpop.f32.mrf.mxu0
      %v2033 = vadd.f32 0.0, %v2032
      %v2034 = vpop.f32.mrf.mxu0
      %v2035 = vadd.f32 0.0, %v2034
      %2036 = vmatprep.mubr.bf16.mxu0 %v511
      %2037 = vmatmul.mubr.bf16.gmra.mxu0 %v510
      %v2038 = vpop.f32.mrf.mxu0
      %v2039 = vadd.f32 0.0, %v2038
      %v2040 = vpop.f32.mrf.mxu0
      %v2041 = vadd.f32 0.0, %v2040
      %v2042 = vpop.f32.mrf.mxu0
      %v2043 = vadd.f32 0.0, %v2042
      %v2044 = vpop.f32.mrf.mxu0
      %v2045 = vadd.f32 0.0, %v2044
      %2046 = vmatprep.mubr.bf16.mxu0 %v515
      %2047 = vmatmul.mubr.bf16.gmra.mxu0 %v514
      %v2048 = vpop.f32.mrf.mxu0
      %v2049 = vadd.f32 0.0, %v2048
      %v2050 = vpop.f32.mrf.mxu0
      %v2051 = vadd.f32 0.0, %v2050
      %v2052 = vpop.f32.mrf.mxu0
      %v2053 = vadd.f32 0.0, %v2052
      %v2054 = vpop.f32.mrf.mxu0
      %v2055 = vadd.f32 0.0, %v2054
      %2056 = vmatprep.mubr.bf16.mxu0 %v519
      %2057 = vmatmul.mubr.bf16.gmra.mxu0 %v518
      %v2058 = vpop.f32.mrf.mxu0
      %v2059 = vadd.f32 0.0, %v2058
      %v2060 = vpop.f32.mrf.mxu0
      %v2061 = vadd.f32 0.0, %v2060
      %v2062 = vpop.f32.mrf.mxu0
      %v2063 = vadd.f32 0.0, %v2062
      %v2064 = vpop.f32.mrf.mxu0
      %v2065 = vadd.f32 0.0, %v2064
      %2066 = vmatprep.mubr.bf16.mxu0 %v523
      %2067 = vmatmul.mubr.bf16.gmra.mxu0 %v522
      %v2068 = vpop.f32.mrf.mxu0
      %v2069 = vadd.f32 0.0, %v2068
      %v2070 = vpop.f32.mrf.mxu0
      %v2071 = vadd.f32 0.0, %v2070
      %v2072 = vpop.f32.mrf.mxu0
      %v2073 = vadd.f32 0.0, %v2072
      %v2074 = vpop.f32.mrf.mxu0
      %v2075 = vadd.f32 0.0, %v2074
      %2076 = vmatprep.mubr.bf16.mxu0 %v527
      %2077 = vmatmul.mubr.bf16.gmra.mxu0 %v526
      %v2078 = vpop.f32.mrf.mxu0
      %v2079 = vadd.f32 0.0, %v2078
      %v2080 = vpop.f32.mrf.mxu0
      %v2081 = vadd.f32 0.0, %v2080
      %v2082 = vpop.f32.mrf.mxu0
      %v2083 = vadd.f32 0.0, %v2082
      %v2084 = vpop.f32.mrf.mxu0
      %v2085 = vadd.f32 0.0, %v2084
      %2086 = vdwg.mxu0
      %2087 = vmatprep.subr.bf16.mxu0 %v1281
      %2088 = vmatpush1.bf16.msra.mxu0 %v1280
      %2089 = vmatprep.subr.bf16.mxu0 %v1275
      %2090 = vmatpush1.bf16.msra.mxu0 %v1274
      %2091 = vmatprep.subr.bf16.mxu0 %v1269
      %2092 = vmatpush1.bf16.msra.mxu0 %v1268
      %2093 = vmatprep.subr.bf16.mxu0 %v1263
      %2094 = vmatpush1.bf16.msra.mxu0 %v1262
      %2095 = vmatprep.subr.bf16.mxu0 %v1257
      %2096 = vmatpush1.bf16.msra.mxu0 %v1256
      %2097 = vmatprep.subr.bf16.mxu0 %v1251
      %2098 = vmatpush1.bf16.msra.mxu0 %v1250
      %2099 = vmatprep.subr.bf16.mxu0 %v1245
      %2100 = vmatpush1.bf16.msra.mxu0 %v1244
      %2101 = vmatprep.subr.bf16.mxu0 %v1239
      %2102 = vmatpush1.bf16.msra.mxu0 %v1238
      %2103 = vmatprep.subr.bf16.mxu0 %v1329
      %2104 = vmatpush2.bf16.msra.mxu0 %v1328
      %2105 = vmatprep.subr.bf16.mxu0 %v1323
      %2106 = vmatpush2.bf16.msra.mxu0 %v1322
      %2107 = vmatprep.subr.bf16.mxu0 %v1317
      %2108 = vmatpush2.bf16.msra.mxu0 %v1316
      %2109 = vmatprep.subr.bf16.mxu0 %v1311
      %2110 = vmatpush2.bf16.msra.mxu0 %v1310
      %2111 = vmatprep.subr.bf16.mxu0 %v1305
      %2112 = vmatpush2.bf16.msra.mxu0 %v1304
      %2113 = vmatprep.subr.bf16.mxu0 %v1299
      %2114 = vmatpush2.bf16.msra.mxu0 %v1298
      %2115 = vmatprep.subr.bf16.mxu0 %v1293
      %2116 = vmatpush2.bf16.msra.mxu0 %v1292
      %2117 = vmatprep.subr.bf16.mxu0 %v1287
      %2118 = vmatpush2.bf16.msra.mxu0 %v1286
      %2119 = vmatprep.mubr.bf16.mxu0 %v501
      %2120 = vmatmul.mubr.bf16.gmra.mxu0 %v500
      %v2121 = vpop.f32.mrf.mxu0
      %v2122 = vadd.f32 %v2009, %v2121
      %v2123 = vpop.f32.mrf.mxu0
      %v2124 = vadd.f32 %v2011, %v2123
      %v2125 = vpop.f32.mrf.mxu0
      %v2126 = vadd.f32 %v2013, %v2125
      %v2127 = vpop.f32.mrf.mxu0
      %v2128 = vadd.f32 %v2015, %v2127
      %2129 = vmatprep.mubr.bf16.mxu0 %v505
      %2130 = vmatmul.mubr.bf16.gmra.mxu0 %v504
      %v2131 = vpop.f32.mrf.mxu0
      %v2132 = vadd.f32 %v2019, %v2131
      %v2133 = vpop.f32.mrf.mxu0
      %v2134 = vadd.f32 %v2021, %v2133
      %v2135 = vpop.f32.mrf.mxu0
      %v2136 = vadd.f32 %v2023, %v2135
      %v2137 = vpop.f32.mrf.mxu0
      %v2138 = vadd.f32 %v2025, %v2137
      %2139 = vmatprep.mubr.bf16.mxu0 %v509
      %2140 = vmatmul.mubr.bf16.gmra.mxu0 %v508
      %v2141 = vpop.f32.mrf.mxu0
      %v2142 = vadd.f32 %v2029, %v2141
      %v2143 = vpop.f32.mrf.mxu0
      %v2144 = vadd.f32 %v2031, %v2143
      %v2145 = vpop.f32.mrf.mxu0
      %v2146 = vadd.f32 %v2033, %v2145
      %v2147 = vpop.f32.mrf.mxu0
      %v2148 = vadd.f32 %v2035, %v2147
      %2149 = vmatprep.mubr.bf16.mxu0 %v513
      %2150 = vmatmul.mubr.bf16.gmra.mxu0 %v512
      %v2151 = vpop.f32.mrf.mxu0
      %v2152 = vadd.f32 %v2039, %v2151
      %v2153 = vpop.f32.mrf.mxu0
      %v2154 = vadd.f32 %v2041, %v2153
      %v2155 = vpop.f32.mrf.mxu0
      %v2156 = vadd.f32 %v2043, %v2155
      %v2157 = vpop.f32.mrf.mxu0
      %v2158 = vadd.f32 %v2045, %v2157
      %2159 = vmatprep.mubr.bf16.mxu0 %v517
      %2160 = vmatmul.mubr.bf16.gmra.mxu0 %v516
      %v2161 = vpop.f32.mrf.mxu0
      %v2162 = vadd.f32 %v2049, %v2161
      %v2163 = vpop.f32.mrf.mxu0
      %v2164 = vadd.f32 %v2051, %v2163
      %v2165 = vpop.f32.mrf.mxu0
      %v2166 = vadd.f32 %v2053, %v2165
      %v2167 = vpop.f32.mrf.mxu0
      %v2168 = vadd.f32 %v2055, %v2167
      %2169 = vmatprep.mubr.bf16.mxu0 %v521
      %2170 = vmatmul.mubr.bf16.gmra.mxu0 %v520
      %v2171 = vpop.f32.mrf.mxu0
      %v2172 = vadd.f32 %v2059, %v2171
      %v2173 = vpop.f32.mrf.mxu0
      %v2174 = vadd.f32 %v2061, %v2173
      %v2175 = vpop.f32.mrf.mxu0
      %v2176 = vadd.f32 %v2063, %v2175
      %v2177 = vpop.f32.mrf.mxu0
      %v2178 = vadd.f32 %v2065, %v2177
      %2179 = vmatprep.mubr.bf16.mxu0 %v525
      %2180 = vmatmul.mubr.bf16.gmra.mxu0 %v524
      %v2181 = vpop.f32.mrf.mxu0
      %v2182 = vadd.f32 %v2069, %v2181
      %v2183 = vpop.f32.mrf.mxu0
      %v2184 = vadd.f32 %v2071, %v2183
      %v2185 = vpop.f32.mrf.mxu0
      %v2186 = vadd.f32 %v2073, %v2185
      %v2187 = vpop.f32.mrf.mxu0
      %v2188 = vadd.f32 %v2075, %v2187
      %2189 = vmatprep.mubr.bf16.mxu0 %v529
      %2190 = vmatmul.mubr.bf16.gmra.mxu0 %v528
      %v2191 = vpop.f32.mrf.mxu0
      %v2192 = vadd.f32 %v2079, %v2191
      %v2193 = vpop.f32.mrf.mxu0
      %v2194 = vadd.f32 %v2081, %v2193
      %v2195 = vpop.f32.mrf.mxu0
      %v2196 = vadd.f32 %v2083, %v2195
      %v2197 = vpop.f32.mrf.mxu0
      %v2198 = vadd.f32 %v2085, %v2197
      %2199 = vdwg.mxu0
      %v2200 = vmul.f32 %v1670, %v1670
      %v2201 = vmul.f32 %v1672, %v1672
      %v2202 = vmul.f32 %v1896, %v1896
      %v2203 = vmul.f32 %v1674, %v1674
      %v2204 = vmul.f32 %v1676, %v1676
      %v2205 = vmul.f32 %v1900, %v1900
      %v2206 = vmul.f32 %v1680, %v1680
      %v2207 = vmul.f32 %v1682, %v1682
      %v2208 = vmul.f32 %v1906, %v1906
      %v2209 = vmul.f32 %v1684, %v1684
      %v2210 = vmul.f32 %v1686, %v1686
      %v2211 = vmul.f32 %v1910, %v1910
      %v2212 = vmul.f32 %v1690, %v1690
      %v2213 = vmul.f32 %v1692, %v1692
      %v2214 = vmul.f32 %v1916, %v1916
      %v2215 = vmul.f32 %v1694, %v1694
      %v2216 = vmul.f32 %v1696, %v1696
      %v2217 = vmul.f32 %v1920, %v1920
      %v2218 = vmul.f32 %v1700, %v1700
      %v2219 = vmul.f32 %v1702, %v1702
      %v2220 = vmul.f32 %v1926, %v1926
      %v2221 = vmul.f32 %v1704, %v1704
      %v2222 = vmul.f32 %v1706, %v1706
      %v2223 = vmul.f32 %v1930, %v1930
      %v2224 = vmul.f32 %v1710, %v1710
      %v2225 = vmul.f32 %v1712, %v1712
      %v2226 = vmul.f32 %v1936, %v1936
      %v2227 = vmul.f32 %v1714, %v1714
      %v2228 = vmul.f32 %v1716, %v1716
      %v2229 = vmul.f32 %v1940, %v1940
      %v2230 = vmul.f32 %v1720, %v1720
      %v2231 = vmul.f32 %v1722, %v1722
      %v2232 = vmul.f32 %v1946, %v1946
      %v2233 = vmul.f32 %v1724, %v1724
      %v2234 = vmul.f32 %v1726, %v1726
      %v2235 = vmul.f32 %v1950, %v1950
      %v2236 = vmul.f32 %v1730, %v1730
      %v2237 = vmul.f32 %v1732, %v1732
      %v2238 = vmul.f32 %v1956, %v1956
      %v2239 = vmul.f32 %v1734, %v1734
      %v2240 = vmul.f32 %v1736, %v1736
      %v2241 = vmul.f32 %v1960, %v1960
      %v2242 = vmul.f32 %v1740, %v1740
      %v2243 = vmul.f32 %v1742, %v1742
      %v2244 = vmul.f32 %v1966, %v1966
      %v2245 = vmul.f32 %v1744, %v1744
      %v2246 = vmul.f32 %v1746, %v1746
      %v2247 = vmul.f32 %v1970, %v1970
      %v2248 = vmul.f32 %v1898, %v1898
      %v2249 = vmul.f32 %v2122, %v2122
      %v2250 = vmul.f32 %v2124, %v2124
      %v2251 = vmul.f32 %v1902, %v1902
      %v2252 = vmul.f32 %v2126, %v2126
      %v2253 = vmul.f32 %v2128, %v2128
      %v2254 = vmul.f32 %v1908, %v1908
      %v2255 = vmul.f32 %v2132, %v2132
      %v2256 = vmul.f32 %v2134, %v2134
      %v2257 = vmul.f32 %v1912, %v1912
      %v2258 = vmul.f32 %v2136, %v2136
      %v2259 = vmul.f32 %v2138, %v2138
      %v2260 = vmul.f32 %v1918, %v1918
      %v2261 = vmul.f32 %v2142, %v2142
      %v2262 = vmul.f32 %v2144, %v2144
      %v2263 = vmul.f32 %v1922, %v1922
      %v2264 = vmul.f32 %v2146, %v2146
      %v2265 = vmul.f32 %v2148, %v2148
      %v2266 = vmul.f32 %v1928, %v1928
      %v2267 = vmul.f32 %v2152, %v2152
      %v2268 = vmul.f32 %v2154, %v2154
      %v2269 = vmul.f32 %v1932, %v1932
      %v2270 = vmul.f32 %v2156, %v2156
      %v2271 = vmul.f32 %v2158, %v2158
      %v2272 = vmul.f32 %v1938, %v1938
      %v2273 = vmul.f32 %v2162, %v2162
      %v2274 = vmul.f32 %v2164, %v2164
      %v2275 = vmul.f32 %v1942, %v1942
      %v2276 = vmul.f32 %v2166, %v2166
      %v2277 = vmul.f32 %v2168, %v2168
      %v2278 = vmul.f32 %v1948, %v1948
      %v2279 = vmul.f32 %v2172, %v2172
      %v2280 = vmul.f32 %v2174, %v2174
      %v2281 = vmul.f32 %v1952, %v1952
      %v2282 = vmul.f32 %v2176, %v2176
      %v2283 = vmul.f32 %v2178, %v2178
      %v2284 = vmul.f32 %v1958, %v1958
      %v2285 = vmul.f32 %v2182, %v2182
      %v2286 = vmul.f32 %v2184, %v2184
      %v2287 = vmul.f32 %v1962, %v1962
      %v2288 = vmul.f32 %v2186, %v2186
      %v2289 = vmul.f32 %v2188, %v2188
      %v2290 = vmul.f32 %v1968, %v1968
      %v2291 = vmul.f32 %v2192, %v2192
      %v2292 = vmul.f32 %v2194, %v2194
      %v2293 = vmul.f32 %v1972, %v1972
      %v2294 = vmul.f32 %v2196, %v2196
      %v2295 = vmul.f32 %v2198, %v2198
      %v2296 = vadd.f32 %v2200, %v2248
      %v2297 = vadd.f32 %v2201, %v2249
      %v2298 = vadd.f32 %v2202, %v2250
      %v2299 = vadd.f32 %v2203, %v2251
      %v2300 = vadd.f32 %v2204, %v2252
      %v2301 = vadd.f32 %v2205, %v2253
      %v2302 = vadd.f32 %v2206, %v2254
      %v2303 = vadd.f32 %v2207, %v2255
      %v2304 = vadd.f32 %v2208, %v2256
      %v2305 = vadd.f32 %v2209, %v2257
      %v2306 = vadd.f32 %v2210, %v2258
      %v2307 = vadd.f32 %v2211, %v2259
      %v2308 = vadd.f32 %v2212, %v2260
      %v2309 = vadd.f32 %v2213, %v2261
      %v2310 = vadd.f32 %v2214, %v2262
      %v2311 = vadd.f32 %v2215, %v2263
      %v2312 = vadd.f32 %v2216, %v2264
      %v2313 = vadd.f32 %v2217, %v2265
      %v2314 = vadd.f32 %v2218, %v2266
      %v2315 = vadd.f32 %v2219, %v2267
      %v2316 = vadd.f32 %v2220, %v2268
      %v2317 = vadd.f32 %v2221, %v2269
      %v2318 = vadd.f32 %v2222, %v2270
      %v2319 = vadd.f32 %v2223, %v2271
      %v2320 = vadd.f32 %v2224, %v2272
      %v2321 = vadd.f32 %v2225, %v2273
      %v2322 = vadd.f32 %v2226, %v2274
      %v2323 = vadd.f32 %v2227, %v2275
      %v2324 = vadd.f32 %v2228, %v2276
      %v2325 = vadd.f32 %v2229, %v2277
      %v2326 = vadd.f32 %v2230, %v2278
      %v2327 = vadd.f32 %v2231, %v2279
      %v2328 = vadd.f32 %v2232, %v2280
      %v2329 = vadd.f32 %v2233, %v2281
      %v2330 = vadd.f32 %v2234, %v2282
      %v2331 = vadd.f32 %v2235, %v2283
      %v2332 = vadd.f32 %v2236, %v2284
      %v2333 = vadd.f32 %v2237, %v2285
      %v2334 = vadd.f32 %v2238, %v2286
      %v2335 = vadd.f32 %v2239, %v2287
      %v2336 = vadd.f32 %v2240, %v2288
      %v2337 = vadd.f32 %v2241, %v2289
      %v2338 = vadd.f32 %v2242, %v2290
      %v2339 = vadd.f32 %v2243, %v2291
      %v2340 = vadd.f32 %v2244, %v2292
      %v2341 = vadd.f32 %v2245, %v2293
      %v2342 = vadd.f32 %v2246, %v2294
      %v2343 = vadd.f32 %v2247, %v2295
      %v2344 = vpack.c.bf16 %v2299, %v2296
      %v2345 = vpack.c.bf16 %v2300, %v2297
      %v2346 = vpack.c.bf16 %v2301, %v2298
      %v2347 = vpack.c.bf16 %v2305, %v2302
      %v2348 = vpack.c.bf16 %v2306, %v2303
      %v2349 = vpack.c.bf16 %v2307, %v2304
      %v2350 = vpack.c.bf16 %v2311, %v2308
      %v2351 = vpack.c.bf16 %v2312, %v2309
      %v2352 = vpack.c.bf16 %v2313, %v2310
      %v2353 = vpack.c.bf16 %v2317, %v2314
      %v2354 = vpack.c.bf16 %v2318, %v2315
      %v2355 = vpack.c.bf16 %v2319, %v2316
      %v2356 = vpack.c.bf16 %v2323, %v2320
      %v2357 = vpack.c.bf16 %v2324, %v2321
      %v2358 = vpack.c.bf16 %v2325, %v2322
      %v2359 = vpack.c.bf16 %v2329, %v2326
      %v2360 = vpack.c.bf16 %v2330, %v2327
      %v2361 = vpack.c.bf16 %v2331, %v2328
      %v2362 = vpack.c.bf16 %v2335, %v2332
      %v2363 = vpack.c.bf16 %v2336, %v2333
      %v2364 = vpack.c.bf16 %v2337, %v2334
      %v2365 = vpack.c.bf16 %v2341, %v2338
      %v2366 = vpack.c.bf16 %v2342, %v2339
      %v2367 = vpack.c.bf16 %v2343, %v2340
      %v2368 = vld [vmem:[%s2] sm:$0xf]
      %v2369 = vld [vmem:[%s2 + $0x4] sm:$0xf]
      %v2370 = vld [vmem:[%s2 + $0x8] sm:$0xf]
      %v2371 = vld [vmem:[%s2 + $0xc] sm:$0xf]
      %v2372 = vld [vmem:[%s2 + $0x10] sm:$0xf]
      %v2373 = vld [vmem:[%s2 + $0x14] sm:$0xf]
      %v2374 = vld [vmem:[%s2 + $0x18] sm:$0xf]
      %v2375 = vld [vmem:[%s2 + $0x1c] sm:$0xf]
      %v2376 = vld [vmem:[%s2 + $0x20] sm:$0xf]
      %v2377 = vld [vmem:[%s2 + $0x24] sm:$0xf]
      %v2378 = vld [vmem:[%s2 + $0x28] sm:$0xf]
      %v2379 = vld [vmem:[%s2 + $0x2c] sm:$0xf]
      %v2380 = vld [vmem:[%s2 + $0x30] sm:$0xf]
      %v2381 = vld [vmem:[%s2 + $0x34] sm:$0xf]
      %v2382 = vld [vmem:[%s2 + $0x38] sm:$0xf]
      %v2383 = vld [vmem:[%s2 + $0x3c] sm:$0xf]
      %v2384 = vld [vmem:[%s2 + $0x40] sm:$0xf]
      %v2385 = vld [vmem:[%s2 + $0x44] sm:$0xf]
      %v2386 = vld [vmem:[%s2 + $0x48] sm:$0xf]
      %v2387 = vld [vmem:[%s2 + $0x4c] sm:$0xf]
      %v2388 = vld [vmem:[%s2 + $0x50] sm:$0xf]
      %v2389 = vld [vmem:[%s2 + $0x54] sm:$0xf]
      %v2390 = vld [vmem:[%s2 + $0x58] sm:$0xf]
      %v2391 = vld [vmem:[%s2 + $0x5c] sm:$0xf]
      %v2392 = vld [vmem:[%s2 + $0x60] sm:$0xf]
      %v2393 = vld [vmem:[%s2 + $0x64] sm:$0xf]
      %v2394 = vld [vmem:[%s2 + $0x68] sm:$0xf]
      %v2395 = vld [vmem:[%s2 + $0x6c] sm:$0xf]
      %v2396 = vld [vmem:[%s2 + $0x70] sm:$0xf]
      %v2397 = vld [vmem:[%s2 + $0x74] sm:$0xf]
      %v2398 = vld [vmem:[%s2 + $0x78] sm:$0xf]
      %v2399 = vld [vmem:[%s2 + $0x7c] sm:$0xf]
      %v2400 = vld [vmem:[%s2 + $0x80] sm:$0xf]
      %v2401 = vld [vmem:[%s2 + $0x84] sm:$0xf]
      %v2402 = vld [vmem:[%s2 + $0x88] sm:$0xf]
      %v2403 = vld [vmem:[%s2 + $0x8c] sm:$0xf]
      %v2404 = vld [vmem:[%s2 + $0x90] sm:$0xf]
      %v2405 = vld [vmem:[%s2 + $0x94] sm:$0xf]
      %v2406 = vld [vmem:[%s2 + $0x98] sm:$0xf]
      %v2407 = vld [vmem:[%s2 + $0x9c] sm:$0xf]
      %v2408 = vld [vmem:[%s2 + $0xa0] sm:$0xf]
      %v2409 = vld [vmem:[%s2 + $0xa4] sm:$0xf]
      %v2410 = vld [vmem:[%s2 + $0xa8] sm:$0xf]
      %v2411 = vld [vmem:[%s2 + $0xac] sm:$0xf]
      %v2412 = vld [vmem:[%s2 + $0xb0] sm:$0xf]
      %v2413 = vld [vmem:[%s2 + $0xb4] sm:$0xf]
      %v2414 = vld [vmem:[%s2 + $0xb8] sm:$0xf]
      %v2415 = vld [vmem:[%s2 + $0xbc] sm:$0xf]
      %v2464 = vunpack.c.l.b16 %v2368
      %v2465 = vunpack.c.l.b16 %v2369
      %v2466 = vunpack.c.l.b16 %v2370
      %v2467 = vunpack.c.l.b16 %v2371
      %v2468 = vunpack.c.l.b16 %v2372
      %v2469 = vunpack.c.l.b16 %v2373
      %v2470 = vunpack.c.l.b16 %v2374
      %v2471 = vunpack.c.l.b16 %v2375
      %v2472 = vunpack.c.l.b16 %v2376
      %v2473 = vunpack.c.l.b16 %v2377
      %v2474 = vunpack.c.l.b16 %v2378
      %v2475 = vunpack.c.l.b16 %v2379
      %v2476 = vunpack.c.l.b16 %v2380
      %v2477 = vunpack.c.l.b16 %v2381
      %v2478 = vunpack.c.l.b16 %v2382
      %v2479 = vunpack.c.l.b16 %v2383
      %v2480 = vunpack.c.l.b16 %v2384
      %v2481 = vunpack.c.l.b16 %v2385
      %v2482 = vunpack.c.l.b16 %v2386
      %v2483 = vunpack.c.l.b16 %v2387
      %v2484 = vunpack.c.l.b16 %v2388
      %v2485 = vunpack.c.l.b16 %v2389
      %v2486 = vunpack.c.l.b16 %v2390
      %v2487 = vunpack.c.l.b16 %v2391
      %v2488 = vunpack.c.l.b16 %v2392
      %v2489 = vunpack.c.l.b16 %v2393
      %v2490 = vunpack.c.l.b16 %v2394
      %v2491 = vunpack.c.l.b16 %v2395
      %v2492 = vunpack.c.l.b16 %v2396
      %v2493 = vunpack.c.l.b16 %v2397
      %v2494 = vunpack.c.l.b16 %v2398
      %v2495 = vunpack.c.l.b16 %v2399
      %v2496 = vunpack.c.l.b16 %v2400
      %v2497 = vunpack.c.l.b16 %v2401
      %v2498 = vunpack.c.l.b16 %v2402
      %v2499 = vunpack.c.l.b16 %v2403
      %v2500 = vunpack.c.l.b16 %v2404
      %v2501 = vunpack.c.l.b16 %v2405
      %v2502 = vunpack.c.l.b16 %v2406
      %v2503 = vunpack.c.l.b16 %v2407
      %v2504 = vunpack.c.l.b16 %v2408
      %v2505 = vunpack.c.l.b16 %v2409
      %v2506 = vunpack.c.l.b16 %v2410
      %v2507 = vunpack.c.l.b16 %v2411
      %v2508 = vunpack.c.l.b16 %v2412
      %v2509 = vunpack.c.l.b16 %v2413
      %v2510 = vunpack.c.l.b16 %v2414
      %v2511 = vunpack.c.l.b16 %v2415
      %v2512 = vpack.c.b16 %v2465, %v2464
      %v2513 = vpack.c.b16 %v2467, %v2466
      %v2514 = vpack.c.b16 %v2469, %v2468
      %v2515 = vpack.c.b16 %v2471, %v2470
      %v2516 = vpack.c.b16 %v2473, %v2472
      %v2517 = vpack.c.b16 %v2475, %v2474
      %v2518 = vpack.c.b16 %v2477, %v2476
      %v2519 = vpack.c.b16 %v2479, %v2478
      %v2520 = vpack.c.b16 %v2481, %v2480
      %v2521 = vpack.c.b16 %v2483, %v2482
      %v2522 = vpack.c.b16 %v2485, %v2484
      %v2523 = vpack.c.b16 %v2487, %v2486
      %v2524 = vpack.c.b16 %v2489, %v2488
      %v2525 = vpack.c.b16 %v2491, %v2490
      %v2526 = vpack.c.b16 %v2493, %v2492
      %v2527 = vpack.c.b16 %v2495, %v2494
      %v2528 = vpack.c.b16 %v2497, %v2496
      %v2529 = vpack.c.b16 %v2499, %v2498
      %v2530 = vpack.c.b16 %v2501, %v2500
      %v2531 = vpack.c.b16 %v2503, %v2502
      %v2532 = vpack.c.b16 %v2505, %v2504
      %v2533 = vpack.c.b16 %v2507, %v2506
      %v2534 = vpack.c.b16 %v2509, %v2508
      %v2535 = vpack.c.b16 %v2511, %v2510
      %2560 = vmatprep.subr.bf16.mxu0 0
      %2561 = vmatpush1.bf16.msra.mxu0 %v2519
      %2562 = vmatprep.subr.bf16.mxu0 0
      %2563 = vmatpush1.bf16.msra.mxu0 %v2518
      %2564 = vmatprep.subr.bf16.mxu0 0
      %2565 = vmatpush1.bf16.msra.mxu0 %v2517
      %2566 = vmatprep.subr.bf16.mxu0 0
      %2567 = vmatpush1.bf16.msra.mxu0 %v2516
      %2568 = vmatprep.subr.bf16.mxu0 0
      %2569 = vmatpush1.bf16.msra.mxu0 %v2515
      %2570 = vmatprep.subr.bf16.mxu0 0
      %2571 = vmatpush1.bf16.msra.mxu0 %v2514
      %2572 = vmatprep.subr.bf16.mxu0 0
      %2573 = vmatpush1.bf16.msra.mxu0 %v2513
      %2574 = vmatprep.subr.bf16.mxu0 0
      %2575 = vmatpush1.bf16.msra.mxu0 %v2512
      %2576 = vmatprep.subr.bf16.mxu0 0
      %2577 = vmatpush2.bf16.msra.mxu0 %v2527
      %2578 = vmatprep.subr.bf16.mxu0 0
      %2579 = vmatpush2.bf16.msra.mxu0 %v2526
      %2580 = vmatprep.subr.bf16.mxu0 0
      %2581 = vmatpush2.bf16.msra.mxu0 %v2525
      %2582 = vmatprep.subr.bf16.mxu0 0
      %2583 = vmatpush2.bf16.msra.mxu0 %v2524
      %2584 = vmatprep.subr.bf16.mxu0 0
      %2585 = vmatpush2.bf16.msra.mxu0 %v2523
      %2586 = vmatprep.subr.bf16.mxu0 0
      %2587 = vmatpush2.bf16.msra.mxu0 %v2522
      %2588 = vmatprep.subr.bf16.mxu0 0
      %2589 = vmatpush2.bf16.msra.mxu0 %v2521
      %2590 = vmatprep.subr.bf16.mxu0 0
      %2591 = vmatpush2.bf16.msra.mxu0 %v2520
      %2592 = vmatprep.mubr.bf16.mxu0 %v2345
      %2593 = vmatmul.mubr.bf16.gmra.mxu0 %v2344
      %v2594 = vpop.f32.mrf.mxu0
      %v2595 = vadd.f32 0.0, %v2594
      %v2596 = vpop.f32.mrf.mxu0
      %v2597 = vpop.f32.mrf.mxu0
      %v2598 = vadd.f32 0.0, %v2597
      %v2599 = vpop.f32.mrf.mxu0
      %2600 = vmatprep.mubr.bf16.mxu0 %v2348
      %2601 = vmatmul.mubr.bf16.gmra.mxu0 %v2347
      %v2602 = vpop.f32.mrf.mxu0
      %v2603 = vadd.f32 0.0, %v2602
      %v2604 = vpop.f32.mrf.mxu0
      %v2605 = vpop.f32.mrf.mxu0
      %v2606 = vadd.f32 0.0, %v2605
      %v2607 = vpop.f32.mrf.mxu0
      %2608 = vmatprep.mubr.bf16.mxu0 %v2351
      %2609 = vmatmul.mubr.bf16.gmra.mxu0 %v2350
      %v2610 = vpop.f32.mrf.mxu0
      %v2611 = vadd.f32 0.0, %v2610
      %v2612 = vpop.f32.mrf.mxu0
      %v2613 = vpop.f32.mrf.mxu0
      %v2614 = vadd.f32 0.0, %v2613
      %v2615 = vpop.f32.mrf.mxu0
      %2616 = vmatprep.mubr.bf16.mxu0 %v2354
      %2617 = vmatmul.mubr.bf16.gmra.mxu0 %v2353
      %v2618 = vpop.f32.mrf.mxu0
      %v2619 = vadd.f32 0.0, %v2618
      %v2620 = vpop.f32.mrf.mxu0
      %v2621 = vpop.f32.mrf.mxu0
      %v2622 = vadd.f32 0.0, %v2621
      %v2623 = vpop.f32.mrf.mxu0
      %2624 = vmatprep.mubr.bf16.mxu0 %v2357
      %2625 = vmatmul.mubr.bf16.gmra.mxu0 %v2356
      %v2626 = vpop.f32.mrf.mxu0
      %v2627 = vadd.f32 0.0, %v2626
      %v2628 = vpop.f32.mrf.mxu0
      %v2629 = vpop.f32.mrf.mxu0
      %v2630 = vadd.f32 0.0, %v2629
      %v2631 = vpop.f32.mrf.mxu0
      %2632 = vmatprep.mubr.bf16.mxu0 %v2360
      %2633 = vmatmul.mubr.bf16.gmra.mxu0 %v2359
      %v2634 = vpop.f32.mrf.mxu0
      %v2635 = vadd.f32 0.0, %v2634
      %v2636 = vpop.f32.mrf.mxu0
      %v2637 = vpop.f32.mrf.mxu0
      %v2638 = vadd.f32 0.0, %v2637
      %v2639 = vpop.f32.mrf.mxu0
      %2640 = vmatprep.mubr.bf16.mxu0 %v2363
      %2641 = vmatmul.mubr.bf16.gmra.mxu0 %v2362
      %v2642 = vpop.f32.mrf.mxu0
      %v2643 = vadd.f32 0.0, %v2642
      %v2644 = vpop.f32.mrf.mxu0
      %v2645 = vpop.f32.mrf.mxu0
      %v2646 = vadd.f32 0.0, %v2645
      %v2647 = vpop.f32.mrf.mxu0
      %2648 = vmatprep.mubr.bf16.mxu0 %v2366
      %2649 = vmatmul.mubr.bf16.gmra.mxu0 %v2365
      %v2650 = vpop.f32.mrf.mxu0
      %v2651 = vadd.f32 0.0, %v2650
      %v2652 = vpop.f32.mrf.mxu0
      %v2653 = vpop.f32.mrf.mxu0
      %v2654 = vadd.f32 0.0, %v2653
      %v2655 = vpop.f32.mrf.mxu0
      %2656 = vdwg.mxu0
      %2657 = vmatprep.subr.bf16.mxu0 0
      %2658 = vmatpush1.bf16.msra.mxu0 %v2535
      %2659 = vmatprep.subr.bf16.mxu0 0
      %2660 = vmatpush1.bf16.msra.mxu0 %v2534
      %2661 = vmatprep.subr.bf16.mxu0 0
      %2662 = vmatpush1.bf16.msra.mxu0 %v2533
      %2663 = vmatprep.subr.bf16.mxu0 0
      %2664 = vmatpush1.bf16.msra.mxu0 %v2532
      %2665 = vmatprep.subr.bf16.mxu0 0
      %2666 = vmatpush1.bf16.msra.mxu0 %v2531
      %2667 = vmatprep.subr.bf16.mxu0 0
      %2668 = vmatpush1.bf16.msra.mxu0 %v2530
      %2669 = vmatprep.subr.bf16.mxu0 0
      %2670 = vmatpush1.bf16.msra.mxu0 %v2529
      %2671 = vmatprep.subr.bf16.mxu0 0
      %2672 = vmatpush1.bf16.msra.mxu0 %v2528
      %2673 = vmatprep.subr.bf16.mxu0 0
      %2674 = vmatpush2.bf16.msra.mxu0 0
      %2675 = vmatprep.subr.bf16.mxu0 0
      %2676 = vmatpush2.bf16.msra.mxu0 0
      %2677 = vmatprep.subr.bf16.mxu0 0
      %2678 = vmatpush2.bf16.msra.mxu0 0
      %2679 = vmatprep.subr.bf16.mxu0 0
      %2680 = vmatpush2.bf16.msra.mxu0 0
      %2681 = vmatprep.subr.bf16.mxu0 0
      %2682 = vmatpush2.bf16.msra.mxu0 0
      %2683 = vmatprep.subr.bf16.mxu0 0
      %2684 = vmatpush2.bf16.msra.mxu0 0
      %2685 = vmatprep.subr.bf16.mxu0 0
      %2686 = vmatpush2.bf16.msra.mxu0 0
      %2687 = vmatprep.subr.bf16.mxu0 0
      %2688 = vmatpush2.bf16.msra.mxu0 0
      %2689 = vmatprep.mubr.bf16.mxu0 0
      %2690 = vmatmul.mubr.bf16.gmra.mxu0 %v2346
      %v2691 = vpop.f32.mrf.mxu0
      %v2692 = vadd.f32 %v2595, %v2691
      %v2693 = vpop.f32.mrf.mxu0
      %v2694 = vpop.f32.mrf.mxu0
      %v2695 = vadd.f32 %v2598, %v2694
      %v2696 = vpop.f32.mrf.mxu0
      %2697 = vmatprep.mubr.bf16.mxu0 0
      %2698 = vmatmul.mubr.bf16.gmra.mxu0 %v2349
      %v2699 = vpop.f32.mrf.mxu0
      %v2700 = vadd.f32 %v2603, %v2699
      %v2701 = vpop.f32.mrf.mxu0
      %v2702 = vpop.f32.mrf.mxu0
      %v2703 = vadd.f32 %v2606, %v2702
      %v2704 = vpop.f32.mrf.mxu0
      %2705 = vmatprep.mubr.bf16.mxu0 0
      %2706 = vmatmul.mubr.bf16.gmra.mxu0 %v2352
      %v2707 = vpop.f32.mrf.mxu0
      %v2708 = vadd.f32 %v2611, %v2707
      %v2709 = vpop.f32.mrf.mxu0
      %v2710 = vpop.f32.mrf.mxu0
      %v2711 = vadd.f32 %v2614, %v2710
      %v2712 = vpop.f32.mrf.mxu0
      %2713 = vmatprep.mubr.bf16.mxu0 0
      %2714 = vmatmul.mubr.bf16.gmra.mxu0 %v2355
      %v2715 = vpop.f32.mrf.mxu0
      %v2716 = vadd.f32 %v2619, %v2715
      %v2717 = vpop.f32.mrf.mxu0
      %v2718 = vpop.f32.mrf.mxu0
      %v2719 = vadd.f32 %v2622, %v2718
      %v2720 = vpop.f32.mrf.mxu0
      %2721 = vmatprep.mubr.bf16.mxu0 0
      %2722 = vmatmul.mubr.bf16.gmra.mxu0 %v2358
      %v2723 = vpop.f32.mrf.mxu0
      %v2724 = vadd.f32 %v2627, %v2723
      %v2725 = vpop.f32.mrf.mxu0
      %v2726 = vpop.f32.mrf.mxu0
      %v2727 = vadd.f32 %v2630, %v2726
      %v2728 = vpop.f32.mrf.mxu0
      %2729 = vmatprep.mubr.bf16.mxu0 0
      %2730 = vmatmul.mubr.bf16.gmra.mxu0 %v2361
      %v2731 = vpop.f32.mrf.mxu0
      %v2732 = vadd.f32 %v2635, %v2731
      %v2733 = vpop.f32.mrf.mxu0
      %v2734 = vpop.f32.mrf.mxu0
      %v2735 = vadd.f32 %v2638, %v2734
      %v2736 = vpop.f32.mrf.mxu0
      %2737 = vmatprep.mubr.bf16.mxu0 0
      %2738 = vmatmul.mubr.bf16.gmra.mxu0 %v2364
      %v2739 = vpop.f32.mrf.mxu0
      %v2740 = vadd.f32 %v2643, %v2739
      %v2741 = vpop.f32.mrf.mxu0
      %v2742 = vpop.f32.mrf.mxu0
      %v2743 = vadd.f32 %v2646, %v2742
      %v2744 = vpop.f32.mrf.mxu0
      %2745 = vmatprep.mubr.bf16.mxu0 0
      %2746 = vmatmul.mubr.bf16.gmra.mxu0 %v2367
      %v2747 = vpop.f32.mrf.mxu0
      %v2748 = vadd.f32 %v2651, %v2747
      %v2749 = vpop.f32.mrf.mxu0
      %v2750 = vpop.f32.mrf.mxu0
      %v2751 = vadd.f32 %v2654, %v2750
      %v2752 = vpop.f32.mrf.mxu0
      %2753 = vdwg.mxu0
      %v2754 = vmax.f32 %v2692, 1e-10
      %v2755 = vmax.f32 %v2695, 1e-10
      %v2756 = vmax.f32 %v2700, 1e-10
      %v2757 = vmax.f32 %v2703, 1e-10
      %v2758 = vmax.f32 %v2708, 1e-10
      %v2759 = vmax.f32 %v2711, 1e-10
      %v2760 = vmax.f32 %v2716, 1e-10
      %v2761 = vmax.f32 %v2719, 1e-10
      %v2762 = vmax.f32 %v2724, 1e-10
      %v2763 = vmax.f32 %v2727, 1e-10
      %v2764 = vmax.f32 %v2732, 1e-10
      %v2765 = vmax.f32 %v2735, 1e-10
      %v2766 = vmax.f32 %v2740, 1e-10
      %v2767 = vmax.f32 %v2743, 1e-10
      %v2768 = vmax.f32 %v2748, 1e-10
      %v2769 = vmax.f32 %v2751, 1e-10
      %v2770 = vlog2.pop %v2754
      %v2771 = vmul.f32 %v2770, 0.6931472
      %v2772 = vlog2.pop %v2755
      %v2773 = vmul.f32 %v2772, 0.6931472
      %v2774 = vlog2.pop %v2756
      %v2775 = vmul.f32 %v2774, 0.6931472
      %v2776 = vlog2.pop %v2757
      %v2777 = vmul.f32 %v2776, 0.6931472
      %v2778 = vlog2.pop %v2758
      %v2779 = vmul.f32 %v2778, 0.6931472
      %v2780 = vlog2.pop %v2759
      %v2781 = vmul.f32 %v2780, 0.6931472
      %v2782 = vlog2.pop %v2760
      %v2783 = vmul.f32 %v2782, 0.6931472
      %v2784 = vlog2.pop %v2761
      %v2785 = vmul.f32 %v2784, 0.6931472
      %v2786 = vlog2.pop %v2762
      %v2787 = vmul.f32 %v2786, 0.6931472
      %v2788 = vlog2.pop %v2763
      %v2789 = vmul.f32 %v2788, 0.6931472
      %v2790 = vlog2.pop %v2764
      %v2791 = vmul.f32 %v2790, 0.6931472
      %v2792 = vlog2.pop %v2765
      %v2793 = vmul.f32 %v2792, 0.6931472
      %v2794 = vlog2.pop %v2766
      %v2795 = vmul.f32 %v2794, 0.6931472
      %v2796 = vlog2.pop %v2767
      %v2797 = vmul.f32 %v2796, 0.6931472
      %v2798 = vlog2.pop %v2768
      %v2799 = vmul.f32 %v2798, 0.6931472
      %v2800 = vlog2.pop %v2769
      %v2801 = vmul.f32 %v2800, 0.6931472
      %v2802 = vmul.f32 %v2771, 0.4342945
      %v2803 = vmul.f32 %v2773, 0.4342945
      %v2804 = vmul.f32 %v2775, 0.4342945
      %v2805 = vmul.f32 %v2777, 0.4342945
      %v2806 = vmul.f32 %v2779, 0.4342945
      %v2807 = vmul.f32 %v2781, 0.4342945
      %v2808 = vmul.f32 %v2783, 0.4342945
      %v2809 = vmul.f32 %v2785, 0.4342945
      %v2810 = vmul.f32 %v2787, 0.4342945
      %v2811 = vmul.f32 %v2789, 0.4342945
      %v2812 = vmul.f32 %v2791, 0.4342945
      %v2813 = vmul.f32 %v2793, 0.4342945
      %v2814 = vmul.f32 %v2795, 0.4342945
      %v2815 = vmul.f32 %v2797, 0.4342945
      %v2816 = vmul.f32 %v2799, 0.4342945
      %v2817 = vmul.f32 %v2801, 0.4342945
      %v2818 = vmul.f32 %v2802, 10.0
      %v2819 = vmul.f32 %v2803, 10.0
      %v2820 = vmul.f32 %v2804, 10.0
      %v2821 = vmul.f32 %v2805, 10.0
      %v2822 = vmul.f32 %v2806, 10.0
      %v2823 = vmul.f32 %v2807, 10.0
      %v2824 = vmul.f32 %v2808, 10.0
      %v2825 = vmul.f32 %v2809, 10.0
      %v2826 = vmul.f32 %v2810, 10.0
      %v2827 = vmul.f32 %v2811, 10.0
      %v2828 = vmul.f32 %v2812, 10.0
      %v2829 = vmul.f32 %v2813, 10.0
      %v2830 = vmul.f32 %v2814, 10.0
      %v2831 = vmul.f32 %v2815, 10.0
      %v2832 = vmul.f32 %v2816, 10.0
      %v2833 = vmul.f32 %v2817, 10.0
      %2834 = vst [vmem:[%s175] sm:$0xff] %v2818
      %2835 = vst [vmem:[%s175 + $0x8] sm:$0xff] %v2819
      %2836 = vst [vmem:[%s175 + $0x10] sm:$0xff] %v2820
      %2837 = vst [vmem:[%s175 + $0x18] sm:$0xff] %v2821
      %2838 = vst [vmem:[%s175 + $0x20] sm:$0xff] %v2822
      %2839 = vst [vmem:[%s175 + $0x28] sm:$0xff] %v2823
      %2840 = vst [vmem:[%s175 + $0x30] sm:$0xff] %v2824
      %2841 = vst [vmem:[%s175 + $0x38] sm:$0xff] %v2825
      %2842 = vst [vmem:[%s175 + $0x40] sm:$0xff] %v2826
      %2843 = vst [vmem:[%s175 + $0x48] sm:$0xff] %v2827
      %2844 = vst [vmem:[%s175 + $0x50] sm:$0xff] %v2828
      %2845 = vst [vmem:[%s175 + $0x58] sm:$0xff] %v2829
      %2846 = vst [vmem:[%s175 + $0x60] sm:$0xff] %v2830
      %2847 = vst [vmem:[%s175 + $0x68] sm:$0xff] %v2831
      %2848 = vst [vmem:[%s175 + $0x70] sm:$0xff] %v2832
      %2849 = vst [vmem:[%s175 + $0x78] sm:$0xff] %v2833
      %s2850 = smul.u32 16, %s14
      %p2851 = scmp.lt.s32.totalorder %s2850, 31
      %s2852 = scalar_select %p2851, %s2850, 31
      %s2853 = smul.addr %s2852, 8
      %s2854 = scalar_lea.vmem %s3, %s2853
      // Predicated region
      $region33: #{eff_trm_forward.5} parent=31 // pred_check
        %p2855 = pneg %p100
      $region34: #{eff_trm_forward.5} parent=31 // pred_check_branch
        %2857 = sbr.rel (%p2855) target = $region36
      $region35: #{eff_trm_forward.5} parent=31 // pred_region
        %s2858 = smul.u32 16, %s14
      $region36: #{eff_trm_forward.5} parent=31 // pred_fallthru
        _
    $region32: #{eff_trm_forward.5} parent=5 // pred_fallthru
      _
    %p2859 = scmp.le.s32.totalorder 2, %s9
    // Predicated region
    $region37: #{eff_trm_forward.5} parent=5 // pred_check
      %p2860 = pneg %p2859
    $region38: #{eff_trm_forward.5} parent=5 // pred_check_branch
      %2862 = sbr.rel (%p2860) target = $region40
    $region39: #{eff_trm_forward.5} parent=5 // pred_region
      %s2863 = ssub.s32 %s9, 2
      // Predicated region
      $region41: #{eff_trm_forward.5} parent=39 // pred_check
        %p2864 = pneg %p106
      $region42: #{eff_trm_forward.5} parent=39 // pred_check_branch
        %2866 = sbr.rel (%p2864) target = $region44
      $region43: #{eff_trm_forward.5} parent=39 // pred_region
        %s2867 = smul.u32 16, %s15
        %p2868 = scmp.lt.s32.totalorder %s2867, 31
        %s2869 = scalar_select %p2868, %s2867, 31
        %s2870 = smul.addr %s2869, 8
        %s2871 = scalar_lea.vmem %s3, %s2870
      $region44: #{eff_trm_forward.5} parent=39 // pred_fallthru
        _
    $region40: #{eff_trm_forward.5} parent=5 // pred_fallthru
      _
  $region6: #{eff_trm_forward.5} parent=0 // loop_footer
    %s13 = sadd.s32 1, %s9
  $region7: #{eff_trm_forward.5} parent=0 // loop_footer_branch
    %8 = sbr.rel target = $region3
  $region8: #{eff_trm_forward.5} parent=0 // loop_exit
    _

// kernel: eff_trm_forward.6
$region0: #{eff_trm_forward.6}
  #allocation0 [shape = 'u32[]', space=smem, size = 0x4, offset = 0x4, fixed_abs, tag = 'smem constant byte address 0x4 - core index']
  #allocation1 [shape = 'u32[144,128]{1,0:T(1,128)}', space=vmem, size = 0x12000, scoped, tag = 'internal scratch']
  %s0 = inlined_call_operand.vmem [shape: bf16[16,1024], index: 0, kind: input, shape index: {}]
  %s1 = inlined_call_operand.vmem [shape: bf16[1024,1408], index: 1, kind: input, shape index: {}]
  %s2 = inlined_call_operand.vmem [shape: f32[1,1408], index: 2, kind: input, shape index: {}]
  %s3 = inlined_call_operand.vmem [shape: f32[16,1408], index: 3, kind: output, shape index: {}]
  %s4 = sld [smem:[#allocation0]]
  $region120: #{eff_trm_forward.6} parent=0
    _
  %s6 = ssub.s32 1, %s4
  %s7 = scalar_select 0, %s6, %s4
  $region1: #{eff_trm_forward.6} parent=0
    #allocation2 [shape = 'u8[524288]{0}', space=vmem, size = 0x80000, scoped, tag = 'input window, operand 1']
    #allocation3 [shape = 'u8[16384]{0}', space=vmem, size = 0x4000, scoped, tag = 'output window, operand 0']
    loop: start=0, step=1, limit=13
    $region2: #{eff_trm_forward.6} parent=1 // loop_pre_header
      _
    $region3: #{eff_trm_forward.6} parent=1 // loop_header
      %s9 = sphi 0, %s13
      %p10 = scmp.ge.s32.totalorder %s9, 13
      %s16 = sphi 0, %s28
      %s17 = sphi 0, %s24
      %s18 = sphi 0, %s16
      %s19 = sphi 0, %s17
      %s20 = sphi 0, %s18
      %s21 = sphi 0, %s19
      %s31 = sphi 0, %s33
      %s34 = sphi 0, %s31
      %s35 = sphi 0, %s34
      %s51 = sphi 0, %s35
      %s57 = sphi 0, %s59
      %s60 = sphi 0, %s57
      %s61 = sphi 0, %s60
      %s77 = sphi 0, %s61
      %s83 = sphi 0, %s85
      %s86 = sphi 0, %s83
      %s87 = sphi 0, %s86
      %s103 = sphi 0, %s87
      %s111 = sphi 0, %s113
      %s114 = sphi 0, %s111
      %s115 = sphi 0, %s114
      %s131 = sphi 0, %s115
    $region4: #{eff_trm_forward.6} parent=1 // loop_header_branch
      %12 = sbr.rel (%p10) target = $region8
    $region5: #{eff_trm_forward.6} parent=1 // loop_body
      %s14 = ssub.s32 %s9, 1
      %s15 = ssub.s32 %s9, 2
      %s22 = sadd.s32 1, %s17
      %p23 = scmp.ge.s32.totalorder %s22, 11
      %s24 = scalar_select %p23, 0, %s22
      %s25 = sadd.s32 1, %s16
      %s26 = scalar_select %p23, %s25, %s16
      %p27 = scmp.ge.s32.totalorder %s26, 1
      %s28 = scalar_select %p27, 0, %s26
      %s29 = ssub.s32 %s16, %s28
      %p30 = scmp.eq.s32.totalorder %s29, 0
      %s32 = sadd.s32 %s31, 1
      %s33 = scalar_select %p30, %s31, %s32
      %p36 = pneg %p30
      %p37 = scmp.eq.s32.totalorder %s9, 10
      %p38 = por %p36, %p37
      %p39 = scmp.ne.s32.totalorder %s31, %s34
      %p40 = scmp.eq.s32.totalorder %s9, 0
      %p41 = por %p39, %p40
      %p42 = scmp.ne.s32.totalorder %s31, %s34
      %p43 = scmp.eq.s32.totalorder %s14, 10
      %p44 = por %p42, %p43
      %p45 = scmp.ne.s32.totalorder %s34, %s35
      %p46 = scmp.eq.s32.totalorder %s14, 0
      %p47 = por %p45, %p46
      %p48 = scmp.ne.s32.totalorder %s34, %s35
      %p49 = scmp.eq.s32.totalorder %s15, 10
      %p50 = por %p48, %p49
      %p52 = scmp.ne.s32.totalorder %s35, %s51
      %p53 = scmp.eq.s32.totalorder %s15, 0
      %p54 = por %p52, %p53
      %s55 = ssub.s32 %s17, %s24
      %p56 = scmp.eq.s32.totalorder %s55, 0
      %s58 = sadd.s32 %s57, 1
      %s59 = scalar_select %p56, %s57, %s58
      %p62 = pneg %p56
      %p63 = scmp.eq.s32.totalorder %s9, 10
      %p64 = por %p62, %p63
      %p65 = scmp.ne.s32.totalorder %s57, %s60
      %p66 = scmp.eq.s32.totalorder %s9, 0
      %p67 = por %p65, %p66
      %p68 = scmp.ne.s32.totalorder %s57, %s60
      %p69 = scmp.eq.s32.totalorder %s14, 10
      %p70 = por %p68, %p69
      %p71 = scmp.ne.s32.totalorder %s60, %s61
      %p72 = scmp.eq.s32.totalorder %s14, 0
      %p73 = por %p71, %p72
      %p74 = scmp.ne.s32.totalorder %s60, %s61
      %p75 = scmp.eq.s32.totalorder %s15, 10
      %p76 = por %p74, %p75
      %p78 = scmp.ne.s32.totalorder %s61, %s77
      %p79 = scmp.eq.s32.totalorder %s15, 0
      %p80 = por %p78, %p79
      %s81 = ssub.s32 %s17, %s24
      %p82 = scmp.eq.s32.totalorder %s81, 0
      %s84 = sadd.s32 %s83, 1
      %s85 = scalar_select %p82, %s83, %s84
      %p88 = pneg %p82
      %p89 = scmp.eq.s32.totalorder %s9, 10
      %p90 = por %p88, %p89
      %p91 = scmp.ne.s32.totalorder %s83, %s86
      %p92 = scmp.eq.s32.totalorder %s9, 0
      %p93 = por %p91, %p92
      %p94 = scmp.ne.s32.totalorder %s83, %s86
      %p95 = scmp.eq.s32.totalorder %s14, 10
      %p96 = por %p94, %p95
      %p97 = scmp.ne.s32.totalorder %s86, %s87
      %p98 = scmp.eq.s32.totalorder %s14, 0
      %p99 = por %p97, %p98
      %p100 = scmp.ne.s32.totalorder %s86, %s87
      %p101 = scmp.eq.s32.totalorder %s15, 10
      %p102 = por %p100, %p101
      %p104 = scmp.ne.s32.totalorder %s87, %s103
      %p105 = scmp.eq.s32.totalorder %s15, 0
      %p106 = por %p104, %p105
      %s107 = ssub.s32 %s16, %s28
      %s108 = ssub.s32 %s17, %s24
      %s109 = sor.u32 %s107, %s108
      %p110 = scmp.eq.s32.totalorder %s109, 0
      %s112 = sadd.s32 %s111, 1
      %s113 = scalar_select %p110, %s111, %s112
      %p116 = pneg %p110
      %p117 = scmp.eq.s32.totalorder %s9, 10
      %p118 = por %p116, %p117
      %p119 = scmp.ne.s32.totalorder %s111, %s114
      %p120 = scmp.eq.s32.totalorder %s9, 0
      %p121 = por %p119, %p120
      %p122 = scmp.ne.s32.totalorder %s111, %s114
      %p123 = scmp.eq.s32.totalorder %s14, 10
      %p124 = por %p122, %p123
      %p125 = scmp.ne.s32.totalorder %s114, %s115
      %p126 = scmp.eq.s32.totalorder %s14, 0
      %p127 = por %p125, %p126
      %p128 = scmp.ne.s32.totalorder %s114, %s115
      %p129 = scmp.eq.s32.totalorder %s15, 10
      %p130 = por %p128, %p129
      %p132 = scmp.ne.s32.totalorder %s115, %s131
      %p133 = scmp.eq.s32.totalorder %s15, 0
      %p134 = por %p132, %p133
      %p135 = scmp.le.s32.totalorder 1, %s9
      %p136 = scmp.lt.s32.totalorder %s9, 12
      %p137 = pnand %p135, %p136
      %p138 = pneg %p137
      // Predicated region
      $region9: #{eff_trm_forward.6} parent=5 // pred_check
        _
      $region10: #{eff_trm_forward.6} parent=5 // pred_check_branch
        %140 = sbr.rel (%p137) target = $region12
      $region11: #{eff_trm_forward.6} parent=5 // pred_region
        %s141 = ssub.s32 %s9, 1
        // Predicated region
        $region13: #{eff_trm_forward.6} parent=11 // pred_check
          %p142 = pneg %p47
        $region14: #{eff_trm_forward.6} parent=11 // pred_check_branch
          %144 = sbr.rel (%p142) target = $region16
        $region15: #{eff_trm_forward.6} parent=11 // pred_region
          %s145 = smul.u32 2, %s18
          %p146 = scmp.lt.s32.totalorder %s145, 1
          %s147 = scalar_select %p146, %s145, 1
          %s148 = smul.addr %s147, 8
          %s149 = smul.addr %s148, 4
          %s150 = scalar_lea.vmem %s0, %s149
          %s151 = smul.u32 2, %s18
        $region16: #{eff_trm_forward.6} parent=11 // pred_fallthru
          _
      $region12: #{eff_trm_forward.6} parent=5 // pred_fallthru
        _
      %p152 = scmp.lt.s32.totalorder %s9, 11
      // Predicated region
      $region17: #{eff_trm_forward.6} parent=5 // pred_check
        %p153 = pneg %p152
      $region18: #{eff_trm_forward.6} parent=5 // pred_check_branch
        %155 = sbr.rel (%p153) target = $region20
      $region19: #{eff_trm_forward.6} parent=5 // pred_region
        // Predicated region
        $region21: #{eff_trm_forward.6} parent=19 // pred_check
          %p156 = pneg %p67
        $region22: #{eff_trm_forward.6} parent=19 // pred_check_branch
          %158 = sbr.rel (%p156) target = $region24
        $region23: #{eff_trm_forward.6} parent=19 // pred_region
          %s159 = sand.u32 %s57, 1
          %s160 = sand.u32 %s57, 1
          %s161 = smul.addr %s160, 512
          %s162 = scalar_lea.vmem [#allocation2], %s161
          %s163 = smul.addr %s17, 4
          %s164 = scalar_lea.vmem %s1, %s163
          // Predicated region
          $region25: #{eff_trm_forward.6} parent=23 // pred_check
            _
          $region26: #{eff_trm_forward.6} parent=23 // pred_check_branch
            %166 = sbr.rel (0) target = $region28
          $region27: #{eff_trm_forward.6} parent=23 // pred_region
            // Predicated region
            $region29: #{eff_trm_forward.6} parent=27 // pred_check
              _
            $region30: #{eff_trm_forward.6} parent=27 // pred_check_branch
              %168 = sbr.rel target = $region32
            $region31: #{eff_trm_forward.6} parent=27 // pred_region
              // Predicated region
              $region44: #{eff_trm_forward.6} parent=31 // pred_check
                _
              $region45: #{eff_trm_forward.6} parent=31 // pred_check_branch
                %438 = sbr.rel (0) target = $region47
              $region46: #{eff_trm_forward.6} parent=31 // pred_region
                loop: start=0, step=1, limit=1
                $region48: #{eff_trm_forward.6} parent=46 // loop_pre_header
                  _
                $region49: #{eff_trm_forward.6} parent=46 // loop_header
                  %s440 = sphi 0, %s444
                  %p441 = scmp.ge.s32.totalorder %s440, 1
                  %s445 = sphi %s164, %s164
                  %s446 = sphi %s162, %s162
                $region50: #{eff_trm_forward.6} parent=46 // loop_header_branch
                  %443 = sbr.rel (%p441) target = $region54
                $region51: #{eff_trm_forward.6} parent=46 // loop_body
                  _
                $region52: #{eff_trm_forward.6} parent=46 // loop_footer
                  %s444 = sadd.s32 1, %s440
                $region53: #{eff_trm_forward.6} parent=46 // loop_footer_branch
                  %439 = sbr.rel target = $region49
                $region54: #{eff_trm_forward.6} parent=46 // loop_exit
                  _
                %s448 = ssub.s32 16, 1
                loop: start=0, step=1, limit=1
                $region55: #{eff_trm_forward.6} parent=46 // loop_pre_header
                  _
                $region56: #{eff_trm_forward.6} parent=46 // loop_header
                  %s450 = sphi 0, %s454
                  %p451 = scmp.ge.s32.totalorder %s450, 1
                  %s455 = sphi %s164, %s164
                  %s456 = sphi %s162, %s162
                $region57: #{eff_trm_forward.6} parent=46 // loop_header_branch
                  %453 = sbr.rel (%p451) target = $region61
                $region58: #{eff_trm_forward.6} parent=46 // loop_body
                  %v457 = vld [vmem:[%s455] sm:%s448]
                  %458 = vst [vmem:[%s456] sm:%s448] %v457
                  %v459 = vld [vmem:[%s455 + $0x2c] sm:%s448]
                  %460 = vst [vmem:[%s456 + $0x4] sm:%s448] %v459
                  %v461 = vld [vmem:[%s455 + $0x58] sm:%s448]
                  %462 = vst [vmem:[%s456 + $0x8] sm:%s448] %v461
                  %v463 = vld [vmem:[%s455 + $0x84] sm:%s448]
                  %464 = vst [vmem:[%s456 + $0xc] sm:%s448] %v463
                  %v465 = vld [vmem:[%s455 + $0xb0] sm:%s448]
                  %466 = vst [vmem:[%s456 + $0x10] sm:%s448] %v465
                  %v467 = vld [vmem:[%s455 + $0xdc] sm:%s448]
                  %468 = vst [vmem:[%s456 + $0x14] sm:%s448] %v467
                  %v469 = vld [vmem:[%s455 + $0x108] sm:%s448]
                  %470 = vst [vmem:[%s456 + $0x18] sm:%s448] %v469
                  %v471 = vld [vmem:[%s455 + $0x134] sm:%s448]
                  %472 = vst [vmem:[%s456 + $0x1c] sm:%s448] %v471
                  %v473 = vld [vmem:[%s455 + $0x160] sm:%s448]
                  %474 = vst [vmem:[%s456 + $0x20] sm:%s448] %v473
                  %v475 = vld [vmem:[%s455 + $0x18c] sm:%s448]
                  %476 = vst [vmem:[%s456 + $0x24] sm:%s448] %v475
                  %v477 = vld [vmem:[%s455 + $0x1b8] sm:%s448]
                  %478 = vst [vmem:[%s456 + $0x28] sm:%s448] %v477
                  %v479 = vld [vmem:[%s455 + $0x1e4] sm:%s448]
                  %480 = vst [vmem:[%s456 + $0x2c] sm:%s448] %v479
                  %v481 = vld [vmem:[%s455 + $0x210] sm:%s448]
                  %482 = vst [vmem:[%s456 + $0x30] sm:%s448] %v481
                  %v483 = vld [vmem:[%s455 + $0x23c] sm:%s448]
                  %484 = vst [vmem:[%s456 + $0x34] sm:%s448] %v483
                  %v485 = vld [vmem:[%s455 + $0x268] sm:%s448]
                  %486 = vst [vmem:[%s456 + $0x38] sm:%s448] %v485
                  %v487 = vld [vmem:[%s455 + $0x294] sm:%s448]
                  %488 = vst [vmem:[%s456 + $0x3c] sm:%s448] %v487
                  %v489 = vld [vmem:[%s455 + $0x2c0] sm:%s448]
                  %490 = vst [vmem:[%s456 + $0x40] sm:%s448] %v489
                  %v491 = vld [vmem:[%s455 + $0x2ec] sm:%s448]
                  %492 = vst [vmem:[%s456 + $0x44] sm:%s448] %v491
                  %v493 = vld [vmem:[%s455 + $0x318] sm:%s448]
                  %494 = vst [vmem:[%s456 + $0x48] sm:%s448] %v493
                  %v495 = vld [vmem:[%s455 + $0x344] sm:%s448]
                  %496 = vst [vmem:[%s456 + $0x4c] sm:%s448] %v495
                  %v497 = vld [vmem:[%s455 + $0x370] sm:%s448]
                  %498 = vst [vmem:[%s456 + $0x50] sm:%s448] %v497
                  %v499 = vld [vmem:[%s455 + $0x39c] sm:%s448]
                  %500 = vst [vmem:[%s456 + $0x54] sm:%s448] %v499
                  %v501 = vld [vmem:[%s455 + $0x3c8] sm:%s448]
                  %502 = vst [vmem:[%s456 + $0x58] sm:%s448] %v501
                  %v503 = vld [vmem:[%s455 + $0x3f4] sm:%s448]
                  %504 = vst [vmem:[%s456 + $0x5c] sm:%s448] %v503
                  %v505 = vld [vmem:[%s455 + $0x420] sm:%s448]
                  %506 = vst [vmem:[%s456 + $0x60] sm:%s448] %v505
                  %v507 = vld [vmem:[%s455 + $0x44c] sm:%s448]
                  %508 = vst [vmem:[%s456 + $0x64] sm:%s448] %v507
                  %v509 = vld [vmem:[%s455 + $0x478] sm:%s448]
                  %510 = vst [vmem:[%s456 + $0x68] sm:%s448] %v509
                  %v511 = vld [vmem:[%s455 + $0x4a4] sm:%s448]
                  %512 = vst [vmem:[%s456 + $0x6c] sm:%s448] %v511
                  %v513 = vld [vmem:[%s455 + $0x4d0] sm:%s448]
                  %514 = vst [vmem:[%s456 + $0x70] sm:%s448] %v513
                  %v515 = vld [vmem:[%s455 + $0x4fc] sm:%s448]
                  %516 = vst [vmem:[%s456 + $0x74] sm:%s448] %v515
                  %v517 = vld [vmem:[%s455 + $0x528] sm:%s448]
                  %518 = vst [vmem:[%s456 + $0x78] sm:%s448] %v517
                  %v519 = vld [vmem:[%s455 + $0x554] sm:%s448]
                  %520 = vst [vmem:[%s456 + $0x7c] sm:%s448] %v519
                  %v521 = vld [vmem:[%s455 + $0x580] sm:%s448]
                  %522 = vst [vmem:[%s456 + $0x80] sm:%s448] %v521
                  %v523 = vld [vmem:[%s455 + $0x5ac] sm:%s448]
                  %524 = vst [vmem:[%s456 + $0x84] sm:%s448] %v523
                  %v525 = vld [vmem:[%s455 + $0x5d8] sm:%s448]
                  %526 = vst [vmem:[%s456 + $0x88] sm:%s448] %v525
                  %v527 = vld [vmem:[%s455 + $0x604] sm:%s448]
                  %528 = vst [vmem:[%s456 + $0x8c] sm:%s448] %v527
                  %v529 = vld [vmem:[%s455 + $0x630] sm:%s448]
                  %530 = vst [vmem:[%s456 + $0x90] sm:%s448] %v529
                  %v531 = vld [vmem:[%s455 + $0x65c] sm:%s448]
                  %532 = vst [vmem:[%s456 + $0x94] sm:%s448] %v531
                  %v533 = vld [vmem:[%s455 + $0x688] sm:%s448]
                  %534 = vst [vmem:[%s456 + $0x98] sm:%s448] %v533
                  %v535 = vld [vmem:[%s455 + $0x6b4] sm:%s448]
                  %536 = vst [vmem:[%s456 + $0x9c] sm:%s448] %v535
                  %v537 = vld [vmem:[%s455 + $0x6e0] sm:%s448]
                  %538 = vst [vmem:[%s456 + $0xa0] sm:%s448] %v537
                  %v539 = vld [vmem:[%s455 + $0x70c] sm:%s448]
                  %540 = vst [vmem:[%s456 + $0xa4] sm:%s448] %v539
                  %v541 = vld [vmem:[%s455 + $0x738] sm:%s448]
                  %542 = vst [vmem:[%s456 + $0xa8] sm:%s448] %v541
                  %v543 = vld [vmem:[%s455 + $0x764] sm:%s448]
                  %544 = vst [vmem:[%s456 + $0xac] sm:%s448] %v543
                  %v545 = vld [vmem:[%s455 + $0x790] sm:%s448]
                  %546 = vst [vmem:[%s456 + $0xb0] sm:%s448] %v545
                  %v547 = vld [vmem:[%s455 + $0x7bc] sm:%s448]
                  %548 = vst [vmem:[%s456 + $0xb4] sm:%s448] %v547
                  %v549 = vld [vmem:[%s455 + $0x7e8] sm:%s448]
                  %550 = vst [vmem:[%s456 + $0xb8] sm:%s448] %v549
                  %v551 = vld [vmem:[%s455 + $0x814] sm:%s448]
                  %552 = vst [vmem:[%s456 + $0xbc] sm:%s448] %v551
                  %v553 = vld [vmem:[%s455 + $0x840] sm:%s448]
                  %554 = vst [vmem:[%s456 + $0xc0] sm:%s448] %v553
                  %v555 = vld [vmem:[%s455 + $0x86c] sm:%s448]
                  %556 = vst [vmem:[%s456 + $0xc4] sm:%s448] %v555
                  %v557 = vld [vmem:[%s455 + $0x898] sm:%s448]
                  %558 = vst [vmem:[%s456 + $0xc8] sm:%s448] %v557
                  %v559 = vld [vmem:[%s455 + $0x8c4] sm:%s448]
                  %560 = vst [vmem:[%s456 + $0xcc] sm:%s448] %v559
                  %v561 = vld [vmem:[%s455 + $0x8f0] sm:%s448]
                  %562 = vst [vmem:[%s456 + $0xd0] sm:%s448] %v561
                  %v563 = vld [vmem:[%s455 + $0x91c] sm:%s448]
                  %564 = vst [vmem:[%s456 + $0xd4] sm:%s448] %v563
                  %v565 = vld [vmem:[%s455 + $0x948] sm:%s448]
                  %566 = vst [vmem:[%s456 + $0xd8] sm:%s448] %v565
                  %v567 = vld [vmem:[%s455 + $0x974] sm:%s448]
                  %568 = vst [vmem:[%s456 + $0xdc] sm:%s448] %v567
                  %v569 = vld [vmem:[%s455 + $0x9a0] sm:%s448]
                  %570 = vst [vmem:[%s456 + $0xe0] sm:%s448] %v569
                  %v571 = vld [vmem:[%s455 + $0x9cc] sm:%s448]
                  %572 = vst [vmem:[%s456 + $0xe4] sm:%s448] %v571
                  %v573 = vld [vmem:[%s455 + $0x9f8] sm:%s448]
                  %574 = vst [vmem:[%s456 + $0xe8] sm:%s448] %v573
                  %v575 = vld [vmem:[%s455 + $0xa24] sm:%s448]
                  %576 = vst [vmem:[%s456 + $0xec] sm:%s448] %v575
                  %v577 = vld [vmem:[%s455 + $0xa50] sm:%s448]
                  %578 = vst [vmem:[%s456 + $0xf0] sm:%s448] %v577
                  %v579 = vld [vmem:[%s455 + $0xa7c] sm:%s448]
                  %580 = vst [vmem:[%s456 + $0xf4] sm:%s448] %v579
                  %v581 = vld [vmem:[%s455 + $0xaa8] sm:%s448]
                  %582 = vst [vmem:[%s456 + $0xf8] sm:%s448] %v581
                  %v583 = vld [vmem:[%s455 + $0xad4] sm:%s448]
                  %584 = vst [vmem:[%s456 + $0xfc] sm:%s448] %v583
                  %v585 = vld [vmem:[%s455 + $0xb00] sm:%s448]
                  %586 = vst [vmem:[%s456 + $0x100] sm:%s448] %v585
                  %v587 = vld [vmem:[%s455 + $0xb2c] sm:%s448]
                  %588 = vst [vmem:[%s456 + $0x104] sm:%s448] %v587
                  %v589 = vld [vmem:[%s455 + $0xb58] sm:%s448]
                  %590 = vst [vmem:[%s456 + $0x108] sm:%s448] %v589
                  %v591 = vld [vmem:[%s455 + $0xb84] sm:%s448]
                  %592 = vst [vmem:[%s456 + $0x10c] sm:%s448] %v591
                  %v593 = vld [vmem:[%s455 + $0xbb0] sm:%s448]
                  %594 = vst [vmem:[%s456 + $0x110] sm:%s448] %v593
                  %v595 = vld [vmem:[%s455 + $0xbdc] sm:%s448]
                  %596 = vst [vmem:[%s456 + $0x114] sm:%s448] %v595
                  %v597 = vld [vmem:[%s455 + $0xc08] sm:%s448]
                  %598 = vst [vmem:[%s456 + $0x118] sm:%s448] %v597
                  %v599 = vld [vmem:[%s455 + $0xc34] sm:%s448]
                  %600 = vst [vmem:[%s456 + $0x11c] sm:%s448] %v599
                  %v601 = vld [vmem:[%s455 + $0xc60] sm:%s448]
                  %602 = vst [vmem:[%s456 + $0x120] sm:%s448] %v601
                  %v603 = vld [vmem:[%s455 + $0xc8c] sm:%s448]
                  %604 = vst [vmem:[%s456 + $0x124] sm:%s448] %v603
                  %v605 = vld [vmem:[%s455 + $0xcb8] sm:%s448]
                  %606 = vst [vmem:[%s456 + $0x128] sm:%s448] %v605
                  %v607 = vld [vmem:[%s455 + $0xce4] sm:%s448]
                  %608 = vst [vmem:[%s456 + $0x12c] sm:%s448] %v607
                  %v609 = vld [vmem:[%s455 + $0xd10] sm:%s448]
                  %610 = vst [vmem:[%s456 + $0x130] sm:%s448] %v609
                  %v611 = vld [vmem:[%s455 + $0xd3c] sm:%s448]
                  %612 = vst [vmem:[%s456 + $0x134] sm:%s448] %v611
                  %v613 = vld [vmem:[%s455 + $0xd68] sm:%s448]
                  %614 = vst [vmem:[%s456 + $0x138] sm:%s448] %v613
                  %v615 = vld [vmem:[%s455 + $0xd94] sm:%s448]
                  %616 = vst [vmem:[%s456 + $0x13c] sm:%s448] %v615
                  %v617 = vld [vmem:[%s455 + $0xdc0] sm:%s448]
                  %618 = vst [vmem:[%s456 + $0x140] sm:%s448] %v617
                  %v619 = vld [vmem:[%s455 + $0xdec] sm:%s448]
                  %620 = vst [vmem:[%s456 + $0x144] sm:%s448] %v619
                  %v621 = vld [vmem:[%s455 + $0xe18] sm:%s448]
                  %622 = vst [vmem:[%s456 + $0x148] sm:%s448] %v621
                  %v623 = vld [vmem:[%s455 + $0xe44] sm:%s448]
                  %624 = vst [vmem:[%s456 + $0x14c] sm:%s448] %v623
                  %v625 = vld [vmem:[%s455 + $0xe70] sm:%s448]
                  %626 = vst [vmem:[%s456 + $0x150] sm:%s448] %v625
                  %v627 = vld [vmem:[%s455 + $0xe9c] sm:%s448]
                  %628 = vst [vmem:[%s456 + $0x154] sm:%s448] %v627
                  %v629 = vld [vmem:[%s455 + $0xec8] sm:%s448]
                  %630 = vst [vmem:[%s456 + $0x158] sm:%s448] %v629
                  %v631 = vld [vmem:[%s455 + $0xef4] sm:%s448]
                  %632 = vst [vmem:[%s456 + $0x15c] sm:%s448] %v631
                  %v633 = vld [vmem:[%s455 + $0xf20] sm:%s448]
                  %634 = vst [vmem:[%s456 + $0x160] sm:%s448] %v633
                  %v635 = vld [vmem:[%s455 + $0xf4c] sm:%s448]
                  %636 = vst [vmem:[%s456 + $0x164] sm:%s448] %v635
                  %v637 = vld [vmem:[%s455 + $0xf78] sm:%s448]
                  %638 = vst [vmem:[%s456 + $0x168] sm:%s448] %v637
                  %v639 = vld [vmem:[%s455 + $0xfa4] sm:%s448]
                  %640 = vst [vmem:[%s456 + $0x16c] sm:%s448] %v639
                  %v641 = vld [vmem:[%s455 + $0xfd0] sm:%s448]
                  %642 = vst [vmem:[%s456 + $0x170] sm:%s448] %v641
                  %v643 = vld [vmem:[%s455 + $0xffc] sm:%s448]
                  %644 = vst [vmem:[%s456 + $0x174] sm:%s448] %v643
                  %v645 = vld [vmem:[%s455 + $0x1028] sm:%s448]
                  %646 = vst [vmem:[%s456 + $0x178] sm:%s448] %v645
                  %v647 = vld [vmem:[%s455 + $0x1054] sm:%s448]
                  %648 = vst [vmem:[%s456 + $0x17c] sm:%s448] %v647
                  %v649 = vld [vmem:[%s455 + $0x1080] sm:%s448]
                  %650 = vst [vmem:[%s456 + $0x180] sm:%s448] %v649
                  %v651 = vld [vmem:[%s455 + $0x10ac] sm:%s448]
                  %652 = vst [vmem:[%s456 + $0x184] sm:%s448] %v651
                  %v653 = vld [vmem:[%s455 + $0x10d8] sm:%s448]
                  %654 = vst [vmem:[%s456 + $0x188] sm:%s448] %v653
                  %v655 = vld [vmem:[%s455 + $0x1104] sm:%s448]
                  %656 = vst [vmem:[%s456 + $0x18c] sm:%s448] %v655
                  %v657 = vld [vmem:[%s455 + $0x1130] sm:%s448]
                  %658 = vst [vmem:[%s456 + $0x190] sm:%s448] %v657
                  %v659 = vld [vmem:[%s455 + $0x115c] sm:%s448]
                  %660 = vst [vmem:[%s456 + $0x194] sm:%s448] %v659
                  %v661 = vld [vmem:[%s455 + $0x1188] sm:%s448]
                  %662 = vst [vmem:[%s456 + $0x198] sm:%s448] %v661
                  %v663 = vld [vmem:[%s455 + $0x11b4] sm:%s448]
                  %664 = vst [vmem:[%s456 + $0x19c] sm:%s448] %v663
                  %v665 = vld [vmem:[%s455 + $0x11e0] sm:%s448]
                  %666 = vst [vmem:[%s456 + $0x1a0] sm:%s448] %v665
                  %v667 = vld [vmem:[%s455 + $0x120c] sm:%s448]
                  %668 = vst [vmem:[%s456 + $0x1a4] sm:%s448] %v667
                  %v669 = vld [vmem:[%s455 + $0x1238] sm:%s448]
                  %670 = vst [vmem:[%s456 + $0x1a8] sm:%s448] %v669
                  %v671 = vld [vmem:[%s455 + $0x1264] sm:%s448]
                  %672 = vst [vmem:[%s456 + $0x1ac] sm:%s448] %v671
                  %v673 = vld [vmem:[%s455 + $0x1290] sm:%s448]
                  %674 = vst [vmem:[%s456 + $0x1b0] sm:%s448] %v673
                  %v675 = vld [vmem:[%s455 + $0x12bc] sm:%s448]
                  %676 = vst [vmem:[%s456 + $0x1b4] sm:%s448] %v675
                  %v677 = vld [vmem:[%s455 + $0x12e8] sm:%s448]
                  %678 = vst [vmem:[%s456 + $0x1b8] sm:%s448] %v677
                  %v679 = vld [vmem:[%s455 + $0x1314] sm:%s448]
                  %680 = vst [vmem:[%s456 + $0x1bc] sm:%s448] %v679
                  %v681 = vld [vmem:[%s455 + $0x1340] sm:%s448]
                  %682 = vst [vmem:[%s456 + $0x1c0] sm:%s448] %v681
                  %v683 = vld [vmem:[%s455 + $0x136c] sm:%s448]
                  %684 = vst [vmem:[%s456 + $0x1c4] sm:%s448] %v683
                  %v685 = vld [vmem:[%s455 + $0x1398] sm:%s448]
                  %686 = vst [vmem:[%s456 + $0x1c8] sm:%s448] %v685
                  %v687 = vld [vmem:[%s455 + $0x13c4] sm:%s448]
                  %688 = vst [vmem:[%s456 + $0x1cc] sm:%s448] %v687
                  %v689 = vld [vmem:[%s455 + $0x13f0] sm:%s448]
                  %690 = vst [vmem:[%s456 + $0x1d0] sm:%s448] %v689
                  %v691 = vld [vmem:[%s455 + $0x141c] sm:%s448]
                  %692 = vst [vmem:[%s456 + $0x1d4] sm:%s448] %v691
                  %v693 = vld [vmem:[%s455 + $0x1448] sm:%s448]
                  %694 = vst [vmem:[%s456 + $0x1d8] sm:%s448] %v693
                  %v695 = vld [vmem:[%s455 + $0x1474] sm:%s448]
                  %696 = vst [vmem:[%s456 + $0x1dc] sm:%s448] %v695
                  %v697 = vld [vmem:[%s455 + $0x14a0] sm:%s448]
                  %698 = vst [vmem:[%s456 + $0x1e0] sm:%s448] %v697
                  %v699 = vld [vmem:[%s455 + $0x14cc] sm:%s448]
                  %700 = vst [vmem:[%s456 + $0x1e4] sm:%s448] %v699
                  %v701 = vld [vmem:[%s455 + $0x14f8] sm:%s448]
                  %702 = vst [vmem:[%s456 + $0x1e8] sm:%s448] %v701
                  %v703 = vld [vmem:[%s455 + $0x1524] sm:%s448]
                  %704 = vst [vmem:[%s456 + $0x1ec] sm:%s448] %v703
                  %v705 = vld [vmem:[%s455 + $0x1550] sm:%s448]
                  %706 = vst [vmem:[%s456 + $0x1f0] sm:%s448] %v705
                  %v707 = vld [vmem:[%s455 + $0x157c] sm:%s448]
                  %708 = vst [vmem:[%s456 + $0x1f4] sm:%s448] %v707
                  %v709 = vld [vmem:[%s455 + $0x15a8] sm:%s448]
                  %710 = vst [vmem:[%s456 + $0x1f8] sm:%s448] %v709
                  %v711 = vld [vmem:[%s455 + $0x15d4] sm:%s448]
                  %712 = vst [vmem:[%s456 + $0x1fc] sm:%s448] %v711
                $region59: #{eff_trm_forward.6} parent=46 // loop_footer
                  %s454 = sadd.s32 1, %s450
                $region60: #{eff_trm_forward.6} parent=46 // loop_footer_branch
                  %449 = sbr.rel target = $region56
                $region61: #{eff_trm_forward.6} parent=46 // loop_exit
                  _
              $region47: #{eff_trm_forward.6} parent=31 // pred_fallthru
                _
            $region32: #{eff_trm_forward.6} parent=27 // pred_fallthru
              _
            // Predicated region
            $region33: #{eff_trm_forward.6} parent=27 // pred_check
              _
            $region34: #{eff_trm_forward.6} parent=27 // pred_check_branch
              %170 = sbr.rel (0) target = $region36
            $region35: #{eff_trm_forward.6} parent=27 // pred_region
              %s172 = ssub.s32 16, 1
              loop: start=0, step=1, limit=1
              $region37: #{eff_trm_forward.6} parent=35 // loop_pre_header
                _
              $region38: #{eff_trm_forward.6} parent=35 // loop_header
                %s174 = sphi 0, %s178
                %p175 = scmp.ge.s32.totalorder %s174, 1
                %s179 = sphi %s164, %s164
                %s180 = sphi %s162, %s162
              $region39: #{eff_trm_forward.6} parent=35 // loop_header_branch
                %177 = sbr.rel (%p175) target = $region43
              $region40: #{eff_trm_forward.6} parent=35 // loop_body
                %v181 = vld [vmem:[%s179] sm:%s172]
                %182 = vst [vmem:[%s180] sm:%s172] %v181
                %v183 = vld [vmem:[%s179 + $0x2c] sm:%s172]
                %184 = vst [vmem:[%s180 + $0x4] sm:%s172] %v183
                %v185 = vld [vmem:[%s179 + $0x58] sm:%s172]
                %186 = vst [vmem:[%s180 + $0x8] sm:%s172] %v185
                %v187 = vld [vmem:[%s179 + $0x84] sm:%s172]
                %188 = vst [vmem:[%s180 + $0xc] sm:%s172] %v187
                %v189 = vld [vmem:[%s179 + $0xb0] sm:%s172]
                %190 = vst [vmem:[%s180 + $0x10] sm:%s172] %v189
                %v191 = vld [vmem:[%s179 + $0xdc] sm:%s172]
                %192 = vst [vmem:[%s180 + $0x14] sm:%s172] %v191
                %v193 = vld [vmem:[%s179 + $0x108] sm:%s172]
                %194 = vst [vmem:[%s180 + $0x18] sm:%s172] %v193
                %v195 = vld [vmem:[%s179 + $0x134] sm:%s172]
                %196 = vst [vmem:[%s180 + $0x1c] sm:%s172] %v195
                %v197 = vld [vmem:[%s179 + $0x160] sm:%s172]
                %198 = vst [vmem:[%s180 + $0x20] sm:%s172] %v197
                %v199 = vld [vmem:[%s179 + $0x18c] sm:%s172]
                %200 = vst [vmem:[%s180 + $0x24] sm:%s172] %v199
                %v201 = vld [vmem:[%s179 + $0x1b8] sm:%s172]
                %202 = vst [vmem:[%s180 + $0x28] sm:%s172] %v201
                %v203 = vld [vmem:[%s179 + $0x1e4] sm:%s172]
                %204 = vst [vmem:[%s180 + $0x2c] sm:%s172] %v203
                %v205 = vld [vmem:[%s179 + $0x210] sm:%s172]
                %206 = vst [vmem:[%s180 + $0x30] sm:%s172] %v205
                %v207 = vld [vmem:[%s179 + $0x23c] sm:%s172]
                %208 = vst [vmem:[%s180 + $0x34] sm:%s172] %v207
                %v209 = vld [vmem:[%s179 + $0x268] sm:%s172]
                %210 = vst [vmem:[%s180 + $0x38] sm:%s172] %v209
                %v211 = vld [vmem:[%s179 + $0x294] sm:%s172]
                %212 = vst [vmem:[%s180 + $0x3c] sm:%s172] %v211
                %v213 = vld [vmem:[%s179 + $0x2c0] sm:%s172]
                %214 = vst [vmem:[%s180 + $0x40] sm:%s172] %v213
                %v215 = vld [vmem:[%s179 + $0x2ec] sm:%s172]
                %216 = vst [vmem:[%s180 + $0x44] sm:%s172] %v215
                %v217 = vld [vmem:[%s179 + $0x318] sm:%s172]
                %218 = vst [vmem:[%s180 + $0x48] sm:%s172] %v217
                %v219 = vld [vmem:[%s179 + $0x344] sm:%s172]
                %220 = vst [vmem:[%s180 + $0x4c] sm:%s172] %v219
                %v221 = vld [vmem:[%s179 + $0x370] sm:%s172]
                %222 = vst [vmem:[%s180 + $0x50] sm:%s172] %v221
                %v223 = vld [vmem:[%s179 + $0x39c] sm:%s172]
                %224 = vst [vmem:[%s180 + $0x54] sm:%s172] %v223
                %v225 = vld [vmem:[%s179 + $0x3c8] sm:%s172]
                %226 = vst [vmem:[%s180 + $0x58] sm:%s172] %v225
                %v227 = vld [vmem:[%s179 + $0x3f4] sm:%s172]
                %228 = vst [vmem:[%s180 + $0x5c] sm:%s172] %v227
                %v229 = vld [vmem:[%s179 + $0x420] sm:%s172]
                %230 = vst [vmem:[%s180 + $0x60] sm:%s172] %v229
                %v231 = vld [vmem:[%s179 + $0x44c] sm:%s172]
                %232 = vst [vmem:[%s180 + $0x64] sm:%s172] %v231
                %v233 = vld [vmem:[%s179 + $0x478] sm:%s172]
                %234 = vst [vmem:[%s180 + $0x68] sm:%s172] %v233
                %v235 = vld [vmem:[%s179 + $0x4a4] sm:%s172]
                %236 = vst [vmem:[%s180 + $0x6c] sm:%s172] %v235
                %v237 = vld [vmem:[%s179 + $0x4d0] sm:%s172]
                %238 = vst [vmem:[%s180 + $0x70] sm:%s172] %v237
                %v239 = vld [vmem:[%s179 + $0x4fc] sm:%s172]
                %240 = vst [vmem:[%s180 + $0x74] sm:%s172] %v239
                %v241 = vld [vmem:[%s179 + $0x528] sm:%s172]
                %242 = vst [vmem:[%s180 + $0x78] sm:%s172] %v241
                %v243 = vld [vmem:[%s179 + $0x554] sm:%s172]
                %244 = vst [vmem:[%s180 + $0x7c] sm:%s172] %v243
                %v245 = vld [vmem:[%s179 + $0x580] sm:%s172]
                %246 = vst [vmem:[%s180 + $0x80] sm:%s172] %v245
                %v247 = vld [vmem:[%s179 + $0x5ac] sm:%s172]
                %248 = vst [vmem:[%s180 + $0x84] sm:%s172] %v247
                %v249 = vld [vmem:[%s179 + $0x5d8] sm:%s172]
                %250 = vst [vmem:[%s180 + $0x88] sm:%s172] %v249
                %v251 = vld [vmem:[%s179 + $0x604] sm:%s172]
                %252 = vst [vmem:[%s180 + $0x8c] sm:%s172] %v251
                %v253 = vld [vmem:[%s179 + $0x630] sm:%s172]
                %254 = vst [vmem:[%s180 + $0x90] sm:%s172] %v253
                %v255 = vld [vmem:[%s179 + $0x65c] sm:%s172]
                %256 = vst [vmem:[%s180 + $0x94] sm:%s172] %v255
                %v257 = vld [vmem:[%s179 + $0x688] sm:%s172]
                %258 = vst [vmem:[%s180 + $0x98] sm:%s172] %v257
                %v259 = vld [vmem:[%s179 + $0x6b4] sm:%s172]
                %260 = vst [vmem:[%s180 + $0x9c] sm:%s172] %v259
                %v261 = vld [vmem:[%s179 + $0x6e0] sm:%s172]
                %262 = vst [vmem:[%s180 + $0xa0] sm:%s172] %v261
                %v263 = vld [vmem:[%s179 + $0x70c] sm:%s172]
                %264 = vst [vmem:[%s180 + $0xa4] sm:%s172] %v263
                %v265 = vld [vmem:[%s179 + $0x738] sm:%s172]
                %266 = vst [vmem:[%s180 + $0xa8] sm:%s172] %v265
                %v267 = vld [vmem:[%s179 + $0x764] sm:%s172]
                %268 = vst [vmem:[%s180 + $0xac] sm:%s172] %v267
                %v269 = vld [vmem:[%s179 + $0x790] sm:%s172]
                %270 = vst [vmem:[%s180 + $0xb0] sm:%s172] %v269
                %v271 = vld [vmem:[%s179 + $0x7bc] sm:%s172]
                %272 = vst [vmem:[%s180 + $0xb4] sm:%s172] %v271
                %v273 = vld [vmem:[%s179 + $0x7e8] sm:%s172]
                %274 = vst [vmem:[%s180 + $0xb8] sm:%s172] %v273
                %v275 = vld [vmem:[%s179 + $0x814] sm:%s172]
                %276 = vst [vmem:[%s180 + $0xbc] sm:%s172] %v275
                %v277 = vld [vmem:[%s179 + $0x840] sm:%s172]
                %278 = vst [vmem:[%s180 + $0xc0] sm:%s172] %v277
                %v279 = vld [vmem:[%s179 + $0x86c] sm:%s172]
                %280 = vst [vmem:[%s180 + $0xc4] sm:%s172] %v279
                %v281 = vld [vmem:[%s179 + $0x898] sm:%s172]
                %282 = vst [vmem:[%s180 + $0xc8] sm:%s172] %v281
                %v283 = vld [vmem:[%s179 + $0x8c4] sm:%s172]
                %284 = vst [vmem:[%s180 + $0xcc] sm:%s172] %v283
                %v285 = vld [vmem:[%s179 + $0x8f0] sm:%s172]
                %286 = vst [vmem:[%s180 + $0xd0] sm:%s172] %v285
                %v287 = vld [vmem:[%s179 + $0x91c] sm:%s172]
                %288 = vst [vmem:[%s180 + $0xd4] sm:%s172] %v287
                %v289 = vld [vmem:[%s179 + $0x948] sm:%s172]
                %290 = vst [vmem:[%s180 + $0xd8] sm:%s172] %v289
                %v291 = vld [vmem:[%s179 + $0x974] sm:%s172]
                %292 = vst [vmem:[%s180 + $0xdc] sm:%s172] %v291
                %v293 = vld [vmem:[%s179 + $0x9a0] sm:%s172]
                %294 = vst [vmem:[%s180 + $0xe0] sm:%s172] %v293
                %v295 = vld [vmem:[%s179 + $0x9cc] sm:%s172]
                %296 = vst [vmem:[%s180 + $0xe4] sm:%s172] %v295
                %v297 = vld [vmem:[%s179 + $0x9f8] sm:%s172]
                %298 = vst [vmem:[%s180 + $0xe8] sm:%s172] %v297
                %v299 = vld [vmem:[%s179 + $0xa24] sm:%s172]
                %300 = vst [vmem:[%s180 + $0xec] sm:%s172] %v299
                %v301 = vld [vmem:[%s179 + $0xa50] sm:%s172]
                %302 = vst [vmem:[%s180 + $0xf0] sm:%s172] %v301
                %v303 = vld [vmem:[%s179 + $0xa7c] sm:%s172]
                %304 = vst [vmem:[%s180 + $0xf4] sm:%s172] %v303
                %v305 = vld [vmem:[%s179 + $0xaa8] sm:%s172]
                %306 = vst [vmem:[%s180 + $0xf8] sm:%s172] %v305
                %v307 = vld [vmem:[%s179 + $0xad4] sm:%s172]
                %308 = vst [vmem:[%s180 + $0xfc] sm:%s172] %v307
                %v309 = vld [vmem:[%s179 + $0xb00] sm:%s172]
                %310 = vst [vmem:[%s180 + $0x100] sm:%s172] %v309
                %v311 = vld [vmem:[%s179 + $0xb2c] sm:%s172]
                %312 = vst [vmem:[%s180 + $0x104] sm:%s172] %v311
                %v313 = vld [vmem:[%s179 + $0xb58] sm:%s172]
                %314 = vst [vmem:[%s180 + $0x108] sm:%s172] %v313
                %v315 = vld [vmem:[%s179 + $0xb84] sm:%s172]
                %316 = vst [vmem:[%s180 + $0x10c] sm:%s172] %v315
                %v317 = vld [vmem:[%s179 + $0xbb0] sm:%s172]
                %318 = vst [vmem:[%s180 + $0x110] sm:%s172] %v317
                %v319 = vld [vmem:[%s179 + $0xbdc] sm:%s172]
                %320 = vst [vmem:[%s180 + $0x114] sm:%s172] %v319
                %v321 = vld [vmem:[%s179 + $0xc08] sm:%s172]
                %322 = vst [vmem:[%s180 + $0x118] sm:%s172] %v321
                %v323 = vld [vmem:[%s179 + $0xc34] sm:%s172]
                %324 = vst [vmem:[%s180 + $0x11c] sm:%s172] %v323
                %v325 = vld [vmem:[%s179 + $0xc60] sm:%s172]
                %326 = vst [vmem:[%s180 + $0x120] sm:%s172] %v325
                %v327 = vld [vmem:[%s179 + $0xc8c] sm:%s172]
                %328 = vst [vmem:[%s180 + $0x124] sm:%s172] %v327
                %v329 = vld [vmem:[%s179 + $0xcb8] sm:%s172]
                %330 = vst [vmem:[%s180 + $0x128] sm:%s172] %v329
                %v331 = vld [vmem:[%s179 + $0xce4] sm:%s172]
                %332 = vst [vmem:[%s180 + $0x12c] sm:%s172] %v331
                %v333 = vld [vmem:[%s179 + $0xd10] sm:%s172]
                %334 = vst [vmem:[%s180 + $0x130] sm:%s172] %v333
                %v335 = vld [vmem:[%s179 + $0xd3c] sm:%s172]
                %336 = vst [vmem:[%s180 + $0x134] sm:%s172] %v335
                %v337 = vld [vmem:[%s179 + $0xd68] sm:%s172]
                %338 = vst [vmem:[%s180 + $0x138] sm:%s172] %v337
                %v339 = vld [vmem:[%s179 + $0xd94] sm:%s172]
                %340 = vst [vmem:[%s180 + $0x13c] sm:%s172] %v339
                %v341 = vld [vmem:[%s179 + $0xdc0] sm:%s172]
                %342 = vst [vmem:[%s180 + $0x140] sm:%s172] %v341
                %v343 = vld [vmem:[%s179 + $0xdec] sm:%s172]
                %344 = vst [vmem:[%s180 + $0x144] sm:%s172] %v343
                %v345 = vld [vmem:[%s179 + $0xe18] sm:%s172]
                %346 = vst [vmem:[%s180 + $0x148] sm:%s172] %v345
                %v347 = vld [vmem:[%s179 + $0xe44] sm:%s172]
                %348 = vst [vmem:[%s180 + $0x14c] sm:%s172] %v347
                %v349 = vld [vmem:[%s179 + $0xe70] sm:%s172]
                %350 = vst [vmem:[%s180 + $0x150] sm:%s172] %v349
                %v351 = vld [vmem:[%s179 + $0xe9c] sm:%s172]
                %352 = vst [vmem:[%s180 + $0x154] sm:%s172] %v351
                %v353 = vld [vmem:[%s179 + $0xec8] sm:%s172]
                %354 = vst [vmem:[%s180 + $0x158] sm:%s172] %v353
                %v355 = vld [vmem:[%s179 + $0xef4] sm:%s172]
                %356 = vst [vmem:[%s180 + $0x15c] sm:%s172] %v355
                %v357 = vld [vmem:[%s179 + $0xf20] sm:%s172]
                %358 = vst [vmem:[%s180 + $0x160] sm:%s172] %v357
                %v359 = vld [vmem:[%s179 + $0xf4c] sm:%s172]
                %360 = vst [vmem:[%s180 + $0x164] sm:%s172] %v359
                %v361 = vld [vmem:[%s179 + $0xf78] sm:%s172]
                %362 = vst [vmem:[%s180 + $0x168] sm:%s172] %v361
                %v363 = vld [vmem:[%s179 + $0xfa4] sm:%s172]
                %364 = vst [vmem:[%s180 + $0x16c] sm:%s172] %v363
                %v365 = vld [vmem:[%s179 + $0xfd0] sm:%s172]
                %366 = vst [vmem:[%s180 + $0x170] sm:%s172] %v365
                %v367 = vld [vmem:[%s179 + $0xffc] sm:%s172]
                %368 = vst [vmem:[%s180 + $0x174] sm:%s172] %v367
                %v369 = vld [vmem:[%s179 + $0x1028] sm:%s172]
                %370 = vst [vmem:[%s180 + $0x178] sm:%s172] %v369
                %v371 = vld [vmem:[%s179 + $0x1054] sm:%s172]
                %372 = vst [vmem:[%s180 + $0x17c] sm:%s172] %v371
                %v373 = vld [vmem:[%s179 + $0x1080] sm:%s172]
                %374 = vst [vmem:[%s180 + $0x180] sm:%s172] %v373
                %v375 = vld [vmem:[%s179 + $0x10ac] sm:%s172]
                %376 = vst [vmem:[%s180 + $0x184] sm:%s172] %v375
                %v377 = vld [vmem:[%s179 + $0x10d8] sm:%s172]
                %378 = vst [vmem:[%s180 + $0x188] sm:%s172] %v377
                %v379 = vld [vmem:[%s179 + $0x1104] sm:%s172]
                %380 = vst [vmem:[%s180 + $0x18c] sm:%s172] %v379
                %v381 = vld [vmem:[%s179 + $0x1130] sm:%s172]
                %382 = vst [vmem:[%s180 + $0x190] sm:%s172] %v381
                %v383 = vld [vmem:[%s179 + $0x115c] sm:%s172]
                %384 = vst [vmem:[%s180 + $0x194] sm:%s172] %v383
                %v385 = vld [vmem:[%s179 + $0x1188] sm:%s172]
                %386 = vst [vmem:[%s180 + $0x198] sm:%s172] %v385
                %v387 = vld [vmem:[%s179 + $0x11b4] sm:%s172]
                %388 = vst [vmem:[%s180 + $0x19c] sm:%s172] %v387
                %v389 = vld [vmem:[%s179 + $0x11e0] sm:%s172]
                %390 = vst [vmem:[%s180 + $0x1a0] sm:%s172] %v389
                %v391 = vld [vmem:[%s179 + $0x120c] sm:%s172]
                %392 = vst [vmem:[%s180 + $0x1a4] sm:%s172] %v391
                %v393 = vld [vmem:[%s179 + $0x1238] sm:%s172]
                %394 = vst [vmem:[%s180 + $0x1a8] sm:%s172] %v393
                %v395 = vld [vmem:[%s179 + $0x1264] sm:%s172]
                %396 = vst [vmem:[%s180 + $0x1ac] sm:%s172] %v395
                %v397 = vld [vmem:[%s179 + $0x1290] sm:%s172]
                %398 = vst [vmem:[%s180 + $0x1b0] sm:%s172] %v397
                %v399 = vld [vmem:[%s179 + $0x12bc] sm:%s172]
                %400 = vst [vmem:[%s180 + $0x1b4] sm:%s172] %v399
                %v401 = vld [vmem:[%s179 + $0x12e8] sm:%s172]
                %402 = vst [vmem:[%s180 + $0x1b8] sm:%s172] %v401
                %v403 = vld [vmem:[%s179 + $0x1314] sm:%s172]
                %404 = vst [vmem:[%s180 + $0x1bc] sm:%s172] %v403
                %v405 = vld [vmem:[%s179 + $0x1340] sm:%s172]
                %406 = vst [vmem:[%s180 + $0x1c0] sm:%s172] %v405
                %v407 = vld [vmem:[%s179 + $0x136c] sm:%s172]
                %408 = vst [vmem:[%s180 + $0x1c4] sm:%s172] %v407
                %v409 = vld [vmem:[%s179 + $0x1398] sm:%s172]
                %410 = vst [vmem:[%s180 + $0x1c8] sm:%s172] %v409
                %v411 = vld [vmem:[%s179 + $0x13c4] sm:%s172]
                %412 = vst [vmem:[%s180 + $0x1cc] sm:%s172] %v411
                %v413 = vld [vmem:[%s179 + $0x13f0] sm:%s172]
                %414 = vst [vmem:[%s180 + $0x1d0] sm:%s172] %v413
                %v415 = vld [vmem:[%s179 + $0x141c] sm:%s172]
                %416 = vst [vmem:[%s180 + $0x1d4] sm:%s172] %v415
                %v417 = vld [vmem:[%s179 + $0x1448] sm:%s172]
                %418 = vst [vmem:[%s180 + $0x1d8] sm:%s172] %v417
                %v419 = vld [vmem:[%s179 + $0x1474] sm:%s172]
                %420 = vst [vmem:[%s180 + $0x1dc] sm:%s172] %v419
                %v421 = vld [vmem:[%s179 + $0x14a0] sm:%s172]
                %422 = vst [vmem:[%s180 + $0x1e0] sm:%s172] %v421
                %v423 = vld [vmem:[%s179 + $0x14cc] sm:%s172]
                %424 = vst [vmem:[%s180 + $0x1e4] sm:%s172] %v423
                %v425 = vld [vmem:[%s179 + $0x14f8] sm:%s172]
                %426 = vst [vmem:[%s180 + $0x1e8] sm:%s172] %v425
                %v427 = vld [vmem:[%s179 + $0x1524] sm:%s172]
                %428 = vst [vmem:[%s180 + $0x1ec] sm:%s172] %v427
                %v429 = vld [vmem:[%s179 + $0x1550] sm:%s172]
                %430 = vst [vmem:[%s180 + $0x1f0] sm:%s172] %v429
                %v431 = vld [vmem:[%s179 + $0x157c] sm:%s172]
                %432 = vst [vmem:[%s180 + $0x1f4] sm:%s172] %v431
                %v433 = vld [vmem:[%s179 + $0x15a8] sm:%s172]
                %434 = vst [vmem:[%s180 + $0x1f8] sm:%s172] %v433
                %v435 = vld [vmem:[%s179 + $0x15d4] sm:%s172]
                %436 = vst [vmem:[%s180 + $0x1fc] sm:%s172] %v435
              $region41: #{eff_trm_forward.6} parent=35 // loop_footer
                %s178 = sadd.s32 1, %s174
              $region42: #{eff_trm_forward.6} parent=35 // loop_footer_branch
                %173 = sbr.rel target = $region38
              $region43: #{eff_trm_forward.6} parent=35 // loop_exit
                _
            $region36: #{eff_trm_forward.6} parent=27 // pred_fallthru
              _
          $region28: #{eff_trm_forward.6} parent=23 // pred_fallthru
            _
          %713 = vnop
        $region24: #{eff_trm_forward.6} parent=19 // pred_fallthru
          _
        // Predicated region
        $region62: #{eff_trm_forward.6} parent=19 // pred_check
          %p714 = pneg %p93
        $region63: #{eff_trm_forward.6} parent=19 // pred_check_branch
          %716 = sbr.rel (%p714) target = $region65
        $region64: #{eff_trm_forward.6} parent=19 // pred_region
          %p717 = scmp.lt.s32.totalorder %s17, 10
          %s718 = scalar_select %p717, %s17, 10
          %s719 = scalar_lea.vmem %s2, %s718
        $region65: #{eff_trm_forward.6} parent=19 // pred_fallthru
          _
      $region20: #{eff_trm_forward.6} parent=5 // pred_fallthru
        _
      %p720 = scmp.le.s32.totalorder 1, %s9
      %p721 = scmp.lt.s32.totalorder %s9, 12
      %p722 = pnand %p720, %p721
      %p723 = pneg %p722
      // Predicated region
      $region66: #{eff_trm_forward.6} parent=5 // pred_check
        _
      $region67: #{eff_trm_forward.6} parent=5 // pred_check_branch
        %725 = sbr.rel (%p722) target = $region69
      $region68: #{eff_trm_forward.6} parent=5 // pred_region
        %s726 = ssub.s32 %s9, 1
        %s727 = sand.u32 %s60, 1
        %s728 = sand.u32 %s60, 1
        %s729 = smul.addr %s728, 512
        %s730 = scalar_lea.vmem [#allocation2], %s729
        // Predicated region
        $region70: #{eff_trm_forward.6} parent=68 // pred_check
          %p731 = pneg %p73
        $region71: #{eff_trm_forward.6} parent=68 // pred_check_branch
          %733 = sbr.rel (%p731) target = $region73
        $region72: #{eff_trm_forward.6} parent=68 // pred_region
          _
        $region73: #{eff_trm_forward.6} parent=68 // pred_fallthru
          _
        %s734 = smul.u32 2, %s18
        %p735 = scmp.lt.s32.totalorder %s734, 1
        %s736 = scalar_select %p735, %s734, 1
        %s737 = smul.addr %s736, 8
        %s738 = smul.addr %s737, 4
        %s739 = scalar_lea.vmem %s0, %s738
        %p740 = pneg %p47
        %p741 = pneg %p44
        %s742 = sand.u32 %s60, 1
        %s743 = sand.u32 %s60, 1
        %s744 = smul.addr %s743, 512
        %s745 = scalar_lea.vmem [#allocation2], %s744
        %p746 = pneg %p73
        %p747 = pneg %p70
        %p748 = scmp.lt.s32.totalorder %s19, 10
        %s749 = scalar_select %p748, %s19, 10
        %s750 = scalar_lea.vmem %s2, %s749
        %p751 = pneg %p99
        %p752 = pneg %p96
        %p753 = pneg %p127
        %p754 = pneg %p124
        %s755 = sand.u32 %s114, 1
        %s756 = sand.u32 %s114, 1
        %s757 = smul.addr %s756, 16
        %s758 = scalar_lea.vmem [#allocation3], %s757
        %s759 = smul.u32 2, %s18
        %p760 = scmp.lt.s32.totalorder %s759, 1
        %s761 = scalar_select %p760, %s759, 1
        %s762 = smul.addr %s761, 8
        %s763 = smul.addr %s762, 4
        %s764 = scalar_lea.vmem %s0, %s763
        %s765 = smul.u32 2, %s18
        %p766 = scmp.lt.s32.totalorder %s19, 10
        %s767 = scalar_select %p766, %s19, 10
        %s768 = scalar_lea.vmem %s2, %s767
        %s769 = smul.u32 2, %s18
        %v771 = vld [vmem:[%s764] sm:$0xff]
        %v772 = vld [vmem:[%s764 + $0x8] sm:$0xff]
        %v773 = vld [vmem:[%s764 + $0x10] sm:$0xff]
        %v774 = vld [vmem:[%s764 + $0x18] sm:$0xff]
        %v775 = vld [vmem:[%s764 + $0x20] sm:$0xff]
        %v776 = vld [vmem:[%s764 + $0x28] sm:$0xff]
        %v777 = vld [vmem:[%s764 + $0x30] sm:$0xff]
        %v778 = vld [vmem:[%s764 + $0x38] sm:$0xff]
        %v779 = vld [vmem:[%s730] sm:$0xf]
        %v780 = vld [vmem:[%s730 + $0x4] sm:$0xf]
        %v781 = vld [vmem:[%s730 + $0x8] sm:$0xf]
        %v782 = vld [vmem:[%s730 + $0xc] sm:$0xf]
        %v783 = vld [vmem:[%s730 + $0x10] sm:$0xf]
        %v784 = vld [vmem:[%s730 + $0x14] sm:$0xf]
        %v785 = vld [vmem:[%s730 + $0x18] sm:$0xf]
        %v786 = vld [vmem:[%s730 + $0x1c] sm:$0xf]
        %v787 = vld [vmem:[%s730 + $0x20] sm:$0xf]
        %v788 = vld [vmem:[%s730 + $0x24] sm:$0xf]
        %v789 = vld [vmem:[%s730 + $0x28] sm:$0xf]
        %v790 = vld [vmem:[%s730 + $0x2c] sm:$0xf]
        %v791 = vld [vmem:[%s730 + $0x30] sm:$0xf]
        %v792 = vld [vmem:[%s730 + $0x34] sm:$0xf]
        %v793 = vld [vmem:[%s730 + $0x38] sm:$0xf]
        %v794 = vld [vmem:[%s730 + $0x3c] sm:$0xf]
        %v795 = vld [vmem:[%s730 + $0x40] sm:$0xf]
        %v796 = vld [vmem:[%s730 + $0x44] sm:$0xf]
        %v797 = vld [vmem:[%s730 + $0x48] sm:$0xf]
        %v798 = vld [vmem:[%s730 + $0x4c] sm:$0xf]
        %v799 = vld [vmem:[%s730 + $0x50] sm:$0xf]
        %v800 = vld [vmem:[%s730 + $0x54] sm:$0xf]
        %v801 = vld [vmem:[%s730 + $0x58] sm:$0xf]
        %v802 = vld [vmem:[%s730 + $0x5c] sm:$0xf]
        %v803 = vld [vmem:[%s730 + $0x60] sm:$0xf]
        %v804 = vld [vmem:[%s730 + $0x64] sm:$0xf]
        %v805 = vld [vmem:[%s730 + $0x68] sm:$0xf]
        %v806 = vld [vmem:[%s730 + $0x6c] sm:$0xf]
        %v807 = vld [vmem:[%s730 + $0x70] sm:$0xf]
        %v808 = vld [vmem:[%s730 + $0x74] sm:$0xf]
        %v809 = vld [vmem:[%s730 + $0x78] sm:$0xf]
        %v810 = vld [vmem:[%s730 + $0x7c] sm:$0xf]
        %v811 = vld [vmem:[%s730 + $0x80] sm:$0xf]
        %v812 = vld [vmem:[%s730 + $0x84] sm:$0xf]
        %v813 = vld [vmem:[%s730 + $0x88] sm:$0xf]
        %v814 = vld [vmem:[%s730 + $0x8c] sm:$0xf]
        %v815 = vld [vmem:[%s730 + $0x90] sm:$0xf]
        %v816 = vld [vmem:[%s730 + $0x94] sm:$0xf]
        %v817 = vld [vmem:[%s730 + $0x98] sm:$0xf]
        %v818 = vld [vmem:[%s730 + $0x9c] sm:$0xf]
        %v819 = vld [vmem:[%s730 + $0xa0] sm:$0xf]
        %v820 = vld [vmem:[%s730 + $0xa4] sm:$0xf]
        %v821 = vld [vmem:[%s730 + $0xa8] sm:$0xf]
        %v822 = vld [vmem:[%s730 + $0xac] sm:$0xf]
        %v823 = vld [vmem:[%s730 + $0xb0] sm:$0xf]
        %v824 = vld [vmem:[%s730 + $0xb4] sm:$0xf]
        %v825 = vld [vmem:[%s730 + $0xb8] sm:$0xf]
        %v826 = vld [vmem:[%s730 + $0xbc] sm:$0xf]
        %v827 = vld [vmem:[%s730 + $0xc0] sm:$0xf]
        %v828 = vld [vmem:[%s730 + $0xc4] sm:$0xf]
        %v829 = vld [vmem:[%s730 + $0xc8] sm:$0xf]
        %v830 = vld [vmem:[%s730 + $0xcc] sm:$0xf]
        %v831 = vld [vmem:[%s730 + $0xd0] sm:$0xf]
        %v832 = vld [vmem:[%s730 + $0xd4] sm:$0xf]
        %v833 = vld [vmem:[%s730 + $0xd8] sm:$0xf]
        %v834 = vld [vmem:[%s730 + $0xdc] sm:$0xf]
        %v835 = vld [vmem:[%s730 + $0xe0] sm:$0xf]
        %v836 = vld [vmem:[%s730 + $0xe4] sm:$0xf]
        %v837 = vld [vmem:[%s730 + $0xe8] sm:$0xf]
        %v838 = vld [vmem:[%s730 + $0xec] sm:$0xf]
        %v839 = vld [vmem:[%s730 + $0xf0] sm:$0xf]
        %v840 = vld [vmem:[%s730 + $0xf4] sm:$0xf]
        %v841 = vld [vmem:[%s730 + $0xf8] sm:$0xf]
        %v842 = vld [vmem:[%s730 + $0xfc] sm:$0xf]
        %v843 = vld [vmem:[%s730 + $0x100] sm:$0xf]
        %v844 = vld [vmem:[%s730 + $0x104] sm:$0xf]
        %v845 = vld [vmem:[%s730 + $0x108] sm:$0xf]
        %v846 = vld [vmem:[%s730 + $0x10c] sm:$0xf]
        %v847 = vld [vmem:[%s730 + $0x110] sm:$0xf]
        %v848 = vld [vmem:[%s730 + $0x114] sm:$0xf]
        %v849 = vld [vmem:[%s730 + $0x118] sm:$0xf]
        %v850 = vld [vmem:[%s730 + $0x11c] sm:$0xf]
        %v851 = vld [vmem:[%s730 + $0x120] sm:$0xf]
        %v852 = vld [vmem:[%s730 + $0x124] sm:$0xf]
        %v853 = vld [vmem:[%s730 + $0x128] sm:$0xf]
        %v854 = vld [vmem:[%s730 + $0x12c] sm:$0xf]
        %v855 = vld [vmem:[%s730 + $0x130] sm:$0xf]
        %v856 = vld [vmem:[%s730 + $0x134] sm:$0xf]
        %v857 = vld [vmem:[%s730 + $0x138] sm:$0xf]
        %v858 = vld [vmem:[%s730 + $0x13c] sm:$0xf]
        %v859 = vld [vmem:[%s730 + $0x140] sm:$0xf]
        %v860 = vld [vmem:[%s730 + $0x144] sm:$0xf]
        %v861 = vld [vmem:[%s730 + $0x148] sm:$0xf]
        %v862 = vld [vmem:[%s730 + $0x14c] sm:$0xf]
        %v863 = vld [vmem:[%s730 + $0x150] sm:$0xf]
        %v864 = vld [vmem:[%s730 + $0x154] sm:$0xf]
        %v865 = vld [vmem:[%s730 + $0x158] sm:$0xf]
        %v866 = vld [vmem:[%s730 + $0x15c] sm:$0xf]
        %v867 = vld [vmem:[%s730 + $0x160] sm:$0xf]
        %v868 = vld [vmem:[%s730 + $0x164] sm:$0xf]
        %v869 = vld [vmem:[%s730 + $0x168] sm:$0xf]
        %v870 = vld [vmem:[%s730 + $0x16c] sm:$0xf]
        %v871 = vld [vmem:[%s730 + $0x170] sm:$0xf]
        %v872 = vld [vmem:[%s730 + $0x174] sm:$0xf]
        %v873 = vld [vmem:[%s730 + $0x178] sm:$0xf]
        %v874 = vld [vmem:[%s730 + $0x17c] sm:$0xf]
        %v875 = vld [vmem:[%s730 + $0x180] sm:$0xf]
        %v876 = vld [vmem:[%s730 + $0x184] sm:$0xf]
        %v877 = vld [vmem:[%s730 + $0x188] sm:$0xf]
        %v878 = vld [vmem:[%s730 + $0x18c] sm:$0xf]
        %v879 = vld [vmem:[%s730 + $0x190] sm:$0xf]
        %v880 = vld [vmem:[%s730 + $0x194] sm:$0xf]
        %v881 = vld [vmem:[%s730 + $0x198] sm:$0xf]
        %v882 = vld [vmem:[%s730 + $0x19c] sm:$0xf]
        %v883 = vld [vmem:[%s730 + $0x1a0] sm:$0xf]
        %v884 = vld [vmem:[%s730 + $0x1a4] sm:$0xf]
        %v885 = vld [vmem:[%s730 + $0x1a8] sm:$0xf]
        %v886 = vld [vmem:[%s730 + $0x1ac] sm:$0xf]
        %v887 = vld [vmem:[%s730 + $0x1b0] sm:$0xf]
        %v888 = vld [vmem:[%s730 + $0x1b4] sm:$0xf]
        %v889 = vld [vmem:[%s730 + $0x1b8] sm:$0xf]
        %v890 = vld [vmem:[%s730 + $0x1bc] sm:$0xf]
        %v891 = vld [vmem:[%s730 + $0x1c0] sm:$0xf]
        %v892 = vld [vmem:[%s730 + $0x1c4] sm:$0xf]
        %v893 = vld [vmem:[%s730 + $0x1c8] sm:$0xf]
        %v894 = vld [vmem:[%s730 + $0x1cc] sm:$0xf]
        %v895 = vld [vmem:[%s730 + $0x1d0] sm:$0xf]
        %v896 = vld [vmem:[%s730 + $0x1d4] sm:$0xf]
        %v897 = vld [vmem:[%s730 + $0x1d8] sm:$0xf]
        %v898 = vld [vmem:[%s730 + $0x1dc] sm:$0xf]
        %v899 = vld [vmem:[%s730 + $0x1e0] sm:$0xf]
        %v900 = vld [vmem:[%s730 + $0x1e4] sm:$0xf]
        %v901 = vld [vmem:[%s730 + $0x1e8] sm:$0xf]
        %v902 = vld [vmem:[%s730 + $0x1ec] sm:$0xf]
        %v903 = vld [vmem:[%s730 + $0x1f0] sm:$0xf]
        %v904 = vld [vmem:[%s730 + $0x1f4] sm:$0xf]
        %v905 = vld [vmem:[%s730 + $0x1f8] sm:$0xf]
        %v906 = vld [vmem:[%s730 + $0x1fc] sm:$0xf]
        %v907 = vld [vmem:[%s768] sm:$0x1]
        %v909 = vlaneseq
        %v910 = vshrl.u32 %v909, 7
        %v911 = vsub.s32 0, %v910
        %v912 = vrot.slane %v907, %v911
        %v922 = vunpack.c.l.b16 %v771
        %v923 = vunpack.c.h.b16 %v771
        %v924 = vunpack.c.l.b16 %v772
        %v925 = vunpack.c.h.b16 %v772
        %v926 = vunpack.c.l.b16 %v773
        %v927 = vunpack.c.h.b16 %v773
        %v928 = vunpack.c.l.b16 %v774
        %v929 = vunpack.c.h.b16 %v774
        %v930 = vunpack.c.l.b16 %v775
        %v931 = vunpack.c.h.b16 %v775
        %v932 = vunpack.c.l.b16 %v776
        %v933 = vunpack.c.h.b16 %v776
        %v934 = vunpack.c.l.b16 %v777
        %v935 = vunpack.c.h.b16 %v777
        %v936 = vunpack.c.l.b16 %v778
        %v937 = vunpack.c.h.b16 %v778
        %v938 = vpack.c.b16 %v930, %v922
        %v939 = vpack.c.b16 %v931, %v923
        %v940 = vpack.c.b16 %v932, %v924
        %v941 = vpack.c.b16 %v933, %v925
        %v942 = vpack.c.b16 %v934, %v926
        %v943 = vpack.c.b16 %v935, %v927
        %v944 = vpack.c.b16 %v936, %v928
        %v945 = vpack.c.b16 %v937, %v929
        %v1082 = vunpack.c.l.b16 %v779
        %v1083 = vunpack.c.l.b16 %v780
        %v1084 = vunpack.c.l.b16 %v781
        %v1085 = vunpack.c.l.b16 %v782
        %v1086 = vunpack.c.l.b16 %v783
        %v1087 = vunpack.c.l.b16 %v784
        %v1088 = vunpack.c.l.b16 %v785
        %v1089 = vunpack.c.l.b16 %v786
        %v1090 = vunpack.c.l.b16 %v787
        %v1091 = vunpack.c.l.b16 %v788
        %v1092 = vunpack.c.l.b16 %v789
        %v1093 = vunpack.c.l.b16 %v790
        %v1094 = vunpack.c.l.b16 %v791
        %v1095 = vunpack.c.l.b16 %v792
        %v1096 = vunpack.c.l.b16 %v793
        %v1097 = vunpack.c.l.b16 %v794
        %v1098 = vunpack.c.l.b16 %v795
        %v1099 = vunpack.c.l.b16 %v796
        %v1100 = vunpack.c.l.b16 %v797
        %v1101 = vunpack.c.l.b16 %v798
        %v1102 = vunpack.c.l.b16 %v799
        %v1103 = vunpack.c.l.b16 %v800
        %v1104 = vunpack.c.l.b16 %v801
        %v1105 = vunpack.c.l.b16 %v802
        %v1106 = vunpack.c.l.b16 %v803
        %v1107 = vunpack.c.l.b16 %v804
        %v1108 = vunpack.c.l.b16 %v805
        %v1109 = vunpack.c.l.b16 %v806
        %v1110 = vunpack.c.l.b16 %v807
        %v1111 = vunpack.c.l.b16 %v808
        %v1112 = vunpack.c.l.b16 %v809
        %v1113 = vunpack.c.l.b16 %v810
        %v1114 = vunpack.c.l.b16 %v811
        %v1115 = vunpack.c.l.b16 %v812
        %v1116 = vunpack.c.l.b16 %v813
        %v1117 = vunpack.c.l.b16 %v814
        %v1118 = vunpack.c.l.b16 %v815
        %v1119 = vunpack.c.l.b16 %v816
        %v1120 = vunpack.c.l.b16 %v817
        %v1121 = vunpack.c.l.b16 %v818
        %v1122 = vunpack.c.l.b16 %v819
        %v1123 = vunpack.c.l.b16 %v820
        %v1124 = vunpack.c.l.b16 %v821
        %v1125 = vunpack.c.l.b16 %v822
        %v1126 = vunpack.c.l.b16 %v823
        %v1127 = vunpack.c.l.b16 %v824
        %v1128 = vunpack.c.l.b16 %v825
        %v1129 = vunpack.c.l.b16 %v826
        %v1130 = vunpack.c.l.b16 %v827
        %v1131 = vunpack.c.l.b16 %v828
        %v1132 = vunpack.c.l.b16 %v829
        %v1133 = vunpack.c.l.b16 %v830
        %v1134 = vunpack.c.l.b16 %v831
        %v1135 = vunpack.c.l.b16 %v832
        %v1136 = vunpack.c.l.b16 %v833
        %v1137 = vunpack.c.l.b16 %v834
        %v1138 = vunpack.c.l.b16 %v835
        %v1139 = vunpack.c.l.b16 %v836
        %v1140 = vunpack.c.l.b16 %v837
        %v1141 = vunpack.c.l.b16 %v838
        %v1142 = vunpack.c.l.b16 %v839
        %v1143 = vunpack.c.l.b16 %v840
        %v1144 = vunpack.c.l.b16 %v841
        %v1145 = vunpack.c.l.b16 %v842
        %v1146 = vunpack.c.l.b16 %v843
        %v1147 = vunpack.c.l.b16 %v844
        %v1148 = vunpack.c.l.b16 %v845
        %v1149 = vunpack.c.l.b16 %v846
        %v1150 = vunpack.c.l.b16 %v847
        %v1151 = vunpack.c.l.b16 %v848
        %v1152 = vunpack.c.l.b16 %v849
        %v1153 = vunpack.c.l.b16 %v850
        %v1154 = vunpack.c.l.b16 %v851
        %v1155 = vunpack.c.l.b16 %v852
        %v1156 = vunpack.c.l.b16 %v853
        %v1157 = vunpack.c.l.b16 %v854
        %v1158 = vunpack.c.l.b16 %v855
        %v1159 = vunpack.c.l.b16 %v856
        %v1160 = vunpack.c.l.b16 %v857
        %v1161 = vunpack.c.l.b16 %v858
        %v1162 = vunpack.c.l.b16 %v859
        %v1163 = vunpack.c.l.b16 %v860
        %v1164 = vunpack.c.l.b16 %v861
        %v1165 = vunpack.c.l.b16 %v862
        %v1166 = vunpack.c.l.b16 %v863
        %v1167 = vunpack.c.l.b16 %v864
        %v1168 = vunpack.c.l.b16 %v865
        %v1169 = vunpack.c.l.b16 %v866
        %v1170 = vunpack.c.l.b16 %v867
        %v1171 = vunpack.c.l.b16 %v868
        %v1172 = vunpack.c.l.b16 %v869
        %v1173 = vunpack.c.l.b16 %v870
        %v1174 = vunpack.c.l.b16 %v871
        %v1175 = vunpack.c.l.b16 %v872
        %v1176 = vunpack.c.l.b16 %v873
        %v1177 = vunpack.c.l.b16 %v874
        %v1178 = vunpack.c.l.b16 %v875
        %v1179 = vunpack.c.l.b16 %v876
        %v1180 = vunpack.c.l.b16 %v877
        %v1181 = vunpack.c.l.b16 %v878
        %v1182 = vunpack.c.l.b16 %v879
        %v1183 = vunpack.c.l.b16 %v880
        %v1184 = vunpack.c.l.b16 %v881
        %v1185 = vunpack.c.l.b16 %v882
        %v1186 = vunpack.c.l.b16 %v883
        %v1187 = vunpack.c.l.b16 %v884
        %v1188 = vunpack.c.l.b16 %v885
        %v1189 = vunpack.c.l.b16 %v886
        %v1190 = vunpack.c.l.b16 %v887
        %v1191 = vunpack.c.l.b16 %v888
        %v1192 = vunpack.c.l.b16 %v889
        %v1193 = vunpack.c.l.b16 %v890
        %v1194 = vunpack.c.l.b16 %v891
        %v1195 = vunpack.c.l.b16 %v892
        %v1196 = vunpack.c.l.b16 %v893
        %v1197 = vunpack.c.l.b16 %v894
        %v1198 = vunpack.c.l.b16 %v895
        %v1199 = vunpack.c.l.b16 %v896
        %v1200 = vunpack.c.l.b16 %v897
        %v1201 = vunpack.c.l.b16 %v898
        %v1202 = vunpack.c.l.b16 %v899
        %v1203 = vunpack.c.l.b16 %v900
        %v1204 = vunpack.c.l.b16 %v901
        %v1205 = vunpack.c.l.b16 %v902
        %v1206 = vunpack.c.l.b16 %v903
        %v1207 = vunpack.c.l.b16 %v904
        %v1208 = vunpack.c.l.b16 %v905
        %v1209 = vunpack.c.l.b16 %v906
        %v1210 = vpack.c.b16 %v1083, %v1082
        %v1211 = vpack.c.b16 %v1085, %v1084
        %v1212 = vpack.c.b16 %v1087, %v1086
        %v1213 = vpack.c.b16 %v1089, %v1088
        %v1214 = vpack.c.b16 %v1091, %v1090
        %v1215 = vpack.c.b16 %v1093, %v1092
        %v1216 = vpack.c.b16 %v1095, %v1094
        %v1217 = vpack.c.b16 %v1097, %v1096
        %v1218 = vpack.c.b16 %v1099, %v1098
        %v1219 = vpack.c.b16 %v1101, %v1100
        %v1220 = vpack.c.b16 %v1103, %v1102
        %v1221 = vpack.c.b16 %v1105, %v1104
        %v1222 = vpack.c.b16 %v1107, %v1106
        %v1223 = vpack.c.b16 %v1109, %v1108
        %v1224 = vpack.c.b16 %v1111, %v1110
        %v1225 = vpack.c.b16 %v1113, %v1112
        %v1226 = vpack.c.b16 %v1115, %v1114
        %v1227 = vpack.c.b16 %v1117, %v1116
        %v1228 = vpack.c.b16 %v1119, %v1118
        %v1229 = vpack.c.b16 %v1121, %v1120
        %v1230 = vpack.c.b16 %v1123, %v1122
        %v1231 = vpack.c.b16 %v1125, %v1124
        %v1232 = vpack.c.b16 %v1127, %v1126
        %v1233 = vpack.c.b16 %v1129, %v1128
        %v1234 = vpack.c.b16 %v1131, %v1130
        %v1235 = vpack.c.b16 %v1133, %v1132
        %v1236 = vpack.c.b16 %v1135, %v1134
        %v1237 = vpack.c.b16 %v1137, %v1136
        %v1238 = vpack.c.b16 %v1139, %v1138
        %v1239 = vpack.c.b16 %v1141, %v1140
        %v1240 = vpack.c.b16 %v1143, %v1142
        %v1241 = vpack.c.b16 %v1145, %v1144
        %v1242 = vpack.c.b16 %v1147, %v1146
        %v1243 = vpack.c.b16 %v1149, %v1148
        %v1244 = vpack.c.b16 %v1151, %v1150
        %v1245 = vpack.c.b16 %v1153, %v1152
        %v1246 = vpack.c.b16 %v1155, %v1154
        %v1247 = vpack.c.b16 %v1157, %v1156
        %v1248 = vpack.c.b16 %v1159, %v1158
        %v1249 = vpack.c.b16 %v1161, %v1160
        %v1250 = vpack.c.b16 %v1163, %v1162
        %v1251 = vpack.c.b16 %v1165, %v1164
        %v1252 = vpack.c.b16 %v1167, %v1166
        %v1253 = vpack.c.b16 %v1169, %v1168
        %v1254 = vpack.c.b16 %v1171, %v1170
        %v1255 = vpack.c.b16 %v1173, %v1172
        %v1256 = vpack.c.b16 %v1175, %v1174
        %v1257 = vpack.c.b16 %v1177, %v1176
        %v1258 = vpack.c.b16 %v1179, %v1178
        %v1259 = vpack.c.b16 %v1181, %v1180
        %v1260 = vpack.c.b16 %v1183, %v1182
        %v1261 = vpack.c.b16 %v1185, %v1184
        %v1262 = vpack.c.b16 %v1187, %v1186
        %v1263 = vpack.c.b16 %v1189, %v1188
        %v1264 = vpack.c.b16 %v1191, %v1190
        %v1265 = vpack.c.b16 %v1193, %v1192
        %v1266 = vpack.c.b16 %v1195, %v1194
        %v1267 = vpack.c.b16 %v1197, %v1196
        %v1268 = vpack.c.b16 %v1199, %v1198
        %v1269 = vpack.c.b16 %v1201, %v1200
        %v1270 = vpack.c.b16 %v1203, %v1202
        %v1271 = vpack.c.b16 %v1205, %v1204
        %v1272 = vpack.c.b16 %v1207, %v1206
        %v1273 = vpack.c.b16 %v1209, %v1208
        %1338 = vmatprep.subr.bf16.mxu0 0
        %1339 = vmatpush1.bf16.msra.mxu0 %v1217
        %1340 = vmatprep.subr.bf16.mxu0 0
        %1341 = vmatpush1.bf16.msra.mxu0 %v1216
        %1342 = vmatprep.subr.bf16.mxu0 0
        %1343 = vmatpush1.bf16.msra.mxu0 %v1215
        %1344 = vmatprep.subr.bf16.mxu0 0
        %1345 = vmatpush1.bf16.msra.mxu0 %v1214
        %1346 = vmatprep.subr.bf16.mxu0 0
        %1347 = vmatpush1.bf16.msra.mxu0 %v1213
        %1348 = vmatprep.subr.bf16.mxu0 0
        %1349 = vmatpush1.bf16.msra.mxu0 %v1212
        %1350 = vmatprep.subr.bf16.mxu0 0
        %1351 = vmatpush1.bf16.msra.mxu0 %v1211
        %1352 = vmatprep.subr.bf16.mxu0 0
        %1353 = vmatpush1.bf16.msra.mxu0 %v1210
        %1354 = vmatprep.subr.bf16.mxu0 0
        %1355 = vmatpush2.bf16.msra.mxu0 %v1225
        %1356 = vmatprep.subr.bf16.mxu0 0
        %1357 = vmatpush2.bf16.msra.mxu0 %v1224
        %1358 = vmatprep.subr.bf16.mxu0 0
        %1359 = vmatpush2.bf16.msra.mxu0 %v1223
        %1360 = vmatprep.subr.bf16.mxu0 0
        %1361 = vmatpush2.bf16.msra.mxu0 %v1222
        %1362 = vmatprep.subr.bf16.mxu0 0
        %1363 = vmatpush2.bf16.msra.mxu0 %v1221
        %1364 = vmatprep.subr.bf16.mxu0 0
        %1365 = vmatpush2.bf16.msra.mxu0 %v1220
        %1366 = vmatprep.subr.bf16.mxu0 0
        %1367 = vmatpush2.bf16.msra.mxu0 %v1219
        %1368 = vmatprep.subr.bf16.mxu0 0
        %1369 = vmatpush2.bf16.msra.mxu0 %v1218
        %1370 = vmatprep.mubr.bf16.mxu0 %v939
        %1371 = vmatmul.mubr.bf16.gmra.mxu0 %v938
        %v1372 = vpop.f32.mrf.mxu0
        %v1373 = vadd.f32 %v912, %v1372
        %v1374 = vpop.f32.mrf.mxu0
        %v1375 = vpop.f32.mrf.mxu0
        %v1376 = vadd.f32 %v912, %v1375
        %v1377 = vpop.f32.mrf.mxu0
        %1378 = vdwg.mxu0
        %1379 = vmatprep.subr.bf16.mxu0 0
        %1380 = vmatpush1.bf16.msra.mxu0 %v1233
        %1381 = vmatprep.subr.bf16.mxu0 0
        %1382 = vmatpush1.bf16.msra.mxu0 %v1232
        %1383 = vmatprep.subr.bf16.mxu0 0
        %1384 = vmatpush1.bf16.msra.mxu0 %v1231
        %1385 = vmatprep.subr.bf16.mxu0 0
        %1386 = vmatpush1.bf16.msra.mxu0 %v1230
        %1387 = vmatprep.subr.bf16.mxu0 0
        %1388 = vmatpush1.bf16.msra.mxu0 %v1229
        %1389 = vmatprep.subr.bf16.mxu0 0
        %1390 = vmatpush1.bf16.msra.mxu0 %v1228
        %1391 = vmatprep.subr.bf16.mxu0 0
        %1392 = vmatpush1.bf16.msra.mxu0 %v1227
        %1393 = vmatprep.subr.bf16.mxu0 0
        %1394 = vmatpush1.bf16.msra.mxu0 %v1226
        %1395 = vmatprep.subr.bf16.mxu0 0
        %1396 = vmatpush2.bf16.msra.mxu0 %v1241
        %1397 = vmatprep.subr.bf16.mxu0 0
        %1398 = vmatpush2.bf16.msra.mxu0 %v1240
        %1399 = vmatprep.subr.bf16.mxu0 0
        %1400 = vmatpush2.bf16.msra.mxu0 %v1239
        %1401 = vmatprep.subr.bf16.mxu0 0
        %1402 = vmatpush2.bf16.msra.mxu0 %v1238
        %1403 = vmatprep.subr.bf16.mxu0 0
        %1404 = vmatpush2.bf16.msra.mxu0 %v1237
        %1405 = vmatprep.subr.bf16.mxu0 0
        %1406 = vmatpush2.bf16.msra.mxu0 %v1236
        %1407 = vmatprep.subr.bf16.mxu0 0
        %1408 = vmatpush2.bf16.msra.mxu0 %v1235
        %1409 = vmatprep.subr.bf16.mxu0 0
        %1410 = vmatpush2.bf16.msra.mxu0 %v1234
        %1411 = vmatprep.mubr.bf16.mxu0 %v941
        %1412 = vmatmul.mubr.bf16.gmra.mxu0 %v940
        %v1413 = vpop.f32.mrf.mxu0
        %v1414 = vadd.f32 %v1373, %v1413
        %v1415 = vpop.f32.mrf.mxu0
        %v1416 = vpop.f32.mrf.mxu0
        %v1417 = vadd.f32 %v1376, %v1416
        %v1418 = vpop.f32.mrf.mxu0
        %1419 = vdwg.mxu0
        %1420 = vmatprep.subr.bf16.mxu0 0
        %1421 = vmatpush1.bf16.msra.mxu0 %v1249
        %1422 = vmatprep.subr.bf16.mxu0 0
        %1423 = vmatpush1.bf16.msra.mxu0 %v1248
        %1424 = vmatprep.subr.bf16.mxu0 0
        %1425 = vmatpush1.bf16.msra.mxu0 %v1247
        %1426 = vmatprep.subr.bf16.mxu0 0
        %1427 = vmatpush1.bf16.msra.mxu0 %v1246
        %1428 = vmatprep.subr.bf16.mxu0 0
        %1429 = vmatpush1.bf16.msra.mxu0 %v1245
        %1430 = vmatprep.subr.bf16.mxu0 0
        %1431 = vmatpush1.bf16.msra.mxu0 %v1244
        %1432 = vmatprep.subr.bf16.mxu0 0
        %1433 = vmatpush1.bf16.msra.mxu0 %v1243
        %1434 = vmatprep.subr.bf16.mxu0 0
        %1435 = vmatpush1.bf16.msra.mxu0 %v1242
        %1436 = vmatprep.subr.bf16.mxu0 0
        %1437 = vmatpush2.bf16.msra.mxu0 %v1257
        %1438 = vmatprep.subr.bf16.mxu0 0
        %1439 = vmatpush2.bf16.msra.mxu0 %v1256
        %1440 = vmatprep.subr.bf16.mxu0 0
        %1441 = vmatpush2.bf16.msra.mxu0 %v1255
        %1442 = vmatprep.subr.bf16.mxu0 0
        %1443 = vmatpush2.bf16.msra.mxu0 %v1254
        %1444 = vmatprep.subr.bf16.mxu0 0
        %1445 = vmatpush2.bf16.msra.mxu0 %v1253
        %1446 = vmatprep.subr.bf16.mxu0 0
        %1447 = vmatpush2.bf16.msra.mxu0 %v1252
        %1448 = vmatprep.subr.bf16.mxu0 0
        %1449 = vmatpush2.bf16.msra.mxu0 %v1251
        %1450 = vmatprep.subr.bf16.mxu0 0
        %1451 = vmatpush2.bf16.msra.mxu0 %v1250
        %1452 = vmatprep.mubr.bf16.mxu0 %v943
        %1453 = vmatmul.mubr.bf16.gmra.mxu0 %v942
        %v1454 = vpop.f32.mrf.mxu0
        %v1455 = vadd.f32 %v1414, %v1454
        %v1456 = vpop.f32.mrf.mxu0
        %v1457 = vpop.f32.mrf.mxu0
        %v1458 = vadd.f32 %v1417, %v1457
        %v1459 = vpop.f32.mrf.mxu0
        %1460 = vdwg.mxu0
        %1461 = vmatprep.subr.bf16.mxu0 0
        %1462 = vmatpush1.bf16.msra.mxu0 %v1265
        %1463 = vmatprep.subr.bf16.mxu0 0
        %1464 = vmatpush1.bf16.msra.mxu0 %v1264
        %1465 = vmatprep.subr.bf16.mxu0 0
        %1466 = vmatpush1.bf16.msra.mxu0 %v1263
        %1467 = vmatprep.subr.bf16.mxu0 0
        %1468 = vmatpush1.bf16.msra.mxu0 %v1262
        %1469 = vmatprep.subr.bf16.mxu0 0
        %1470 = vmatpush1.bf16.msra.mxu0 %v1261
        %1471 = vmatprep.subr.bf16.mxu0 0
        %1472 = vmatpush1.bf16.msra.mxu0 %v1260
        %1473 = vmatprep.subr.bf16.mxu0 0
        %1474 = vmatpush1.bf16.msra.mxu0 %v1259
        %1475 = vmatprep.subr.bf16.mxu0 0
        %1476 = vmatpush1.bf16.msra.mxu0 %v1258
        %1477 = vmatprep.subr.bf16.mxu0 0
        %1478 = vmatpush2.bf16.msra.mxu0 %v1273
        %1479 = vmatprep.subr.bf16.mxu0 0
        %1480 = vmatpush2.bf16.msra.mxu0 %v1272
        %1481 = vmatprep.subr.bf16.mxu0 0
        %1482 = vmatpush2.bf16.msra.mxu0 %v1271
        %1483 = vmatprep.subr.bf16.mxu0 0
        %1484 = vmatpush2.bf16.msra.mxu0 %v1270
        %1485 = vmatprep.subr.bf16.mxu0 0
        %1486 = vmatpush2.bf16.msra.mxu0 %v1269
        %1487 = vmatprep.subr.bf16.mxu0 0
        %1488 = vmatpush2.bf16.msra.mxu0 %v1268
        %1489 = vmatprep.subr.bf16.mxu0 0
        %1490 = vmatpush2.bf16.msra.mxu0 %v1267
        %1491 = vmatprep.subr.bf16.mxu0 0
        %1492 = vmatpush2.bf16.msra.mxu0 %v1266
        %1493 = vmatprep.mubr.bf16.mxu0 %v945
        %1494 = vmatmul.mubr.bf16.gmra.mxu0 %v944
        %v1495 = vpop.f32.mrf.mxu0
        %v1496 = vadd.f32 %v1455, %v1495
        %v1497 = vpop.f32.mrf.mxu0
        %v1498 = vpop.f32.mrf.mxu0
        %v1499 = vadd.f32 %v1458, %v1498
        %v1500 = vpop.f32.mrf.mxu0
        %1501 = vdwg.mxu0
        %v1502 = vmax.f32 %v1496, 0.0
        %v1503 = vmax.f32 %v1499, 0.0
        %1504 = vst [vmem:[%s758] sm:$0xff] %v1502
        %1505 = vst [vmem:[%s758 + $0x8] sm:$0xff] %v1503
        %s1506 = sand.u32 %s114, 1
        %s1507 = sand.u32 %s114, 1
        %s1508 = smul.addr %s1507, 16
        %s1509 = scalar_lea.vmem [#allocation3], %s1508
        // Predicated region
        $region74: #{eff_trm_forward.6} parent=68 // pred_check
          %p1510 = pneg %p124
        $region75: #{eff_trm_forward.6} parent=68 // pred_check_branch
          %1512 = sbr.rel (%p1510) target = $region77
        $region76: #{eff_trm_forward.6} parent=68 // pred_region
          %s1513 = smul.u32 2, %s18
          %s1514 = smul.addr %s1513, 11
          %s1515 = sadd.s32 %s19, %s1514
          %s1516 = smul.addr %s1515, 8
          %s1517 = scalar_lea.vmem %s3, %s1516
          // Predicated region
          $region78: #{eff_trm_forward.6} parent=76 // pred_check
            _
          $region79: #{eff_trm_forward.6} parent=76 // pred_check_branch
            %1519 = sbr.rel (0) target = $region81
          $region80: #{eff_trm_forward.6} parent=76 // pred_region
            // Predicated region
            $region82: #{eff_trm_forward.6} parent=80 // pred_check
              _
            $region83: #{eff_trm_forward.6} parent=80 // pred_check_branch
              %1521 = sbr.rel (0) target = $region85
            $region84: #{eff_trm_forward.6} parent=80 // pred_region
              // Predicated region
              $region97: #{eff_trm_forward.6} parent=84 // pred_check
                _
              $region98: #{eff_trm_forward.6} parent=84 // pred_check_branch
                %1539 = sbr.rel (0) target = $region100
              $region99: #{eff_trm_forward.6} parent=84 // pred_region
                loop: start=0, step=1, limit=1
                $region101: #{eff_trm_forward.6} parent=99 // loop_pre_header
                  _
                $region102: #{eff_trm_forward.6} parent=99 // loop_header
                  %s1541 = sphi 0, %s1545
                  %p1542 = scmp.ge.s32.totalorder %s1541, 1
                  %s1546 = sphi %s1509, %s1509
                  %s1547 = sphi %s1517, %s1517
                $region103: #{eff_trm_forward.6} parent=99 // loop_header_branch
                  %1544 = sbr.rel (%p1542) target = $region107
                $region104: #{eff_trm_forward.6} parent=99 // loop_body
                  %v1548 = vld [vmem:[%s1546] sm:$0xff]
                  %1549 = vst [vmem:[%s1547] sm:$0xff] %v1548
                  %v1550 = vld [vmem:[%s1546 + $0x8] sm:$0xff]
                  %1551 = vst [vmem:[%s1547 + $0x58] sm:$0xff] %v1550
                $region105: #{eff_trm_forward.6} parent=99 // loop_footer
                  %s1545 = sadd.s32 1, %s1541
                $region106: #{eff_trm_forward.6} parent=99 // loop_footer_branch
                  %1540 = sbr.rel target = $region102
                $region107: #{eff_trm_forward.6} parent=99 // loop_exit
                  _
              $region100: #{eff_trm_forward.6} parent=84 // pred_fallthru
                _
              // Predicated region
              $region108: #{eff_trm_forward.6} parent=84 // pred_check
                _
              $region109: #{eff_trm_forward.6} parent=84 // pred_check_branch
                %1553 = sbr.rel target = $region111
              $region110: #{eff_trm_forward.6} parent=84 // pred_region
                _
              $region111: #{eff_trm_forward.6} parent=84 // pred_fallthru
                _
            $region85: #{eff_trm_forward.6} parent=80 // pred_fallthru
              _
            // Predicated region
            $region86: #{eff_trm_forward.6} parent=80 // pred_check
              _
            $region87: #{eff_trm_forward.6} parent=80 // pred_check_branch
              %1523 = sbr.rel target = $region89
            $region88: #{eff_trm_forward.6} parent=80 // pred_region
              %s1525 = ssub.s32 256, 1
              loop: start=0, step=1, limit=1
              $region90: #{eff_trm_forward.6} parent=88 // loop_pre_header
                _
              $region91: #{eff_trm_forward.6} parent=88 // loop_header
                %s1527 = sphi 0, %s1531
                %p1528 = scmp.ge.s32.totalorder %s1527, 1
                %s1532 = sphi %s1509, %s1509
                %s1533 = sphi %s1517, %s1517
              $region92: #{eff_trm_forward.6} parent=88 // loop_header_branch
                %1530 = sbr.rel (%p1528) target = $region96
              $region93: #{eff_trm_forward.6} parent=88 // loop_body
                %v1534 = vld [vmem:[%s1532] sm:%s1525]
                %1535 = vst [vmem:[%s1533] sm:%s1525] %v1534
                %v1536 = vld [vmem:[%s1532 + $0x8] sm:%s1525]
                %1537 = vst [vmem:[%s1533 + $0x58] sm:%s1525] %v1536
              $region94: #{eff_trm_forward.6} parent=88 // loop_footer
                %s1531 = sadd.s32 1, %s1527
              $region95: #{eff_trm_forward.6} parent=88 // loop_footer_branch
                %1526 = sbr.rel target = $region91
              $region96: #{eff_trm_forward.6} parent=88 // loop_exit
                _
            $region89: #{eff_trm_forward.6} parent=80 // pred_fallthru
              _
          $region81: #{eff_trm_forward.6} parent=76 // pred_fallthru
            _
          %1554 = vnop
        $region77: #{eff_trm_forward.6} parent=68 // pred_fallthru
          _
      $region69: #{eff_trm_forward.6} parent=5 // pred_fallthru
        _
      %p1555 = scmp.le.s32.totalorder 2, %s9
      // Predicated region
      $region112: #{eff_trm_forward.6} parent=5 // pred_check
        %p1556 = pneg %p1555
      $region113: #{eff_trm_forward.6} parent=5 // pred_check_branch
        %1558 = sbr.rel (%p1556) target = $region115
      $region114: #{eff_trm_forward.6} parent=5 // pred_region
        %s1559 = ssub.s32 %s9, 2
        // Predicated region
        $region116: #{eff_trm_forward.6} parent=114 // pred_check
          %p1560 = pneg %p130
        $region117: #{eff_trm_forward.6} parent=114 // pred_check_branch
          %1562 = sbr.rel (%p1560) target = $region119
        $region118: #{eff_trm_forward.6} parent=114 // pred_region
          %s1563 = sand.u32 %s115, 1
          %s1564 = sand.u32 %s115, 1
          %s1565 = smul.addr %s1564, 16
          %s1566 = scalar_lea.vmem [#allocation3], %s1565
        $region119: #{eff_trm_forward.6} parent=114 // pred_fallthru
          _
      $region115: #{eff_trm_forward.6} parent=5 // pred_fallthru
        _
    $region6: #{eff_trm_forward.6} parent=1 // loop_footer
      %s13 = sadd.s32 1, %s9
    $region7: #{eff_trm_forward.6} parent=1 // loop_footer_branch
      %8 = sbr.rel target = $region3
    $region8: #{eff_trm_forward.6} parent=1 // loop_exit
      _

// kernel: eff_trm_forward.7
$region0: #{eff_trm_forward.7}
  #allocation0 [shape = 'u32[]', space=smem, size = 0x4, offset = 0x4, fixed_abs, tag = 'smem constant byte address 0x4 - core index']
  #allocation1 [shape = 'u32[144,128]{1,0:T(1,128)}', space=vmem, size = 0x12000, scoped, tag = 'internal scratch']
  %s0 = inlined_call_operand.vmem [shape: bf16[8,1408], index: 0, kind: input, shape index: {}]
  %s1 = inlined_call_operand.vmem [shape: bf16[1408,128], index: 1, kind: input, shape index: {}]
  %s2 = inlined_call_operand.hbm [shape: f32[1,128], index: 2, kind: input, shape index: {}]
  %s3 = inlined_call_operand.hbm [shape: f32[1,128], index: 3, kind: input, shape index: {}]
  %s4 = inlined_call_operand.hbm [shape: f32[1,128], index: 4, kind: input, shape index: {}]
  %s5 = inlined_call_operand.vmem [shape: f32[8,128], index: 5, kind: output, shape index: {}]
  %s6 = sld [smem:[#allocation0]]
  $region42: #{eff_trm_forward.7} parent=0
    _
  %s8 = ssub.s32 1, %s6
  %s9 = scalar_select 0, %s8, %s6
  $region1: #{eff_trm_forward.7} parent=0
    #allocation2 [shape = 'u8[512]{0}', space=vmem, size = 0x400, scoped, tag = 'input window, operand 2, single buffered']
    #allocation3 [shape = 's32[1]{0}', space=sflag, size = 0x4, scoped, tag = 'scoped memory for eff_trm_forward.7']
    #allocation4 [shape = 'u8[512]{0}', space=vmem, size = 0x400, scoped, tag = 'input window, operand 3, single buffered']
    #allocation5 [shape = 's32[1]{0}', space=sflag, size = 0x4, scoped, tag = 'scoped memory for eff_trm_forward.7']
    #allocation6 [shape = 'u8[512]{0}', space=vmem, size = 0x400, scoped, tag = 'input window, operand 4, single buffered']
    %10 = vsyncpa [#allocation3], 0
    %11 = vsyncpa [#allocation5], 0
    // Predicated region
    $region2: #{eff_trm_forward.7} parent=1 // pred_check
      _
    $region3: #{eff_trm_forward.7} parent=1 // pred_check_branch
      %13 = sbr.rel (0) target = $region5
    $region4: #{eff_trm_forward.7} parent=1 // pred_region
      _
    $region5: #{eff_trm_forward.7} parent=1 // pred_fallthru
      _
    // Predicated region
    $region6: #{eff_trm_forward.7} parent=1 // pred_check
      _
    $region7: #{eff_trm_forward.7} parent=1 // pred_check_branch
      %15 = sbr.rel (0) target = $region9
    $region8: #{eff_trm_forward.7} parent=1 // pred_region
      _
    $region9: #{eff_trm_forward.7} parent=1 // pred_fallthru
      _
    // Predicated region
    $region10: #{eff_trm_forward.7} parent=1 // pred_check
      _
    $region11: #{eff_trm_forward.7} parent=1 // pred_check_branch
      %17 = sbr.rel (0) target = $region13
    $region12: #{eff_trm_forward.7} parent=1 // pred_region
      %s19 = ssub.s32 16, 16
      %20 = vsyncadd [#allocation3], %s19
      %s22 = sshll.u32 [#allocation2], 4
      %s23 = int_to_ptr.vmem [resolvable:$true] %s22
      %25 = dma.hbm_to_vmem [thread:$0]  %s2, 16, %s23, [#allocation3]
    $region13: #{eff_trm_forward.7} parent=1 // pred_fallthru
      _
    // Predicated region
    $region14: #{eff_trm_forward.7} parent=1 // pred_check
      _
    $region15: #{eff_trm_forward.7} parent=1 // pred_check_branch
      %27 = sbr.rel (0) target = $region17
    $region16: #{eff_trm_forward.7} parent=1 // pred_region
      %s29 = ssub.s32 16, 16
      %30 = vsyncadd [#allocation5], %s29
      %s32 = sshll.u32 [#allocation4], 4
      %s33 = int_to_ptr.vmem [resolvable:$true] %s32
      %35 = dma.hbm_to_vmem [thread:$0]  %s3, 16, %s33, [#allocation5]
    $region17: #{eff_trm_forward.7} parent=1 // pred_fallthru
      _
    // Predicated region
    $region18: #{eff_trm_forward.7} parent=1 // pred_check
      _
    $region19: #{eff_trm_forward.7} parent=1 // pred_check_branch
      %37 = sbr.rel (0) target = $region21
    $region20: #{eff_trm_forward.7} parent=1 // pred_region
      %s39 = ssub.s32 16, 16
      %40 = vsyncadd [#allocation5], %s39
      %s42 = sshll.u32 [#allocation6], 4
      %s43 = int_to_ptr.vmem [resolvable:$true] %s42
      %45 = dma.hbm_to_vmem [thread:$0]  %s4, 16, %s43, [#allocation5]
    $region21: #{eff_trm_forward.7} parent=1 // pred_fallthru
      _
    // Predicated region
    $region22: #{eff_trm_forward.7} parent=1 // pred_check
      _
    $region23: #{eff_trm_forward.7} parent=1 // pred_check_branch
      %47 = sbr.rel (0) target = $region25
    $region24: #{eff_trm_forward.7} parent=1 // pred_region
      %48 = dma.done [#allocation3], 16
    $region25: #{eff_trm_forward.7} parent=1 // pred_fallthru
      _
    // Predicated region
    $region26: #{eff_trm_forward.7} parent=1 // pred_check
      _
    $region27: #{eff_trm_forward.7} parent=1 // pred_check_branch
      %50 = sbr.rel (0) target = $region29
    $region28: #{eff_trm_forward.7} parent=1 // pred_region
      %51 = dma.done [#allocation5], 16
    $region29: #{eff_trm_forward.7} parent=1 // pred_fallthru
      _
    // Predicated region
    $region30: #{eff_trm_forward.7} parent=1 // pred_check
      _
    $region31: #{eff_trm_forward.7} parent=1 // pred_check_branch
      %53 = sbr.rel (0) target = $region33
    $region32: #{eff_trm_forward.7} parent=1 // pred_region
      %54 = dma.done [#allocation5], 16
    $region33: #{eff_trm_forward.7} parent=1 // pred_fallthru
      _
    %v56 = vld [vmem:[%s0] sm:$0xff]
    %v57 = vld [vmem:[%s0 + $0x8] sm:$0xff]
    %v58 = vld [vmem:[%s0 + $0x10] sm:$0xff]
    %v59 = vld [vmem:[%s0 + $0x18] sm:$0xff]
    %v60 = vld [vmem:[%s0 + $0x20] sm:$0xff]
    %v61 = vld [vmem:[%s0 + $0x28] sm:$0xf]
    %v62 = vld [vmem:[%s1] sm:$0xf]
    %v63 = vld [vmem:[%s1 + $0x4] sm:$0xf]
    %v64 = vld [vmem:[%s1 + $0x8] sm:$0xf]
    %v65 = vld [vmem:[%s1 + $0xc] sm:$0xf]
    %v66 = vld [vmem:[%s1 + $0x10] sm:$0xf]
    %v67 = vld [vmem:[%s1 + $0x14] sm:$0xf]
    %v68 = vld [vmem:[%s1 + $0x18] sm:$0xf]
    %v69 = vld [vmem:[%s1 + $0x1c] sm:$0xf]
    %v70 = vld [vmem:[%s1 + $0x20] sm:$0xf]
    %v71 = vld [vmem:[%s1 + $0x24] sm:$0xf]
    %v72 = vld [vmem:[%s1 + $0x28] sm:$0xf]
    %v73 = vld [vmem:[%s1 + $0x2c] sm:$0xf]
    %v74 = vld [vmem:[%s1 + $0x30] sm:$0xf]
    %v75 = vld [vmem:[%s1 + $0x34] sm:$0xf]
    %v76 = vld [vmem:[%s1 + $0x38] sm:$0xf]
    %v77 = vld [vmem:[%s1 + $0x3c] sm:$0xf]
    %v78 = vld [vmem:[%s1 + $0x40] sm:$0xf]
    %v79 = vld [vmem:[%s1 + $0x44] sm:$0xf]
    %v80 = vld [vmem:[%s1 + $0x48] sm:$0xf]
    %v81 = vld [vmem:[%s1 + $0x4c] sm:$0xf]
    %v82 = vld [vmem:[%s1 + $0x50] sm:$0xf]
    %v83 = vld [vmem:[%s1 + $0x54] sm:$0xf]
    %v84 = vld [vmem:[%s1 + $0x58] sm:$0xf]
    %v85 = vld [vmem:[%s1 + $0x5c] sm:$0xf]
    %v86 = vld [vmem:[%s1 + $0x60] sm:$0xf]
    %v87 = vld [vmem:[%s1 + $0x64] sm:$0xf]
    %v88 = vld [vmem:[%s1 + $0x68] sm:$0xf]
    %v89 = vld [vmem:[%s1 + $0x6c] sm:$0xf]
    %v90 = vld [vmem:[%s1 + $0x70] sm:$0xf]
    %v91 = vld [vmem:[%s1 + $0x74] sm:$0xf]
    %v92 = vld [vmem:[%s1 + $0x78] sm:$0xf]
    %v93 = vld [vmem:[%s1 + $0x7c] sm:$0xf]
    %v94 = vld [vmem:[%s1 + $0x80] sm:$0xf]
    %v95 = vld [vmem:[%s1 + $0x84] sm:$0xf]
    %v96 = vld [vmem:[%s1 + $0x88] sm:$0xf]
    %v97 = vld [vmem:[%s1 + $0x8c] sm:$0xf]
    %v98 = vld [vmem:[%s1 + $0x90] sm:$0xf]
    %v99 = vld [vmem:[%s1 + $0x94] sm:$0xf]
    %v100 = vld [vmem:[%s1 + $0x98] sm:$0xf]
    %v101 = vld [vmem:[%s1 + $0x9c] sm:$0xf]
    %v102 = vld [vmem:[%s1 + $0xa0] sm:$0xf]
    %v103 = vld [vmem:[%s1 + $0xa4] sm:$0xf]
    %v104 = vld [vmem:[%s1 + $0xa8] sm:$0xf]
    %v105 = vld [vmem:[%s1 + $0xac] sm:$0xf]
    %v106 = vld [vmem:[%s1 + $0xb0] sm:$0xf]
    %v107 = vld [vmem:[%s1 + $0xb4] sm:$0xf]
    %v108 = vld [vmem:[%s1 + $0xb8] sm:$0xf]
    %v109 = vld [vmem:[%s1 + $0xbc] sm:$0xf]
    %v110 = vld [vmem:[%s1 + $0xc0] sm:$0xf]
    %v111 = vld [vmem:[%s1 + $0xc4] sm:$0xf]
    %v112 = vld [vmem:[%s1 + $0xc8] sm:$0xf]
    %v113 = vld [vmem:[%s1 + $0xcc] sm:$0xf]
    %v114 = vld [vmem:[%s1 + $0xd0] sm:$0xf]
    %v115 = vld [vmem:[%s1 + $0xd4] sm:$0xf]
    %v116 = vld [vmem:[%s1 + $0xd8] sm:$0xf]
    %v117 = vld [vmem:[%s1 + $0xdc] sm:$0xf]
    %v118 = vld [vmem:[%s1 + $0xe0] sm:$0xf]
    %v119 = vld [vmem:[%s1 + $0xe4] sm:$0xf]
    %v120 = vld [vmem:[%s1 + $0xe8] sm:$0xf]
    %v121 = vld [vmem:[%s1 + $0xec] sm:$0xf]
    %v122 = vld [vmem:[%s1 + $0xf0] sm:$0xf]
    %v123 = vld [vmem:[%s1 + $0xf4] sm:$0xf]
    %v124 = vld [vmem:[%s1 + $0xf8] sm:$0xf]
    %v125 = vld [vmem:[%s1 + $0xfc] sm:$0xf]
    %v126 = vld [vmem:[%s1 + $0x100] sm:$0xf]
    %v127 = vld [vmem:[%s1 + $0x104] sm:$0xf]
    %v128 = vld [vmem:[%s1 + $0x108] sm:$0xf]
    %v129 = vld [vmem:[%s1 + $0x10c] sm:$0xf]
    %v130 = vld [vmem:[%s1 + $0x110] sm:$0xf]
    %v131 = vld [vmem:[%s1 + $0x114] sm:$0xf]
    %v132 = vld [vmem:[%s1 + $0x118] sm:$0xf]
    %v133 = vld [vmem:[%s1 + $0x11c] sm:$0xf]
    %v134 = vld [vmem:[%s1 + $0x120] sm:$0xf]
    %v135 = vld [vmem:[%s1 + $0x124] sm:$0xf]
    %v136 = vld [vmem:[%s1 + $0x128] sm:$0xf]
    %v137 = vld [vmem:[%s1 + $0x12c] sm:$0xf]
    %v138 = vld [vmem:[%s1 + $0x130] sm:$0xf]
    %v139 = vld [vmem:[%s1 + $0x134] sm:$0xf]
    %v140 = vld [vmem:[%s1 + $0x138] sm:$0xf]
    %v141 = vld [vmem:[%s1 + $0x13c] sm:$0xf]
    %v142 = vld [vmem:[%s1 + $0x140] sm:$0xf]
    %v143 = vld [vmem:[%s1 + $0x144] sm:$0xf]
    %v144 = vld [vmem:[%s1 + $0x148] sm:$0xf]
    %v145 = vld [vmem:[%s1 + $0x14c] sm:$0xf]
    %v146 = vld [vmem:[%s1 + $0x150] sm:$0xf]
    %v147 = vld [vmem:[%s1 + $0x154] sm:$0xf]
    %v148 = vld [vmem:[%s1 + $0x158] sm:$0xf]
    %v149 = vld [vmem:[%s1 + $0x15c] sm:$0xf]
    %v150 = vld [vmem:[%s1 + $0x160] sm:$0xf]
    %v151 = vld [vmem:[%s1 + $0x164] sm:$0xf]
    %v152 = vld [vmem:[%s1 + $0x168] sm:$0xf]
    %v153 = vld [vmem:[%s1 + $0x16c] sm:$0xf]
    %v154 = vld [vmem:[%s1 + $0x170] sm:$0xf]
    %v155 = vld [vmem:[%s1 + $0x174] sm:$0xf]
    %v156 = vld [vmem:[%s1 + $0x178] sm:$0xf]
    %v157 = vld [vmem:[%s1 + $0x17c] sm:$0xf]
    %v158 = vld [vmem:[%s1 + $0x180] sm:$0xf]
    %v159 = vld [vmem:[%s1 + $0x184] sm:$0xf]
    %v160 = vld [vmem:[%s1 + $0x188] sm:$0xf]
    %v161 = vld [vmem:[%s1 + $0x18c] sm:$0xf]
    %v162 = vld [vmem:[%s1 + $0x190] sm:$0xf]
    %v163 = vld [vmem:[%s1 + $0x194] sm:$0xf]
    %v164 = vld [vmem:[%s1 + $0x198] sm:$0xf]
    %v165 = vld [vmem:[%s1 + $0x19c] sm:$0xf]
    %v166 = vld [vmem:[%s1 + $0x1a0] sm:$0xf]
    %v167 = vld [vmem:[%s1 + $0x1a4] sm:$0xf]
    %v168 = vld [vmem:[%s1 + $0x1a8] sm:$0xf]
    %v169 = vld [vmem:[%s1 + $0x1ac] sm:$0xf]
    %v170 = vld [vmem:[%s1 + $0x1b0] sm:$0xf]
    %v171 = vld [vmem:[%s1 + $0x1b4] sm:$0xf]
    %v172 = vld [vmem:[%s1 + $0x1b8] sm:$0xf]
    %v173 = vld [vmem:[%s1 + $0x1bc] sm:$0xf]
    %v174 = vld [vmem:[%s1 + $0x1c0] sm:$0xf]
    %v175 = vld [vmem:[%s1 + $0x1c4] sm:$0xf]
    %v176 = vld [vmem:[%s1 + $0x1c8] sm:$0xf]
    %v177 = vld [vmem:[%s1 + $0x1cc] sm:$0xf]
    %v178 = vld [vmem:[%s1 + $0x1d0] sm:$0xf]
    %v179 = vld [vmem:[%s1 + $0x1d4] sm:$0xf]
    %v180 = vld [vmem:[%s1 + $0x1d8] sm:$0xf]
    %v181 = vld [vmem:[%s1 + $0x1dc] sm:$0xf]
    %v182 = vld [vmem:[%s1 + $0x1e0] sm:$0xf]
    %v183 = vld [vmem:[%s1 + $0x1e4] sm:$0xf]
    %v184 = vld [vmem:[%s1 + $0x1e8] sm:$0xf]
    %v185 = vld [vmem:[%s1 + $0x1ec] sm:$0xf]
    %v186 = vld [vmem:[%s1 + $0x1f0] sm:$0xf]
    %v187 = vld [vmem:[%s1 + $0x1f4] sm:$0xf]
    %v188 = vld [vmem:[%s1 + $0x1f8] sm:$0xf]
    %v189 = vld [vmem:[%s1 + $0x1fc] sm:$0xf]
    %v190 = vld [vmem:[%s1 + $0x200] sm:$0xf]
    %v191 = vld [vmem:[%s1 + $0x204] sm:$0xf]
    %v192 = vld [vmem:[%s1 + $0x208] sm:$0xf]
    %v193 = vld [vmem:[%s1 + $0x20c] sm:$0xf]
    %v194 = vld [vmem:[%s1 + $0x210] sm:$0xf]
    %v195 = vld [vmem:[%s1 + $0x214] sm:$0xf]
    %v196 = vld [vmem:[%s1 + $0x218] sm:$0xf]
    %v197 = vld [vmem:[%s1 + $0x21c] sm:$0xf]
    %v198 = vld [vmem:[%s1 + $0x220] sm:$0xf]
    %v199 = vld [vmem:[%s1 + $0x224] sm:$0xf]
    %v200 = vld [vmem:[%s1 + $0x228] sm:$0xf]
    %v201 = vld [vmem:[%s1 + $0x22c] sm:$0xf]
    %v202 = vld [vmem:[%s1 + $0x230] sm:$0xf]
    %v203 = vld [vmem:[%s1 + $0x234] sm:$0xf]
    %v204 = vld [vmem:[%s1 + $0x238] sm:$0xf]
    %v205 = vld [vmem:[%s1 + $0x23c] sm:$0xf]
    %v206 = vld [vmem:[%s1 + $0x240] sm:$0xf]
    %v207 = vld [vmem:[%s1 + $0x244] sm:$0xf]
    %v208 = vld [vmem:[%s1 + $0x248] sm:$0xf]
    %v209 = vld [vmem:[%s1 + $0x24c] sm:$0xf]
    %v210 = vld [vmem:[%s1 + $0x250] sm:$0xf]
    %v211 = vld [vmem:[%s1 + $0x254] sm:$0xf]
    %v212 = vld [vmem:[%s1 + $0x258] sm:$0xf]
    %v213 = vld [vmem:[%s1 + $0x25c] sm:$0xf]
    %v214 = vld [vmem:[%s1 + $0x260] sm:$0xf]
    %v215 = vld [vmem:[%s1 + $0x264] sm:$0xf]
    %v216 = vld [vmem:[%s1 + $0x268] sm:$0xf]
    %v217 = vld [vmem:[%s1 + $0x26c] sm:$0xf]
    %v218 = vld [vmem:[%s1 + $0x270] sm:$0xf]
    %v219 = vld [vmem:[%s1 + $0x274] sm:$0xf]
    %v220 = vld [vmem:[%s1 + $0x278] sm:$0xf]
    %v221 = vld [vmem:[%s1 + $0x27c] sm:$0xf]
    %v222 = vld [vmem:[%s1 + $0x280] sm:$0xf]
    %v223 = vld [vmem:[%s1 + $0x284] sm:$0xf]
    %v224 = vld [vmem:[%s1 + $0x288] sm:$0xf]
    %v225 = vld [vmem:[%s1 + $0x28c] sm:$0xf]
    %v226 = vld [vmem:[%s1 + $0x290] sm:$0xf]
    %v227 = vld [vmem:[%s1 + $0x294] sm:$0xf]
    %v228 = vld [vmem:[%s1 + $0x298] sm:$0xf]
    %v229 = vld [vmem:[%s1 + $0x29c] sm:$0xf]
    %v230 = vld [vmem:[%s1 + $0x2a0] sm:$0xf]
    %v231 = vld [vmem:[%s1 + $0x2a4] sm:$0xf]
    %v232 = vld [vmem:[%s1 + $0x2a8] sm:$0xf]
    %v233 = vld [vmem:[%s1 + $0x2ac] sm:$0xf]
    %v234 = vld [vmem:[%s1 + $0x2b0] sm:$0xf]
    %v235 = vld [vmem:[%s1 + $0x2b4] sm:$0xf]
    %v236 = vld [vmem:[%s1 + $0x2b8] sm:$0xf]
    %v237 = vld [vmem:[%s1 + $0x2bc] sm:$0xf]
    %v238 = vld [vmem:[#allocation2] sm:$0x1]
    %v240 = vlaneseq
    %v241 = vshrl.u32 %v240, 7
    %v242 = vsub.s32 0, %v241
    %v243 = vrot.slane %v238, %v242
    %v251 = vunpack.c.l.b16 %v56
    %v252 = vunpack.c.h.b16 %v56
    %v253 = vunpack.c.l.b16 %v57
    %v254 = vunpack.c.h.b16 %v57
    %v255 = vunpack.c.l.b16 %v58
    %v256 = vunpack.c.h.b16 %v58
    %v257 = vunpack.c.l.b16 %v59
    %v258 = vunpack.c.h.b16 %v59
    %v259 = vunpack.c.l.b16 %v60
    %v260 = vunpack.c.h.b16 %v60
    %v261 = vunpack.c.l.b16 %v61
    %v262 = vpack.c.b16 %v251, %v251
    %v263 = vpack.c.b16 %v252, %v252
    %v264 = vpack.c.b16 %v253, %v253
    %v265 = vpack.c.b16 %v254, %v254
    %v266 = vpack.c.b16 %v255, %v255
    %v267 = vpack.c.b16 %v256, %v256
    %v268 = vpack.c.b16 %v257, %v257
    %v269 = vpack.c.b16 %v258, %v258
    %v270 = vpack.c.b16 %v259, %v259
    %v271 = vpack.c.b16 %v260, %v260
    %v272 = vpack.c.b16 %v261, %v261
    %v460 = vunpack.c.l.b16 %v62
    %v461 = vunpack.c.l.b16 %v63
    %v462 = vunpack.c.l.b16 %v64
    %v463 = vunpack.c.l.b16 %v65
    %v464 = vunpack.c.l.b16 %v66
    %v465 = vunpack.c.l.b16 %v67
    %v466 = vunpack.c.l.b16 %v68
    %v467 = vunpack.c.l.b16 %v69
    %v468 = vunpack.c.l.b16 %v70
    %v469 = vunpack.c.l.b16 %v71
    %v470 = vunpack.c.l.b16 %v72
    %v471 = vunpack.c.l.b16 %v73
    %v472 = vunpack.c.l.b16 %v74
    %v473 = vunpack.c.l.b16 %v75
    %v474 = vunpack.c.l.b16 %v76
    %v475 = vunpack.c.l.b16 %v77
    %v476 = vunpack.c.l.b16 %v78
    %v477 = vunpack.c.l.b16 %v79
    %v478 = vunpack.c.l.b16 %v80
    %v479 = vunpack.c.l.b16 %v81
    %v480 = vunpack.c.l.b16 %v82
    %v481 = vunpack.c.l.b16 %v83
    %v482 = vunpack.c.l.b16 %v84
    %v483 = vunpack.c.l.b16 %v85
    %v484 = vunpack.c.l.b16 %v86
    %v485 = vunpack.c.l.b16 %v87
    %v486 = vunpack.c.l.b16 %v88
    %v487 = vunpack.c.l.b16 %v89
    %v488 = vunpack.c.l.b16 %v90
    %v489 = vunpack.c.l.b16 %v91
    %v490 = vunpack.c.l.b16 %v92
    %v491 = vunpack.c.l.b16 %v93
    %v492 = vunpack.c.l.b16 %v94
    %v493 = vunpack.c.l.b16 %v95
    %v494 = vunpack.c.l.b16 %v96
    %v495 = vunpack.c.l.b16 %v97
    %v496 = vunpack.c.l.b16 %v98
    %v497 = vunpack.c.l.b16 %v99
    %v498 = vunpack.c.l.b16 %v100
    %v499 = vunpack.c.l.b16 %v101
    %v500 = vunpack.c.l.b16 %v102
    %v501 = vunpack.c.l.b16 %v103
    %v502 = vunpack.c.l.b16 %v104
    %v503 = vunpack.c.l.b16 %v105
    %v504 = vunpack.c.l.b16 %v106
    %v505 = vunpack.c.l.b16 %v107
    %v506 = vunpack.c.l.b16 %v108
    %v507 = vunpack.c.l.b16 %v109
    %v508 = vunpack.c.l.b16 %v110
    %v509 = vunpack.c.l.b16 %v111
    %v510 = vunpack.c.l.b16 %v112
    %v511 = vunpack.c.l.b16 %v113
    %v512 = vunpack.c.l.b16 %v114
    %v513 = vunpack.c.l.b16 %v115
    %v514 = vunpack.c.l.b16 %v116
    %v515 = vunpack.c.l.b16 %v117
    %v516 = vunpack.c.l.b16 %v118
    %v517 = vunpack.c.l.b16 %v119
    %v518 = vunpack.c.l.b16 %v120
    %v519 = vunpack.c.l.b16 %v121
    %v520 = vunpack.c.l.b16 %v122
    %v521 = vunpack.c.l.b16 %v123
    %v522 = vunpack.c.l.b16 %v124
    %v523 = vunpack.c.l.b16 %v125
    %v524 = vunpack.c.l.b16 %v126
    %v525 = vunpack.c.l.b16 %v127
    %v526 = vunpack.c.l.b16 %v128
    %v527 = vunpack.c.l.b16 %v129
    %v528 = vunpack.c.l.b16 %v130
    %v529 = vunpack.c.l.b16 %v131
    %v530 = vunpack.c.l.b16 %v132
    %v531 = vunpack.c.l.b16 %v133
    %v532 = vunpack.c.l.b16 %v134
    %v533 = vunpack.c.l.b16 %v135
    %v534 = vunpack.c.l.b16 %v136
    %v535 = vunpack.c.l.b16 %v137
    %v536 = vunpack.c.l.b16 %v138
    %v537 = vunpack.c.l.b16 %v139
    %v538 = vunpack.c.l.b16 %v140
    %v539 = vunpack.c.l.b16 %v141
    %v540 = vunpack.c.l.b16 %v142
    %v541 = vunpack.c.l.b16 %v143
    %v542 = vunpack.c.l.b16 %v144
    %v543 = vunpack.c.l.b16 %v145
    %v544 = vunpack.c.l.b16 %v146
    %v545 = vunpack.c.l.b16 %v147
    %v546 = vunpack.c.l.b16 %v148
    %v547 = vunpack.c.l.b16 %v149
    %v548 = vunpack.c.l.b16 %v150
    %v549 = vunpack.c.l.b16 %v151
    %v550 = vunpack.c.l.b16 %v152
    %v551 = vunpack.c.l.b16 %v153
    %v552 = vunpack.c.l.b16 %v154
    %v553 = vunpack.c.l.b16 %v155
    %v554 = vunpack.c.l.b16 %v156
    %v555 = vunpack.c.l.b16 %v157
    %v556 = vunpack.c.l.b16 %v158
    %v557 = vunpack.c.l.b16 %v159
    %v558 = vunpack.c.l.b16 %v160
    %v559 = vunpack.c.l.b16 %v161
    %v560 = vunpack.c.l.b16 %v162
    %v561 = vunpack.c.l.b16 %v163
    %v562 = vunpack.c.l.b16 %v164
    %v563 = vunpack.c.l.b16 %v165
    %v564 = vunpack.c.l.b16 %v166
    %v565 = vunpack.c.l.b16 %v167
    %v566 = vunpack.c.l.b16 %v168
    %v567 = vunpack.c.l.b16 %v169
    %v568 = vunpack.c.l.b16 %v170
    %v569 = vunpack.c.l.b16 %v171
    %v570 = vunpack.c.l.b16 %v172
    %v571 = vunpack.c.l.b16 %v173
    %v572 = vunpack.c.l.b16 %v174
    %v573 = vunpack.c.l.b16 %v175
    %v574 = vunpack.c.l.b16 %v176
    %v575 = vunpack.c.l.b16 %v177
    %v576 = vunpack.c.l.b16 %v178
    %v577 = vunpack.c.l.b16 %v179
    %v578 = vunpack.c.l.b16 %v180
    %v579 = vunpack.c.l.b16 %v181
    %v580 = vunpack.c.l.b16 %v182
    %v581 = vunpack.c.l.b16 %v183
    %v582 = vunpack.c.l.b16 %v184
    %v583 = vunpack.c.l.b16 %v185
    %v584 = vunpack.c.l.b16 %v186
    %v585 = vunpack.c.l.b16 %v187
    %v586 = vunpack.c.l.b16 %v188
    %v587 = vunpack.c.l.b16 %v189
    %v588 = vunpack.c.l.b16 %v190
    %v589 = vunpack.c.l.b16 %v191
    %v590 = vunpack.c.l.b16 %v192
    %v591 = vunpack.c.l.b16 %v193
    %v592 = vunpack.c.l.b16 %v194
    %v593 = vunpack.c.l.b16 %v195
    %v594 = vunpack.c.l.b16 %v196
    %v595 = vunpack.c.l.b16 %v197
    %v596 = vunpack.c.l.b16 %v198
    %v597 = vunpack.c.l.b16 %v199
    %v598 = vunpack.c.l.b16 %v200
    %v599 = vunpack.c.l.b16 %v201
    %v600 = vunpack.c.l.b16 %v202
    %v601 = vunpack.c.l.b16 %v203
    %v602 = vunpack.c.l.b16 %v204
    %v603 = vunpack.c.l.b16 %v205
    %v604 = vunpack.c.l.b16 %v206
    %v605 = vunpack.c.l.b16 %v207
    %v606 = vunpack.c.l.b16 %v208
    %v607 = vunpack.c.l.b16 %v209
    %v608 = vunpack.c.l.b16 %v210
    %v609 = vunpack.c.l.b16 %v211
    %v610 = vunpack.c.l.b16 %v212
    %v611 = vunpack.c.l.b16 %v213
    %v612 = vunpack.c.l.b16 %v214
    %v613 = vunpack.c.l.b16 %v215
    %v614 = vunpack.c.l.b16 %v216
    %v615 = vunpack.c.l.b16 %v217
    %v616 = vunpack.c.l.b16 %v218
    %v617 = vunpack.c.l.b16 %v219
    %v618 = vunpack.c.l.b16 %v220
    %v619 = vunpack.c.l.b16 %v221
    %v620 = vunpack.c.l.b16 %v222
    %v621 = vunpack.c.l.b16 %v223
    %v622 = vunpack.c.l.b16 %v224
    %v623 = vunpack.c.l.b16 %v225
    %v624 = vunpack.c.l.b16 %v226
    %v625 = vunpack.c.l.b16 %v227
    %v626 = vunpack.c.l.b16 %v228
    %v627 = vunpack.c.l.b16 %v229
    %v628 = vunpack.c.l.b16 %v230
    %v629 = vunpack.c.l.b16 %v231
    %v630 = vunpack.c.l.b16 %v232
    %v631 = vunpack.c.l.b16 %v233
    %v632 = vunpack.c.l.b16 %v234
    %v633 = vunpack.c.l.b16 %v235
    %v634 = vunpack.c.l.b16 %v236
    %v635 = vunpack.c.l.b16 %v237
    %v636 = vpack.c.b16 %v461, %v460
    %v637 = vpack.c.b16 %v463, %v462
    %v638 = vpack.c.b16 %v465, %v464
    %v639 = vpack.c.b16 %v467, %v466
    %v640 = vpack.c.b16 %v469, %v468
    %v641 = vpack.c.b16 %v471, %v470
    %v642 = vpack.c.b16 %v473, %v472
    %v643 = vpack.c.b16 %v475, %v474
    %v644 = vpack.c.b16 %v477, %v476
    %v645 = vpack.c.b16 %v479, %v478
    %v646 = vpack.c.b16 %v481, %v480
    %v647 = vpack.c.b16 %v483, %v482
    %v648 = vpack.c.b16 %v485, %v484
    %v649 = vpack.c.b16 %v487, %v486
    %v650 = vpack.c.b16 %v489, %v488
    %v651 = vpack.c.b16 %v491, %v490
    %v652 = vpack.c.b16 %v493, %v492
    %v653 = vpack.c.b16 %v495, %v494
    %v654 = vpack.c.b16 %v497, %v496
    %v655 = vpack.c.b16 %v499, %v498
    %v656 = vpack.c.b16 %v501, %v500
    %v657 = vpack.c.b16 %v503, %v502
    %v658 = vpack.c.b16 %v505, %v504
    %v659 = vpack.c.b16 %v507, %v506
    %v660 = vpack.c.b16 %v509, %v508
    %v661 = vpack.c.b16 %v511, %v510
    %v662 = vpack.c.b16 %v513, %v512
    %v663 = vpack.c.b16 %v515, %v514
    %v664 = vpack.c.b16 %v517, %v516
    %v665 = vpack.c.b16 %v519, %v518
    %v666 = vpack.c.b16 %v521, %v520
    %v667 = vpack.c.b16 %v523, %v522
    %v668 = vpack.c.b16 %v525, %v524
    %v669 = vpack.c.b16 %v527, %v526
    %v670 = vpack.c.b16 %v529, %v528
    %v671 = vpack.c.b16 %v531, %v530
    %v672 = vpack.c.b16 %v533, %v532
    %v673 = vpack.c.b16 %v535, %v534
    %v674 = vpack.c.b16 %v537, %v536
    %v675 = vpack.c.b16 %v539, %v538
    %v676 = vpack.c.b16 %v541, %v540
    %v677 = vpack.c.b16 %v543, %v542
    %v678 = vpack.c.b16 %v545, %v544
    %v679 = vpack.c.b16 %v547, %v546
    %v680 = vpack.c.b16 %v549, %v548
    %v681 = vpack.c.b16 %v551, %v550
    %v682 = vpack.c.b16 %v553, %v552
    %v683 = vpack.c.b16 %v555, %v554
    %v684 = vpack.c.b16 %v557, %v556
    %v685 = vpack.c.b16 %v559, %v558
    %v686 = vpack.c.b16 %v561, %v560
    %v687 = vpack.c.b16 %v563, %v562
    %v688 = vpack.c.b16 %v565, %v564
    %v689 = vpack.c.b16 %v567, %v566
    %v690 = vpack.c.b16 %v569, %v568
    %v691 = vpack.c.b16 %v571, %v570
    %v692 = vpack.c.b16 %v573, %v572
    %v693 = vpack.c.b16 %v575, %v574
    %v694 = vpack.c.b16 %v577, %v576
    %v695 = vpack.c.b16 %v579, %v578
    %v696 = vpack.c.b16 %v581, %v580
    %v697 = vpack.c.b16 %v583, %v582
    %v698 = vpack.c.b16 %v585, %v584
    %v699 = vpack.c.b16 %v587, %v586
    %v700 = vpack.c.b16 %v589, %v588
    %v701 = vpack.c.b16 %v591, %v590
    %v702 = vpack.c.b16 %v593, %v592
    %v703 = vpack.c.b16 %v595, %v594
    %v704 = vpack.c.b16 %v597, %v596
    %v705 = vpack.c.b16 %v599, %v598
    %v706 = vpack.c.b16 %v601, %v600
    %v707 = vpack.c.b16 %v603, %v602
    %v708 = vpack.c.b16 %v605, %v604
    %v709 = vpack.c.b16 %v607, %v606
    %v710 = vpack.c.b16 %v609, %v608
    %v711 = vpack.c.b16 %v611, %v610
    %v712 = vpack.c.b16 %v613, %v612
    %v713 = vpack.c.b16 %v615, %v614
    %v714 = vpack.c.b16 %v617, %v616
    %v715 = vpack.c.b16 %v619, %v618
    %v716 = vpack.c.b16 %v621, %v620
    %v717 = vpack.c.b16 %v623, %v622
    %v718 = vpack.c.b16 %v625, %v624
    %v719 = vpack.c.b16 %v627, %v626
    %v720 = vpack.c.b16 %v629, %v628
    %v721 = vpack.c.b16 %v631, %v630
    %v722 = vpack.c.b16 %v633, %v632
    %v723 = vpack.c.b16 %v635, %v634
    %812 = vmatprep.subr.bf16.mxu0 0
    %813 = vmatpush1.bf16.msra.mxu0 %v643
    %814 = vmatprep.subr.bf16.mxu0 0
    %815 = vmatpush1.bf16.msra.mxu0 %v642
    %816 = vmatprep.subr.bf16.mxu0 0
    %817 = vmatpush1.bf16.msra.mxu0 %v641
    %818 = vmatprep.subr.bf16.mxu0 0
    %819 = vmatpush1.bf16.msra.mxu0 %v640
    %820 = vmatprep.subr.bf16.mxu0 0
    %821 = vmatpush1.bf16.msra.mxu0 %v639
    %822 = vmatprep.subr.bf16.mxu0 0
    %823 = vmatpush1.bf16.msra.mxu0 %v638
    %824 = vmatprep.subr.bf16.mxu0 0
    %825 = vmatpush1.bf16.msra.mxu0 %v637
    %826 = vmatprep.subr.bf16.mxu0 0
    %827 = vmatpush1.bf16.msra.mxu0 %v636
    %828 = vmatprep.subr.bf16.mxu0 0
    %829 = vmatpush2.bf16.msra.mxu0 %v651
    %830 = vmatprep.subr.bf16.mxu0 0
    %831 = vmatpush2.bf16.msra.mxu0 %v650
    %832 = vmatprep.subr.bf16.mxu0 0
    %833 = vmatpush2.bf16.msra.mxu0 %v649
    %834 = vmatprep.subr.bf16.mxu0 0
    %835 = vmatpush2.bf16.msra.mxu0 %v648
    %836 = vmatprep.subr.bf16.mxu0 0
    %837 = vmatpush2.bf16.msra.mxu0 %v647
    %838 = vmatprep.subr.bf16.mxu0 0
    %839 = vmatpush2.bf16.msra.mxu0 %v646
    %840 = vmatprep.subr.bf16.mxu0 0
    %841 = vmatpush2.bf16.msra.mxu0 %v645
    %842 = vmatprep.subr.bf16.mxu0 0
    %843 = vmatpush2.bf16.msra.mxu0 %v644
    %844 = vmatprep.mubr.bf16.mxu0 %v263
    %845 = vmatmul.mubr.bf16.gmra.mxu0 %v262
    %v846 = vpop.f32.mrf.mxu0
    %v847 = vadd.f32 %v243, %v846
    %v848 = vpop.f32.mrf.mxu0
    %v849 = vpop.f32.mrf.mxu0
    %v850 = vpop.f32.mrf.mxu0
    %851 = vdwg.mxu0
    %852 = vmatprep.subr.bf16.mxu0 0
    %853 = vmatpush1.bf16.msra.mxu0 %v659
    %854 = vmatprep.subr.bf16.mxu0 0
    %855 = vmatpush1.bf16.msra.mxu0 %v658
    %856 = vmatprep.subr.bf16.mxu0 0
    %857 = vmatpush1.bf16.msra.mxu0 %v657
    %858 = vmatprep.subr.bf16.mxu0 0
    %859 = vmatpush1.bf16.msra.mxu0 %v656
    %860 = vmatprep.subr.bf16.mxu0 0
    %861 = vmatpush1.bf16.msra.mxu0 %v655
    %862 = vmatprep.subr.bf16.mxu0 0
    %863 = vmatpush1.bf16.msra.mxu0 %v654
    %864 = vmatprep.subr.bf16.mxu0 0
    %865 = vmatpush1.bf16.msra.mxu0 %v653
    %866 = vmatprep.subr.bf16.mxu0 0
    %867 = vmatpush1.bf16.msra.mxu0 %v652
    %868 = vmatprep.subr.bf16.mxu0 0
    %869 = vmatpush2.bf16.msra.mxu0 %v667
    %870 = vmatprep.subr.bf16.mxu0 0
    %871 = vmatpush2.bf16.msra.mxu0 %v666
    %872 = vmatprep.subr.bf16.mxu0 0
    %873 = vmatpush2.bf16.msra.mxu0 %v665
    %874 = vmatprep.subr.bf16.mxu0 0
    %875 = vmatpush2.bf16.msra.mxu0 %v664
    %876 = vmatprep.subr.bf16.mxu0 0
    %877 = vmatpush2.bf16.msra.mxu0 %v663
    %878 = vmatprep.subr.bf16.mxu0 0
    %879 = vmatpush2.bf16.msra.mxu0 %v662
    %880 = vmatprep.subr.bf16.mxu0 0
    %881 = vmatpush2.bf16.msra.mxu0 %v661
    %882 = vmatprep.subr.bf16.mxu0 0
    %883 = vmatpush2.bf16.msra.mxu0 %v660
    %884 = vmatprep.mubr.bf16.mxu0 %v265
    %885 = vmatmul.mubr.bf16.gmra.mxu0 %v264
    %v886 = vpop.f32.mrf.mxu0
    %v887 = vadd.f32 %v847, %v886
    %v888 = vpop.f32.mrf.mxu0
    %v889 = vpop.f32.mrf.mxu0
    %v890 = vpop.f32.mrf.mxu0
    %891 = vdwg.mxu0
    %892 = vmatprep.subr.bf16.mxu0 0
    %893 = vmatpush1.bf16.msra.mxu0 %v675
    %894 = vmatprep.subr.bf16.mxu0 0
    %895 = vmatpush1.bf16.msra.mxu0 %v674
    %896 = vmatprep.subr.bf16.mxu0 0
    %897 = vmatpush1.bf16.msra.mxu0 %v673
    %898 = vmatprep.subr.bf16.mxu0 0
    %899 = vmatpush1.bf16.msra.mxu0 %v672
    %900 = vmatprep.subr.bf16.mxu0 0
    %901 = vmatpush1.bf16.msra.mxu0 %v671
    %902 = vmatprep.subr.bf16.mxu0 0
    %903 = vmatpush1.bf16.msra.mxu0 %v670
    %904 = vmatprep.subr.bf16.mxu0 0
    %905 = vmatpush1.bf16.msra.mxu0 %v669
    %906 = vmatprep.subr.bf16.mxu0 0
    %907 = vmatpush1.bf16.msra.mxu0 %v668
    %908 = vmatprep.subr.bf16.mxu0 0
    %909 = vmatpush2.bf16.msra.mxu0 %v683
    %910 = vmatprep.subr.bf16.mxu0 0
    %911 = vmatpush2.bf16.msra.mxu0 %v682
    %912 = vmatprep.subr.bf16.mxu0 0
    %913 = vmatpush2.bf16.msra.mxu0 %v681
    %914 = vmatprep.subr.bf16.mxu0 0
    %915 = vmatpush2.bf16.msra.mxu0 %v680
    %916 = vmatprep.subr.bf16.mxu0 0
    %917 = vmatpush2.bf16.msra.mxu0 %v679
    %918 = vmatprep.subr.bf16.mxu0 0
    %919 = vmatpush2.bf16.msra.mxu0 %v678
    %920 = vmatprep.subr.bf16.mxu0 0
    %921 = vmatpush2.bf16.msra.mxu0 %v677
    %922 = vmatprep.subr.bf16.mxu0 0
    %923 = vmatpush2.bf16.msra.mxu0 %v676
    %924 = vmatprep.mubr.bf16.mxu0 %v267
    %925 = vmatmul.mubr.bf16.gmra.mxu0 %v266
    %v926 = vpop.f32.mrf.mxu0
    %v927 = vadd.f32 %v887, %v926
    %v928 = vpop.f32.mrf.mxu0
    %v929 = vpop.f32.mrf.mxu0
    %v930 = vpop.f32.mrf.mxu0
    %931 = vdwg.mxu0
    %932 = vmatprep.subr.bf16.mxu0 0
    %933 = vmatpush1.bf16.msra.mxu0 %v691
    %934 = vmatprep.subr.bf16.mxu0 0
    %935 = vmatpush1.bf16.msra.mxu0 %v690
    %936 = vmatprep.subr.bf16.mxu0 0
    %937 = vmatpush1.bf16.msra.mxu0 %v689
    %938 = vmatprep.subr.bf16.mxu0 0
    %939 = vmatpush1.bf16.msra.mxu0 %v688
    %940 = vmatprep.subr.bf16.mxu0 0
    %941 = vmatpush1.bf16.msra.mxu0 %v687
    %942 = vmatprep.subr.bf16.mxu0 0
    %943 = vmatpush1.bf16.msra.mxu0 %v686
    %944 = vmatprep.subr.bf16.mxu0 0
    %945 = vmatpush1.bf16.msra.mxu0 %v685
    %946 = vmatprep.subr.bf16.mxu0 0
    %947 = vmatpush1.bf16.msra.mxu0 %v684
    %948 = vmatprep.subr.bf16.mxu0 0
    %949 = vmatpush2.bf16.msra.mxu0 %v699
    %950 = vmatprep.subr.bf16.mxu0 0
    %951 = vmatpush2.bf16.msra.mxu0 %v698
    %952 = vmatprep.subr.bf16.mxu0 0
    %953 = vmatpush2.bf16.msra.mxu0 %v697
    %954 = vmatprep.subr.bf16.mxu0 0
    %955 = vmatpush2.bf16.msra.mxu0 %v696
    %956 = vmatprep.subr.bf16.mxu0 0
    %957 = vmatpush2.bf16.msra.mxu0 %v695
    %958 = vmatprep.subr.bf16.mxu0 0
    %959 = vmatpush2.bf16.msra.mxu0 %v694
    %960 = vmatprep.subr.bf16.mxu0 0
    %961 = vmatpush2.bf16.msra.mxu0 %v693
    %962 = vmatprep.subr.bf16.mxu0 0
    %963 = vmatpush2.bf16.msra.mxu0 %v692
    %964 = vmatprep.mubr.bf16.mxu0 %v269
    %965 = vmatmul.mubr.bf16.gmra.mxu0 %v268
    %v966 = vpop.f32.mrf.mxu0
    %v967 = vadd.f32 %v927, %v966
    %v968 = vpop.f32.mrf.mxu0
    %v969 = vpop.f32.mrf.mxu0
    %v970 = vpop.f32.mrf.mxu0
    %971 = vdwg.mxu0
    %972 = vmatprep.subr.bf16.mxu0 0
    %973 = vmatpush1.bf16.msra.mxu0 %v707
    %974 = vmatprep.subr.bf16.mxu0 0
    %975 = vmatpush1.bf16.msra.mxu0 %v706
    %976 = vmatprep.subr.bf16.mxu0 0
    %977 = vmatpush1.bf16.msra.mxu0 %v705
    %978 = vmatprep.subr.bf16.mxu0 0
    %979 = vmatpush1.bf16.msra.mxu0 %v704
    %980 = vmatprep.subr.bf16.mxu0 0
    %981 = vmatpush1.bf16.msra.mxu0 %v703
    %982 = vmatprep.subr.bf16.mxu0 0
    %983 = vmatpush1.bf16.msra.mxu0 %v702
    %984 = vmatprep.subr.bf16.mxu0 0
    %985 = vmatpush1.bf16.msra.mxu0 %v701
    %986 = vmatprep.subr.bf16.mxu0 0
    %987 = vmatpush1.bf16.msra.mxu0 %v700
    %988 = vmatprep.subr.bf16.mxu0 0
    %989 = vmatpush2.bf16.msra.mxu0 %v715
    %990 = vmatprep.subr.bf16.mxu0 0
    %991 = vmatpush2.bf16.msra.mxu0 %v714
    %992 = vmatprep.subr.bf16.mxu0 0
    %993 = vmatpush2.bf16.msra.mxu0 %v713
    %994 = vmatprep.subr.bf16.mxu0 0
    %995 = vmatpush2.bf16.msra.mxu0 %v712
    %996 = vmatprep.subr.bf16.mxu0 0
    %997 = vmatpush2.bf16.msra.mxu0 %v711
    %998 = vmatprep.subr.bf16.mxu0 0
    %999 = vmatpush2.bf16.msra.mxu0 %v710
    %1000 = vmatprep.subr.bf16.mxu0 0
    %1001 = vmatpush2.bf16.msra.mxu0 %v709
    %1002 = vmatprep.subr.bf16.mxu0 0
    %1003 = vmatpush2.bf16.msra.mxu0 %v708
    %1004 = vmatprep.mubr.bf16.mxu0 %v271
    %1005 = vmatmul.mubr.bf16.gmra.mxu0 %v270
    %v1006 = vpop.f32.mrf.mxu0
    %v1007 = vadd.f32 %v967, %v1006
    %v1008 = vpop.f32.mrf.mxu0
    %v1009 = vpop.f32.mrf.mxu0
    %v1010 = vpop.f32.mrf.mxu0
    %1011 = vdwg.mxu0
    %1012 = vmatprep.subr.bf16.mxu0 0
    %1013 = vmatpush1.bf16.msra.mxu0 %v723
    %1014 = vmatprep.subr.bf16.mxu0 0
    %1015 = vmatpush1.bf16.msra.mxu0 %v722
    %1016 = vmatprep.subr.bf16.mxu0 0
    %1017 = vmatpush1.bf16.msra.mxu0 %v721
    %1018 = vmatprep.subr.bf16.mxu0 0
    %1019 = vmatpush1.bf16.msra.mxu0 %v720
    %1020 = vmatprep.subr.bf16.mxu0 0
    %1021 = vmatpush1.bf16.msra.mxu0 %v719
    %1022 = vmatprep.subr.bf16.mxu0 0
    %1023 = vmatpush1.bf16.msra.mxu0 %v718
    %1024 = vmatprep.subr.bf16.mxu0 0
    %1025 = vmatpush1.bf16.msra.mxu0 %v717
    %1026 = vmatprep.subr.bf16.mxu0 0
    %1027 = vmatpush1.bf16.msra.mxu0 %v716
    %1028 = vmatprep.subr.bf16.mxu0 0
    %1029 = vmatpush2.bf16.msra.mxu0 0
    %1030 = vmatprep.subr.bf16.mxu0 0
    %1031 = vmatpush2.bf16.msra.mxu0 0
    %1032 = vmatprep.subr.bf16.mxu0 0
    %1033 = vmatpush2.bf16.msra.mxu0 0
    %1034 = vmatprep.subr.bf16.mxu0 0
    %1035 = vmatpush2.bf16.msra.mxu0 0
    %1036 = vmatprep.subr.bf16.mxu0 0
    %1037 = vmatpush2.bf16.msra.mxu0 0
    %1038 = vmatprep.subr.bf16.mxu0 0
    %1039 = vmatpush2.bf16.msra.mxu0 0
    %1040 = vmatprep.subr.bf16.mxu0 0
    %1041 = vmatpush2.bf16.msra.mxu0 0
    %1042 = vmatprep.subr.bf16.mxu0 0
    %1043 = vmatpush2.bf16.msra.mxu0 0
    %1044 = vmatprep.mubr.bf16.mxu0 0
    %1045 = vmatmul.mubr.bf16.gmra.mxu0 %v272
    %v1046 = vpop.f32.mrf.mxu0
    %v1047 = vadd.f32 %v1007, %v1046
    %v1048 = vpop.f32.mrf.mxu0
    %v1049 = vpop.f32.mrf.mxu0
    %v1050 = vpop.f32.mrf.mxu0
    %1051 = vdwg.mxu0
    %v1052 = vmax.f32 %v1047, 0.0
    %1053 = vadd.xlane.f32.xlu0 %v1052
    %v1054 = vpop.xlane.xlu0 %1053
    %v1055 = vrcp.pop 128.0
    %v1056 = vmul.f32 %v1054, %v1055
    %v1057 = vsub.f32 %v1052, %v1056
    %v1058 = vmul.f32 %v1057, %v1057
    %1059 = vadd.xlane.f32.xlu0 %v1058
    %v1060 = vpop.xlane.xlu0 %1059
    %v1061 = vmul.f32 %v1060, %v1055
    %v1062 = vadd.f32 %v1061, 1e-05
    %v1063 = vrsqrt.pop %v1062
    %v1064 = vmul.f32 %v1057, %v1063
    %v1065 = vld [vmem:[#allocation4] sm:$0x1]
    %v1067 = vlaneseq
    %v1068 = vshrl.u32 %v1067, 7
    %v1069 = vsub.s32 0, %v1068
    %v1070 = vrot.slane %v1065, %v1069
    %v1072 = vmul.f32 %v1064, %v1070
    %v1073 = vld [vmem:[#allocation6] sm:$0x1]
    %v1075 = vlaneseq
    %v1076 = vshrl.u32 %v1075, 7
    %v1077 = vsub.s32 0, %v1076
    %v1078 = vrot.slane %v1073, %v1077
    %v1080 = vadd.f32 %v1072, %v1078
    %1081 = vst [vmem:[%s5] sm:$0xff] %v1080
    // Predicated region
    $region34: #{eff_trm_forward.7} parent=1 // pred_check
      _
    $region35: #{eff_trm_forward.7} parent=1 // pred_check_branch
      %1083 = sbr.rel (0) target = $region37
    $region36: #{eff_trm_forward.7} parent=1 // pred_region
      _
    $region37: #{eff_trm_forward.7} parent=1 // pred_fallthru
      _
    // Predicated region
    $region38: #{eff_trm_forward.7} parent=1 // pred_check
      _
    $region39: #{eff_trm_forward.7} parent=1 // pred_check_branch
      %1085 = sbr.rel (0) target = $region41
    $region40: #{eff_trm_forward.7} parent=1 // pred_region
      _
    $region41: #{eff_trm_forward.7} parent=1 // pred_fallthru
      _
    %1086 = vsyncpa [#allocation3], 1
    %1087 = vsyncpa [#allocation5], 1

// kernel: eff_trm_forward.9
$region0: #{eff_trm_forward.9}
  #allocation0 [shape = 'u32[]', space=smem, size = 0x4, offset = 0x4, fixed_abs, tag = 'smem constant byte address 0x4 - core index']
  #allocation1 [shape = 'u32[144,128]{1,0:T(1,128)}', space=vmem, size = 0x12000, scoped, tag = 'internal scratch']
  %s0 = inlined_call_operand.vmem [shape: bf16[16,128], index: 0, kind: input, shape index: {}]
  %s1 = inlined_call_operand.vmem [shape: bf16[128,256], index: 1, kind: input, shape index: {}]
  %s2 = inlined_call_operand.hbm [shape: f32[1,256], index: 2, kind: input, shape index: {}]
  %s3 = inlined_call_operand.vmem [shape: f32[16,256], index: 3, kind: output, shape index: {}]
  %s4 = sld [smem:[#allocation0]]
  $region26: #{eff_trm_forward.9} parent=0
    _
  %s6 = ssub.s32 1, %s4
  %s7 = scalar_select 0, %s6, %s4
  $region1: #{eff_trm_forward.9} parent=0
    #allocation2 [shape = 'u8[1024]{0}', space=vmem, size = 0x400, scoped, tag = 'input window, operand 2, single buffered']
    #allocation3 [shape = 's32[1]{0}', space=sflag, size = 0x4, scoped, tag = 'scoped memory for eff_trm_forward.9']
    %8 = vsyncpa [#allocation3], 0
    // Predicated region
    $region2: #{eff_trm_forward.9} parent=1 // pred_check
      _
    $region3: #{eff_trm_forward.9} parent=1 // pred_check_branch
      %10 = sbr.rel (0) target = $region5
    $region4: #{eff_trm_forward.9} parent=1 // pred_region
      _
    $region5: #{eff_trm_forward.9} parent=1 // pred_fallthru
      _
    // Predicated region
    $region6: #{eff_trm_forward.9} parent=1 // pred_check
      _
    $region7: #{eff_trm_forward.9} parent=1 // pred_check_branch
      %12 = sbr.rel (0) target = $region9
    $region8: #{eff_trm_forward.9} parent=1 // pred_region
      _
    $region9: #{eff_trm_forward.9} parent=1 // pred_fallthru
      _
    // Predicated region
    $region10: #{eff_trm_forward.9} parent=1 // pred_check
      _
    $region11: #{eff_trm_forward.9} parent=1 // pred_check_branch
      %14 = sbr.rel (0) target = $region13
    $region12: #{eff_trm_forward.9} parent=1 // pred_region
      %s16 = ssub.s32 32, 32
      %17 = vsyncadd [#allocation3], %s16
      %s19 = sshll.u32 [#allocation2], 4
      %s20 = int_to_ptr.vmem [resolvable:$true] %s19
      %22 = dma.hbm_to_vmem [thread:$0]  %s2, 32, %s20, [#allocation3]
    $region13: #{eff_trm_forward.9} parent=1 // pred_fallthru
      _
    // Predicated region
    $region14: #{eff_trm_forward.9} parent=1 // pred_check
      _
    $region15: #{eff_trm_forward.9} parent=1 // pred_check_branch
      %24 = sbr.rel (0) target = $region17
    $region16: #{eff_trm_forward.9} parent=1 // pred_region
      %25 = dma.done [#allocation3], 32
    $region17: #{eff_trm_forward.9} parent=1 // pred_fallthru
      _
    %v27 = vld [vmem:[%s0] sm:$0xf]
    %v28 = vld [vmem:[%s0 + $0x4] sm:$0xf]
    %v29 = vld [vmem:[%s1] sm:$0xff]
    %v30 = vld [vmem:[%s1 + $0x8] sm:$0xff]
    %v31 = vld [vmem:[%s1 + $0x10] sm:$0xff]
    %v32 = vld [vmem:[%s1 + $0x18] sm:$0xff]
    %v33 = vld [vmem:[%s1 + $0x20] sm:$0xff]
    %v34 = vld [vmem:[%s1 + $0x28] sm:$0xff]
    %v35 = vld [vmem:[%s1 + $0x30] sm:$0xff]
    %v36 = vld [vmem:[%s1 + $0x38] sm:$0xff]
    %v37 = vld [vmem:[%s1 + $0x40] sm:$0xff]
    %v38 = vld [vmem:[%s1 + $0x48] sm:$0xff]
    %v39 = vld [vmem:[%s1 + $0x50] sm:$0xff]
    %v40 = vld [vmem:[%s1 + $0x58] sm:$0xff]
    %v41 = vld [vmem:[%s1 + $0x60] sm:$0xff]
    %v42 = vld [vmem:[%s1 + $0x68] sm:$0xff]
    %v43 = vld [vmem:[%s1 + $0x70] sm:$0xff]
    %v44 = vld [vmem:[%s1 + $0x78] sm:$0xff]
    %v45 = vld [vmem:[#allocation2] sm:$0x3]
    %v47 = vlaneseq
    %v48 = vshrl.u32 %v47, 7
    %v49 = vsub.s32 0, %v48
    %v50 = vrot.slane %v45, %v49
    %v51 = vlaneseq
    %v52 = vshrl.u32 %v51, 7
    %v53 = vsub.s32 1, %v52
    %v54 = vrot.slane %v45, %v53
    %v59 = vunpack.c.l.b16 %v27
    %v60 = vunpack.c.l.b16 %v28
    %v61 = vpack.c.b16 %v60, %v59
    %v79 = vunpack.c.l.b16 %v29
    %v80 = vunpack.c.h.b16 %v29
    %v81 = vunpack.c.l.b16 %v30
    %v82 = vunpack.c.h.b16 %v30
    %v83 = vunpack.c.l.b16 %v31
    %v84 = vunpack.c.h.b16 %v31
    %v85 = vunpack.c.l.b16 %v32
    %v86 = vunpack.c.h.b16 %v32
    %v87 = vunpack.c.l.b16 %v33
    %v88 = vunpack.c.h.b16 %v33
    %v89 = vunpack.c.l.b16 %v34
    %v90 = vunpack.c.h.b16 %v34
    %v91 = vunpack.c.l.b16 %v35
    %v92 = vunpack.c.h.b16 %v35
    %v93 = vunpack.c.l.b16 %v36
    %v94 = vunpack.c.h.b16 %v36
    %v95 = vunpack.c.l.b16 %v37
    %v96 = vunpack.c.h.b16 %v37
    %v97 = vunpack.c.l.b16 %v38
    %v98 = vunpack.c.h.b16 %v38
    %v99 = vunpack.c.l.b16 %v39
    %v100 = vunpack.c.h.b16 %v39
    %v101 = vunpack.c.l.b16 %v40
    %v102 = vunpack.c.h.b16 %v40
    %v103 = vunpack.c.l.b16 %v41
    %v104 = vunpack.c.h.b16 %v41
    %v105 = vunpack.c.l.b16 %v42
    %v106 = vunpack.c.h.b16 %v42
    %v107 = vunpack.c.l.b16 %v43
    %v108 = vunpack.c.h.b16 %v43
    %v109 = vunpack.c.l.b16 %v44
    %v110 = vunpack.c.h.b16 %v44
    %v111 = vpack.c.b16 %v81, %v79
    %v112 = vpack.c.b16 %v82, %v80
    %v113 = vpack.c.b16 %v85, %v83
    %v114 = vpack.c.b16 %v86, %v84
    %v115 = vpack.c.b16 %v89, %v87
    %v116 = vpack.c.b16 %v90, %v88
    %v117 = vpack.c.b16 %v93, %v91
    %v118 = vpack.c.b16 %v94, %v92
    %v119 = vpack.c.b16 %v97, %v95
    %v120 = vpack.c.b16 %v98, %v96
    %v121 = vpack.c.b16 %v101, %v99
    %v122 = vpack.c.b16 %v102, %v100
    %v123 = vpack.c.b16 %v105, %v103
    %v124 = vpack.c.b16 %v106, %v104
    %v125 = vpack.c.b16 %v109, %v107
    %v126 = vpack.c.b16 %v110, %v108
    %143 = vmatprep.subr.bf16.mxu0 %v126
    %144 = vmatpush1.bf16.msra.mxu0 %v125
    %145 = vmatprep.subr.bf16.mxu0 %v124
    %146 = vmatpush1.bf16.msra.mxu0 %v123
    %147 = vmatprep.subr.bf16.mxu0 %v122
    %148 = vmatpush1.bf16.msra.mxu0 %v121
    %149 = vmatprep.subr.bf16.mxu0 %v120
    %150 = vmatpush1.bf16.msra.mxu0 %v119
    %151 = vmatprep.subr.bf16.mxu0 %v118
    %152 = vmatpush1.bf16.msra.mxu0 %v117
    %153 = vmatprep.subr.bf16.mxu0 %v116
    %154 = vmatpush1.bf16.msra.mxu0 %v115
    %155 = vmatprep.subr.bf16.mxu0 %v114
    %156 = vmatpush1.bf16.msra.mxu0 %v113
    %157 = vmatprep.subr.bf16.mxu0 %v112
    %158 = vmatpush1.bf16.msra.mxu0 %v111
    %159 = vmatprep.subr.bf16.mxu0 0
    %160 = vmatpush2.bf16.msra.mxu0 0
    %161 = vmatprep.subr.bf16.mxu0 0
    %162 = vmatpush2.bf16.msra.mxu0 0
    %163 = vmatprep.subr.bf16.mxu0 0
    %164 = vmatpush2.bf16.msra.mxu0 0
    %165 = vmatprep.subr.bf16.mxu0 0
    %166 = vmatpush2.bf16.msra.mxu0 0
    %167 = vmatprep.subr.bf16.mxu0 0
    %168 = vmatpush2.bf16.msra.mxu0 0
    %169 = vmatprep.subr.bf16.mxu0 0
    %170 = vmatpush2.bf16.msra.mxu0 0
    %171 = vmatprep.subr.bf16.mxu0 0
    %172 = vmatpush2.bf16.msra.mxu0 0
    %173 = vmatprep.subr.bf16.mxu0 0
    %174 = vmatpush2.bf16.msra.mxu0 0
    %175 = vmatprep.mubr.bf16.mxu0 0
    %176 = vmatmul.mubr.bf16.gmra.mxu0 %v61
    %v177 = vpop.f32.mrf.mxu0
    %v178 = vadd.f32 %v50, %v177
    %v179 = vpop.f32.mrf.mxu0
    %v180 = vadd.f32 %v54, %v179
    %v181 = vpop.f32.mrf.mxu0
    %v182 = vadd.f32 %v50, %v181
    %v183 = vpop.f32.mrf.mxu0
    %v184 = vadd.f32 %v54, %v183
    %185 = vdwg.mxu0
    %186 = vst [vmem:[%s3] sm:$0xff] %v178
    %187 = vst [vmem:[%s3 + $0x8] sm:$0xff] %v180
    %188 = vst [vmem:[%s3 + $0x10] sm:$0xff] %v182
    %189 = vst [vmem:[%s3 + $0x18] sm:$0xff] %v184
    // Predicated region
    $region18: #{eff_trm_forward.9} parent=1 // pred_check
      _
    $region19: #{eff_trm_forward.9} parent=1 // pred_check_branch
      %191 = sbr.rel (0) target = $region21
    $region20: #{eff_trm_forward.9} parent=1 // pred_region
      _
    $region21: #{eff_trm_forward.9} parent=1 // pred_fallthru
      _
    // Predicated region
    $region22: #{eff_trm_forward.9} parent=1 // pred_check
      _
    $region23: #{eff_trm_forward.9} parent=1 // pred_check_branch
      %193 = sbr.rel (0) target = $region25
    $region24: #{eff_trm_forward.9} parent=1 // pred_region
      _
    $region25: #{eff_trm_forward.9} parent=1 // pred_fallthru
      _
    %194 = vsyncpa [#allocation3], 1

// kernel: closed_call.38
$region0: #{closed_call.38}
  #allocation0 [shape = 'u32[]', space=smem, size = 0x4, offset = 0x4, fixed_abs, tag = 'smem constant byte address 0x4 - core index']
  #allocation1 [shape = 'u32[144,128]{1,0:T(1,128)}', space=vmem, size = 0x12000, scoped, tag = 'internal scratch']
  %s0 = inlined_call_operand.vmem [shape: bf16[16,128], index: 0, kind: input, shape index: {}]
  %s1 = inlined_call_operand.vmem [shape: bf16[128,128], index: 1, kind: input, shape index: {}]
  %s2 = inlined_call_operand.vmem [shape: f32[1,128], index: 2, kind: input, shape index: {}]
  %s3 = inlined_call_operand.vmem [shape: f32[16,128], index: 3, kind: output, shape index: {}]
  %s4 = sld [smem:[#allocation0]]
  $region22: #{closed_call.38} parent=0
    _
  %s6 = ssub.s32 1, %s4
  %s7 = scalar_select 0, %s6, %s4
  // Predicated region
  $region2: #{closed_call.38} parent=0 // pred_check
    _
  $region3: #{closed_call.38} parent=0 // pred_check_branch
    %9 = sbr.rel (0) target = $region5
  $region4: #{closed_call.38} parent=0 // pred_region
    _
  $region5: #{closed_call.38} parent=0 // pred_fallthru
    _
  // Predicated region
  $region6: #{closed_call.38} parent=0 // pred_check
    _
  $region7: #{closed_call.38} parent=0 // pred_check_branch
    %11 = sbr.rel (0) target = $region9
  $region8: #{closed_call.38} parent=0 // pred_region
    _
  $region9: #{closed_call.38} parent=0 // pred_fallthru
    _
  // Predicated region
  $region10: #{closed_call.38} parent=0 // pred_check
    _
  $region11: #{closed_call.38} parent=0 // pred_check_branch
    %13 = sbr.rel (0) target = $region13
  $region12: #{closed_call.38} parent=0 // pred_region
    _
  $region13: #{closed_call.38} parent=0 // pred_fallthru
    _
  %v15 = vld [vmem:[%s0] sm:$0xf]
  %v16 = vld [vmem:[%s0 + $0x4] sm:$0xf]
  %v17 = vld [vmem:[%s1] sm:$0xf]
  %v18 = vld [vmem:[%s1 + $0x4] sm:$0xf]
  %v19 = vld [vmem:[%s1 + $0x8] sm:$0xf]
  %v20 = vld [vmem:[%s1 + $0xc] sm:$0xf]
  %v21 = vld [vmem:[%s1 + $0x10] sm:$0xf]
  %v22 = vld [vmem:[%s1 + $0x14] sm:$0xf]
  %v23 = vld [vmem:[%s1 + $0x18] sm:$0xf]
  %v24 = vld [vmem:[%s1 + $0x1c] sm:$0xf]
  %v25 = vld [vmem:[%s1 + $0x20] sm:$0xf]
  %v26 = vld [vmem:[%s1 + $0x24] sm:$0xf]
  %v27 = vld [vmem:[%s1 + $0x28] sm:$0xf]
  %v28 = vld [vmem:[%s1 + $0x2c] sm:$0xf]
  %v29 = vld [vmem:[%s1 + $0x30] sm:$0xf]
  %v30 = vld [vmem:[%s1 + $0x34] sm:$0xf]
  %v31 = vld [vmem:[%s1 + $0x38] sm:$0xf]
  %v32 = vld [vmem:[%s1 + $0x3c] sm:$0xf]
  %v33 = vld [vmem:[%s2] sm:$0x1]
  %v35 = vlaneseq
  %v36 = vshrl.u32 %v35, 7
  %v37 = vsub.s32 0, %v36
  %v38 = vrot.slane %v33, %v37
  %v42 = vunpack.c.l.b16 %v15
  %v43 = vunpack.c.l.b16 %v16
  %v44 = vpack.c.b16 %v43, %v42
  %v62 = vunpack.c.l.b16 %v17
  %v63 = vunpack.c.l.b16 %v18
  %v64 = vunpack.c.l.b16 %v19
  %v65 = vunpack.c.l.b16 %v20
  %v66 = vunpack.c.l.b16 %v21
  %v67 = vunpack.c.l.b16 %v22
  %v68 = vunpack.c.l.b16 %v23
  %v69 = vunpack.c.l.b16 %v24
  %v70 = vunpack.c.l.b16 %v25
  %v71 = vunpack.c.l.b16 %v26
  %v72 = vunpack.c.l.b16 %v27
  %v73 = vunpack.c.l.b16 %v28
  %v74 = vunpack.c.l.b16 %v29
  %v75 = vunpack.c.l.b16 %v30
  %v76 = vunpack.c.l.b16 %v31
  %v77 = vunpack.c.l.b16 %v32
  %v78 = vpack.c.b16 %v63, %v62
  %v79 = vpack.c.b16 %v65, %v64
  %v80 = vpack.c.b16 %v67, %v66
  %v81 = vpack.c.b16 %v69, %v68
  %v82 = vpack.c.b16 %v71, %v70
  %v83 = vpack.c.b16 %v73, %v72
  %v84 = vpack.c.b16 %v75, %v74
  %v85 = vpack.c.b16 %v77, %v76
  %94 = vmatprep.subr.bf16.mxu0 0
  %95 = vmatpush1.bf16.msra.mxu0 %v85
  %96 = vmatprep.subr.bf16.mxu0 0
  %97 = vmatpush1.bf16.msra.mxu0 %v84
  %98 = vmatprep.subr.bf16.mxu0 0
  %99 = vmatpush1.bf16.msra.mxu0 %v83
  %100 = vmatprep.subr.bf16.mxu0 0
  %101 = vmatpush1.bf16.msra.mxu0 %v82
  %102 = vmatprep.subr.bf16.mxu0 0
  %103 = vmatpush1.bf16.msra.mxu0 %v81
  %104 = vmatprep.subr.bf16.mxu0 0
  %105 = vmatpush1.bf16.msra.mxu0 %v80
  %106 = vmatprep.subr.bf16.mxu0 0
  %107 = vmatpush1.bf16.msra.mxu0 %v79
  %108 = vmatprep.subr.bf16.mxu0 0
  %109 = vmatpush1.bf16.msra.mxu0 %v78
  %110 = vmatprep.subr.bf16.mxu0 0
  %111 = vmatpush2.bf16.msra.mxu0 0
  %112 = vmatprep.subr.bf16.mxu0 0
  %113 = vmatpush2.bf16.msra.mxu0 0
  %114 = vmatprep.subr.bf16.mxu0 0
  %115 = vmatpush2.bf16.msra.mxu0 0
  %116 = vmatprep.subr.bf16.mxu0 0
  %117 = vmatpush2.bf16.msra.mxu0 0
  %118 = vmatprep.subr.bf16.mxu0 0
  %119 = vmatpush2.bf16.msra.mxu0 0
  %120 = vmatprep.subr.bf16.mxu0 0
  %121 = vmatpush2.bf16.msra.mxu0 0
  %122 = vmatprep.subr.bf16.mxu0 0
  %123 = vmatpush2.bf16.msra.mxu0 0
  %124 = vmatprep.subr.bf16.mxu0 0
  %125 = vmatpush2.bf16.msra.mxu0 0
  %126 = vmatprep.mubr.bf16.mxu0 0
  %127 = vmatmul.mubr.bf16.gmra.mxu0 %v44
  %v128 = vpop.f32.mrf.mxu0
  %v129 = vadd.f32 %v38, %v128
  %v130 = vpop.f32.mrf.mxu0
  %v131 = vpop.f32.mrf.mxu0
  %v132 = vadd.f32 %v38, %v131
  %v133 = vpop.f32.mrf.mxu0
  %134 = vdwg.mxu0
  %135 = vst [vmem:[%s3] sm:$0xff] %v129
  %136 = vst [vmem:[%s3 + $0x8] sm:$0xff] %v132
  // Predicated region
  $region14: #{closed_call.38} parent=0 // pred_check
    _
  $region15: #{closed_call.38} parent=0 // pred_check_branch
    %138 = sbr.rel (0) target = $region17
  $region16: #{closed_call.38} parent=0 // pred_region
    _
  $region17: #{closed_call.38} parent=0 // pred_fallthru
    _
  // Predicated region
  $region18: #{closed_call.38} parent=0 // pred_check
    _
  $region19: #{closed_call.38} parent=0 // pred_check_branch
    %140 = sbr.rel (0) target = $region21
  $region20: #{closed_call.38} parent=0 // pred_region
    _
  $region21: #{closed_call.38} parent=0 // pred_fallthru
    _

// kernel: closed_call.36
$region0: #{closed_call.36}
  #allocation0 [shape = 'u32[]', space=smem, size = 0x4, offset = 0x4, fixed_abs, tag = 'smem constant byte address 0x4 - core index']
  #allocation1 [shape = 'u32[144,128]{1,0:T(1,128)}', space=vmem, size = 0x12000, scoped, tag = 'internal scratch']
  %s0 = inlined_call_operand.vmem [shape: f32[16,128], index: 0, kind: input, shape index: {}]
  %s1 = inlined_call_operand.vmem [shape: bf16[16,128], index: 1, kind: input, shape index: {}]
  %s2 = inlined_call_operand.vmem [shape: bf16[16,128], index: 2, kind: input, shape index: {}]
  %s3 = inlined_call_operand.vmem [shape: f32[16,8], index: 3, kind: input, shape index: {}]
  %s4 = inlined_call_operand.vmem [shape: f32[16,8], index: 4, kind: input, shape index: {}]
  %s5 = inlined_call_operand.vmem [shape: bf16[128,384], index: 5, kind: input, shape index: {}]
  %s6 = inlined_call_operand.vmem [shape: f32[1,384], index: 6, kind: input, shape index: {}]
  %s7 = inlined_call_operand.vmem [shape: bf16[128,128], index: 7, kind: input, shape index: {}]
  %s8 = inlined_call_operand.vmem [shape: f32[1,128], index: 8, kind: input, shape index: {}]
  %s9 = inlined_call_operand.vmem [shape: f32[1,128], index: 9, kind: input, shape index: {}]
  %s10 = inlined_call_operand.vmem [shape: f32[1,128], index: 10, kind: input, shape index: {}]
  %s11 = inlined_call_operand.vmem [shape: bf16[128,128], index: 11, kind: input, shape index: {}]
  %s12 = inlined_call_operand.vmem [shape: f32[1,128], index: 12, kind: input, shape index: {}]
  %s13 = inlined_call_operand.vmem [shape: bf16[128,128], index: 13, kind: input, shape index: {}]
  %s14 = inlined_call_operand.vmem [shape: f32[1,128], index: 14, kind: input, shape index: {}]
  %s15 = inlined_call_operand.vmem [shape: f32[1,128], index: 15, kind: input, shape index: {}]
  %s16 = inlined_call_operand.vmem [shape: f32[1,128], index: 16, kind: input, shape index: {}]
  %s17 = inlined_call_operand.vmem [shape: bf16[128,512], index: 17, kind: input, shape index: {}]
  %s18 = inlined_call_operand.vmem [shape: f32[1,512], index: 18, kind: input, shape index: {}]
  %s19 = inlined_call_operand.vmem [shape: bf16[512,128], index: 19, kind: input, shape index: {}]
  %s20 = inlined_call_operand.vmem [shape: f32[1,128], index: 20, kind: input, shape index: {}]
  %s21 = inlined_call_operand.vmem [shape: f32[1,128], index: 21, kind: input, shape index: {}]
  %s22 = inlined_call_operand.vmem [shape: f32[1,128], index: 22, kind: input, shape index: {}]
  %s23 = inlined_call_operand.vmem [shape: f32[16,128], index: 23, kind: output, shape index: {}]
  %s24 = sld [smem:[#allocation0]]
  $region102: #{closed_call.36} parent=0
    _
  %s26 = ssub.s32 1, %s24
  %s27 = scalar_select 0, %s26, %s24
  // Predicated region
  $region2: #{closed_call.36} parent=0 // pred_check
    _
  $region3: #{closed_call.36} parent=0 // pred_check_branch
    %29 = sbr.rel (0) target = $region5
  $region4: #{closed_call.36} parent=0 // pred_region
    _
  $region5: #{closed_call.36} parent=0 // pred_fallthru
    _
  // Predicated region
  $region6: #{closed_call.36} parent=0 // pred_check
    _
  $region7: #{closed_call.36} parent=0 // pred_check_branch
    %31 = sbr.rel (0) target = $region9
  $region8: #{closed_call.36} parent=0 // pred_region
    _
  $region9: #{closed_call.36} parent=0 // pred_fallthru
    _
  // Predicated region
  $region10: #{closed_call.36} parent=0 // pred_check
    _
  $region11: #{closed_call.36} parent=0 // pred_check_branch
    %33 = sbr.rel (0) target = $region13
  $region12: #{closed_call.36} parent=0 // pred_region
    _
  $region13: #{closed_call.36} parent=0 // pred_fallthru
    _
  // Predicated region
  $region14: #{closed_call.36} parent=0 // pred_check
    _
  $region15: #{closed_call.36} parent=0 // pred_check_branch
    %35 = sbr.rel (0) target = $region17
  $region16: #{closed_call.36} parent=0 // pred_region
    _
  $region17: #{closed_call.36} parent=0 // pred_fallthru
    _
  // Predicated region
  $region18: #{closed_call.36} parent=0 // pred_check
    _
  $region19: #{closed_call.36} parent=0 // pred_check_branch
    %37 = sbr.rel (0) target = $region21
  $region20: #{closed_call.36} parent=0 // pred_region
    _
  $region21: #{closed_call.36} parent=0 // pred_fallthru
    _
  // Predicated region
  $region22: #{closed_call.36} parent=0 // pred_check
    _
  $region23: #{closed_call.36} parent=0 // pred_check_branch
    %39 = sbr.rel (0) target = $region25
  $region24: #{closed_call.36} parent=0 // pred_region
    _
  $region25: #{closed_call.36} parent=0 // pred_fallthru
    _
  // Predicated region
  $region26: #{closed_call.36} parent=0 // pred_check
    _
  $region27: #{closed_call.36} parent=0 // pred_check_branch
    %41 = sbr.rel (0) target = $region29
  $region28: #{closed_call.36} parent=0 // pred_region
    _
  $region29: #{closed_call.36} parent=0 // pred_fallthru
    _
  // Predicated region
  $region30: #{closed_call.36} parent=0 // pred_check
    _
  $region31: #{closed_call.36} parent=0 // pred_check_branch
    %43 = sbr.rel (0) target = $region33
  $region32: #{closed_call.36} parent=0 // pred_region
    _
  $region33: #{closed_call.36} parent=0 // pred_fallthru
    _
  // Predicated region
  $region34: #{closed_call.36} parent=0 // pred_check
    _
  $region35: #{closed_call.36} parent=0 // pred_check_branch
    %45 = sbr.rel (0) target = $region37
  $region36: #{closed_call.36} parent=0 // pred_region
    _
  $region37: #{closed_call.36} parent=0 // pred_fallthru
    _
  // Predicated region
  $region38: #{closed_call.36} parent=0 // pred_check
    _
  $region39: #{closed_call.36} parent=0 // pred_check_branch
    %47 = sbr.rel (0) target = $region41
  $region40: #{closed_call.36} parent=0 // pred_region
    _
  $region41: #{closed_call.36} parent=0 // pred_fallthru
    _
  // Predicated region
  $region42: #{closed_call.36} parent=0 // pred_check
    _
  $region43: #{closed_call.36} parent=0 // pred_check_branch
    %49 = sbr.rel (0) target = $region45
  $region44: #{closed_call.36} parent=0 // pred_region
    _
  $region45: #{closed_call.36} parent=0 // pred_fallthru
    _
  // Predicated region
  $region46: #{closed_call.36} parent=0 // pred_check
    _
  $region47: #{closed_call.36} parent=0 // pred_check_branch
    %51 = sbr.rel (0) target = $region49
  $region48: #{closed_call.36} parent=0 // pred_region
    _
  $region49: #{closed_call.36} parent=0 // pred_fallthru
    _
  // Predicated region
  $region50: #{closed_call.36} parent=0 // pred_check
    _
  $region51: #{closed_call.36} parent=0 // pred_check_branch
    %53 = sbr.rel (0) target = $region53
  $region52: #{closed_call.36} parent=0 // pred_region
    _
  $region53: #{closed_call.36} parent=0 // pred_fallthru
    _
  // Predicated region
  $region54: #{closed_call.36} parent=0 // pred_check
    _
  $region55: #{closed_call.36} parent=0 // pred_check_branch
    %55 = sbr.rel (0) target = $region57
  $region56: #{closed_call.36} parent=0 // pred_region
    _
  $region57: #{closed_call.36} parent=0 // pred_fallthru
    _
  // Predicated region
  $region58: #{closed_call.36} parent=0 // pred_check
    _
  $region59: #{closed_call.36} parent=0 // pred_check_branch
    %57 = sbr.rel (0) target = $region61
  $region60: #{closed_call.36} parent=0 // pred_region
    _
  $region61: #{closed_call.36} parent=0 // pred_fallthru
    _
  // Predicated region
  $region62: #{closed_call.36} parent=0 // pred_check
    _
  $region63: #{closed_call.36} parent=0 // pred_check_branch
    %59 = sbr.rel (0) target = $region65
  $region64: #{closed_call.36} parent=0 // pred_region
    _
  $region65: #{closed_call.36} parent=0 // pred_fallthru
    _
  // Predicated region
  $region66: #{closed_call.36} parent=0 // pred_check
    _
  $region67: #{closed_call.36} parent=0 // pred_check_branch
    %61 = sbr.rel (0) target = $region69
  $region68: #{closed_call.36} parent=0 // pred_region
    _
  $region69: #{closed_call.36} parent=0 // pred_fallthru
    _
  // Predicated region
  $region70: #{closed_call.36} parent=0 // pred_check
    _
  $region71: #{closed_call.36} parent=0 // pred_check_branch
    %63 = sbr.rel (0) target = $region73
  $region72: #{closed_call.36} parent=0 // pred_region
    _
  $region73: #{closed_call.36} parent=0 // pred_fallthru
    _
  // Predicated region
  $region74: #{closed_call.36} parent=0 // pred_check
    _
  $region75: #{closed_call.36} parent=0 // pred_check_branch
    %65 = sbr.rel (0) target = $region77
  $region76: #{closed_call.36} parent=0 // pred_region
    _
  $region77: #{closed_call.36} parent=0 // pred_fallthru
    _
  // Predicated region
  $region78: #{closed_call.36} parent=0 // pred_check
    _
  $region79: #{closed_call.36} parent=0 // pred_check_branch
    %67 = sbr.rel (0) target = $region81
  $region80: #{closed_call.36} parent=0 // pred_region
    _
  $region81: #{closed_call.36} parent=0 // pred_fallthru
    _
  // Predicated region
  $region82: #{closed_call.36} parent=0 // pred_check
    _
  $region83: #{closed_call.36} parent=0 // pred_check_branch
    %69 = sbr.rel (0) target = $region85
  $region84: #{closed_call.36} parent=0 // pred_region
    _
  $region85: #{closed_call.36} parent=0 // pred_fallthru
    _
  // Predicated region
  $region86: #{closed_call.36} parent=0 // pred_check
    _
  $region87: #{closed_call.36} parent=0 // pred_check_branch
    %71 = sbr.rel (0) target = $region89
  $region88: #{closed_call.36} parent=0 // pred_region
    _
  $region89: #{closed_call.36} parent=0 // pred_fallthru
    _
  // Predicated region
  $region90: #{closed_call.36} parent=0 // pred_check
    _
  $region91: #{closed_call.36} parent=0 // pred_check_branch
    %73 = sbr.rel (0) target = $region93
  $region92: #{closed_call.36} parent=0 // pred_region
    _
  $region93: #{closed_call.36} parent=0 // pred_fallthru
    _
  %v75 = vld [vmem:[%s0] sm:$0xff]
  %v76 = vld [vmem:[%s0 + $0x8] sm:$0xff]
  %v77 = vld [vmem:[%s5] sm:$0xff]
  %v78 = vld [vmem:[%s5 + $0x8] sm:$0xf]
  %v79 = vld [vmem:[%s5 + $0xc] sm:$0xff]
  %v80 = vld [vmem:[%s5 + $0x14] sm:$0xf]
  %v81 = vld [vmem:[%s5 + $0x18] sm:$0xff]
  %v82 = vld [vmem:[%s5 + $0x20] sm:$0xf]
  %v83 = vld [vmem:[%s5 + $0x24] sm:$0xff]
  %v84 = vld [vmem:[%s5 + $0x2c] sm:$0xf]
  %v85 = vld [vmem:[%s5 + $0x30] sm:$0xff]
  %v86 = vld [vmem:[%s5 + $0x38] sm:$0xf]
  %v87 = vld [vmem:[%s5 + $0x3c] sm:$0xff]
  %v88 = vld [vmem:[%s5 + $0x44] sm:$0xf]
  %v89 = vld [vmem:[%s5 + $0x48] sm:$0xff]
  %v90 = vld [vmem:[%s5 + $0x50] sm:$0xf]
  %v91 = vld [vmem:[%s5 + $0x54] sm:$0xff]
  %v92 = vld [vmem:[%s5 + $0x5c] sm:$0xf]
  %v93 = vld [vmem:[%s5 + $0x60] sm:$0xff]
  %v94 = vld [vmem:[%s5 + $0x68] sm:$0xf]
  %v95 = vld [vmem:[%s5 + $0x6c] sm:$0xff]
  %v96 = vld [vmem:[%s5 + $0x74] sm:$0xf]
  %v97 = vld [vmem:[%s5 + $0x78] sm:$0xff]
  %v98 = vld [vmem:[%s5 + $0x80] sm:$0xf]
  %v99 = vld [vmem:[%s5 + $0x84] sm:$0xff]
  %v100 = vld [vmem:[%s5 + $0x8c] sm:$0xf]
  %v101 = vld [vmem:[%s5 + $0x90] sm:$0xff]
  %v102 = vld [vmem:[%s5 + $0x98] sm:$0xf]
  %v103 = vld [vmem:[%s5 + $0x9c] sm:$0xff]
  %v104 = vld [vmem:[%s5 + $0xa4] sm:$0xf]
  %v105 = vld [vmem:[%s5 + $0xa8] sm:$0xff]
  %v106 = vld [vmem:[%s5 + $0xb0] sm:$0xf]
  %v107 = vld [vmem:[%s5 + $0xb4] sm:$0xff]
  %v108 = vld [vmem:[%s5 + $0xbc] sm:$0xf]
  %v109 = vpack.c.bf16 %v76, %v75
  %v110 = vld [vmem:[%s6] sm:$0x7]
  %v112 = vlaneseq
  %v113 = vshrl.u32 %v112, 7
  %v114 = vsub.s32 0, %v113
  %v115 = vrot.slane %v110, %v114
  %v116 = vlaneseq
  %v117 = vshrl.u32 %v116, 7
  %v118 = vsub.s32 1, %v117
  %v119 = vrot.slane %v110, %v118
  %v120 = vlaneseq
  %v121 = vshrl.u32 %v120, 7
  %v122 = vsub.s32 2, %v121
  %v123 = vrot.slane %v110, %v122
  %v159 = vunpack.c.l.b16 %v77
  %v160 = vunpack.c.h.b16 %v77
  %v161 = vunpack.c.l.b16 %v78
  %v162 = vunpack.c.l.b16 %v79
  %v163 = vunpack.c.h.b16 %v79
  %v164 = vunpack.c.l.b16 %v80
  %v165 = vunpack.c.l.b16 %v81
  %v166 = vunpack.c.h.b16 %v81
  %v167 = vunpack.c.l.b16 %v82
  %v168 = vunpack.c.l.b16 %v83
  %v169 = vunpack.c.h.b16 %v83
  %v170 = vunpack.c.l.b16 %v84
  %v171 = vunpack.c.l.b16 %v85
  %v172 = vunpack.c.h.b16 %v85
  %v173 = vunpack.c.l.b16 %v86
  %v174 = vunpack.c.l.b16 %v87
  %v175 = vunpack.c.h.b16 %v87
  %v176 = vunpack.c.l.b16 %v88
  %v177 = vunpack.c.l.b16 %v89
  %v178 = vunpack.c.h.b16 %v89
  %v179 = vunpack.c.l.b16 %v90
  %v180 = vunpack.c.l.b16 %v91
  %v181 = vunpack.c.h.b16 %v91
  %v182 = vunpack.c.l.b16 %v92
  %v183 = vunpack.c.l.b16 %v93
  %v184 = vunpack.c.h.b16 %v93
  %v185 = vunpack.c.l.b16 %v94
  %v186 = vunpack.c.l.b16 %v95
  %v187 = vunpack.c.h.b16 %v95
  %v188 = vunpack.c.l.b16 %v96
  %v189 = vunpack.c.l.b16 %v97
  %v190 = vunpack.c.h.b16 %v97
  %v191 = vunpack.c.l.b16 %v98
  %v192 = vunpack.c.l.b16 %v99
  %v193 = vunpack.c.h.b16 %v99
  %v194 = vunpack.c.l.b16 %v100
  %v195 = vunpack.c.l.b16 %v101
  %v196 = vunpack.c.h.b16 %v101
  %v197 = vunpack.c.l.b16 %v102
  %v198 = vunpack.c.l.b16 %v103
  %v199 = vunpack.c.h.b16 %v103
  %v200 = vunpack.c.l.b16 %v104
  %v201 = vunpack.c.l.b16 %v105
  %v202 = vunpack.c.h.b16 %v105
  %v203 = vunpack.c.l.b16 %v106
  %v204 = vunpack.c.l.b16 %v107
  %v205 = vunpack.c.h.b16 %v107
  %v206 = vunpack.c.l.b16 %v108
  %v207 = vpack.c.b16 %v162, %v159
  %v208 = vpack.c.b16 %v163, %v160
  %v209 = vpack.c.b16 %v164, %v161
  %v210 = vpack.c.b16 %v168, %v165
  %v211 = vpack.c.b16 %v169, %v166
  %v212 = vpack.c.b16 %v170, %v167
  %v213 = vpack.c.b16 %v174, %v171
  %v214 = vpack.c.b16 %v175, %v172
  %v215 = vpack.c.b16 %v176, %v173
  %v216 = vpack.c.b16 %v180, %v177
  %v217 = vpack.c.b16 %v181, %v178
  %v218 = vpack.c.b16 %v182, %v179
  %v219 = vpack.c.b16 %v186, %v183
  %v220 = vpack.c.b16 %v187, %v184
  %v221 = vpack.c.b16 %v188, %v185
  %v222 = vpack.c.b16 %v192, %v189
  %v223 = vpack.c.b16 %v193, %v190
  %v224 = vpack.c.b16 %v194, %v191
  %v225 = vpack.c.b16 %v198, %v195
  %v226 = vpack.c.b16 %v199, %v196
  %v227 = vpack.c.b16 %v200, %v197
  %v228 = vpack.c.b16 %v204, %v201
  %v229 = vpack.c.b16 %v205, %v202
  %v230 = vpack.c.b16 %v206, %v203
  %255 = vmatprep.subr.bf16.mxu0 %v229
  %256 = vmatpush1.bf16.msra.mxu0 %v228
  %257 = vmatprep.subr.bf16.mxu0 %v226
  %258 = vmatpush1.bf16.msra.mxu0 %v225
  %259 = vmatprep.subr.bf16.mxu0 %v223
  %260 = vmatpush1.bf16.msra.mxu0 %v222
  %261 = vmatprep.subr.bf16.mxu0 %v220
  %262 = vmatpush1.bf16.msra.mxu0 %v219
  %263 = vmatprep.subr.bf16.mxu0 %v217
  %264 = vmatpush1.bf16.msra.mxu0 %v216
  %265 = vmatprep.subr.bf16.mxu0 %v214
  %266 = vmatpush1.bf16.msra.mxu0 %v213
  %267 = vmatprep.subr.bf16.mxu0 %v211
  %268 = vmatpush1.bf16.msra.mxu0 %v210
  %269 = vmatprep.subr.bf16.mxu0 %v208
  %270 = vmatpush1.bf16.msra.mxu0 %v207
  %271 = vmatprep.subr.bf16.mxu0 0
  %272 = vmatpush2.bf16.msra.mxu0 0
  %273 = vmatprep.subr.bf16.mxu0 0
  %274 = vmatpush2.bf16.msra.mxu0 0
  %275 = vmatprep.subr.bf16.mxu0 0
  %276 = vmatpush2.bf16.msra.mxu0 0
  %277 = vmatprep.subr.bf16.mxu0 0
  %278 = vmatpush2.bf16.msra.mxu0 0
  %279 = vmatprep.subr.bf16.mxu0 0
  %280 = vmatpush2.bf16.msra.mxu0 0
  %281 = vmatprep.subr.bf16.mxu0 0
  %282 = vmatpush2.bf16.msra.mxu0 0
  %283 = vmatprep.subr.bf16.mxu0 0
  %284 = vmatpush2.bf16.msra.mxu0 0
  %285 = vmatprep.subr.bf16.mxu0 0
  %286 = vmatpush2.bf16.msra.mxu0 0
  %287 = vmatprep.mubr.bf16.mxu0 0
  %288 = vmatmul.mubr.bf16.gmra.mxu0 %v109
  %v289 = vpop.f32.mrf.mxu0
  %v290 = vadd.f32 %v115, %v289
  %v291 = vpop.f32.mrf.mxu0
  %v292 = vadd.f32 %v119, %v291
  %v293 = vpop.f32.mrf.mxu0
  %v294 = vadd.f32 %v115, %v293
  %v295 = vpop.f32.mrf.mxu0
  %v296 = vadd.f32 %v119, %v295
  %297 = vdwg.mxu0
  %298 = vmatprep.subr.bf16.mxu0 0
  %299 = vmatpush1.bf16.msra.mxu0 %v230
  %300 = vmatprep.subr.bf16.mxu0 0
  %301 = vmatpush1.bf16.msra.mxu0 %v227
  %302 = vmatprep.subr.bf16.mxu0 0
  %303 = vmatpush1.bf16.msra.mxu0 %v224
  %304 = vmatprep.subr.bf16.mxu0 0
  %305 = vmatpush1.bf16.msra.mxu0 %v221
  %306 = vmatprep.subr.bf16.mxu0 0
  %307 = vmatpush1.bf16.msra.mxu0 %v218
  %308 = vmatprep.subr.bf16.mxu0 0
  %309 = vmatpush1.bf16.msra.mxu0 %v215
  %310 = vmatprep.subr.bf16.mxu0 0
  %311 = vmatpush1.bf16.msra.mxu0 %v212
  %312 = vmatprep.subr.bf16.mxu0 0
  %313 = vmatpush1.bf16.msra.mxu0 %v209
  %314 = vmatprep.subr.bf16.mxu0 0
  %315 = vmatpush2.bf16.msra.mxu0 0
  %316 = vmatprep.subr.bf16.mxu0 0
  %317 = vmatpush2.bf16.msra.mxu0 0
  %318 = vmatprep.subr.bf16.mxu0 0
  %319 = vmatpush2.bf16.msra.mxu0 0
  %320 = vmatprep.subr.bf16.mxu0 0
  %321 = vmatpush2.bf16.msra.mxu0 0
  %322 = vmatprep.subr.bf16.mxu0 0
  %323 = vmatpush2.bf16.msra.mxu0 0
  %324 = vmatprep.subr.bf16.mxu0 0
  %325 = vmatpush2.bf16.msra.mxu0 0
  %326 = vmatprep.subr.bf16.mxu0 0
  %327 = vmatpush2.bf16.msra.mxu0 0
  %328 = vmatprep.subr.bf16.mxu0 0
  %329 = vmatpush2.bf16.msra.mxu0 0
  %330 = vmatprep.mubr.bf16.mxu0 0
  %331 = vmatmul.mubr.bf16.gmra.mxu0 %v109
  %v332 = vpop.f32.mrf.mxu0
  %v333 = vadd.f32 %v123, %v332
  %v334 = vpop.f32.mrf.mxu0
  %v335 = vpop.f32.mrf.mxu0
  %v336 = vadd.f32 %v123, %v335
  %v337 = vpop.f32.mrf.mxu0
  %338 = vdwg.mxu0
  %v339 = vld [vmem:[%s3] sm:$0xff]
  %v340 = vld [vmem:[%s3 + $0x8] sm:$0xff]
  %v341 = vpack.c.bf16 %v290, %v290
  %v342 = vpack.c.bf16 %v292, %v292
  %v343 = vpack.c.bf16 %v333, %v333
  %vm344 = vcmask 523264
  %v346 = vsel %vm344, %v341, 0
  %v349 = vsel %vm344, %v342, 0
  %351 = vmatprep.subr.bf16.mxu0 0
  %352 = vmatpush1.bf16.xpose.msra.mxu0 0
  %353 = vmatprep.subr.bf16.mxu0 0
  %354 = vmatpush1.bf16.xpose.msra.mxu0 0
  %355 = vmatprep.subr.bf16.mxu0 0
  %356 = vmatpush1.bf16.xpose.msra.mxu0 0
  %357 = vmatprep.subr.bf16.mxu0 0
  %358 = vmatpush1.bf16.xpose.msra.mxu0 0
  %359 = vmatprep.subr.bf16.mxu0 0
  %360 = vmatpush1.bf16.xpose.msra.mxu0 0
  %361 = vmatprep.subr.bf16.mxu0 0
  %362 = vmatpush1.bf16.xpose.msra.mxu0 0
  %363 = vmatprep.subr.bf16.mxu0 0
  %364 = vmatpush1.bf16.xpose.msra.mxu0 0
  %365 = vmatprep.subr.bf16.mxu0 0
  %366 = vmatpush1.bf16.xpose.msra.mxu0 %v349
  %367 = vmatprep.subr.bf16.mxu0 0
  %368 = vmatpush2.bf16.xpose.msra.mxu0 0
  %369 = vmatprep.subr.bf16.mxu0 0
  %370 = vmatpush2.bf16.xpose.msra.mxu0 0
  %371 = vmatprep.subr.bf16.mxu0 0
  %372 = vmatpush2.bf16.xpose.msra.mxu0 0
  %373 = vmatprep.subr.bf16.mxu0 0
  %374 = vmatpush2.bf16.xpose.msra.mxu0 0
  %375 = vmatprep.subr.bf16.mxu0 0
  %376 = vmatpush2.bf16.xpose.msra.mxu0 0
  %377 = vmatprep.subr.bf16.mxu0 0
  %378 = vmatpush2.bf16.xpose.msra.mxu0 0
  %379 = vmatprep.subr.bf16.mxu0 0
  %380 = vmatpush2.bf16.xpose.msra.mxu0 0
  %381 = vmatprep.subr.bf16.mxu0 0
  %382 = vmatpush2.bf16.xpose.msra.mxu0 0
  %383 = vmatprep.mubr.bf16.mxu0 0
  %384 = vmatmul.mubr.bf16.gmra.mxu0 %v346
  %v385 = vpop.f32.mrf.mxu0
  %v386 = vadd.f32 %v339, %v385
  %v387 = vpop.f32.mrf.mxu0
  %v388 = vpop.f32.mrf.mxu0
  %v389 = vpop.f32.mrf.mxu0
  %390 = vdwg.mxu0
  %vm391 = vcmask 64512
  %v392 = vsel %vm391, %v386, -inf
  %393 = vmax.xlane.f32.xlu0 %v392
  %v394 = vpop.xlane.xlu0 %393
  %v395 = vsub.f32 %v386, %v394
  %v396 = vmul.f32 %v395, 1.442695
  %v397 = vpow.pop %v396
  %v398 = vsel %vm391, %v397, 0.0
  %399 = vadd.xlane.f32.xlu0 %v398
  %v400 = vpop.xlane.xlu0 %399
  %v401 = vrcp.pop %v400
  %v402 = vmul.f32 %v397, %v401
  %v403 = vpack.c.bf16 %v402, %v402
  %v405 = vsel %vm391, %v403, 0
  %vm407 = vcmask 1043456
  %v409 = vsel %vm407, %v343, 0
  %411 = vmatprep.subr.bf16.mxu0 0
  %412 = vmatpush1.bf16.msra.mxu0 0
  %413 = vmatprep.subr.bf16.mxu0 0
  %414 = vmatpush1.bf16.msra.mxu0 0
  %415 = vmatprep.subr.bf16.mxu0 0
  %416 = vmatpush1.bf16.msra.mxu0 0
  %417 = vmatprep.subr.bf16.mxu0 0
  %418 = vmatpush1.bf16.msra.mxu0 0
  %419 = vmatprep.subr.bf16.mxu0 0
  %420 = vmatpush1.bf16.msra.mxu0 0
  %421 = vmatprep.subr.bf16.mxu0 0
  %422 = vmatpush1.bf16.msra.mxu0 0
  %423 = vmatprep.subr.bf16.mxu0 0
  %424 = vmatpush1.bf16.msra.mxu0 0
  %425 = vmatprep.subr.bf16.mxu0 0
  %426 = vmatpush1.bf16.msra.mxu0 %v409
  %427 = vmatprep.subr.bf16.mxu0 0
  %428 = vmatpush2.bf16.msra.mxu0 0
  %429 = vmatprep.subr.bf16.mxu0 0
  %430 = vmatpush2.bf16.msra.mxu0 0
  %431 = vmatprep.subr.bf16.mxu0 0
  %432 = vmatpush2.bf16.msra.mxu0 0
  %433 = vmatprep.subr.bf16.mxu0 0
  %434 = vmatpush2.bf16.msra.mxu0 0
  %435 = vmatprep.subr.bf16.mxu0 0
  %436 = vmatpush2.bf16.msra.mxu0 0
  %437 = vmatprep.subr.bf16.mxu0 0
  %438 = vmatpush2.bf16.msra.mxu0 0
  %439 = vmatprep.subr.bf16.mxu0 0
  %440 = vmatpush2.bf16.msra.mxu0 0
  %441 = vmatprep.subr.bf16.mxu0 0
  %442 = vmatpush2.bf16.msra.mxu0 0
  %443 = vmatprep.mubr.bf16.mxu0 0
  %444 = vmatmul.mubr.bf16.gmra.mxu0 %v405
  %v445 = vpop.f32.mrf.mxu0
  %v446 = vadd.f32 0.0, %v445
  %v447 = vpop.f32.mrf.mxu0
  %v448 = vpop.f32.mrf.mxu0
  %v449 = vpop.f32.mrf.mxu0
  %450 = vdwg.mxu0
  %452 = vrot.lane.b32.xlu0 %v341, 64
  %v453 = vpop.permute.xlu0 %452
  %455 = vrot.lane.b32.xlu0 %v342, 64
  %v456 = vpop.permute.xlu0 %455
  %v458 = vsel %vm344, %v453, 0
  %v461 = vsel %vm344, %v456, 0
  %463 = vmatprep.subr.bf16.mxu0 0
  %464 = vmatpush1.bf16.xpose.msra.mxu0 0
  %465 = vmatprep.subr.bf16.mxu0 0
  %466 = vmatpush1.bf16.xpose.msra.mxu0 0
  %467 = vmatprep.subr.bf16.mxu0 0
  %468 = vmatpush1.bf16.xpose.msra.mxu0 0
  %469 = vmatprep.subr.bf16.mxu0 0
  %470 = vmatpush1.bf16.xpose.msra.mxu0 0
  %471 = vmatprep.subr.bf16.mxu0 0
  %472 = vmatpush1.bf16.xpose.msra.mxu0 0
  %473 = vmatprep.subr.bf16.mxu0 0
  %474 = vmatpush1.bf16.xpose.msra.mxu0 0
  %475 = vmatprep.subr.bf16.mxu0 0
  %476 = vmatpush1.bf16.xpose.msra.mxu0 0
  %477 = vmatprep.subr.bf16.mxu0 0
  %478 = vmatpush1.bf16.xpose.msra.mxu0 %v461
  %479 = vmatprep.subr.bf16.mxu0 0
  %480 = vmatpush2.bf16.xpose.msra.mxu0 0
  %481 = vmatprep.subr.bf16.mxu0 0
  %482 = vmatpush2.bf16.xpose.msra.mxu0 0
  %483 = vmatprep.subr.bf16.mxu0 0
  %484 = vmatpush2.bf16.xpose.msra.mxu0 0
  %485 = vmatprep.subr.bf16.mxu0 0
  %486 = vmatpush2.bf16.xpose.msra.mxu0 0
  %487 = vmatprep.subr.bf16.mxu0 0
  %488 = vmatpush2.bf16.xpose.msra.mxu0 0
  %489 = vmatprep.subr.bf16.mxu0 0
  %490 = vmatpush2.bf16.xpose.msra.mxu0 0
  %491 = vmatprep.subr.bf16.mxu0 0
  %492 = vmatpush2.bf16.xpose.msra.mxu0 0
  %493 = vmatprep.subr.bf16.mxu0 0
  %494 = vmatpush2.bf16.xpose.msra.mxu0 0
  %495 = vmatprep.mubr.bf16.mxu0 0
  %496 = vmatmul.mubr.bf16.gmra.mxu0 %v458
  %v497 = vpop.f32.mrf.mxu0
  %v498 = vadd.f32 %v339, %v497
  %v499 = vpop.f32.mrf.mxu0
  %v500 = vpop.f32.mrf.mxu0
  %v501 = vpop.f32.mrf.mxu0
  %502 = vdwg.mxu0
  %v503 = vsel %vm391, %v498, -inf
  %504 = vmax.xlane.f32.xlu0 %v503
  %v505 = vpop.xlane.xlu0 %504
  %v506 = vsub.f32 %v498, %v505
  %v507 = vmul.f32 %v506, 1.442695
  %v508 = vpow.pop %v507
  %v509 = vsel %vm391, %v508, 0.0
  %510 = vadd.xlane.f32.xlu0 %v509
  %v511 = vpop.xlane.xlu0 %510
  %v512 = vrcp.pop %v511
  %v513 = vmul.f32 %v508, %v512
  %v514 = vpack.c.bf16 %v513, %v513
  %516 = vrot.lane.b32.xlu0 %v343, 64
  %v517 = vpop.permute.xlu0 %516
  %v519 = vsel %vm391, %v514, 0
  %v522 = vsel %vm407, %v517, 0
  %524 = vmatprep.subr.bf16.mxu0 0
  %525 = vmatpush1.bf16.msra.mxu0 0
  %526 = vmatprep.subr.bf16.mxu0 0
  %527 = vmatpush1.bf16.msra.mxu0 0
  %528 = vmatprep.subr.bf16.mxu0 0
  %529 = vmatpush1.bf16.msra.mxu0 0
  %530 = vmatprep.subr.bf16.mxu0 0
  %531 = vmatpush1.bf16.msra.mxu0 0
  %532 = vmatprep.subr.bf16.mxu0 0
  %533 = vmatpush1.bf16.msra.mxu0 0
  %534 = vmatprep.subr.bf16.mxu0 0
  %535 = vmatpush1.bf16.msra.mxu0 0
  %536 = vmatprep.subr.bf16.mxu0 0
  %537 = vmatpush1.bf16.msra.mxu0 0
  %538 = vmatprep.subr.bf16.mxu0 0
  %539 = vmatpush1.bf16.msra.mxu0 %v522
  %540 = vmatprep.subr.bf16.mxu0 0
  %541 = vmatpush2.bf16.msra.mxu0 0
  %542 = vmatprep.subr.bf16.mxu0 0
  %543 = vmatpush2.bf16.msra.mxu0 0
  %544 = vmatprep.subr.bf16.mxu0 0
  %545 = vmatpush2.bf16.msra.mxu0 0
  %546 = vmatprep.subr.bf16.mxu0 0
  %547 = vmatpush2.bf16.msra.mxu0 0
  %548 = vmatprep.subr.bf16.mxu0 0
  %549 = vmatpush2.bf16.msra.mxu0 0
  %550 = vmatprep.subr.bf16.mxu0 0
  %551 = vmatpush2.bf16.msra.mxu0 0
  %552 = vmatprep.subr.bf16.mxu0 0
  %553 = vmatpush2.bf16.msra.mxu0 0
  %554 = vmatprep.subr.bf16.mxu0 0
  %555 = vmatpush2.bf16.msra.mxu0 0
  %556 = vmatprep.mubr.bf16.mxu0 0
  %557 = vmatmul.mubr.bf16.gmra.mxu0 %v519
  %v558 = vpop.f32.mrf.mxu0
  %v559 = vadd.f32 0.0, %v558
  %v560 = vpop.f32.mrf.mxu0
  %v561 = vpop.f32.mrf.mxu0
  %v562 = vpop.f32.mrf.mxu0
  %563 = vdwg.mxu0
  %565 = vrot.lane.b32.xlu0 %v559, 64
  %v566 = vpop.permute.xlu0 %565
  %v568 = vsel %vm344, %v446, %v566
  %v569 = vpack.c.bf16 %v294, %v294
  %v570 = vpack.c.bf16 %v296, %v296
  %v571 = vpack.c.bf16 %v336, %v336
  %v573 = vsel %vm344, %v569, 0
  %v576 = vsel %vm344, %v570, 0
  %578 = vmatprep.subr.bf16.mxu0 0
  %579 = vmatpush1.bf16.xpose.msra.mxu0 0
  %580 = vmatprep.subr.bf16.mxu0 0
  %581 = vmatpush1.bf16.xpose.msra.mxu0 0
  %582 = vmatprep.subr.bf16.mxu0 0
  %583 = vmatpush1.bf16.xpose.msra.mxu0 0
  %584 = vmatprep.subr.bf16.mxu0 0
  %585 = vmatpush1.bf16.xpose.msra.mxu0 0
  %586 = vmatprep.subr.bf16.mxu0 0
  %587 = vmatpush1.bf16.xpose.msra.mxu0 0
  %588 = vmatprep.subr.bf16.mxu0 0
  %589 = vmatpush1.bf16.xpose.msra.mxu0 0
  %590 = vmatprep.subr.bf16.mxu0 0
  %591 = vmatpush1.bf16.xpose.msra.mxu0 0
  %592 = vmatprep.subr.bf16.mxu0 0
  %593 = vmatpush1.bf16.xpose.msra.mxu0 %v576
  %594 = vmatprep.subr.bf16.mxu0 0
  %595 = vmatpush2.bf16.xpose.msra.mxu0 0
  %596 = vmatprep.subr.bf16.mxu0 0
  %597 = vmatpush2.bf16.xpose.msra.mxu0 0
  %598 = vmatprep.subr.bf16.mxu0 0
  %599 = vmatpush2.bf16.xpose.msra.mxu0 0
  %600 = vmatprep.subr.bf16.mxu0 0
  %601 = vmatpush2.bf16.xpose.msra.mxu0 0
  %602 = vmatprep.subr.bf16.mxu0 0
  %603 = vmatpush2.bf16.xpose.msra.mxu0 0
  %604 = vmatprep.subr.bf16.mxu0 0
  %605 = vmatpush2.bf16.xpose.msra.mxu0 0
  %606 = vmatprep.subr.bf16.mxu0 0
  %607 = vmatpush2.bf16.xpose.msra.mxu0 0
  %608 = vmatprep.subr.bf16.mxu0 0
  %609 = vmatpush2.bf16.xpose.msra.mxu0 0
  %610 = vmatprep.mubr.bf16.mxu0 0
  %611 = vmatmul.mubr.bf16.gmra.mxu0 %v573
  %v612 = vpop.f32.mrf.mxu0
  %v613 = vadd.f32 %v340, %v612
  %v614 = vpop.f32.mrf.mxu0
  %v615 = vpop.f32.mrf.mxu0
  %v616 = vpop.f32.mrf.mxu0
  %617 = vdwg.mxu0
  %v618 = vsel %vm391, %v613, -inf
  %619 = vmax.xlane.f32.xlu0 %v618
  %v620 = vpop.xlane.xlu0 %619
  %v621 = vsub.f32 %v613, %v620
  %v622 = vmul.f32 %v621, 1.442695
  %v623 = vpow.pop %v622
  %v624 = vsel %vm391, %v623, 0.0
  %625 = vadd.xlane.f32.xlu0 %v624
  %v626 = vpop.xlane.xlu0 %625
  %v627 = vrcp.pop %v626
  %v628 = vmul.f32 %v623, %v627
  %v629 = vpack.c.bf16 %v628, %v628
  %v631 = vsel %vm391, %v629, 0
  %v634 = vsel %vm407, %v571, 0
  %636 = vmatprep.subr.bf16.mxu0 0
  %637 = vmatpush1.bf16.msra.mxu0 0
  %638 = vmatprep.subr.bf16.mxu0 0
  %639 = vmatpush1.bf16.msra.mxu0 0
  %640 = vmatprep.subr.bf16.mxu0 0
  %641 = vmatpush1.bf16.msra.mxu0 0
  %642 = vmatprep.subr.bf16.mxu0 0
  %643 = vmatpush1.bf16.msra.mxu0 0
  %644 = vmatprep.subr.bf16.mxu0 0
  %645 = vmatpush1.bf16.msra.mxu0 0
  %646 = vmatprep.subr.bf16.mxu0 0
  %647 = vmatpush1.bf16.msra.mxu0 0
  %648 = vmatprep.subr.bf16.mxu0 0
  %649 = vmatpush1.bf16.msra.mxu0 0
  %650 = vmatprep.subr.bf16.mxu0 0
  %651 = vmatpush1.bf16.msra.mxu0 %v634
  %652 = vmatprep.subr.bf16.mxu0 0
  %653 = vmatpush2.bf16.msra.mxu0 0
  %654 = vmatprep.subr.bf16.mxu0 0
  %655 = vmatpush2.bf16.msra.mxu0 0
  %656 = vmatprep.subr.bf16.mxu0 0
  %657 = vmatpush2.bf16.msra.mxu0 0
  %658 = vmatprep.subr.bf16.mxu0 0
  %659 = vmatpush2.bf16.msra.mxu0 0
  %660 = vmatprep.subr.bf16.mxu0 0
  %661 = vmatpush2.bf16.msra.mxu0 0
  %662 = vmatprep.subr.bf16.mxu0 0
  %663 = vmatpush2.bf16.msra.mxu0 0
  %664 = vmatprep.subr.bf16.mxu0 0
  %665 = vmatpush2.bf16.msra.mxu0 0
  %666 = vmatprep.subr.bf16.mxu0 0
  %667 = vmatpush2.bf16.msra.mxu0 0
  %668 = vmatprep.mubr.bf16.mxu0 0
  %669 = vmatmul.mubr.bf16.gmra.mxu0 %v631
  %v670 = vpop.f32.mrf.mxu0
  %v671 = vadd.f32 0.0, %v670
  %v672 = vpop.f32.mrf.mxu0
  %v673 = vpop.f32.mrf.mxu0
  %v674 = vpop.f32.mrf.mxu0
  %675 = vdwg.mxu0
  %677 = vrot.lane.b32.xlu0 %v569, 64
  %v678 = vpop.permute.xlu0 %677
  %680 = vrot.lane.b32.xlu0 %v570, 64
  %v681 = vpop.permute.xlu0 %680
  %v683 = vsel %vm344, %v678, 0
  %v686 = vsel %vm344, %v681, 0
  %688 = vmatprep.subr.bf16.mxu0 0
  %689 = vmatpush1.bf16.xpose.msra.mxu0 0
  %690 = vmatprep.subr.bf16.mxu0 0
  %691 = vmatpush1.bf16.xpose.msra.mxu0 0
  %692 = vmatprep.subr.bf16.mxu0 0
  %693 = vmatpush1.bf16.xpose.msra.mxu0 0
  %694 = vmatprep.subr.bf16.mxu0 0
  %695 = vmatpush1.bf16.xpose.msra.mxu0 0
  %696 = vmatprep.subr.bf16.mxu0 0
  %697 = vmatpush1.bf16.xpose.msra.mxu0 0
  %698 = vmatprep.subr.bf16.mxu0 0
  %699 = vmatpush1.bf16.xpose.msra.mxu0 0
  %700 = vmatprep.subr.bf16.mxu0 0
  %701 = vmatpush1.bf16.xpose.msra.mxu0 0
  %702 = vmatprep.subr.bf16.mxu0 0
  %703 = vmatpush1.bf16.xpose.msra.mxu0 %v686
  %704 = vmatprep.subr.bf16.mxu0 0
  %705 = vmatpush2.bf16.xpose.msra.mxu0 0
  %706 = vmatprep.subr.bf16.mxu0 0
  %707 = vmatpush2.bf16.xpose.msra.mxu0 0
  %708 = vmatprep.subr.bf16.mxu0 0
  %709 = vmatpush2.bf16.xpose.msra.mxu0 0
  %710 = vmatprep.subr.bf16.mxu0 0
  %711 = vmatpush2.bf16.xpose.msra.mxu0 0
  %712 = vmatprep.subr.bf16.mxu0 0
  %713 = vmatpush2.bf16.xpose.msra.mxu0 0
  %714 = vmatprep.subr.bf16.mxu0 0
  %715 = vmatpush2.bf16.xpose.msra.mxu0 0
  %716 = vmatprep.subr.bf16.mxu0 0
  %717 = vmatpush2.bf16.xpose.msra.mxu0 0
  %718 = vmatprep.subr.bf16.mxu0 0
  %719 = vmatpush2.bf16.xpose.msra.mxu0 0
  %720 = vmatprep.mubr.bf16.mxu0 0
  %721 = vmatmul.mubr.bf16.gmra.mxu0 %v683
  %v722 = vpop.f32.mrf.mxu0
  %v723 = vadd.f32 %v340, %v722
  %v724 = vpop.f32.mrf.mxu0
  %v725 = vpop.f32.mrf.mxu0
  %v726 = vpop.f32.mrf.mxu0
  %727 = vdwg.mxu0
  %v728 = vsel %vm391, %v723, -inf
  %729 = vmax.xlane.f32.xlu0 %v728
  %v730 = vpop.xlane.xlu0 %729
  %v731 = vsub.f32 %v723, %v730
  %v732 = vmul.f32 %v731, 1.442695
  %v733 = vpow.pop %v732
  %v734 = vsel %vm391, %v733, 0.0
  %735 = vadd.xlane.f32.xlu0 %v734
  %v736 = vpop.xlane.xlu0 %735
  %v737 = vrcp.pop %v736
  %v738 = vmul.f32 %v733, %v737
  %v739 = vpack.c.bf16 %v738, %v738
  %741 = vrot.lane.b32.xlu0 %v571, 64
  %v742 = vpop.permute.xlu0 %741
  %v744 = vsel %vm391, %v739, 0
  %v747 = vsel %vm407, %v742, 0
  %749 = vmatprep.subr.bf16.mxu0 0
  %750 = vmatpush1.bf16.msra.mxu0 0
  %751 = vmatprep.subr.bf16.mxu0 0
  %752 = vmatpush1.bf16.msra.mxu0 0
  %753 = vmatprep.subr.bf16.mxu0 0
  %754 = vmatpush1.bf16.msra.mxu0 0
  %755 = vmatprep.subr.bf16.mxu0 0
  %756 = vmatpush1.bf16.msra.mxu0 0
  %757 = vmatprep.subr.bf16.mxu0 0
  %758 = vmatpush1.bf16.msra.mxu0 0
  %759 = vmatprep.subr.bf16.mxu0 0
  %760 = vmatpush1.bf16.msra.mxu0 0
  %761 = vmatprep.subr.bf16.mxu0 0
  %762 = vmatpush1.bf16.msra.mxu0 0
  %763 = vmatprep.subr.bf16.mxu0 0
  %764 = vmatpush1.bf16.msra.mxu0 %v747
  %765 = vmatprep.subr.bf16.mxu0 0
  %766 = vmatpush2.bf16.msra.mxu0 0
  %767 = vmatprep.subr.bf16.mxu0 0
  %768 = vmatpush2.bf16.msra.mxu0 0
  %769 = vmatprep.subr.bf16.mxu0 0
  %770 = vmatpush2.bf16.msra.mxu0 0
  %771 = vmatprep.subr.bf16.mxu0 0
  %772 = vmatpush2.bf16.msra.mxu0 0
  %773 = vmatprep.subr.bf16.mxu0 0
  %774 = vmatpush2.bf16.msra.mxu0 0
  %775 = vmatprep.subr.bf16.mxu0 0
  %776 = vmatpush2.bf16.msra.mxu0 0
  %777 = vmatprep.subr.bf16.mxu0 0
  %778 = vmatpush2.bf16.msra.mxu0 0
  %779 = vmatprep.subr.bf16.mxu0 0
  %780 = vmatpush2.bf16.msra.mxu0 0
  %781 = vmatprep.mubr.bf16.mxu0 0
  %782 = vmatmul.mubr.bf16.gmra.mxu0 %v744
  %v783 = vpop.f32.mrf.mxu0
  %v784 = vadd.f32 0.0, %v783
  %v785 = vpop.f32.mrf.mxu0
  %v786 = vpop.f32.mrf.mxu0
  %v787 = vpop.f32.mrf.mxu0
  %788 = vdwg.mxu0
  %790 = vrot.lane.b32.xlu0 %v784, 64
  %v791 = vpop.permute.xlu0 %790
  %v793 = vsel %vm344, %v671, %v791
  %v794 = vld [vmem:[%s7] sm:$0xf]
  %v795 = vld [vmem:[%s7 + $0x4] sm:$0xf]
  %v796 = vld [vmem:[%s7 + $0x8] sm:$0xf]
  %v797 = vld [vmem:[%s7 + $0xc] sm:$0xf]
  %v798 = vld [vmem:[%s7 + $0x10] sm:$0xf]
  %v799 = vld [vmem:[%s7 + $0x14] sm:$0xf]
  %v800 = vld [vmem:[%s7 + $0x18] sm:$0xf]
  %v801 = vld [vmem:[%s7 + $0x1c] sm:$0xf]
  %v802 = vld [vmem:[%s7 + $0x20] sm:$0xf]
  %v803 = vld [vmem:[%s7 + $0x24] sm:$0xf]
  %v804 = vld [vmem:[%s7 + $0x28] sm:$0xf]
  %v805 = vld [vmem:[%s7 + $0x2c] sm:$0xf]
  %v806 = vld [vmem:[%s7 + $0x30] sm:$0xf]
  %v807 = vld [vmem:[%s7 + $0x34] sm:$0xf]
  %v808 = vld [vmem:[%s7 + $0x38] sm:$0xf]
  %v809 = vld [vmem:[%s7 + $0x3c] sm:$0xf]
  %v810 = vpack.c.bf16 %v793, %v568
  %v827 = vunpack.c.l.b16 %v794
  %v828 = vunpack.c.l.b16 %v795
  %v829 = vunpack.c.l.b16 %v796
  %v830 = vunpack.c.l.b16 %v797
  %v831 = vunpack.c.l.b16 %v798
  %v832 = vunpack.c.l.b16 %v799
  %v833 = vunpack.c.l.b16 %v800
  %v834 = vunpack.c.l.b16 %v801
  %v835 = vunpack.c.l.b16 %v802
  %v836 = vunpack.c.l.b16 %v803
  %v837 = vunpack.c.l.b16 %v804
  %v838 = vunpack.c.l.b16 %v805
  %v839 = vunpack.c.l.b16 %v806
  %v840 = vunpack.c.l.b16 %v807
  %v841 = vunpack.c.l.b16 %v808
  %v842 = vunpack.c.l.b16 %v809
  %v843 = vpack.c.b16 %v828, %v827
  %v844 = vpack.c.b16 %v830, %v829
  %v845 = vpack.c.b16 %v832, %v831
  %v846 = vpack.c.b16 %v834, %v833
  %v847 = vpack.c.b16 %v836, %v835
  %v848 = vpack.c.b16 %v838, %v837
  %v849 = vpack.c.b16 %v840, %v839
  %v850 = vpack.c.b16 %v842, %v841
  %859 = vmatprep.subr.bf16.mxu0 0
  %860 = vmatpush1.bf16.msra.mxu0 %v850
  %861 = vmatprep.subr.bf16.mxu0 0
  %862 = vmatpush1.bf16.msra.mxu0 %v849
  %863 = vmatprep.subr.bf16.mxu0 0
  %864 = vmatpush1.bf16.msra.mxu0 %v848
  %865 = vmatprep.subr.bf16.mxu0 0
  %866 = vmatpush1.bf16.msra.mxu0 %v847
  %867 = vmatprep.subr.bf16.mxu0 0
  %868 = vmatpush1.bf16.msra.mxu0 %v846
  %869 = vmatprep.subr.bf16.mxu0 0
  %870 = vmatpush1.bf16.msra.mxu0 %v845
  %871 = vmatprep.subr.bf16.mxu0 0
  %872 = vmatpush1.bf16.msra.mxu0 %v844
  %873 = vmatprep.subr.bf16.mxu0 0
  %874 = vmatpush1.bf16.msra.mxu0 %v843
  %875 = vmatprep.subr.bf16.mxu0 0
  %876 = vmatpush2.bf16.msra.mxu0 0
  %877 = vmatprep.subr.bf16.mxu0 0
  %878 = vmatpush2.bf16.msra.mxu0 0
  %879 = vmatprep.subr.bf16.mxu0 0
  %880 = vmatpush2.bf16.msra.mxu0 0
  %881 = vmatprep.subr.bf16.mxu0 0
  %882 = vmatpush2.bf16.msra.mxu0 0
  %883 = vmatprep.subr.bf16.mxu0 0
  %884 = vmatpush2.bf16.msra.mxu0 0
  %885 = vmatprep.subr.bf16.mxu0 0
  %886 = vmatpush2.bf16.msra.mxu0 0
  %887 = vmatprep.subr.bf16.mxu0 0
  %888 = vmatpush2.bf16.msra.mxu0 0
  %889 = vmatprep.subr.bf16.mxu0 0
  %890 = vmatpush2.bf16.msra.mxu0 0
  %891 = vmatprep.mubr.bf16.mxu0 0
  %892 = vmatmul.mubr.bf16.gmra.mxu0 %v810
  %v893 = vpop.f32.mrf.mxu0
  %v894 = vadd.f32 0.0, %v893
  %v895 = vpop.f32.mrf.mxu0
  %v896 = vpop.f32.mrf.mxu0
  %v897 = vadd.f32 0.0, %v896
  %v898 = vpop.f32.mrf.mxu0
  %899 = vdwg.mxu0
  %v900 = vadd.f32 %v75, %v894
  %v901 = vadd.f32 %v76, %v897
  %v902 = vld [vmem:[%s8] sm:$0x1]
  %v904 = vlaneseq
  %v905 = vshrl.u32 %v904, 7
  %v906 = vsub.s32 0, %v905
  %v907 = vrot.slane %v902, %v906
  %v909 = vadd.f32 %v900, %v907
  %v910 = vadd.f32 %v901, %v907
  %v911 = vld [vmem:[%s9] sm:$0x1]
  %v912 = vld [vmem:[%s10] sm:$0x1]
  %913 = vadd.xlane.f32.xlu0 %v909
  %v914 = vpop.xlane.xlu0 %913
  %915 = vadd.xlane.f32.xlu0 %v910
  %v916 = vpop.xlane.xlu0 %915
  %v917 = vrcp.pop 128.0
  %v918 = vmul.f32 %v914, %v917
  %v919 = vmul.f32 %v916, %v917
  %v920 = vsub.f32 %v909, %v918
  %v921 = vsub.f32 %v910, %v919
  %v922 = vmul.f32 %v920, %v920
  %v923 = vmul.f32 %v921, %v921
  %924 = vadd.xlane.f32.xlu0 %v922
  %v925 = vpop.xlane.xlu0 %924
  %926 = vadd.xlane.f32.xlu0 %v923
  %v927 = vpop.xlane.xlu0 %926
  %v928 = vmul.f32 %v925, %v917
  %v929 = vmul.f32 %v927, %v917
  %v930 = vadd.f32 %v928, 1e-05
  %v931 = vadd.f32 %v929, 1e-05
  %v932 = vrsqrt.pop %v930
  %v933 = vrsqrt.pop %v931
  %v934 = vmul.f32 %v920, %v932
  %v935 = vmul.f32 %v921, %v933
  %v937 = vlaneseq
  %v938 = vshrl.u32 %v937, 7
  %v939 = vsub.s32 0, %v938
  %v940 = vrot.slane %v911, %v939
  %v942 = vmul.f32 %v934, %v940
  %v943 = vmul.f32 %v935, %v940
  %v945 = vlaneseq
  %v946 = vshrl.u32 %v945, 7
  %v947 = vsub.s32 0, %v946
  %v948 = vrot.slane %v912, %v947
  %v950 = vadd.f32 %v942, %v948
  %v951 = vadd.f32 %v943, %v948
  %v952 = vld [vmem:[%s11] sm:$0xf]
  %v953 = vld [vmem:[%s11 + $0x4] sm:$0xf]
  %v954 = vld [vmem:[%s11 + $0x8] sm:$0xf]
  %v955 = vld [vmem:[%s11 + $0xc] sm:$0xf]
  %v956 = vld [vmem:[%s11 + $0x10] sm:$0xf]
  %v957 = vld [vmem:[%s11 + $0x14] sm:$0xf]
  %v958 = vld [vmem:[%s11 + $0x18] sm:$0xf]
  %v959 = vld [vmem:[%s11 + $0x1c] sm:$0xf]
  %v960 = vld [vmem:[%s11 + $0x20] sm:$0xf]
  %v961 = vld [vmem:[%s11 + $0x24] sm:$0xf]
  %v962 = vld [vmem:[%s11 + $0x28] sm:$0xf]
  %v963 = vld [vmem:[%s11 + $0x2c] sm:$0xf]
  %v964 = vld [vmem:[%s11 + $0x30] sm:$0xf]
  %v965 = vld [vmem:[%s11 + $0x34] sm:$0xf]
  %v966 = vld [vmem:[%s11 + $0x38] sm:$0xf]
  %v967 = vld [vmem:[%s11 + $0x3c] sm:$0xf]
  %v968 = vpack.c.bf16 %v951, %v950
  %v969 = vld [vmem:[%s12] sm:$0x1]
  %v971 = vlaneseq
  %v972 = vshrl.u32 %v971, 7
  %v973 = vsub.s32 0, %v972
  %v974 = vrot.slane %v969, %v973
  %v992 = vunpack.c.l.b16 %v952
  %v993 = vunpack.c.l.b16 %v953
  %v994 = vunpack.c.l.b16 %v954
  %v995 = vunpack.c.l.b16 %v955
  %v996 = vunpack.c.l.b16 %v956
  %v997 = vunpack.c.l.b16 %v957
  %v998 = vunpack.c.l.b16 %v958
  %v999 = vunpack.c.l.b16 %v959
  %v1000 = vunpack.c.l.b16 %v960
  %v1001 = vunpack.c.l.b16 %v961
  %v1002 = vunpack.c.l.b16 %v962
  %v1003 = vunpack.c.l.b16 %v963
  %v1004 = vunpack.c.l.b16 %v964
  %v1005 = vunpack.c.l.b16 %v965
  %v1006 = vunpack.c.l.b16 %v966
  %v1007 = vunpack.c.l.b16 %v967
  %v1008 = vpack.c.b16 %v993, %v992
  %v1009 = vpack.c.b16 %v995, %v994
  %v1010 = vpack.c.b16 %v997, %v996
  %v1011 = vpack.c.b16 %v999, %v998
  %v1012 = vpack.c.b16 %v1001, %v1000
  %v1013 = vpack.c.b16 %v1003, %v1002
  %v1014 = vpack.c.b16 %v1005, %v1004
  %v1015 = vpack.c.b16 %v1007, %v1006
  %1024 = vmatprep.subr.bf16.mxu0 0
  %1025 = vmatpush1.bf16.msra.mxu0 %v1015
  %1026 = vmatprep.subr.bf16.mxu0 0
  %1027 = vmatpush1.bf16.msra.mxu0 %v1014
  %1028 = vmatprep.subr.bf16.mxu0 0
  %1029 = vmatpush1.bf16.msra.mxu0 %v1013
  %1030 = vmatprep.subr.bf16.mxu0 0
  %1031 = vmatpush1.bf16.msra.mxu0 %v1012
  %1032 = vmatprep.subr.bf16.mxu0 0
  %1033 = vmatpush1.bf16.msra.mxu0 %v1011
  %1034 = vmatprep.subr.bf16.mxu0 0
  %1035 = vmatpush1.bf16.msra.mxu0 %v1010
  %1036 = vmatprep.subr.bf16.mxu0 0
  %1037 = vmatpush1.bf16.msra.mxu0 %v1009
  %1038 = vmatprep.subr.bf16.mxu0 0
  %1039 = vmatpush1.bf16.msra.mxu0 %v1008
  %1040 = vmatprep.subr.bf16.mxu0 0
  %1041 = vmatpush2.bf16.msra.mxu0 0
  %1042 = vmatprep.subr.bf16.mxu0 0
  %1043 = vmatpush2.bf16.msra.mxu0 0
  %1044 = vmatprep.subr.bf16.mxu0 0
  %1045 = vmatpush2.bf16.msra.mxu0 0
  %1046 = vmatprep.subr.bf16.mxu0 0
  %1047 = vmatpush2.bf16.msra.mxu0 0
  %1048 = vmatprep.subr.bf16.mxu0 0
  %1049 = vmatpush2.bf16.msra.mxu0 0
  %1050 = vmatprep.subr.bf16.mxu0 0
  %1051 = vmatpush2.bf16.msra.mxu0 0
  %1052 = vmatprep.subr.bf16.mxu0 0
  %1053 = vmatpush2.bf16.msra.mxu0 0
  %1054 = vmatprep.subr.bf16.mxu0 0
  %1055 = vmatpush2.bf16.msra.mxu0 0
  %1056 = vmatprep.mubr.bf16.mxu0 0
  %1057 = vmatmul.mubr.bf16.gmra.mxu0 %v968
  %v1058 = vpop.f32.mrf.mxu0
  %v1059 = vadd.f32 %v974, %v1058
  %v1060 = vpop.f32.mrf.mxu0
  %v1061 = vpop.f32.mrf.mxu0
  %v1062 = vadd.f32 %v974, %v1061
  %v1063 = vpop.f32.mrf.mxu0
  %1064 = vdwg.mxu0
  %v1065 = vld [vmem:[%s1] sm:$0xf]
  %v1066 = vld [vmem:[%s1 + $0x4] sm:$0xf]
  %v1067 = vld [vmem:[%s2] sm:$0xf]
  %v1068 = vld [vmem:[%s2 + $0x4] sm:$0xf]
  %v1069 = vld [vmem:[%s4] sm:$0xff]
  %v1070 = vld [vmem:[%s4 + $0x8] sm:$0xff]
  %v1071 = vpack.c.bf16 %v1059, %v1059
  %v1073 = vsel %vm344, %v1071, 0
  %v1076 = vsel %vm344, %v1065, 0
  %1078 = vmatprep.subr.bf16.mxu0 0
  %1079 = vmatpush1.bf16.xpose.msra.mxu0 0
  %1080 = vmatprep.subr.bf16.mxu0 0
  %1081 = vmatpush1.bf16.xpose.msra.mxu0 0
  %1082 = vmatprep.subr.bf16.mxu0 0
  %1083 = vmatpush1.bf16.xpose.msra.mxu0 0
  %1084 = vmatprep.subr.bf16.mxu0 0
  %1085 = vmatpush1.bf16.xpose.msra.mxu0 0
  %1086 = vmatprep.subr.bf16.mxu0 0
  %1087 = vmatpush1.bf16.xpose.msra.mxu0 0
  %1088 = vmatprep.subr.bf16.mxu0 0
  %1089 = vmatpush1.bf16.xpose.msra.mxu0 0
  %1090 = vmatprep.subr.bf16.mxu0 0
  %1091 = vmatpush1.bf16.xpose.msra.mxu0 0
  %1092 = vmatprep.subr.bf16.mxu0 0
  %1093 = vmatpush1.bf16.xpose.msra.mxu0 %v1076
  %1094 = vmatprep.subr.bf16.mxu0 0
  %1095 = vmatpush2.bf16.xpose.msra.mxu0 0
  %1096 = vmatprep.subr.bf16.mxu0 0
  %1097 = vmatpush2.bf16.xpose.msra.mxu0 0
  %1098 = vmatprep.subr.bf16.mxu0 0
  %1099 = vmatpush2.bf16.xpose.msra.mxu0 0
  %1100 = vmatprep.subr.bf16.mxu0 0
  %1101 = vmatpush2.bf16.xpose.msra.mxu0 0
  %1102 = vmatprep.subr.bf16.mxu0 0
  %1103 = vmatpush2.bf16.xpose.msra.mxu0 0
  %1104 = vmatprep.subr.bf16.mxu0 0
  %1105 = vmatpush2.bf16.xpose.msra.mxu0 0
  %1106 = vmatprep.subr.bf16.mxu0 0
  %1107 = vmatpush2.bf16.xpose.msra.mxu0 0
  %1108 = vmatprep.subr.bf16.mxu0 0
  %1109 = vmatpush2.bf16.xpose.msra.mxu0 0
  %1110 = vmatprep.mubr.bf16.mxu0 0
  %1111 = vmatmul.mubr.bf16.gmra.mxu0 %v1073
  %v1112 = vpop.f32.mrf.mxu0
  %v1113 = vadd.f32 %v1069, %v1112
  %v1114 = vpop.f32.mrf.mxu0
  %v1115 = vpop.f32.mrf.mxu0
  %v1116 = vpop.f32.mrf.mxu0
  %1117 = vdwg.mxu0
  %v1118 = vsel %vm391, %v1113, -inf
  %1119 = vmax.xlane.f32.xlu0 %v1118
  %v1120 = vpop.xlane.xlu0 %1119
  %v1121 = vsub.f32 %v1113, %v1120
  %v1122 = vmul.f32 %v1121, 1.442695
  %v1123 = vpow.pop %v1122
  %v1124 = vsel %vm391, %v1123, 0.0
  %1125 = vadd.xlane.f32.xlu0 %v1124
  %v1126 = vpop.xlane.xlu0 %1125
  %v1127 = vrcp.pop %v1126
  %v1128 = vmul.f32 %v1123, %v1127
  %v1129 = vpack.c.bf16 %v1128, %v1128
  %v1131 = vsel %vm391, %v1129, 0
  %v1134 = vsel %vm407, %v1067, 0
  %1136 = vmatprep.subr.bf16.mxu0 0
  %1137 = vmatpush1.bf16.msra.mxu0 0
  %1138 = vmatprep.subr.bf16.mxu0 0
  %1139 = vmatpush1.bf16.msra.mxu0 0
  %1140 = vmatprep.subr.bf16.mxu0 0
  %1141 = vmatpush1.bf16.msra.mxu0 0
  %1142 = vmatprep.subr.bf16.mxu0 0
  %1143 = vmatpush1.bf16.msra.mxu0 0
  %1144 = vmatprep.subr.bf16.mxu0 0
  %1145 = vmatpush1.bf16.msra.mxu0 0
  %1146 = vmatprep.subr.bf16.mxu0 0
  %1147 = vmatpush1.bf16.msra.mxu0 0
  %1148 = vmatprep.subr.bf16.mxu0 0
  %1149 = vmatpush1.bf16.msra.mxu0 0
  %1150 = vmatprep.subr.bf16.mxu0 0
  %1151 = vmatpush1.bf16.msra.mxu0 %v1134
  %1152 = vmatprep.subr.bf16.mxu0 0
  %1153 = vmatpush2.bf16.msra.mxu0 0
  %1154 = vmatprep.subr.bf16.mxu0 0
  %1155 = vmatpush2.bf16.msra.mxu0 0
  %1156 = vmatprep.subr.bf16.mxu0 0
  %1157 = vmatpush2.bf16.msra.mxu0 0
  %1158 = vmatprep.subr.bf16.mxu0 0
  %1159 = vmatpush2.bf16.msra.mxu0 0
  %1160 = vmatprep.subr.bf16.mxu0 0
  %1161 = vmatpush2.bf16.msra.mxu0 0
  %1162 = vmatprep.subr.bf16.mxu0 0
  %1163 = vmatpush2.bf16.msra.mxu0 0
  %1164 = vmatprep.subr.bf16.mxu0 0
  %1165 = vmatpush2.bf16.msra.mxu0 0
  %1166 = vmatprep.subr.bf16.mxu0 0
  %1167 = vmatpush2.bf16.msra.mxu0 0
  %1168 = vmatprep.mubr.bf16.mxu0 0
  %1169 = vmatmul.mubr.bf16.gmra.mxu0 %v1131
  %v1170 = vpop.f32.mrf.mxu0
  %v1171 = vadd.f32 0.0, %v1170
  %v1172 = vpop.f32.mrf.mxu0
  %v1173 = vpop.f32.mrf.mxu0
  %v1174 = vpop.f32.mrf.mxu0
  %1175 = vdwg.mxu0
  %1177 = vrot.lane.b32.xlu0 %v1071, 64
  %v1178 = vpop.permute.xlu0 %1177
  %v1180 = vunpack.c.l.b16 %v1065
  %v1181 = vpack.c.b16 %v1180, %v1180
  %1182 = vrot.lane.b32.xlu0 %v1181, 64
  %v1183 = vpop.permute.xlu0 %1182
  %v1185 = vsel %vm344, %v1178, 0
  %v1188 = vsel %vm344, %v1183, 0
  %1190 = vmatprep.subr.bf16.mxu0 0
  %1191 = vmatpush1.bf16.xpose.msra.mxu0 0
  %1192 = vmatprep.subr.bf16.mxu0 0
  %1193 = vmatpush1.bf16.xpose.msra.mxu0 0
  %1194 = vmatprep.subr.bf16.mxu0 0
  %1195 = vmatpush1.bf16.xpose.msra.mxu0 0
  %1196 = vmatprep.subr.bf16.mxu0 0
  %1197 = vmatpush1.bf16.xpose.msra.mxu0 0
  %1198 = vmatprep.subr.bf16.mxu0 0
  %1199 = vmatpush1.bf16.xpose.msra.mxu0 0
  %1200 = vmatprep.subr.bf16.mxu0 0
  %1201 = vmatpush1.bf16.xpose.msra.mxu0 0
  %1202 = vmatprep.subr.bf16.mxu0 0
  %1203 = vmatpush1.bf16.xpose.msra.mxu0 0
  %1204 = vmatprep.subr.bf16.mxu0 0
  %1205 = vmatpush1.bf16.xpose.msra.mxu0 %v1188
  %1206 = vmatprep.subr.bf16.mxu0 0
  %1207 = vmatpush2.bf16.xpose.msra.mxu0 0
  %1208 = vmatprep.subr.bf16.mxu0 0
  %1209 = vmatpush2.bf16.xpose.msra.mxu0 0
  %1210 = vmatprep.subr.bf16.mxu0 0
  %1211 = vmatpush2.bf16.xpose.msra.mxu0 0
  %1212 = vmatprep.subr.bf16.mxu0 0
  %1213 = vmatpush2.bf16.xpose.msra.mxu0 0
  %1214 = vmatprep.subr.bf16.mxu0 0
  %1215 = vmatpush2.bf16.xpose.msra.mxu0 0
  %1216 = vmatprep.subr.bf16.mxu0 0
  %1217 = vmatpush2.bf16.xpose.msra.mxu0 0
  %1218 = vmatprep.subr.bf16.mxu0 0
  %1219 = vmatpush2.bf16.xpose.msra.mxu0 0
  %1220 = vmatprep.subr.bf16.mxu0 0
  %1221 = vmatpush2.bf16.xpose.msra.mxu0 0
  %1222 = vmatprep.mubr.bf16.mxu0 0
  %1223 = vmatmul.mubr.bf16.gmra.mxu0 %v1185
  %v1224 = vpop.f32.mrf.mxu0
  %v1225 = vadd.f32 %v1069, %v1224
  %v1226 = vpop.f32.mrf.mxu0
  %v1227 = vpop.f32.mrf.mxu0
  %v1228 = vpop.f32.mrf.mxu0
  %1229 = vdwg.mxu0
  %v1230 = vsel %vm391, %v1225, -inf
  %1231 = vmax.xlane.f32.xlu0 %v1230
  %v1232 = vpop.xlane.xlu0 %1231
  %v1233 = vsub.f32 %v1225, %v1232
  %v1234 = vmul.f32 %v1233, 1.442695
  %v1235 = vpow.pop %v1234
  %v1236 = vsel %vm391, %v1235, 0.0
  %1237 = vadd.xlane.f32.xlu0 %v1236
  %v1238 = vpop.xlane.xlu0 %1237
  %v1239 = vrcp.pop %v1238
  %v1240 = vmul.f32 %v1235, %v1239
  %v1241 = vpack.c.bf16 %v1240, %v1240
  %v1243 = vunpack.c.l.b16 %v1067
  %v1244 = vpack.c.b16 %v1243, %v1243
  %1245 = vrot.lane.b32.xlu0 %v1244, 64
  %v1246 = vpop.permute.xlu0 %1245
  %v1248 = vsel %vm391, %v1241, 0
  %v1251 = vsel %vm407, %v1246, 0
  %1253 = vmatprep.subr.bf16.mxu0 0
  %1254 = vmatpush1.bf16.msra.mxu0 0
  %1255 = vmatprep.subr.bf16.mxu0 0
  %1256 = vmatpush1.bf16.msra.mxu0 0
  %1257 = vmatprep.subr.bf16.mxu0 0
  %1258 = vmatpush1.bf16.msra.mxu0 0
  %1259 = vmatprep.subr.bf16.mxu0 0
  %1260 = vmatpush1.bf16.msra.mxu0 0
  %1261 = vmatprep.subr.bf16.mxu0 0
  %1262 = vmatpush1.bf16.msra.mxu0 0
  %1263 = vmatprep.subr.bf16.mxu0 0
  %1264 = vmatpush1.bf16.msra.mxu0 0
  %1265 = vmatprep.subr.bf16.mxu0 0
  %1266 = vmatpush1.bf16.msra.mxu0 0
  %1267 = vmatprep.subr.bf16.mxu0 0
  %1268 = vmatpush1.bf16.msra.mxu0 %v1251
  %1269 = vmatprep.subr.bf16.mxu0 0
  %1270 = vmatpush2.bf16.msra.mxu0 0
  %1271 = vmatprep.subr.bf16.mxu0 0
  %1272 = vmatpush2.bf16.msra.mxu0 0
  %1273 = vmatprep.subr.bf16.mxu0 0
  %1274 = vmatpush2.bf16.msra.mxu0 0
  %1275 = vmatprep.subr.bf16.mxu0 0
  %1276 = vmatpush2.bf16.msra.mxu0 0
  %1277 = vmatprep.subr.bf16.mxu0 0
  %1278 = vmatpush2.bf16.msra.mxu0 0
  %1279 = vmatprep.subr.bf16.mxu0 0
  %1280 = vmatpush2.bf16.msra.mxu0 0
  %1281 = vmatprep.subr.bf16.mxu0 0
  %1282 = vmatpush2.bf16.msra.mxu0 0
  %1283 = vmatprep.subr.bf16.mxu0 0
  %1284 = vmatpush2.bf16.msra.mxu0 0
  %1285 = vmatprep.mubr.bf16.mxu0 0
  %1286 = vmatmul.mubr.bf16.gmra.mxu0 %v1248
  %v1287 = vpop.f32.mrf.mxu0
  %v1288 = vadd.f32 0.0, %v1287
  %v1289 = vpop.f32.mrf.mxu0
  %v1290 = vpop.f32.mrf.mxu0
  %v1291 = vpop.f32.mrf.mxu0
  %1292 = vdwg.mxu0
  %1294 = vrot.lane.b32.xlu0 %v1288, 64
  %v1295 = vpop.permute.xlu0 %1294
  %v1297 = vsel %vm344, %v1171, %v1295
  %v1298 = vpack.c.bf16 %v1062, %v1062
  %v1300 = vsel %vm344, %v1298, 0
  %v1303 = vsel %vm344, %v1066, 0
  %1305 = vmatprep.subr.bf16.mxu0 0
  %1306 = vmatpush1.bf16.xpose.msra.mxu0 0
  %1307 = vmatprep.subr.bf16.mxu0 0
  %1308 = vmatpush1.bf16.xpose.msra.mxu0 0
  %1309 = vmatprep.subr.bf16.mxu0 0
  %1310 = vmatpush1.bf16.xpose.msra.mxu0 0
  %1311 = vmatprep.subr.bf16.mxu0 0
  %1312 = vmatpush1.bf16.xpose.msra.mxu0 0
  %1313 = vmatprep.subr.bf16.mxu0 0
  %1314 = vmatpush1.bf16.xpose.msra.mxu0 0
  %1315 = vmatprep.subr.bf16.mxu0 0
  %1316 = vmatpush1.bf16.xpose.msra.mxu0 0
  %1317 = vmatprep.subr.bf16.mxu0 0
  %1318 = vmatpush1.bf16.xpose.msra.mxu0 0
  %1319 = vmatprep.subr.bf16.mxu0 0
  %1320 = vmatpush1.bf16.xpose.msra.mxu0 %v1303
  %1321 = vmatprep.subr.bf16.mxu0 0
  %1322 = vmatpush2.bf16.xpose.msra.mxu0 0
  %1323 = vmatprep.subr.bf16.mxu0 0
  %1324 = vmatpush2.bf16.xpose.msra.mxu0 0
  %1325 = vmatprep.subr.bf16.mxu0 0
  %1326 = vmatpush2.bf16.xpose.msra.mxu0 0
  %1327 = vmatprep.subr.bf16.mxu0 0
  %1328 = vmatpush2.bf16.xpose.msra.mxu0 0
  %1329 = vmatprep.subr.bf16.mxu0 0
  %1330 = vmatpush2.bf16.xpose.msra.mxu0 0
  %1331 = vmatprep.subr.bf16.mxu0 0
  %1332 = vmatpush2.bf16.xpose.msra.mxu0 0
  %1333 = vmatprep.subr.bf16.mxu0 0
  %1334 = vmatpush2.bf16.xpose.msra.mxu0 0
  %1335 = vmatprep.subr.bf16.mxu0 0
  %1336 = vmatpush2.bf16.xpose.msra.mxu0 0
  %1337 = vmatprep.mubr.bf16.mxu0 0
  %1338 = vmatmul.mubr.bf16.gmra.mxu0 %v1300
  %v1339 = vpop.f32.mrf.mxu0
  %v1340 = vadd.f32 %v1070, %v1339
  %v1341 = vpop.f32.mrf.mxu0
  %v1342 = vpop.f32.mrf.mxu0
  %v1343 = vpop.f32.mrf.mxu0
  %1344 = vdwg.mxu0
  %v1345 = vsel %vm391, %v1340, -inf
  %1346 = vmax.xlane.f32.xlu0 %v1345
  %v1347 = vpop.xlane.xlu0 %1346
  %v1348 = vsub.f32 %v1340, %v1347
  %v1349 = vmul.f32 %v1348, 1.442695
  %v1350 = vpow.pop %v1349
  %v1351 = vsel %vm391, %v1350, 0.0
  %1352 = vadd.xlane.f32.xlu0 %v1351
  %v1353 = vpop.xlane.xlu0 %1352
  %v1354 = vrcp.pop %v1353
  %v1355 = vmul.f32 %v1350, %v1354
  %v1356 = vpack.c.bf16 %v1355, %v1355
  %v1358 = vsel %vm391, %v1356, 0
  %v1361 = vsel %vm407, %v1068, 0
  %1363 = vmatprep.subr.bf16.mxu0 0
  %1364 = vmatpush1.bf16.msra.mxu0 0
  %1365 = vmatprep.subr.bf16.mxu0 0
  %1366 = vmatpush1.bf16.msra.mxu0 0
  %1367 = vmatprep.subr.bf16.mxu0 0
  %1368 = vmatpush1.bf16.msra.mxu0 0
  %1369 = vmatprep.subr.bf16.mxu0 0
  %1370 = vmatpush1.bf16.msra.mxu0 0
  %1371 = vmatprep.subr.bf16.mxu0 0
  %1372 = vmatpush1.bf16.msra.mxu0 0
  %1373 = vmatprep.subr.bf16.mxu0 0
  %1374 = vmatpush1.bf16.msra.mxu0 0
  %1375 = vmatprep.subr.bf16.mxu0 0
  %1376 = vmatpush1.bf16.msra.mxu0 0
  %1377 = vmatprep.subr.bf16.mxu0 0
  %1378 = vmatpush1.bf16.msra.mxu0 %v1361
  %1379 = vmatprep.subr.bf16.mxu0 0
  %1380 = vmatpush2.bf16.msra.mxu0 0
  %1381 = vmatprep.subr.bf16.mxu0 0
  %1382 = vmatpush2.bf16.msra.mxu0 0
  %1383 = vmatprep.subr.bf16.mxu0 0
  %1384 = vmatpush2.bf16.msra.mxu0 0
  %1385 = vmatprep.subr.bf16.mxu0 0
  %1386 = vmatpush2.bf16.msra.mxu0 0
  %1387 = vmatprep.subr.bf16.mxu0 0
  %1388 = vmatpush2.bf16.msra.mxu0 0
  %1389 = vmatprep.subr.bf16.mxu0 0
  %1390 = vmatpush2.bf16.msra.mxu0 0
  %1391 = vmatprep.subr.bf16.mxu0 0
  %1392 = vmatpush2.bf16.msra.mxu0 0
  %1393 = vmatprep.subr.bf16.mxu0 0
  %1394 = vmatpush2.bf16.msra.mxu0 0
  %1395 = vmatprep.mubr.bf16.mxu0 0
  %1396 = vmatmul.mubr.bf16.gmra.mxu0 %v1358
  %v1397 = vpop.f32.mrf.mxu0
  %v1398 = vadd.f32 0.0, %v1397
  %v1399 = vpop.f32.mrf.mxu0
  %v1400 = vpop.f32.mrf.mxu0
  %v1401 = vpop.f32.mrf.mxu0
  %1402 = vdwg.mxu0
  %1404 = vrot.lane.b32.xlu0 %v1298, 64
  %v1405 = vpop.permute.xlu0 %1404
  %v1407 = vunpack.c.l.b16 %v1066
  %v1408 = vpack.c.b16 %v1407, %v1407
  %1409 = vrot.lane.b32.xlu0 %v1408, 64
  %v1410 = vpop.permute.xlu0 %1409
  %v1412 = vsel %vm344, %v1405, 0
  %v1415 = vsel %vm344, %v1410, 0
  %1417 = vmatprep.subr.bf16.mxu0 0
  %1418 = vmatpush1.bf16.xpose.msra.mxu0 0
  %1419 = vmatprep.subr.bf16.mxu0 0
  %1420 = vmatpush1.bf16.xpose.msra.mxu0 0
  %1421 = vmatprep.subr.bf16.mxu0 0
  %1422 = vmatpush1.bf16.xpose.msra.mxu0 0
  %1423 = vmatprep.subr.bf16.mxu0 0
  %1424 = vmatpush1.bf16.xpose.msra.mxu0 0
  %1425 = vmatprep.subr.bf16.mxu0 0
  %1426 = vmatpush1.bf16.xpose.msra.mxu0 0
  %1427 = vmatprep.subr.bf16.mxu0 0
  %1428 = vmatpush1.bf16.xpose.msra.mxu0 0
  %1429 = vmatprep.subr.bf16.mxu0 0
  %1430 = vmatpush1.bf16.xpose.msra.mxu0 0
  %1431 = vmatprep.subr.bf16.mxu0 0
  %1432 = vmatpush1.bf16.xpose.msra.mxu0 %v1415
  %1433 = vmatprep.subr.bf16.mxu0 0
  %1434 = vmatpush2.bf16.xpose.msra.mxu0 0
  %1435 = vmatprep.subr.bf16.mxu0 0
  %1436 = vmatpush2.bf16.xpose.msra.mxu0 0
  %1437 = vmatprep.subr.bf16.mxu0 0
  %1438 = vmatpush2.bf16.xpose.msra.mxu0 0
  %1439 = vmatprep.subr.bf16.mxu0 0
  %1440 = vmatpush2.bf16.xpose.msra.mxu0 0
  %1441 = vmatprep.subr.bf16.mxu0 0
  %1442 = vmatpush2.bf16.xpose.msra.mxu0 0
  %1443 = vmatprep.subr.bf16.mxu0 0
  %1444 = vmatpush2.bf16.xpose.msra.mxu0 0
  %1445 = vmatprep.subr.bf16.mxu0 0
  %1446 = vmatpush2.bf16.xpose.msra.mxu0 0
  %1447 = vmatprep.subr.bf16.mxu0 0
  %1448 = vmatpush2.bf16.xpose.msra.mxu0 0
  %1449 = vmatprep.mubr.bf16.mxu0 0
  %1450 = vmatmul.mubr.bf16.gmra.mxu0 %v1412
  %v1451 = vpop.f32.mrf.mxu0
  %v1452 = vadd.f32 %v1070, %v1451
  %v1453 = vpop.f32.mrf.mxu0
  %v1454 = vpop.f32.mrf.mxu0
  %v1455 = vpop.f32.mrf.mxu0
  %1456 = vdwg.mxu0
  %v1457 = vsel %vm391, %v1452, -inf
  %1458 = vmax.xlane.f32.xlu0 %v1457
  %v1459 = vpop.xlane.xlu0 %1458
  %v1460 = vsub.f32 %v1452, %v1459
  %v1461 = vmul.f32 %v1460, 1.442695
  %v1462 = vpow.pop %v1461
  %v1463 = vsel %vm391, %v1462, 0.0
  %1464 = vadd.xlane.f32.xlu0 %v1463
  %v1465 = vpop.xlane.xlu0 %1464
  %v1466 = vrcp.pop %v1465
  %v1467 = vmul.f32 %v1462, %v1466
  %v1468 = vpack.c.bf16 %v1467, %v1467
  %v1470 = vunpack.c.l.b16 %v1068
  %v1471 = vpack.c.b16 %v1470, %v1470
  %1472 = vrot.lane.b32.xlu0 %v1471, 64
  %v1473 = vpop.permute.xlu0 %1472
  %v1475 = vsel %vm391, %v1468, 0
  %v1478 = vsel %vm407, %v1473, 0
  %1480 = vmatprep.subr.bf16.mxu0 0
  %1481 = vmatpush1.bf16.msra.mxu0 0
  %1482 = vmatprep.subr.bf16.mxu0 0
  %1483 = vmatpush1.bf16.msra.mxu0 0
  %1484 = vmatprep.subr.bf16.mxu0 0
  %1485 = vmatpush1.bf16.msra.mxu0 0
  %1486 = vmatprep.subr.bf16.mxu0 0
  %1487 = vmatpush1.bf16.msra.mxu0 0
  %1488 = vmatprep.subr.bf16.mxu0 0
  %1489 = vmatpush1.bf16.msra.mxu0 0
  %1490 = vmatprep.subr.bf16.mxu0 0
  %1491 = vmatpush1.bf16.msra.mxu0 0
  %1492 = vmatprep.subr.bf16.mxu0 0
  %1493 = vmatpush1.bf16.msra.mxu0 0
  %1494 = vmatprep.subr.bf16.mxu0 0
  %1495 = vmatpush1.bf16.msra.mxu0 %v1478
  %1496 = vmatprep.subr.bf16.mxu0 0
  %1497 = vmatpush2.bf16.msra.mxu0 0
  %1498 = vmatprep.subr.bf16.mxu0 0
  %1499 = vmatpush2.bf16.msra.mxu0 0
  %1500 = vmatprep.subr.bf16.mxu0 0
  %1501 = vmatpush2.bf16.msra.mxu0 0
  %1502 = vmatprep.subr.bf16.mxu0 0
  %1503 = vmatpush2.bf16.msra.mxu0 0
  %1504 = vmatprep.subr.bf16.mxu0 0
  %1505 = vmatpush2.bf16.msra.mxu0 0
  %1506 = vmatprep.subr.bf16.mxu0 0
  %1507 = vmatpush2.bf16.msra.mxu0 0
  %1508 = vmatprep.subr.bf16.mxu0 0
  %1509 = vmatpush2.bf16.msra.mxu0 0
  %1510 = vmatprep.subr.bf16.mxu0 0
  %1511 = vmatpush2.bf16.msra.mxu0 0
  %1512 = vmatprep.mubr.bf16.mxu0 0
  %1513 = vmatmul.mubr.bf16.gmra.mxu0 %v1475
  %v1514 = vpop.f32.mrf.mxu0
  %v1515 = vadd.f32 0.0, %v1514
  %v1516 = vpop.f32.mrf.mxu0
  %v1517 = vpop.f32.mrf.mxu0
  %v1518 = vpop.f32.mrf.mxu0
  %1519 = vdwg.mxu0
  %1521 = vrot.lane.b32.xlu0 %v1515, 64
  %v1522 = vpop.permute.xlu0 %1521
  %v1524 = vsel %vm344, %v1398, %v1522
  %v1525 = vld [vmem:[%s13] sm:$0xf]
  %v1526 = vld [vmem:[%s13 + $0x4] sm:$0xf]
  %v1527 = vld [vmem:[%s13 + $0x8] sm:$0xf]
  %v1528 = vld [vmem:[%s13 + $0xc] sm:$0xf]
  %v1529 = vld [vmem:[%s13 + $0x10] sm:$0xf]
  %v1530 = vld [vmem:[%s13 + $0x14] sm:$0xf]
  %v1531 = vld [vmem:[%s13 + $0x18] sm:$0xf]
  %v1532 = vld [vmem:[%s13 + $0x1c] sm:$0xf]
  %v1533 = vld [vmem:[%s13 + $0x20] sm:$0xf]
  %v1534 = vld [vmem:[%s13 + $0x24] sm:$0xf]
  %v1535 = vld [vmem:[%s13 + $0x28] sm:$0xf]
  %v1536 = vld [vmem:[%s13 + $0x2c] sm:$0xf]
  %v1537 = vld [vmem:[%s13 + $0x30] sm:$0xf]
  %v1538 = vld [vmem:[%s13 + $0x34] sm:$0xf]
  %v1539 = vld [vmem:[%s13 + $0x38] sm:$0xf]
  %v1540 = vld [vmem:[%s13 + $0x3c] sm:$0xf]
  %v1541 = vpack.c.bf16 %v1524, %v1297
  %v1558 = vunpack.c.l.b16 %v1525
  %v1559 = vunpack.c.l.b16 %v1526
  %v1560 = vunpack.c.l.b16 %v1527
  %v1561 = vunpack.c.l.b16 %v1528
  %v1562 = vunpack.c.l.b16 %v1529
  %v1563 = vunpack.c.l.b16 %v1530
  %v1564 = vunpack.c.l.b16 %v1531
  %v1565 = vunpack.c.l.b16 %v1532
  %v1566 = vunpack.c.l.b16 %v1533
  %v1567 = vunpack.c.l.b16 %v1534
  %v1568 = vunpack.c.l.b16 %v1535
  %v1569 = vunpack.c.l.b16 %v1536
  %v1570 = vunpack.c.l.b16 %v1537
  %v1571 = vunpack.c.l.b16 %v1538
  %v1572 = vunpack.c.l.b16 %v1539
  %v1573 = vunpack.c.l.b16 %v1540
  %v1574 = vpack.c.b16 %v1559, %v1558
  %v1575 = vpack.c.b16 %v1561, %v1560
  %v1576 = vpack.c.b16 %v1563, %v1562
  %v1577 = vpack.c.b16 %v1565, %v1564
  %v1578 = vpack.c.b16 %v1567, %v1566
  %v1579 = vpack.c.b16 %v1569, %v1568
  %v1580 = vpack.c.b16 %v1571, %v1570
  %v1581 = vpack.c.b16 %v1573, %v1572
  %1590 = vmatprep.subr.bf16.mxu0 0
  %1591 = vmatpush1.bf16.msra.mxu0 %v1581
  %1592 = vmatprep.subr.bf16.mxu0 0
  %1593 = vmatpush1.bf16.msra.mxu0 %v1580
  %1594 = vmatprep.subr.bf16.mxu0 0
  %1595 = vmatpush1.bf16.msra.mxu0 %v1579
  %1596 = vmatprep.subr.bf16.mxu0 0
  %1597 = vmatpush1.bf16.msra.mxu0 %v1578
  %1598 = vmatprep.subr.bf16.mxu0 0
  %1599 = vmatpush1.bf16.msra.mxu0 %v1577
  %1600 = vmatprep.subr.bf16.mxu0 0
  %1601 = vmatpush1.bf16.msra.mxu0 %v1576
  %1602 = vmatprep.subr.bf16.mxu0 0
  %1603 = vmatpush1.bf16.msra.mxu0 %v1575
  %1604 = vmatprep.subr.bf16.mxu0 0
  %1605 = vmatpush1.bf16.msra.mxu0 %v1574
  %1606 = vmatprep.subr.bf16.mxu0 0
  %1607 = vmatpush2.bf16.msra.mxu0 0
  %1608 = vmatprep.subr.bf16.mxu0 0
  %1609 = vmatpush2.bf16.msra.mxu0 0
  %1610 = vmatprep.subr.bf16.mxu0 0
  %1611 = vmatpush2.bf16.msra.mxu0 0
  %1612 = vmatprep.subr.bf16.mxu0 0
  %1613 = vmatpush2.bf16.msra.mxu0 0
  %1614 = vmatprep.subr.bf16.mxu0 0
  %1615 = vmatpush2.bf16.msra.mxu0 0
  %1616 = vmatprep.subr.bf16.mxu0 0
  %1617 = vmatpush2.bf16.msra.mxu0 0
  %1618 = vmatprep.subr.bf16.mxu0 0
  %1619 = vmatpush2.bf16.msra.mxu0 0
  %1620 = vmatprep.subr.bf16.mxu0 0
  %1621 = vmatpush2.bf16.msra.mxu0 0
  %1622 = vmatprep.mubr.bf16.mxu0 0
  %1623 = vmatmul.mubr.bf16.gmra.mxu0 %v1541
  %v1624 = vpop.f32.mrf.mxu0
  %v1625 = vadd.f32 0.0, %v1624
  %v1626 = vpop.f32.mrf.mxu0
  %v1627 = vpop.f32.mrf.mxu0
  %v1628 = vadd.f32 0.0, %v1627
  %v1629 = vpop.f32.mrf.mxu0
  %1630 = vdwg.mxu0
  %v1631 = vadd.f32 %v950, %v1625
  %v1632 = vadd.f32 %v951, %v1628
  %v1633 = vld [vmem:[%s14] sm:$0x1]
  %v1635 = vlaneseq
  %v1636 = vshrl.u32 %v1635, 7
  %v1637 = vsub.s32 0, %v1636
  %v1638 = vrot.slane %v1633, %v1637
  %v1640 = vadd.f32 %v1631, %v1638
  %v1641 = vadd.f32 %v1632, %v1638
  %v1642 = vld [vmem:[%s15] sm:$0x1]
  %v1643 = vld [vmem:[%s16] sm:$0x1]
  %1644 = vadd.xlane.f32.xlu0 %v1640
  %v1645 = vpop.xlane.xlu0 %1644
  %1646 = vadd.xlane.f32.xlu0 %v1641
  %v1647 = vpop.xlane.xlu0 %1646
  %v1648 = vmul.f32 %v1645, %v917
  %v1649 = vmul.f32 %v1647, %v917
  %v1650 = vsub.f32 %v1640, %v1648
  %v1651 = vsub.f32 %v1641, %v1649
  %v1652 = vmul.f32 %v1650, %v1650
  %v1653 = vmul.f32 %v1651, %v1651
  %1654 = vadd.xlane.f32.xlu0 %v1652
  %v1655 = vpop.xlane.xlu0 %1654
  %1656 = vadd.xlane.f32.xlu0 %v1653
  %v1657 = vpop.xlane.xlu0 %1656
  %v1658 = vmul.f32 %v1655, %v917
  %v1659 = vmul.f32 %v1657, %v917
  %v1660 = vadd.f32 %v1658, 1e-05
  %v1661 = vadd.f32 %v1659, 1e-05
  %v1662 = vrsqrt.pop %v1660
  %v1663 = vrsqrt.pop %v1661
  %v1664 = vmul.f32 %v1650, %v1662
  %v1665 = vmul.f32 %v1651, %v1663
  %v1667 = vlaneseq
  %v1668 = vshrl.u32 %v1667, 7
  %v1669 = vsub.s32 0, %v1668
  %v1670 = vrot.slane %v1642, %v1669
  %v1672 = vmul.f32 %v1664, %v1670
  %v1673 = vmul.f32 %v1665, %v1670
  %v1675 = vlaneseq
  %v1676 = vshrl.u32 %v1675, 7
  %v1677 = vsub.s32 0, %v1676
  %v1678 = vrot.slane %v1643, %v1677
  %v1680 = vadd.f32 %v1672, %v1678
  %v1681 = vadd.f32 %v1673, %v1678
  %v1682 = vld [vmem:[%s17] sm:$0xff]
  %v1683 = vld [vmem:[%s17 + $0x8] sm:$0xff]
  %v1684 = vld [vmem:[%s17 + $0x10] sm:$0xff]
  %v1685 = vld [vmem:[%s17 + $0x18] sm:$0xff]
  %v1686 = vld [vmem:[%s17 + $0x20] sm:$0xff]
  %v1687 = vld [vmem:[%s17 + $0x28] sm:$0xff]
  %v1688 = vld [vmem:[%s17 + $0x30] sm:$0xff]
  %v1689 = vld [vmem:[%s17 + $0x38] sm:$0xff]
  %v1690 = vld [vmem:[%s17 + $0x40] sm:$0xff]
  %v1691 = vld [vmem:[%s17 + $0x48] sm:$0xff]
  %v1692 = vld [vmem:[%s17 + $0x50] sm:$0xff]
  %v1693 = vld [vmem:[%s17 + $0x58] sm:$0xff]
  %v1694 = vld [vmem:[%s17 + $0x60] sm:$0xff]
  %v1695 = vld [vmem:[%s17 + $0x68] sm:$0xff]
  %v1696 = vld [vmem:[%s17 + $0x70] sm:$0xff]
  %v1697 = vld [vmem:[%s17 + $0x78] sm:$0xff]
  %v1698 = vld [vmem:[%s17 + $0x80] sm:$0xff]
  %v1699 = vld [vmem:[%s17 + $0x88] sm:$0xff]
  %v1700 = vld [vmem:[%s17 + $0x90] sm:$0xff]
  %v1701 = vld [vmem:[%s17 + $0x98] sm:$0xff]
  %v1702 = vld [vmem:[%s17 + $0xa0] sm:$0xff]
  %v1703 = vld [vmem:[%s17 + $0xa8] sm:$0xff]
  %v1704 = vld [vmem:[%s17 + $0xb0] sm:$0xff]
  %v1705 = vld [vmem:[%s17 + $0xb8] sm:$0xff]
  %v1706 = vld [vmem:[%s17 + $0xc0] sm:$0xff]
  %v1707 = vld [vmem:[%s17 + $0xc8] sm:$0xff]
  %v1708 = vld [vmem:[%s17 + $0xd0] sm:$0xff]
  %v1709 = vld [vmem:[%s17 + $0xd8] sm:$0xff]
  %v1710 = vld [vmem:[%s17 + $0xe0] sm:$0xff]
  %v1711 = vld [vmem:[%s17 + $0xe8] sm:$0xff]
  %v1712 = vld [vmem:[%s17 + $0xf0] sm:$0xff]
  %v1713 = vld [vmem:[%s17 + $0xf8] sm:$0xff]
  %v1714 = vpack.c.bf16 %v1681, %v1680
  %v1715 = vld [vmem:[%s18] sm:$0xf]
  %v1717 = vlaneseq
  %v1718 = vshrl.u32 %v1717, 7
  %v1719 = vsub.s32 0, %v1718
  %v1720 = vrot.slane %v1715, %v1719
  %v1721 = vlaneseq
  %v1722 = vshrl.u32 %v1721, 7
  %v1723 = vsub.s32 1, %v1722
  %v1724 = vrot.slane %v1715, %v1723
  %v1725 = vlaneseq
  %v1726 = vshrl.u32 %v1725, 7
  %v1727 = vsub.s32 2, %v1726
  %v1728 = vrot.slane %v1715, %v1727
  %v1729 = vlaneseq
  %v1730 = vshrl.u32 %v1729, 7
  %v1731 = vsub.s32 3, %v1730
  %v1732 = vrot.slane %v1715, %v1731
  %v1769 = vunpack.c.l.b16 %v1682
  %v1770 = vunpack.c.h.b16 %v1682
  %v1771 = vunpack.c.l.b16 %v1683
  %v1772 = vunpack.c.h.b16 %v1683
  %v1773 = vunpack.c.l.b16 %v1684
  %v1774 = vunpack.c.h.b16 %v1684
  %v1775 = vunpack.c.l.b16 %v1685
  %v1776 = vunpack.c.h.b16 %v1685
  %v1777 = vunpack.c.l.b16 %v1686
  %v1778 = vunpack.c.h.b16 %v1686
  %v1779 = vunpack.c.l.b16 %v1687
  %v1780 = vunpack.c.h.b16 %v1687
  %v1781 = vunpack.c.l.b16 %v1688
  %v1782 = vunpack.c.h.b16 %v1688
  %v1783 = vunpack.c.l.b16 %v1689
  %v1784 = vunpack.c.h.b16 %v1689
  %v1785 = vunpack.c.l.b16 %v1690
  %v1786 = vunpack.c.h.b16 %v1690
  %v1787 = vunpack.c.l.b16 %v1691
  %v1788 = vunpack.c.h.b16 %v1691
  %v1789 = vunpack.c.l.b16 %v1692
  %v1790 = vunpack.c.h.b16 %v1692
  %v1791 = vunpack.c.l.b16 %v1693
  %v1792 = vunpack.c.h.b16 %v1693
  %v1793 = vunpack.c.l.b16 %v1694
  %v1794 = vunpack.c.h.b16 %v1694
  %v1795 = vunpack.c.l.b16 %v1695
  %v1796 = vunpack.c.h.b16 %v1695
  %v1797 = vunpack.c.l.b16 %v1696
  %v1798 = vunpack.c.h.b16 %v1696
  %v1799 = vunpack.c.l.b16 %v1697
  %v1800 = vunpack.c.h.b16 %v1697
  %v1801 = vunpack.c.l.b16 %v1698
  %v1802 = vunpack.c.h.b16 %v1698
  %v1803 = vunpack.c.l.b16 %v1699
  %v1804 = vunpack.c.h.b16 %v1699
  %v1805 = vunpack.c.l.b16 %v1700
  %v1806 = vunpack.c.h.b16 %v1700
  %v1807 = vunpack.c.l.b16 %v1701
  %v1808 = vunpack.c.h.b16 %v1701
  %v1809 = vunpack.c.l.b16 %v1702
  %v1810 = vunpack.c.h.b16 %v1702
  %v1811 = vunpack.c.l.b16 %v1703
  %v1812 = vunpack.c.h.b16 %v1703
  %v1813 = vunpack.c.l.b16 %v1704
  %v1814 = vunpack.c.h.b16 %v1704
  %v1815 = vunpack.c.l.b16 %v1705
  %v1816 = vunpack.c.h.b16 %v1705
  %v1817 = vunpack.c.l.b16 %v1706
  %v1818 = vunpack.c.h.b16 %v1706
  %v1819 = vunpack.c.l.b16 %v1707
  %v1820 = vunpack.c.h.b16 %v1707
  %v1821 = vunpack.c.l.b16 %v1708
  %v1822 = vunpack.c.h.b16 %v1708
  %v1823 = vunpack.c.l.b16 %v1709
  %v1824 = vunpack.c.h.b16 %v1709
  %v1825 = vunpack.c.l.b16 %v1710
  %v1826 = vunpack.c.h.b16 %v1710
  %v1827 = vunpack.c.l.b16 %v1711
  %v1828 = vunpack.c.h.b16 %v1711
  %v1829 = vunpack.c.l.b16 %v1712
  %v1830 = vunpack.c.h.b16 %v1712
  %v1831 = vunpack.c.l.b16 %v1713
  %v1832 = vunpack.c.h.b16 %v1713
  %v1833 = vpack.c.b16 %v1773, %v1769
  %v1834 = vpack.c.b16 %v1774, %v1770
  %v1835 = vpack.c.b16 %v1775, %v1771
  %v1836 = vpack.c.b16 %v1776, %v1772
  %v1837 = vpack.c.b16 %v1781, %v1777
  %v1838 = vpack.c.b16 %v1782, %v1778
  %v1839 = vpack.c.b16 %v1783, %v1779
  %v1840 = vpack.c.b16 %v1784, %v1780
  %v1841 = vpack.c.b16 %v1789, %v1785
  %v1842 = vpack.c.b16 %v1790, %v1786
  %v1843 = vpack.c.b16 %v1791, %v1787
  %v1844 = vpack.c.b16 %v1792, %v1788
  %v1845 = vpack.c.b16 %v1797, %v1793
  %v1846 = vpack.c.b16 %v1798, %v1794
  %v1847 = vpack.c.b16 %v1799, %v1795
  %v1848 = vpack.c.b16 %v1800, %v1796
  %v1849 = vpack.c.b16 %v1805, %v1801
  %v1850 = vpack.c.b16 %v1806, %v1802
  %v1851 = vpack.c.b16 %v1807, %v1803
  %v1852 = vpack.c.b16 %v1808, %v1804
  %v1853 = vpack.c.b16 %v1813, %v1809
  %v1854 = vpack.c.b16 %v1814, %v1810
  %v1855 = vpack.c.b16 %v1815, %v1811
  %v1856 = vpack.c.b16 %v1816, %v1812
  %v1857 = vpack.c.b16 %v1821, %v1817
  %v1858 = vpack.c.b16 %v1822, %v1818
  %v1859 = vpack.c.b16 %v1823, %v1819
  %v1860 = vpack.c.b16 %v1824, %v1820
  %v1861 = vpack.c.b16 %v1829, %v1825
  %v1862 = vpack.c.b16 %v1830, %v1826
  %v1863 = vpack.c.b16 %v1831, %v1827
  %v1864 = vpack.c.b16 %v1832, %v1828
  %1897 = vmatprep.subr.bf16.mxu0 %v1862
  %1898 = vmatpush1.bf16.msra.mxu0 %v1861
  %1899 = vmatprep.subr.bf16.mxu0 %v1858
  %1900 = vmatpush1.bf16.msra.mxu0 %v1857
  %1901 = vmatprep.subr.bf16.mxu0 %v1854
  %1902 = vmatpush1.bf16.msra.mxu0 %v1853
  %1903 = vmatprep.subr.bf16.mxu0 %v1850
  %1904 = vmatpush1.bf16.msra.mxu0 %v1849
  %1905 = vmatprep.subr.bf16.mxu0 %v1846
  %1906 = vmatpush1.bf16.msra.mxu0 %v1845
  %1907 = vmatprep.subr.bf16.mxu0 %v1842
  %1908 = vmatpush1.bf16.msra.mxu0 %v1841
  %1909 = vmatprep.subr.bf16.mxu0 %v1838
  %1910 = vmatpush1.bf16.msra.mxu0 %v1837
  %1911 = vmatprep.subr.bf16.mxu0 %v1834
  %1912 = vmatpush1.bf16.msra.mxu0 %v1833
  %1913 = vmatprep.subr.bf16.mxu0 0
  %1914 = vmatpush2.bf16.msra.mxu0 0
  %1915 = vmatprep.subr.bf16.mxu0 0
  %1916 = vmatpush2.bf16.msra.mxu0 0
  %1917 = vmatprep.subr.bf16.mxu0 0
  %1918 = vmatpush2.bf16.msra.mxu0 0
  %1919 = vmatprep.subr.bf16.mxu0 0
  %1920 = vmatpush2.bf16.msra.mxu0 0
  %1921 = vmatprep.subr.bf16.mxu0 0
  %1922 = vmatpush2.bf16.msra.mxu0 0
  %1923 = vmatprep.subr.bf16.mxu0 0
  %1924 = vmatpush2.bf16.msra.mxu0 0
  %1925 = vmatprep.subr.bf16.mxu0 0
  %1926 = vmatpush2.bf16.msra.mxu0 0
  %1927 = vmatprep.subr.bf16.mxu0 0
  %1928 = vmatpush2.bf16.msra.mxu0 0
  %1929 = vmatprep.mubr.bf16.mxu0 0
  %1930 = vmatmul.mubr.bf16.gmra.mxu0 %v1714
  %v1931 = vpop.f32.mrf.mxu0
  %v1932 = vadd.f32 %v1720, %v1931
  %v1933 = vpop.f32.mrf.mxu0
  %v1934 = vadd.f32 %v1724, %v1933
  %v1935 = vpop.f32.mrf.mxu0
  %v1936 = vadd.f32 %v1720, %v1935
  %v1937 = vpop.f32.mrf.mxu0
  %v1938 = vadd.f32 %v1724, %v1937
  %1939 = vdwg.mxu0
  %1940 = vmatprep.subr.bf16.mxu0 %v1864
  %1941 = vmatpush1.bf16.msra.mxu0 %v1863
  %1942 = vmatprep.subr.bf16.mxu0 %v1860
  %1943 = vmatpush1.bf16.msra.mxu0 %v1859
  %1944 = vmatprep.subr.bf16.mxu0 %v1856
  %1945 = vmatpush1.bf16.msra.mxu0 %v1855
  %1946 = vmatprep.subr.bf16.mxu0 %v1852
  %1947 = vmatpush1.bf16.msra.mxu0 %v1851
  %1948 = vmatprep.subr.bf16.mxu0 %v1848
  %1949 = vmatpush1.bf16.msra.mxu0 %v1847
  %1950 = vmatprep.subr.bf16.mxu0 %v1844
  %1951 = vmatpush1.bf16.msra.mxu0 %v1843
  %1952 = vmatprep.subr.bf16.mxu0 %v1840
  %1953 = vmatpush1.bf16.msra.mxu0 %v1839
  %1954 = vmatprep.subr.bf16.mxu0 %v1836
  %1955 = vmatpush1.bf16.msra.mxu0 %v1835
  %1956 = vmatprep.subr.bf16.mxu0 0
  %1957 = vmatpush2.bf16.msra.mxu0 0
  %1958 = vmatprep.subr.bf16.mxu0 0
  %1959 = vmatpush2.bf16.msra.mxu0 0
  %1960 = vmatprep.subr.bf16.mxu0 0
  %1961 = vmatpush2.bf16.msra.mxu0 0
  %1962 = vmatprep.subr.bf16.mxu0 0
  %1963 = vmatpush2.bf16.msra.mxu0 0
  %1964 = vmatprep.subr.bf16.mxu0 0
  %1965 = vmatpush2.bf16.msra.mxu0 0
  %1966 = vmatprep.subr.bf16.mxu0 0
  %1967 = vmatpush2.bf16.msra.mxu0 0
  %1968 = vmatprep.subr.bf16.mxu0 0
  %1969 = vmatpush2.bf16.msra.mxu0 0
  %1970 = vmatprep.subr.bf16.mxu0 0
  %1971 = vmatpush2.bf16.msra.mxu0 0
  %1972 = vmatprep.mubr.bf16.mxu0 0
  %1973 = vmatmul.mubr.bf16.gmra.mxu0 %v1714
  %v1974 = vpop.f32.mrf.mxu0
  %v1975 = vadd.f32 %v1728, %v1974
  %v1976 = vpop.f32.mrf.mxu0
  %v1977 = vadd.f32 %v1732, %v1976
  %v1978 = vpop.f32.mrf.mxu0
  %v1979 = vadd.f32 %v1728, %v1978
  %v1980 = vpop.f32.mrf.mxu0
  %v1981 = vadd.f32 %v1732, %v1980
  %1982 = vdwg.mxu0
  %v1983 = vmax.f32 %v1932, 0.0
  %v1984 = vmax.f32 %v1934, 0.0
  %v1985 = vmax.f32 %v1975, 0.0
  %v1986 = vmax.f32 %v1977, 0.0
  %v1987 = vmax.f32 %v1936, 0.0
  %v1988 = vmax.f32 %v1938, 0.0
  %v1989 = vmax.f32 %v1979, 0.0
  %v1990 = vmax.f32 %v1981, 0.0
  %v1991 = vld [vmem:[%s19] sm:$0xf]
  %v1992 = vld [vmem:[%s19 + $0x4] sm:$0xf]
  %v1993 = vld [vmem:[%s19 + $0x8] sm:$0xf]
  %v1994 = vld [vmem:[%s19 + $0xc] sm:$0xf]
  %v1995 = vld [vmem:[%s19 + $0x10] sm:$0xf]
  %v1996 = vld [vmem:[%s19 + $0x14] sm:$0xf]
  %v1997 = vld [vmem:[%s19 + $0x18] sm:$0xf]
  %v1998 = vld [vmem:[%s19 + $0x1c] sm:$0xf]
  %v1999 = vld [vmem:[%s19 + $0x20] sm:$0xf]
  %v2000 = vld [vmem:[%s19 + $0x24] sm:$0xf]
  %v2001 = vld [vmem:[%s19 + $0x28] sm:$0xf]
  %v2002 = vld [vmem:[%s19 + $0x2c] sm:$0xf]
  %v2003 = vld [vmem:[%s19 + $0x30] sm:$0xf]
  %v2004 = vld [vmem:[%s19 + $0x34] sm:$0xf]
  %v2005 = vld [vmem:[%s19 + $0x38] sm:$0xf]
  %v2006 = vld [vmem:[%s19 + $0x3c] sm:$0xf]
  %v2007 = vld [vmem:[%s19 + $0x40] sm:$0xf]
  %v2008 = vld [vmem:[%s19 + $0x44] sm:$0xf]
  %v2009 = vld [vmem:[%s19 + $0x48] sm:$0xf]
  %v2010 = vld [vmem:[%s19 + $0x4c] sm:$0xf]
  %v2011 = vld [vmem:[%s19 + $0x50] sm:$0xf]
  %v2012 = vld [vmem:[%s19 + $0x54] sm:$0xf]
  %v2013 = vld [vmem:[%s19 + $0x58] sm:$0xf]
  %v2014 = vld [vmem:[%s19 + $0x5c] sm:$0xf]
  %v2015 = vld [vmem:[%s19 + $0x60] sm:$0xf]
  %v2016 = vld [vmem:[%s19 + $0x64] sm:$0xf]
  %v2017 = vld [vmem:[%s19 + $0x68] sm:$0xf]
  %v2018 = vld [vmem:[%s19 + $0x6c] sm:$0xf]
  %v2019 = vld [vmem:[%s19 + $0x70] sm:$0xf]
  %v2020 = vld [vmem:[%s19 + $0x74] sm:$0xf]
  %v2021 = vld [vmem:[%s19 + $0x78] sm:$0xf]
  %v2022 = vld [vmem:[%s19 + $0x7c] sm:$0xf]
  %v2023 = vld [vmem:[%s19 + $0x80] sm:$0xf]
  %v2024 = vld [vmem:[%s19 + $0x84] sm:$0xf]
  %v2025 = vld [vmem:[%s19 + $0x88] sm:$0xf]
  %v2026 = vld [vmem:[%s19 + $0x8c] sm:$0xf]
  %v2027 = vld [vmem:[%s19 + $0x90] sm:$0xf]
  %v2028 = vld [vmem:[%s19 + $0x94] sm:$0xf]
  %v2029 = vld [vmem:[%s19 + $0x98] sm:$0xf]
  %v2030 = vld [vmem:[%s19 + $0x9c] sm:$0xf]
  %v2031 = vld [vmem:[%s19 + $0xa0] sm:$0xf]
  %v2032 = vld [vmem:[%s19 + $0xa4] sm:$0xf]
  %v2033 = vld [vmem:[%s19 + $0xa8] sm:$0xf]
  %v2034 = vld [vmem:[%s19 + $0xac] sm:$0xf]
  %v2035 = vld [vmem:[%s19 + $0xb0] sm:$0xf]
  %v2036 = vld [vmem:[%s19 + $0xb4] sm:$0xf]
  %v2037 = vld [vmem:[%s19 + $0xb8] sm:$0xf]
  %v2038 = vld [vmem:[%s19 + $0xbc] sm:$0xf]
  %v2039 = vld [vmem:[%s19 + $0xc0] sm:$0xf]
  %v2040 = vld [vmem:[%s19 + $0xc4] sm:$0xf]
  %v2041 = vld [vmem:[%s19 + $0xc8] sm:$0xf]
  %v2042 = vld [vmem:[%s19 + $0xcc] sm:$0xf]
  %v2043 = vld [vmem:[%s19 + $0xd0] sm:$0xf]
  %v2044 = vld [vmem:[%s19 + $0xd4] sm:$0xf]
  %v2045 = vld [vmem:[%s19 + $0xd8] sm:$0xf]
  %v2046 = vld [vmem:[%s19 + $0xdc] sm:$0xf]
  %v2047 = vld [vmem:[%s19 + $0xe0] sm:$0xf]
  %v2048 = vld [vmem:[%s19 + $0xe4] sm:$0xf]
  %v2049 = vld [vmem:[%s19 + $0xe8] sm:$0xf]
  %v2050 = vld [vmem:[%s19 + $0xec] sm:$0xf]
  %v2051 = vld [vmem:[%s19 + $0xf0] sm:$0xf]
  %v2052 = vld [vmem:[%s19 + $0xf4] sm:$0xf]
  %v2053 = vld [vmem:[%s19 + $0xf8] sm:$0xf]
  %v2054 = vld [vmem:[%s19 + $0xfc] sm:$0xf]
  %v2055 = vpack.c.bf16 %v1987, %v1983
  %v2056 = vpack.c.bf16 %v1988, %v1984
  %v2057 = vpack.c.bf16 %v1989, %v1985
  %v2058 = vpack.c.bf16 %v1990, %v1986
  %v2123 = vunpack.c.l.b16 %v1991
  %v2124 = vunpack.c.l.b16 %v1992
  %v2125 = vunpack.c.l.b16 %v1993
  %v2126 = vunpack.c.l.b16 %v1994
  %v2127 = vunpack.c.l.b16 %v1995
  %v2128 = vunpack.c.l.b16 %v1996
  %v2129 = vunpack.c.l.b16 %v1997
  %v2130 = vunpack.c.l.b16 %v1998
  %v2131 = vunpack.c.l.b16 %v1999
  %v2132 = vunpack.c.l.b16 %v2000
  %v2133 = vunpack.c.l.b16 %v2001
  %v2134 = vunpack.c.l.b16 %v2002
  %v2135 = vunpack.c.l.b16 %v2003
  %v2136 = vunpack.c.l.b16 %v2004
  %v2137 = vunpack.c.l.b16 %v2005
  %v2138 = vunpack.c.l.b16 %v2006
  %v2139 = vunpack.c.l.b16 %v2007
  %v2140 = vunpack.c.l.b16 %v2008
  %v2141 = vunpack.c.l.b16 %v2009
  %v2142 = vunpack.c.l.b16 %v2010
  %v2143 = vunpack.c.l.b16 %v2011
  %v2144 = vunpack.c.l.b16 %v2012
  %v2145 = vunpack.c.l.b16 %v2013
  %v2146 = vunpack.c.l.b16 %v2014
  %v2147 = vunpack.c.l.b16 %v2015
  %v2148 = vunpack.c.l.b16 %v2016
  %v2149 = vunpack.c.l.b16 %v2017
  %v2150 = vunpack.c.l.b16 %v2018
  %v2151 = vunpack.c.l.b16 %v2019
  %v2152 = vunpack.c.l.b16 %v2020
  %v2153 = vunpack.c.l.b16 %v2021
  %v2154 = vunpack.c.l.b16 %v2022
  %v2155 = vunpack.c.l.b16 %v2023
  %v2156 = vunpack.c.l.b16 %v2024
  %v2157 = vunpack.c.l.b16 %v2025
  %v2158 = vunpack.c.l.b16 %v2026
  %v2159 = vunpack.c.l.b16 %v2027
  %v2160 = vunpack.c.l.b16 %v2028
  %v2161 = vunpack.c.l.b16 %v2029
  %v2162 = vunpack.c.l.b16 %v2030
  %v2163 = vunpack.c.l.b16 %v2031
  %v2164 = vunpack.c.l.b16 %v2032
  %v2165 = vunpack.c.l.b16 %v2033
  %v2166 = vunpack.c.l.b16 %v2034
  %v2167 = vunpack.c.l.b16 %v2035
  %v2168 = vunpack.c.l.b16 %v2036
  %v2169 = vunpack.c.l.b16 %v2037
  %v2170 = vunpack.c.l.b16 %v2038
  %v2171 = vunpack.c.l.b16 %v2039
  %v2172 = vunpack.c.l.b16 %v2040
  %v2173 = vunpack.c.l.b16 %v2041
  %v2174 = vunpack.c.l.b16 %v2042
  %v2175 = vunpack.c.l.b16 %v2043
  %v2176 = vunpack.c.l.b16 %v2044
  %v2177 = vunpack.c.l.b16 %v2045
  %v2178 = vunpack.c.l.b16 %v2046
  %v2179 = vunpack.c.l.b16 %v2047
  %v2180 = vunpack.c.l.b16 %v2048
  %v2181 = vunpack.c.l.b16 %v2049
  %v2182 = vunpack.c.l.b16 %v2050
  %v2183 = vunpack.c.l.b16 %v2051
  %v2184 = vunpack.c.l.b16 %v2052
  %v2185 = vunpack.c.l.b16 %v2053
  %v2186 = vunpack.c.l.b16 %v2054
  %v2187 = vpack.c.b16 %v2124, %v2123
  %v2188 = vpack.c.b16 %v2126, %v2125
  %v2189 = vpack.c.b16 %v2128, %v2127
  %v2190 = vpack.c.b16 %v2130, %v2129
  %v2191 = vpack.c.b16 %v2132, %v2131
  %v2192 = vpack.c.b16 %v2134, %v2133
  %v2193 = vpack.c.b16 %v2136, %v2135
  %v2194 = vpack.c.b16 %v2138, %v2137
  %v2195 = vpack.c.b16 %v2140, %v2139
  %v2196 = vpack.c.b16 %v2142, %v2141
  %v2197 = vpack.c.b16 %v2144, %v2143
  %v2198 = vpack.c.b16 %v2146, %v2145
  %v2199 = vpack.c.b16 %v2148, %v2147
  %v2200 = vpack.c.b16 %v2150, %v2149
  %v2201 = vpack.c.b16 %v2152, %v2151
  %v2202 = vpack.c.b16 %v2154, %v2153
  %v2203 = vpack.c.b16 %v2156, %v2155
  %v2204 = vpack.c.b16 %v2158, %v2157
  %v2205 = vpack.c.b16 %v2160, %v2159
  %v2206 = vpack.c.b16 %v2162, %v2161
  %v2207 = vpack.c.b16 %v2164, %v2163
  %v2208 = vpack.c.b16 %v2166, %v2165
  %v2209 = vpack.c.b16 %v2168, %v2167
  %v2210 = vpack.c.b16 %v2170, %v2169
  %v2211 = vpack.c.b16 %v2172, %v2171
  %v2212 = vpack.c.b16 %v2174, %v2173
  %v2213 = vpack.c.b16 %v2176, %v2175
  %v2214 = vpack.c.b16 %v2178, %v2177
  %v2215 = vpack.c.b16 %v2180, %v2179
  %v2216 = vpack.c.b16 %v2182, %v2181
  %v2217 = vpack.c.b16 %v2184, %v2183
  %v2218 = vpack.c.b16 %v2186, %v2185
  %2251 = vmatprep.subr.bf16.mxu0 0
  %2252 = vmatpush1.bf16.msra.mxu0 %v2194
  %2253 = vmatprep.subr.bf16.mxu0 0
  %2254 = vmatpush1.bf16.msra.mxu0 %v2193
  %2255 = vmatprep.subr.bf16.mxu0 0
  %2256 = vmatpush1.bf16.msra.mxu0 %v2192
  %2257 = vmatprep.subr.bf16.mxu0 0
  %2258 = vmatpush1.bf16.msra.mxu0 %v2191
  %2259 = vmatprep.subr.bf16.mxu0 0
  %2260 = vmatpush1.bf16.msra.mxu0 %v2190
  %2261 = vmatprep.subr.bf16.mxu0 0
  %2262 = vmatpush1.bf16.msra.mxu0 %v2189
  %2263 = vmatprep.subr.bf16.mxu0 0
  %2264 = vmatpush1.bf16.msra.mxu0 %v2188
  %2265 = vmatprep.subr.bf16.mxu0 0
  %2266 = vmatpush1.bf16.msra.mxu0 %v2187
  %2267 = vmatprep.subr.bf16.mxu0 0
  %2268 = vmatpush2.bf16.msra.mxu0 %v2202
  %2269 = vmatprep.subr.bf16.mxu0 0
  %2270 = vmatpush2.bf16.msra.mxu0 %v2201
  %2271 = vmatprep.subr.bf16.mxu0 0
  %2272 = vmatpush2.bf16.msra.mxu0 %v2200
  %2273 = vmatprep.subr.bf16.mxu0 0
  %2274 = vmatpush2.bf16.msra.mxu0 %v2199
  %2275 = vmatprep.subr.bf16.mxu0 0
  %2276 = vmatpush2.bf16.msra.mxu0 %v2198
  %2277 = vmatprep.subr.bf16.mxu0 0
  %2278 = vmatpush2.bf16.msra.mxu0 %v2197
  %2279 = vmatprep.subr.bf16.mxu0 0
  %2280 = vmatpush2.bf16.msra.mxu0 %v2196
  %2281 = vmatprep.subr.bf16.mxu0 0
  %2282 = vmatpush2.bf16.msra.mxu0 %v2195
  %2283 = vmatprep.mubr.bf16.mxu0 %v2056
  %2284 = vmatmul.mubr.bf16.gmra.mxu0 %v2055
  %v2285 = vpop.f32.mrf.mxu0
  %v2286 = vadd.f32 0.0, %v2285
  %v2287 = vpop.f32.mrf.mxu0
  %v2288 = vpop.f32.mrf.mxu0
  %v2289 = vadd.f32 0.0, %v2288
  %v2290 = vpop.f32.mrf.mxu0
  %2291 = vdwg.mxu0
  %2292 = vmatprep.subr.bf16.mxu0 0
  %2293 = vmatpush1.bf16.msra.mxu0 %v2210
  %2294 = vmatprep.subr.bf16.mxu0 0
  %2295 = vmatpush1.bf16.msra.mxu0 %v2209
  %2296 = vmatprep.subr.bf16.mxu0 0
  %2297 = vmatpush1.bf16.msra.mxu0 %v2208
  %2298 = vmatprep.subr.bf16.mxu0 0
  %2299 = vmatpush1.bf16.msra.mxu0 %v2207
  %2300 = vmatprep.subr.bf16.mxu0 0
  %2301 = vmatpush1.bf16.msra.mxu0 %v2206
  %2302 = vmatprep.subr.bf16.mxu0 0
  %2303 = vmatpush1.bf16.msra.mxu0 %v2205
  %2304 = vmatprep.subr.bf16.mxu0 0
  %2305 = vmatpush1.bf16.msra.mxu0 %v2204
  %2306 = vmatprep.subr.bf16.mxu0 0
  %2307 = vmatpush1.bf16.msra.mxu0 %v2203
  %2308 = vmatprep.subr.bf16.mxu0 0
  %2309 = vmatpush2.bf16.msra.mxu0 %v2218
  %2310 = vmatprep.subr.bf16.mxu0 0
  %2311 = vmatpush2.bf16.msra.mxu0 %v2217
  %2312 = vmatprep.subr.bf16.mxu0 0
  %2313 = vmatpush2.bf16.msra.mxu0 %v2216
  %2314 = vmatprep.subr.bf16.mxu0 0
  %2315 = vmatpush2.bf16.msra.mxu0 %v2215
  %2316 = vmatprep.subr.bf16.mxu0 0
  %2317 = vmatpush2.bf16.msra.mxu0 %v2214
  %2318 = vmatprep.subr.bf16.mxu0 0
  %2319 = vmatpush2.bf16.msra.mxu0 %v2213
  %2320 = vmatprep.subr.bf16.mxu0 0
  %2321 = vmatpush2.bf16.msra.mxu0 %v2212
  %2322 = vmatprep.subr.bf16.mxu0 0
  %2323 = vmatpush2.bf16.msra.mxu0 %v2211
  %2324 = vmatprep.mubr.bf16.mxu0 %v2058
  %2325 = vmatmul.mubr.bf16.gmra.mxu0 %v2057
  %v2326 = vpop.f32.mrf.mxu0
  %v2327 = vadd.f32 %v2286, %v2326
  %v2328 = vpop.f32.mrf.mxu0
  %v2329 = vpop.f32.mrf.mxu0
  %v2330 = vadd.f32 %v2289, %v2329
  %v2331 = vpop.f32.mrf.mxu0
  %2332 = vdwg.mxu0
  %v2333 = vadd.f32 %v1680, %v2327
  %v2334 = vadd.f32 %v1681, %v2330
  %v2335 = vld [vmem:[%s20] sm:$0x1]
  %v2337 = vlaneseq
  %v2338 = vshrl.u32 %v2337, 7
  %v2339 = vsub.s32 0, %v2338
  %v2340 = vrot.slane %v2335, %v2339
  %v2342 = vadd.f32 %v2333, %v2340
  %v2343 = vadd.f32 %v2334, %v2340
  %v2344 = vld [vmem:[%s21] sm:$0x1]
  %v2345 = vld [vmem:[%s22] sm:$0x1]
  %2346 = vadd.xlane.f32.xlu0 %v2342
  %v2347 = vpop.xlane.xlu0 %2346
  %2348 = vadd.xlane.f32.xlu0 %v2343
  %v2349 = vpop.xlane.xlu0 %2348
  %v2350 = vmul.f32 %v2347, %v917
  %v2351 = vmul.f32 %v2349, %v917
  %v2352 = vsub.f32 %v2342, %v2350
  %v2353 = vsub.f32 %v2343, %v2351
  %v2354 = vmul.f32 %v2352, %v2352
  %v2355 = vmul.f32 %v2353, %v2353
  %2356 = vadd.xlane.f32.xlu0 %v2354
  %v2357 = vpop.xlane.xlu0 %2356
  %2358 = vadd.xlane.f32.xlu0 %v2355
  %v2359 = vpop.xlane.xlu0 %2358
  %v2360 = vmul.f32 %v2357, %v917
  %v2361 = vmul.f32 %v2359, %v917
  %v2362 = vadd.f32 %v2360, 1e-05
  %v2363 = vadd.f32 %v2361, 1e-05
  %v2364 = vrsqrt.pop %v2362
  %v2365 = vrsqrt.pop %v2363
  %v2366 = vmul.f32 %v2352, %v2364
  %v2367 = vmul.f32 %v2353, %v2365
  %v2369 = vlaneseq
  %v2370 = vshrl.u32 %v2369, 7
  %v2371 = vsub.s32 0, %v2370
  %v2372 = vrot.slane %v2344, %v2371
  %v2374 = vmul.f32 %v2366, %v2372
  %v2375 = vmul.f32 %v2367, %v2372
  %v2377 = vlaneseq
  %v2378 = vshrl.u32 %v2377, 7
  %v2379 = vsub.s32 0, %v2378
  %v2380 = vrot.slane %v2345, %v2379
  %v2382 = vadd.f32 %v2374, %v2380
  %v2383 = vadd.f32 %v2375, %v2380
  %2384 = vst [vmem:[%s23] sm:$0xff] %v2382
  %2385 = vst [vmem:[%s23 + $0x8] sm:$0xff] %v2383
  // Predicated region
  $region94: #{closed_call.36} parent=0 // pred_check
    _
  $region95: #{closed_call.36} parent=0 // pred_check_branch
    %2387 = sbr.rel (0) target = $region97
  $region96: #{closed_call.36} parent=0 // pred_region
    _
  $region97: #{closed_call.36} parent=0 // pred_fallthru
    _
  // Predicated region
  $region98: #{closed_call.36} parent=0 // pred_check
    _
  $region99: #{closed_call.36} parent=0 // pred_check_branch
    %2389 = sbr.rel (0) target = $region101
  $region100: #{closed_call.36} parent=0 // pred_region
    _
  $region101: #{closed_call.36} parent=0 // pred_fallthru
    _

</llo_original>
